<compile_context>
chip_gen: v7x
topology: tpu7x:2x2x1
jax: 0.10.0
libtpu: 0.0.40
codegen_flags: <defaults>
</compile_context>

<pallas_src>
import functools

import jax
import jax.numpy as jnp
from jax import lax
from jax.experimental import pallas as pl
from jax.experimental.pallas import tpu as pltpu


_CPARAMS = pltpu.CompilerParams(
    dimension_semantics=("parallel",),
    vmem_limit_bytes=48 * 1024 * 1024,   # <= v7x 64 MiB physical, generous on v5e/v6e
)


def _silu(x):
    # exp and the approx reciprocal both route to the EUP slot (VPU divide avoided).
    return x * pl.reciprocal(1.0 + jnp.exp(-x), approx=True)


# ------------------------------ Pallas kernel ------------------------------

def _fused_resnet_kernel(H, W, groups, eps, has_res,
                         xp_ref, w1_ref, b1_ref, g1_ref, be1_ref,
                         w2_ref, b2_ref, g2_ref, be2_ref,
                         mcg_ref, mgc_ref, sc_ref, sh_ref, *rest):
    """Whole ResnetBlock forward for one batch element (both Blocks + residual)."""
    if has_res:
        rw_ref, rb_ref, o_ref, x32_ref, hp_ref = rest
    else:
        o_ref, x32_ref, hp_ref = rest

    Wp = W + 2
    n_out = H * Wp
    cout = w1_ref.shape[-1]
    cg = cout // groups
    count = float(H * W)                      # valid spatial positions per channel
    inv_cnt = 1.0 / (count * cg)

    # One aligned upcast of the padded input: bf16 on the HBM/DMA side, f32 in
    # VMEM so the 9 shifted tap slices below use the 32-bit slice path.
    x32_ref[...] = xp_ref[...].astype(jnp.float32)

    # Validity masks built in-kernel: col(p) = p mod (W+2), float formulation
    # (floor((p+0.5)/Wp)) to avoid integer div/mod on the VPU.
    def _col(shape, dim):
        p = lax.broadcasted_iota(jnp.int32, shape, dim).astype(jnp.float32)
        r = jnp.floor((p + 0.5) * (1.0 / Wp))
        return p - r * Wp

    mask_row = (_col((1, n_out), 1) < (W - 0.5)).astype(jnp.float32)   # (1, n_out)
    mask_col = (_col((n_out, 1), 0) < (W - 0.5)).astype(jnp.float32)   # (n_out, 1)

    def conv9(src_ref, w_ref):
        # fused-im2col 3x3 conv: 9 shifted-slice bf16 matmuls, f32 accumulation.
        acc = jnp.zeros((n_out, w_ref.shape[-1]), jnp.float32)
        for t in range(9):
            ky, kx = divmod(t, 3)
            tap = src_ref[pl.ds(ky * Wp + kx, n_out), :].astype(jnp.bfloat16)
            acc = acc + jnp.dot(tap, w_ref[t], preferred_element_type=jnp.float32)
        return acc

    def gn_coeffs(acc, b, gamma, beta, scale, shift):
        # Per-channel sums over valid positions as M=1 MXU matmuls (off the XLU).
        asum = jnp.dot(mask_row, acc, preferred_element_type=jnp.float32)       # (1,C)
        asq = jnp.dot(mask_row, acc * acc, preferred_element_type=jnp.float32)  # (1,C)
        # Conv bias folded analytically into the statistics (y = acc + b).
        ysum = asum + count * b
        ysq = asq + 2.0 * b * asum + count * (b * b)
        gstats = jnp.dot(jnp.concatenate([ysum, ysq], axis=0), mcg_ref[...],
                         preferred_element_type=jnp.float32)                    # (2,G)
        mean = gstats[0:1] * inv_cnt
        var = jnp.maximum(gstats[1:2] * inv_cnt - mean * mean, 0.0)             # clamp
        inv = lax.rsqrt(var + eps)
        cstats = jnp.dot(jnp.concatenate([mean, inv], axis=0), mgc_ref[...],
                         preferred_element_type=jnp.float32)                    # (2,C)
        mean_c, inv_c = cstats[0:1], cstats[1:2]
        # Fold GN affine (+ FiLM) into one per-channel multiplier / adder.
        a = inv_c * gamma
        c = beta - mean_c * a
        if scale is not None:
            s1 = scale + 1.0
            a = a * s1
            c = c * s1 + shift
        return a, c + b * a               # apply as: out = acc * a + c'

    # ---- block1: conv + GN + FiLM + SiLU; result stays in padded-flat VMEM.
    acc1 = conv9(x32_ref, w1_ref)
    a1, c1 = gn_coeffs(acc1, b1_ref[...], g1_ref[...], be1_ref[...],
                       sc_ref[...], sh_ref[...])
    h1 = _silu(acc1 * a1 + c1)
    hp_ref[...] = jnp.zeros(hp_ref.shape, jnp.float32)         # zero pad rows/cols
    hp_ref[pl.ds(W + 3, n_out), :] = h1 * mask_col             # padded-flat layout

    # ---- block2: conv + GN + SiLU, fused with the residual path.
    acc2 = conv9(hp_ref, w2_ref)
    a2, c2 = gn_coeffs(acc2, b2_ref[...], g2_ref[...], be2_ref[...], None, None)
    y2 = _silu(acc2 * a2 + c2)

    x_base = x32_ref[pl.ds(W + 3, n_out), :]                   # x at the output grid
    if has_res:
        res = jnp.dot(x_base.astype(jnp.bfloat16), rw_ref[...],
                      preferred_element_type=jnp.float32) + rb_ref[...]
    else:
        res = x_base                                           # identity residual
    o_ref[...] = y2 + res


# -------------------------------- wrapper ----------------------------------

def fused_resnet_pallas(xp, w1, b1, g1, be1, w2, b2, g2, be2, mcg, mgc,
                        scale, shift, rw, rb, groups, H, W):
    B, Np, Cin = xp.shape
    Cout = w1.shape[-1]
    n_out = H * (W + 2)
    has_res = rw is not None

    kernel = functools.partial(_fused_resnet_kernel, H, W, groups, 1e-5, has_res)

    vec = pl.BlockSpec((1, Cout), lambda b: (0, 0))
    in_specs = [
        pl.BlockSpec((None, Np, Cin), lambda b: (b, 0, 0)),      # x padded-flat (bf16)
        pl.BlockSpec((9, Cin, Cout), lambda b: (0, 0, 0)),       # conv1 weight (bf16)
        vec, vec, vec,                                           # conv1 bias, gn1 g/b
        pl.BlockSpec((9, Cout, Cout), lambda b: (0, 0, 0)),      # conv2 weight (bf16)
        vec, vec, vec,                                           # conv2 bias, gn2 g/b
        pl.BlockSpec((Cout, groups), lambda b: (0, 0)),          # channel->group one-hot
        pl.BlockSpec((groups, Cout), lambda b: (0, 0)),          # group->channel one-hot
        pl.BlockSpec((None, 1, Cout), lambda b: (b, 0, 0)),      # FiLM scale
        pl.BlockSpec((None, 1, Cout), lambda b: (b, 0, 0)),      # FiLM shift
    ]
    args = [xp, w1, b1, g1, be1, w2, b2, g2, be2, mcg, mgc, scale, shift]
    if has_res:
        in_specs += [pl.BlockSpec((Cin, Cout), lambda b: (0, 0)),  # 1x1 res weight
                     vec]                                          # res bias
        args += [rw, rb]

    return pl.pallas_call(
        kernel,
        out_shape=jax.ShapeDtypeStruct((B, n_out, Cout), jnp.float32),
        grid_spec=pltpu.PrefetchScalarGridSpec(
            num_scalar_prefetch=0,
            grid=(B,),
            in_specs=in_specs,
            out_specs=pl.BlockSpec((None, n_out, Cout), lambda b: (b, 0, 0)),
            scratch_shapes=[pltpu.VMEM((Np, Cin), jnp.float32),     # upcast x
                            pltpu.VMEM((Np, Cout), jnp.float32)]),  # padded-flat h1
        compiler_params=_CPARAMS,
    )(*args)


def _pad_flat(x_nhwc, Np):
    # Glue: zero-pad spatially, flatten (H+2)*(W+2), pad tail rows to Np.
    B, H, W, C = x_nhwc.shape
    xp = jnp.pad(x_nhwc, ((0, 0), (1, 1), (1, 1), (0, 0)))
    xf = xp.reshape(B, (H + 2) * (W + 2), C)
    return jnp.pad(xf, ((0, 0), (0, Np - (H + 2) * (W + 2)), (0, 0)))


def resnet_block_forward(params, x_nchw, time_emb, class_emb, groups):
    """Pallas implementation of ResnetBlockWithClassEmbeddings.forward."""
    B, Cin, H, W = x_nchw.shape
    Cout = params["conv1_w"].shape[-1]
    Np = (((H + 2) * (W + 2) + 2) + 7) // 8 * 8

    x = jnp.transpose(x_nchw, (0, 2, 3, 1))                     # NHWC (glue)

    # Conditioning MLP: SiLU -> Linear, in plain XLA (too tiny for a kernel).
    cond = jnp.concatenate([time_emb, class_emb], axis=-1)
    emb = jax.nn.silu(cond) @ params["mlp_w"] + params["mlp_b"]  # (B, 2*Cout)
    scale, shift = emb[:, :Cout], emb[:, Cout:]

    # One-hot group matrices (constant-folded under jit, VMEM-resident).
    cg = Cout // groups
    ch = jnp.arange(Cout)
    mcg = (ch[:, None] // cg == jnp.arange(groups)[None, :]).astype(jnp.float32)
    mgc = mcg.T

    w1 = params["conv1_w"].reshape(9, Cin, Cout).astype(jnp.bfloat16)
    w2 = params["conv2_w"].reshape(9, Cout, Cout).astype(jnp.bfloat16)

    xp = _pad_flat(x, Np).astype(jnp.bfloat16)                   # (B, Np, Cin) bf16

    if Cin != Cout:
        rw = params["res_w"].astype(jnp.bfloat16)
        rb = params["res_b"].reshape(1, Cout)
    else:
        rw, rb = None, None

    out = fused_resnet_pallas(
        xp, w1,
        params["conv1_b"].reshape(1, Cout), params["gn1_g"].reshape(1, Cout),
        params["gn1_b"].reshape(1, Cout),
        w2,
        params["conv2_b"].reshape(1, Cout), params["gn2_g"].reshape(1, Cout),
        params["gn2_b"].reshape(1, Cout),
        mcg, mgc,
        scale.reshape(B, 1, Cout), shift.reshape(B, 1, Cout),
        rw, rb, groups, H, W)                                    # (B, n_out, Cout)

    out = out.reshape(B, H, W + 2, Cout)[:, :, :W, :]            # drop garbage cols
    return jnp.transpose(out, (0, 3, 1, 2))                      # back to NCHW


# --------------------------- pure-JAX reference -----------------------------

def reference_forward(params, x, t_emb, c_emb, groups):
    Cout = params["conv1_w"].shape[-1]
    cond = jnp.concatenate([t_emb, c_emb], axis=-1)
    emb = jax.nn.silu(cond) @ params["mlp_w"] + params["mlp_b"]
    scale, shift = emb[:, :Cout], emb[:, Cout:]

    def conv3(y, w_hwio, b):
        y = lax.conv_general_dilated(y, w_hwio, (1, 1), "SAME",
                                     dimension_numbers=("NCHW", "HWIO", "NCHW"))
        return y + b[None, :, None, None]

    def gnorm(y, g, b):
        B, C, H, W = y.shape
        yg = y.reshape(B, groups, C // groups, H, W)
        mean = yg.mean(axis=(2, 3, 4), keepdims=True)
        var = yg.var(axis=(2, 3, 4), keepdims=True)
        yn = ((yg - mean) / jnp.sqrt(var + 1e-5)).reshape(B, C, H, W)
        return yn * g[None, :, None, None] + b[None, :, None, None]

    h = conv3(x, params["conv1_w"], params["conv1_b"])
    h = gnorm(h, params["gn1_g"], params["gn1_b"])
    h = h * (scale[:, :, None, None] + 1.0) + shift[:, :, None, None]
    h = jax.nn.silu(h)
    h2 = conv3(h, params["conv2_w"], params["conv2_b"])
    h2 = gnorm(h2, params["gn2_g"], params["gn2_b"])
    h2 = jax.nn.silu(h2)
    res = jnp.einsum("bchw,co->bohw", x, params["res_w"]) + params["res_b"][None, :, None, None]
    return h2 + res


# ---------------------------------- main ------------------------------------

if __name__ == "__main__":
    key = jax.random.PRNGKey(0)
    B, Cin, Cout, H, W = 2, 4, 8, 16, 16
    groups = 4
    tdim, cdim = 16, 16
    keys = jax.random.split(key, 16)

    def nrm(k, shape, s=0.1):
        return s * jax.random.normal(k, shape, jnp.float32)

    params = dict(
        mlp_w=nrm(keys[0], (tdim + cdim, 2 * Cout)),
        mlp_b=nrm(keys[1], (2 * Cout,)),
        conv1_w=nrm(keys[2], (3, 3, Cin, Cout)),       # HWIO
        conv1_b=nrm(keys[3], (Cout,)),
        gn1_g=1.0 + nrm(keys[4], (Cout,)),
        gn1_b=nrm(keys[5], (Cout,)),
        conv2_w=nrm(keys[6], (3, 3, Cout, Cout)),      # HWIO
        conv2_b=nrm(keys[7], (Cout,)),
        gn2_g=1.0 + nrm(keys[8], (Cout,)),
        gn2_b=nrm(keys[9], (Cout,)),
        res_w=nrm(keys[10], (Cin, Cout)),              # 1x1 conv as (Cin, Cout)
        res_b=nrm(keys[11], (Cout,)),
    )

    x = jax.random.normal(keys[12], (B, Cin, H, W), jnp.float32)
    t_emb = jax.random.normal(keys[13], (B, tdim), jnp.float32)
    c_emb = jax.random.normal(keys[14], (B, cdim), jnp.float32)

    fwd = jax.jit(functools.partial(resnet_block_forward, groups=groups))
    out = jax.block_until_ready(fwd(params, x, t_emb, c_emb))
    assert out.shape == (B, Cout, H, W)

    ref = reference_forward(params, x, t_emb, c_emb, groups)
    # bf16 HBM activations + bf16 MXU operands (f32 accumulation) add ~1e-2
    # level quantization noise vs the pure-f32 XLA reference; tolerance reflects it.
    if not bool(jnp.allclose(out, ref, atol=3e-2, rtol=2e-2)):
        raise AssertionError("Pallas output mismatch vs JAX reference")

    print("KERNEL_OK")
</pallas_src>

<mosaic_0001>
module attributes {stable_mosaic.version = 11 : i64} {
  func.func @_fused_resnet_kernel(%arg0: i32, %arg1: memref<1x328x4xbf16, #tpu.memory_space<vmem>>, %arg2: memref<9x4x8xbf16, #tpu.memory_space<vmem>>, %arg3: memref<1x8xf32, #tpu.memory_space<vmem>>, %arg4: memref<1x8xf32, #tpu.memory_space<vmem>>, %arg5: memref<1x8xf32, #tpu.memory_space<vmem>>, %arg6: memref<9x8x8xbf16, #tpu.memory_space<vmem>>, %arg7: memref<1x8xf32, #tpu.memory_space<vmem>>, %arg8: memref<1x8xf32, #tpu.memory_space<vmem>>, %arg9: memref<1x8xf32, #tpu.memory_space<vmem>>, %arg10: memref<8x4xf32, #tpu.memory_space<vmem>>, %arg11: memref<4x8xf32, #tpu.memory_space<vmem>>, %arg12: memref<1x1x8xf32, #tpu.memory_space<vmem>>, %arg13: memref<1x1x8xf32, #tpu.memory_space<vmem>>, %arg14: memref<4x8xbf16, #tpu.memory_space<vmem>>, %arg15: memref<1x8xf32, #tpu.memory_space<vmem>>, %arg16: memref<1x288x8xf32, #tpu.memory_space<vmem>>, %arg17: memref<328x4xf32, #tpu.memory_space<vmem>>, %arg18: memref<328x8xf32, #tpu.memory_space<vmem>>) attributes {dimension_semantics = [#tpu.dimension_semantics<parallel>], iteration_bounds = array<i64: 2>, scalar_prefetch = 0 : i64, scratch_operands = 2 : i64, tpu.core_type = #tpu.core_type<tc>, window_params = [{transform_indices = @transform_0, window_bounds = array<i64: 1, 328, 4>}, {pipeline_mode = #tpu.pipeline_mode<synchronous>, transform_indices = @transform_1, window_bounds = array<i64: 9, 4, 8>}, {pipeline_mode = #tpu.pipeline_mode<synchronous>, transform_indices = @transform_2, window_bounds = array<i64: 1, 8>}, {pipeline_mode = #tpu.pipeline_mode<synchronous>, transform_indices = @transform_3, window_bounds = array<i64: 1, 8>}, {pipeline_mode = #tpu.pipeline_mode<synchronous>, transform_indices = @transform_4, window_bounds = array<i64: 1, 8>}, {pipeline_mode = #tpu.pipeline_mode<synchronous>, transform_indices = @transform_5, window_bounds = array<i64: 9, 8, 8>}, {pipeline_mode = #tpu.pipeline_mode<synchronous>, transform_indices = @transform_6, window_bounds = array<i64: 1, 8>}, {pipeline_mode = #tpu.pipeline_mode<synchronous>, transform_indices = @transform_7, window_bounds = array<i64: 1, 8>}, {pipeline_mode = #tpu.pipeline_mode<synchronous>, transform_indices = @transform_8, window_bounds = array<i64: 1, 8>}, {pipeline_mode = #tpu.pipeline_mode<synchronous>, transform_indices = @transform_9, window_bounds = array<i64: 8, 4>}, {pipeline_mode = #tpu.pipeline_mode<synchronous>, transform_indices = @transform_10, window_bounds = array<i64: 4, 8>}, {transform_indices = @transform_11, window_bounds = array<i64: 1, 1, 8>}, {transform_indices = @transform_12, window_bounds = array<i64: 1, 1, 8>}, {pipeline_mode = #tpu.pipeline_mode<synchronous>, transform_indices = @transform_13, window_bounds = array<i64: 4, 8>}, {pipeline_mode = #tpu.pipeline_mode<synchronous>, transform_indices = @transform_14, window_bounds = array<i64: 1, 8>}, {transform_indices = @transform_15, window_bounds = array<i64: 1, 288, 8>}]} {
    %c0 = arith.constant 0 : index
    %c0_0 = arith.constant 0 : index
    %c0_1 = arith.constant 0 : index
    %0 = vector.load %arg1[%c0, %c0_0, %c0_1] : memref<1x328x4xbf16, #tpu.memory_space<vmem>>, vector<1x328x4xbf16>
    %1 = vector.shape_cast %0 : vector<1x328x4xbf16> to vector<328x4xbf16>
    %2 = arith.extf %1 : vector<328x4xbf16> to vector<328x4xf32>
    %c0_2 = arith.constant 0 : index
    %c0_3 = arith.constant 0 : index
    %3 = vector.load %arg17[%c0_2, %c0_3] : memref<328x4xf32, #tpu.memory_space<vmem>>, vector<328x4xf32>
    tpu.vector_store %arg17[%c0_2, %c0_3], %2 {strides = array<i32>} : memref<328x4xf32, #tpu.memory_space<vmem>>, vector<328x4xf32>,
    %4 = tpu.iota {dimensions = array<i32: 1>} : vector<1x288xi32>
    %5 = arith.sitofp %4 : vector<1x288xi32> to vector<1x288xf32>
    %cst = arith.constant 5.000000e-01 : f32
    %6 = vector.broadcast %cst : f32 to vector<1x288xf32>
    %7 = arith.addf %5, %6 : vector<1x288xf32>
    %cst_4 = arith.constant 0.055555556 : f32
    %8 = vector.broadcast %cst_4 : f32 to vector<1x288xf32>
    %9 = arith.mulf %7, %8 : vector<1x288xf32>
    %10 = math.floor %9 : vector<1x288xf32>
    %cst_5 = arith.constant 1.800000e+01 : f32
    %11 = vector.broadcast %cst_5 : f32 to vector<1x288xf32>
    %12 = arith.mulf %10, %11 : vector<1x288xf32>
    %13 = arith.subf %5, %12 : vector<1x288xf32>
    %cst_6 = arith.constant 1.550000e+01 : f32
    %14 = vector.broadcast %cst_6 : f32 to vector<1x288xf32>
    %15 = arith.cmpf olt, %13, %14 : vector<1x288xf32>
    %16 = arith.extui %15 : vector<1x288xi1> to vector<1x288xi32>
    %17 = arith.sitofp %16 : vector<1x288xi32> to vector<1x288xf32>
    %18 = tpu.iota {dimensions = array<i32: 0>} : vector<288x1xi32>
    %19 = arith.sitofp %18 : vector<288x1xi32> to vector<288x1xf32>
    %cst_7 = arith.constant 5.000000e-01 : f32
    %20 = vector.broadcast %cst_7 : f32 to vector<288x1xf32>
    %21 = arith.addf %19, %20 : vector<288x1xf32>
    %cst_8 = arith.constant 0.055555556 : f32
    %22 = vector.broadcast %cst_8 : f32 to vector<288x1xf32>
    %23 = arith.mulf %21, %22 : vector<288x1xf32>
    %24 = math.floor %23 : vector<288x1xf32>
    %cst_9 = arith.constant 1.800000e+01 : f32
    %25 = vector.broadcast %cst_9 : f32 to vector<288x1xf32>
    %26 = arith.mulf %24, %25 : vector<288x1xf32>
    %27 = arith.subf %19, %26 : vector<288x1xf32>
    %cst_10 = arith.constant 1.550000e+01 : f32
    %28 = vector.broadcast %cst_10 : f32 to vector<288x1xf32>
    %29 = arith.cmpf olt, %27, %28 : vector<288x1xf32>
    %30 = arith.extui %29 : vector<288x1xi1> to vector<288x1xi32>
    %31 = arith.sitofp %30 : vector<288x1xi32> to vector<288x1xf32>
    %cst_11 = arith.constant 0.000000e+00 : f32
    %32 = vector.broadcast %cst_11 : f32 to vector<288x8xf32>
    %c0_12 = arith.constant 0 : index
    %c0_13 = arith.constant 0 : index
    %33 = vector.load %arg17[%c0_12, %c0_13] : memref<328x4xf32, #tpu.memory_space<vmem>>, vector<288x4xf32>
    %34 = arith.truncf %33 : vector<288x4xf32> to vector<288x4xbf16>
    %c0_14 = arith.constant 0 : index
    %c0_15 = arith.constant 0 : index
    %c0_16 = arith.constant 0 : index
    %35 = vector.load %arg2[%c0_14, %c0_15, %c0_16] : memref<9x4x8xbf16, #tpu.memory_space<vmem>>, vector<1x4x8xbf16>
    %36 = vector.shape_cast %35 : vector<1x4x8xbf16> to vector<4x8xbf16>
    %cst_17 = arith.constant dense<0.000000e+00> : vector<288x8xf32>
    %37 = tpu.matmul %34, %36, %cst_17 {dimension_numbers = #tpu.dot_dimension_numbers<[1], [0], [0], [1], [0, 0, 1, 1], [], []>} : vector<288x4xbf16>, vector<4x8xbf16>, vector<288x8xf32> -> vector<288x8xf32>
    %38 = arith.addf %32, %37 : vector<288x8xf32>
    %c1 = arith.constant 1 : index
    %c0_18 = arith.constant 0 : index
    %39 = vector.load %arg17[%c1, %c0_18] : memref<328x4xf32, #tpu.memory_space<vmem>>, vector<288x4xf32>
    %40 = arith.truncf %39 : vector<288x4xf32> to vector<288x4xbf16>
    %c1_19 = arith.constant 1 : index
    %c0_20 = arith.constant 0 : index
    %c0_21 = arith.constant 0 : index
    %41 = vector.load %arg2[%c1_19, %c0_20, %c0_21] : memref<9x4x8xbf16, #tpu.memory_space<vmem>>, vector<1x4x8xbf16>
    %42 = vector.shape_cast %41 : vector<1x4x8xbf16> to vector<4x8xbf16>
    %cst_22 = arith.constant dense<0.000000e+00> : vector<288x8xf32>
    %43 = tpu.matmul %40, %42, %cst_22 {dimension_numbers = #tpu.dot_dimension_numbers<[1], [0], [0], [1], [0, 0, 1, 1], [], []>} : vector<288x4xbf16>, vector<4x8xbf16>, vector<288x8xf32> -> vector<288x8xf32>
    %44 = arith.addf %38, %43 : vector<288x8xf32>
    %c2 = arith.constant 2 : index
    %c0_23 = arith.constant 0 : index
    %45 = vector.load %arg17[%c2, %c0_23] : memref<328x4xf32, #tpu.memory_space<vmem>>, vector<288x4xf32>
    %46 = arith.truncf %45 : vector<288x4xf32> to vector<288x4xbf16>
    %c2_24 = arith.constant 2 : index
    %c0_25 = arith.constant 0 : index
    %c0_26 = arith.constant 0 : index
    %47 = vector.load %arg2[%c2_24, %c0_25, %c0_26] : memref<9x4x8xbf16, #tpu.memory_space<vmem>>, vector<1x4x8xbf16>
    %48 = vector.shape_cast %47 : vector<1x4x8xbf16> to vector<4x8xbf16>
    %cst_27 = arith.constant dense<0.000000e+00> : vector<288x8xf32>
    %49 = tpu.matmul %46, %48, %cst_27 {dimension_numbers = #tpu.dot_dimension_numbers<[1], [0], [0], [1], [0, 0, 1, 1], [], []>} : vector<288x4xbf16>, vector<4x8xbf16>, vector<288x8xf32> -> vector<288x8xf32>
    %50 = arith.addf %44, %49 : vector<288x8xf32>
    %c18 = arith.constant 18 : index
    %c0_28 = arith.constant 0 : index
    %51 = vector.load %arg17[%c18, %c0_28] : memref<328x4xf32, #tpu.memory_space<vmem>>, vector<288x4xf32>
    %52 = arith.truncf %51 : vector<288x4xf32> to vector<288x4xbf16>
    %c3 = arith.constant 3 : index
    %c0_29 = arith.constant 0 : index
    %c0_30 = arith.constant 0 : index
    %53 = vector.load %arg2[%c3, %c0_29, %c0_30] : memref<9x4x8xbf16, #tpu.memory_space<vmem>>, vector<1x4x8xbf16>
    %54 = vector.shape_cast %53 : vector<1x4x8xbf16> to vector<4x8xbf16>
    %cst_31 = arith.constant dense<0.000000e+00> : vector<288x8xf32>
    %55 = tpu.matmul %52, %54, %cst_31 {dimension_numbers = #tpu.dot_dimension_numbers<[1], [0], [0], [1], [0, 0, 1, 1], [], []>} : vector<288x4xbf16>, vector<4x8xbf16>, vector<288x8xf32> -> vector<288x8xf32>
    %56 = arith.addf %50, %55 : vector<288x8xf32>
    %c19 = arith.constant 19 : index
    %c0_32 = arith.constant 0 : index
    %57 = vector.load %arg17[%c19, %c0_32] : memref<328x4xf32, #tpu.memory_space<vmem>>, vector<288x4xf32>
    %58 = arith.truncf %57 : vector<288x4xf32> to vector<288x4xbf16>
    %c4 = arith.constant 4 : index
    %c0_33 = arith.constant 0 : index
    %c0_34 = arith.constant 0 : index
    %59 = vector.load %arg2[%c4, %c0_33, %c0_34] : memref<9x4x8xbf16, #tpu.memory_space<vmem>>, vector<1x4x8xbf16>
    %60 = vector.shape_cast %59 : vector<1x4x8xbf16> to vector<4x8xbf16>
    %cst_35 = arith.constant dense<0.000000e+00> : vector<288x8xf32>
    %61 = tpu.matmul %58, %60, %cst_35 {dimension_numbers = #tpu.dot_dimension_numbers<[1], [0], [0], [1], [0, 0, 1, 1], [], []>} : vector<288x4xbf16>, vector<4x8xbf16>, vector<288x8xf32> -> vector<288x8xf32>
    %62 = arith.addf %56, %61 : vector<288x8xf32>
    %c20 = arith.constant 20 : index
    %c0_36 = arith.constant 0 : index
    %63 = vector.load %arg17[%c20, %c0_36] : memref<328x4xf32, #tpu.memory_space<vmem>>, vector<288x4xf32>
    %64 = arith.truncf %63 : vector<288x4xf32> to vector<288x4xbf16>
    %c5 = arith.constant 5 : index
    %c0_37 = arith.constant 0 : index
    %c0_38 = arith.constant 0 : index
    %65 = vector.load %arg2[%c5, %c0_37, %c0_38] : memref<9x4x8xbf16, #tpu.memory_space<vmem>>, vector<1x4x8xbf16>
    %66 = vector.shape_cast %65 : vector<1x4x8xbf16> to vector<4x8xbf16>
    %cst_39 = arith.constant dense<0.000000e+00> : vector<288x8xf32>
    %67 = tpu.matmul %64, %66, %cst_39 {dimension_numbers = #tpu.dot_dimension_numbers<[1], [0], [0], [1], [0, 0, 1, 1], [], []>} : vector<288x4xbf16>, vector<4x8xbf16>, vector<288x8xf32> -> vector<288x8xf32>
    %68 = arith.addf %62, %67 : vector<288x8xf32>
    %c36 = arith.constant 36 : index
    %c0_40 = arith.constant 0 : index
    %69 = vector.load %arg17[%c36, %c0_40] : memref<328x4xf32, #tpu.memory_space<vmem>>, vector<288x4xf32>
    %70 = arith.truncf %69 : vector<288x4xf32> to vector<288x4xbf16>
    %c6 = arith.constant 6 : index
    %c0_41 = arith.constant 0 : index
    %c0_42 = arith.constant 0 : index
    %71 = vector.load %arg2[%c6, %c0_41, %c0_42] : memref<9x4x8xbf16, #tpu.memory_space<vmem>>, vector<1x4x8xbf16>
    %72 = vector.shape_cast %71 : vector<1x4x8xbf16> to vector<4x8xbf16>
    %cst_43 = arith.constant dense<0.000000e+00> : vector<288x8xf32>
    %73 = tpu.matmul %70, %72, %cst_43 {dimension_numbers = #tpu.dot_dimension_numbers<[1], [0], [0], [1], [0, 0, 1, 1], [], []>} : vector<288x4xbf16>, vector<4x8xbf16>, vector<288x8xf32> -> vector<288x8xf32>
    %74 = arith.addf %68, %73 : vector<288x8xf32>
    %c37 = arith.constant 37 : index
    %c0_44 = arith.constant 0 : index
    %75 = vector.load %arg17[%c37, %c0_44] : memref<328x4xf32, #tpu.memory_space<vmem>>, vector<288x4xf32>
    %76 = arith.truncf %75 : vector<288x4xf32> to vector<288x4xbf16>
    %c7 = arith.constant 7 : index
    %c0_45 = arith.constant 0 : index
    %c0_46 = arith.constant 0 : index
    %77 = vector.load %arg2[%c7, %c0_45, %c0_46] : memref<9x4x8xbf16, #tpu.memory_space<vmem>>, vector<1x4x8xbf16>
    %78 = vector.shape_cast %77 : vector<1x4x8xbf16> to vector<4x8xbf16>
    %cst_47 = arith.constant dense<0.000000e+00> : vector<288x8xf32>
    %79 = tpu.matmul %76, %78, %cst_47 {dimension_numbers = #tpu.dot_dimension_numbers<[1], [0], [0], [1], [0, 0, 1, 1], [], []>} : vector<288x4xbf16>, vector<4x8xbf16>, vector<288x8xf32> -> vector<288x8xf32>
    %80 = arith.addf %74, %79 : vector<288x8xf32>
    %c38 = arith.constant 38 : index
    %c0_48 = arith.constant 0 : index
    %81 = vector.load %arg17[%c38, %c0_48] : memref<328x4xf32, #tpu.memory_space<vmem>>, vector<288x4xf32>
    %82 = arith.truncf %81 : vector<288x4xf32> to vector<288x4xbf16>
    %c8 = arith.constant 8 : index
    %c0_49 = arith.constant 0 : index
    %c0_50 = arith.constant 0 : index
    %83 = vector.load %arg2[%c8, %c0_49, %c0_50] : memref<9x4x8xbf16, #tpu.memory_space<vmem>>, vector<1x4x8xbf16>
    %84 = vector.shape_cast %83 : vector<1x4x8xbf16> to vector<4x8xbf16>
    %cst_51 = arith.constant dense<0.000000e+00> : vector<288x8xf32>
    %85 = tpu.matmul %82, %84, %cst_51 {dimension_numbers = #tpu.dot_dimension_numbers<[1], [0], [0], [1], [0, 0, 1, 1], [], []>} : vector<288x4xbf16>, vector<4x8xbf16>, vector<288x8xf32> -> vector<288x8xf32>
    %86 = arith.addf %80, %85 : vector<288x8xf32>
    %c0_52 = arith.constant 0 : index
    %c0_53 = arith.constant 0 : index
    %87 = vector.load %arg3[%c0_52, %c0_53] : memref<1x8xf32, #tpu.memory_space<vmem>>, vector<1x8xf32>
    %c0_54 = arith.constant 0 : index
    %c0_55 = arith.constant 0 : index
    %88 = vector.load %arg4[%c0_54, %c0_55] : memref<1x8xf32, #tpu.memory_space<vmem>>, vector<1x8xf32>
    %c0_56 = arith.constant 0 : index
    %c0_57 = arith.constant 0 : index
    %89 = vector.load %arg5[%c0_56, %c0_57] : memref<1x8xf32, #tpu.memory_space<vmem>>, vector<1x8xf32>
    %c0_58 = arith.constant 0 : index
    %c0_59 = arith.constant 0 : index
    %c0_60 = arith.constant 0 : index
    %90 = vector.load %arg12[%c0_58, %c0_59, %c0_60] : memref<1x1x8xf32, #tpu.memory_space<vmem>>, vector<1x1x8xf32>
    %91 = vector.shape_cast %90 : vector<1x1x8xf32> to vector<1x8xf32>
    %c0_61 = arith.constant 0 : index
    %c0_62 = arith.constant 0 : index
    %c0_63 = arith.constant 0 : index
    %92 = vector.load %arg13[%c0_61, %c0_62, %c0_63] : memref<1x1x8xf32, #tpu.memory_space<vmem>>, vector<1x1x8xf32>
    %93 = vector.shape_cast %92 : vector<1x1x8xf32> to vector<1x8xf32>
    %cst_64 = arith.constant dense<0.000000e+00> : vector<1x8xf32>
    %94 = tpu.matmul %17, %86, %cst_64 {dimension_numbers = #tpu.dot_dimension_numbers<[1], [0], [0], [1], [0, 0, 1, 1], [], []>} : vector<1x288xf32>, vector<288x8xf32>, vector<1x8xf32> -> vector<1x8xf32>
    %95 = arith.mulf %86, %86 : vector<288x8xf32>
    %cst_65 = arith.constant dense<0.000000e+00> : vector<1x8xf32>
    %96 = tpu.matmul %17, %95, %cst_65 {dimension_numbers = #tpu.dot_dimension_numbers<[1], [0], [0], [1], [0, 0, 1, 1], [], []>} : vector<1x288xf32>, vector<288x8xf32>, vector<1x8xf32> -> vector<1x8xf32>
    %cst_66 = arith.constant 2.560000e+02 : f32
    %97 = vector.broadcast %cst_66 : f32 to vector<1x8xf32>
    %98 = arith.mulf %97, %87 : vector<1x8xf32>
    %99 = arith.addf %94, %98 : vector<1x8xf32>
    %cst_67 = arith.constant 2.000000e+00 : f32
    %100 = vector.broadcast %cst_67 : f32 to vector<1x8xf32>
    %101 = arith.mulf %100, %87 : vector<1x8xf32>
    %102 = arith.mulf %101, %94 : vector<1x8xf32>
    %103 = arith.addf %96, %102 : vector<1x8xf32>
    %104 = arith.mulf %87, %87 : vector<1x8xf32>
    %cst_68 = arith.constant 2.560000e+02 : f32
    %105 = vector.broadcast %cst_68 : f32 to vector<1x8xf32>
    %106 = arith.mulf %105, %104 : vector<1x8xf32>
    %107 = arith.addf %103, %106 : vector<1x8xf32>
    %108 = tpu.concatenate %99, %107 in 0 : vector<1x8xf32>, vector<1x8xf32> -> vector<2x8xf32>
    %c0_69 = arith.constant 0 : index
    %c0_70 = arith.constant 0 : index
    %109 = vector.load %arg10[%c0_69, %c0_70] : memref<8x4xf32, #tpu.memory_space<vmem>>, vector<8x4xf32>
    %cst_71 = arith.constant dense<0.000000e+00> : vector<2x4xf32>
    %110 = tpu.matmul %108, %109, %cst_71 {dimension_numbers = #tpu.dot_dimension_numbers<[1], [0], [0], [1], [0, 0, 1, 1], [], []>} : vector<2x8xf32>, vector<8x4xf32>, vector<2x4xf32> -> vector<2x4xf32>
    %111 = vector.extract_strided_slice %110 {offsets = [0, 0], sizes = [1, 4], strides = [1, 1]} : vector<2x4xf32> to vector<1x4xf32>
    %cst_72 = arith.constant 0.001953125 : f32
    %112 = vector.broadcast %cst_72 : f32 to vector<1x4xf32>
    %113 = arith.mulf %111, %112 : vector<1x4xf32>
    %114 = vector.extract_strided_slice %110 {offsets = [1, 0], sizes = [1, 4], strides = [1, 1]} : vector<2x4xf32> to vector<1x4xf32>
    %cst_73 = arith.constant 0.001953125 : f32
    %115 = vector.broadcast %cst_73 : f32 to vector<1x4xf32>
    %116 = arith.mulf %114, %115 : vector<1x4xf32>
    %117 = arith.mulf %113, %113 : vector<1x4xf32>
    %118 = arith.subf %116, %117 : vector<1x4xf32>
    %cst_74 = arith.constant 0.000000e+00 : f32
    %119 = vector.broadcast %cst_74 : f32 to vector<1x4xf32>
    %120 = arith.maximumf %118, %119 : vector<1x4xf32>
    %cst_75 = arith.constant 9.99999974E-6 : f32
    %121 = vector.broadcast %cst_75 : f32 to vector<1x4xf32>
    %122 = arith.addf %120, %121 : vector<1x4xf32>
    %123 = math.rsqrt %122 : vector<1x4xf32>
    %124 = tpu.concatenate %113, %123 in 0 : vector<1x4xf32>, vector<1x4xf32> -> vector<2x4xf32>
    %c0_76 = arith.constant 0 : index
    %c0_77 = arith.constant 0 : index
    %125 = vector.load %arg11[%c0_76, %c0_77] : memref<4x8xf32, #tpu.memory_space<vmem>>, vector<4x8xf32>
    %cst_78 = arith.constant dense<0.000000e+00> : vector<2x8xf32>
    %126 = tpu.matmul %124, %125, %cst_78 {dimension_numbers = #tpu.dot_dimension_numbers<[1], [0], [0], [1], [0, 0, 1, 1], [], []>} : vector<2x4xf32>, vector<4x8xf32>, vector<2x8xf32> -> vector<2x8xf32>
    %127 = vector.extract_strided_slice %126 {offsets = [0, 0], sizes = [1, 8], strides = [1, 1]} : vector<2x8xf32> to vector<1x8xf32>
    %128 = vector.extract_strided_slice %126 {offsets = [1, 0], sizes = [1, 8], strides = [1, 1]} : vector<2x8xf32> to vector<1x8xf32>
    %129 = arith.mulf %128, %88 : vector<1x8xf32>
    %130 = arith.mulf %127, %129 : vector<1x8xf32>
    %131 = arith.subf %89, %130 : vector<1x8xf32>
    %cst_79 = arith.constant 1.000000e+00 : f32
    %132 = vector.broadcast %cst_79 : f32 to vector<1x8xf32>
    %133 = arith.addf %91, %132 : vector<1x8xf32>
    %134 = arith.mulf %129, %133 : vector<1x8xf32>
    %135 = arith.mulf %131, %133 : vector<1x8xf32>
    %136 = arith.addf %135, %93 : vector<1x8xf32>
    %137 = arith.mulf %87, %134 : vector<1x8xf32>
    %138 = arith.addf %136, %137 : vector<1x8xf32>
    %139 = vector.broadcast %134 : vector<1x8xf32> to vector<288x8xf32>
    %140 = arith.mulf %86, %139 : vector<288x8xf32>
    %141 = vector.broadcast %138 : vector<1x8xf32> to vector<288x8xf32>
    %142 = arith.addf %140, %141 : vector<288x8xf32>
    %cst_80 = arith.constant 0.000000e+00 : f32
    %143 = vector.broadcast %cst_80 : f32 to vector<288x8xf32>
    %144 = arith.subf %143, %142 : vector<288x8xf32>
    %145 = math.exp %144 : vector<288x8xf32>
    %cst_81 = arith.constant 1.000000e+00 : f32
    %146 = vector.broadcast %cst_81 : f32 to vector<288x8xf32>
    %147 = arith.addf %146, %145 : vector<288x8xf32>
    %148 = tpu.reciprocal %147 {approx = true} : vector<288x8xf32> -> vector<288x8xf32>
    %149 = arith.mulf %142, %148 : vector<288x8xf32>
    %cst_82 = arith.constant 0.000000e+00 : f32
    %150 = vector.broadcast %cst_82 : f32 to vector<328x8xf32>
    %c0_83 = arith.constant 0 : index
    %c0_84 = arith.constant 0 : index
    %151 = vector.load %arg18[%c0_83, %c0_84] : memref<328x8xf32, #tpu.memory_space<vmem>>, vector<328x8xf32>
    tpu.vector_store %arg18[%c0_83, %c0_84], %150 {strides = array<i32>} : memref<328x8xf32, #tpu.memory_space<vmem>>, vector<328x8xf32>,
    %152 = vector.broadcast %31 : vector<288x1xf32> to vector<288x8xf32>
    %153 = arith.mulf %149, %152 : vector<288x8xf32>
    %c19_85 = arith.constant 19 : index
    %c0_86 = arith.constant 0 : index
    %154 = vector.load %arg18[%c19_85, %c0_86] : memref<328x8xf32, #tpu.memory_space<vmem>>, vector<288x8xf32>
    tpu.vector_store %arg18[%c19_85, %c0_86], %153 {strides = array<i32>} : memref<328x8xf32, #tpu.memory_space<vmem>>, vector<288x8xf32>,
    %cst_87 = arith.constant 0.000000e+00 : f32
    %155 = vector.broadcast %cst_87 : f32 to vector<288x8xf32>
    %c0_88 = arith.constant 0 : index
    %c0_89 = arith.constant 0 : index
    %156 = vector.load %arg18[%c0_88, %c0_89] : memref<328x8xf32, #tpu.memory_space<vmem>>, vector<288x8xf32>
    %157 = arith.truncf %156 : vector<288x8xf32> to vector<288x8xbf16>
    %c0_90 = arith.constant 0 : index
    %c0_91 = arith.constant 0 : index
    %c0_92 = arith.constant 0 : index
    %158 = vector.load %arg6[%c0_90, %c0_91, %c0_92] : memref<9x8x8xbf16, #tpu.memory_space<vmem>>, vector<1x8x8xbf16>
    %159 = vector.shape_cast %158 : vector<1x8x8xbf16> to vector<8x8xbf16>
    %cst_93 = arith.constant dense<0.000000e+00> : vector<288x8xf32>
    %160 = tpu.matmul %157, %159, %cst_93 {dimension_numbers = #tpu.dot_dimension_numbers<[1], [0], [0], [1], [0, 0, 1, 1], [], []>} : vector<288x8xbf16>, vector<8x8xbf16>, vector<288x8xf32> -> vector<288x8xf32>
    %161 = arith.addf %155, %160 : vector<288x8xf32>
    %c1_94 = arith.constant 1 : index
    %c0_95 = arith.constant 0 : index
    %162 = vector.load %arg18[%c1_94, %c0_95] : memref<328x8xf32, #tpu.memory_space<vmem>>, vector<288x8xf32>
    %163 = arith.truncf %162 : vector<288x8xf32> to vector<288x8xbf16>
    %c1_96 = arith.constant 1 : index
    %c0_97 = arith.constant 0 : index
    %c0_98 = arith.constant 0 : index
    %164 = vector.load %arg6[%c1_96, %c0_97, %c0_98] : memref<9x8x8xbf16, #tpu.memory_space<vmem>>, vector<1x8x8xbf16>
    %165 = vector.shape_cast %164 : vector<1x8x8xbf16> to vector<8x8xbf16>
    %cst_99 = arith.constant dense<0.000000e+00> : vector<288x8xf32>
    %166 = tpu.matmul %163, %165, %cst_99 {dimension_numbers = #tpu.dot_dimension_numbers<[1], [0], [0], [1], [0, 0, 1, 1], [], []>} : vector<288x8xbf16>, vector<8x8xbf16>, vector<288x8xf32> -> vector<288x8xf32>
    %167 = arith.addf %161, %166 : vector<288x8xf32>
    %c2_100 = arith.constant 2 : index
    %c0_101 = arith.constant 0 : index
    %168 = vector.load %arg18[%c2_100, %c0_101] : memref<328x8xf32, #tpu.memory_space<vmem>>, vector<288x8xf32>
    %169 = arith.truncf %168 : vector<288x8xf32> to vector<288x8xbf16>
    %c2_102 = arith.constant 2 : index
    %c0_103 = arith.constant 0 : index
    %c0_104 = arith.constant 0 : index
    %170 = vector.load %arg6[%c2_102, %c0_103, %c0_104] : memref<9x8x8xbf16, #tpu.memory_space<vmem>>, vector<1x8x8xbf16>
    %171 = vector.shape_cast %170 : vector<1x8x8xbf16> to vector<8x8xbf16>
    %cst_105 = arith.constant dense<0.000000e+00> : vector<288x8xf32>
    %172 = tpu.matmul %169, %171, %cst_105 {dimension_numbers = #tpu.dot_dimension_numbers<[1], [0], [0], [1], [0, 0, 1, 1], [], []>} : vector<288x8xbf16>, vector<8x8xbf16>, vector<288x8xf32> -> vector<288x8xf32>
    %173 = arith.addf %167, %172 : vector<288x8xf32>
    %c18_106 = arith.constant 18 : index
    %c0_107 = arith.constant 0 : index
    %174 = vector.load %arg18[%c18_106, %c0_107] : memref<328x8xf32, #tpu.memory_space<vmem>>, vector<288x8xf32>
    %175 = arith.truncf %174 : vector<288x8xf32> to vector<288x8xbf16>
    %c3_108 = arith.constant 3 : index
    %c0_109 = arith.constant 0 : index
    %c0_110 = arith.constant 0 : index
    %176 = vector.load %arg6[%c3_108, %c0_109, %c0_110] : memref<9x8x8xbf16, #tpu.memory_space<vmem>>, vector<1x8x8xbf16>
    %177 = vector.shape_cast %176 : vector<1x8x8xbf16> to vector<8x8xbf16>
    %cst_111 = arith.constant dense<0.000000e+00> : vector<288x8xf32>
    %178 = tpu.matmul %175, %177, %cst_111 {dimension_numbers = #tpu.dot_dimension_numbers<[1], [0], [0], [1], [0, 0, 1, 1], [], []>} : vector<288x8xbf16>, vector<8x8xbf16>, vector<288x8xf32> -> vector<288x8xf32>
    %179 = arith.addf %173, %178 : vector<288x8xf32>
    %c19_112 = arith.constant 19 : index
    %c0_113 = arith.constant 0 : index
    %180 = vector.load %arg18[%c19_112, %c0_113] : memref<328x8xf32, #tpu.memory_space<vmem>>, vector<288x8xf32>
    %181 = arith.truncf %180 : vector<288x8xf32> to vector<288x8xbf16>
    %c4_114 = arith.constant 4 : index
    %c0_115 = arith.constant 0 : index
    %c0_116 = arith.constant 0 : index
    %182 = vector.load %arg6[%c4_114, %c0_115, %c0_116] : memref<9x8x8xbf16, #tpu.memory_space<vmem>>, vector<1x8x8xbf16>
    %183 = vector.shape_cast %182 : vector<1x8x8xbf16> to vector<8x8xbf16>
    %cst_117 = arith.constant dense<0.000000e+00> : vector<288x8xf32>
    %184 = tpu.matmul %181, %183, %cst_117 {dimension_numbers = #tpu.dot_dimension_numbers<[1], [0], [0], [1], [0, 0, 1, 1], [], []>} : vector<288x8xbf16>, vector<8x8xbf16>, vector<288x8xf32> -> vector<288x8xf32>
    %185 = arith.addf %179, %184 : vector<288x8xf32>
    %c20_118 = arith.constant 20 : index
    %c0_119 = arith.constant 0 : index
    %186 = vector.load %arg18[%c20_118, %c0_119] : memref<328x8xf32, #tpu.memory_space<vmem>>, vector<288x8xf32>
    %187 = arith.truncf %186 : vector<288x8xf32> to vector<288x8xbf16>
    %c5_120 = arith.constant 5 : index
    %c0_121 = arith.constant 0 : index
    %c0_122 = arith.constant 0 : index
    %188 = vector.load %arg6[%c5_120, %c0_121, %c0_122] : memref<9x8x8xbf16, #tpu.memory_space<vmem>>, vector<1x8x8xbf16>
    %189 = vector.shape_cast %188 : vector<1x8x8xbf16> to vector<8x8xbf16>
    %cst_123 = arith.constant dense<0.000000e+00> : vector<288x8xf32>
    %190 = tpu.matmul %187, %189, %cst_123 {dimension_numbers = #tpu.dot_dimension_numbers<[1], [0], [0], [1], [0, 0, 1, 1], [], []>} : vector<288x8xbf16>, vector<8x8xbf16>, vector<288x8xf32> -> vector<288x8xf32>
    %191 = arith.addf %185, %190 : vector<288x8xf32>
    %c36_124 = arith.constant 36 : index
    %c0_125 = arith.constant 0 : index
    %192 = vector.load %arg18[%c36_124, %c0_125] : memref<328x8xf32, #tpu.memory_space<vmem>>, vector<288x8xf32>
    %193 = arith.truncf %192 : vector<288x8xf32> to vector<288x8xbf16>
    %c6_126 = arith.constant 6 : index
    %c0_127 = arith.constant 0 : index
    %c0_128 = arith.constant 0 : index
    %194 = vector.load %arg6[%c6_126, %c0_127, %c0_128] : memref<9x8x8xbf16, #tpu.memory_space<vmem>>, vector<1x8x8xbf16>
    %195 = vector.shape_cast %194 : vector<1x8x8xbf16> to vector<8x8xbf16>
    %cst_129 = arith.constant dense<0.000000e+00> : vector<288x8xf32>
    %196 = tpu.matmul %193, %195, %cst_129 {dimension_numbers = #tpu.dot_dimension_numbers<[1], [0], [0], [1], [0, 0, 1, 1], [], []>} : vector<288x8xbf16>, vector<8x8xbf16>, vector<288x8xf32> -> vector<288x8xf32>
    %197 = arith.addf %191, %196 : vector<288x8xf32>
    %c37_130 = arith.constant 37 : index
    %c0_131 = arith.constant 0 : index
    %198 = vector.load %arg18[%c37_130, %c0_131] : memref<328x8xf32, #tpu.memory_space<vmem>>, vector<288x8xf32>
    %199 = arith.truncf %198 : vector<288x8xf32> to vector<288x8xbf16>
    %c7_132 = arith.constant 7 : index
    %c0_133 = arith.constant 0 : index
    %c0_134 = arith.constant 0 : index
    %200 = vector.load %arg6[%c7_132, %c0_133, %c0_134] : memref<9x8x8xbf16, #tpu.memory_space<vmem>>, vector<1x8x8xbf16>
    %201 = vector.shape_cast %200 : vector<1x8x8xbf16> to vector<8x8xbf16>
    %cst_135 = arith.constant dense<0.000000e+00> : vector<288x8xf32>
    %202 = tpu.matmul %199, %201, %cst_135 {dimension_numbers = #tpu.dot_dimension_numbers<[1], [0], [0], [1], [0, 0, 1, 1], [], []>} : vector<288x8xbf16>, vector<8x8xbf16>, vector<288x8xf32> -> vector<288x8xf32>
    %203 = arith.addf %197, %202 : vector<288x8xf32>
    %c38_136 = arith.constant 38 : index
    %c0_137 = arith.constant 0 : index
    %204 = vector.load %arg18[%c38_136, %c0_137] : memref<328x8xf32, #tpu.memory_space<vmem>>, vector<288x8xf32>
    %205 = arith.truncf %204 : vector<288x8xf32> to vector<288x8xbf16>
    %c8_138 = arith.constant 8 : index
    %c0_139 = arith.constant 0 : index
    %c0_140 = arith.constant 0 : index
    %206 = vector.load %arg6[%c8_138, %c0_139, %c0_140] : memref<9x8x8xbf16, #tpu.memory_space<vmem>>, vector<1x8x8xbf16>
    %207 = vector.shape_cast %206 : vector<1x8x8xbf16> to vector<8x8xbf16>
    %cst_141 = arith.constant dense<0.000000e+00> : vector<288x8xf32>
    %208 = tpu.matmul %205, %207, %cst_141 {dimension_numbers = #tpu.dot_dimension_numbers<[1], [0], [0], [1], [0, 0, 1, 1], [], []>} : vector<288x8xbf16>, vector<8x8xbf16>, vector<288x8xf32> -> vector<288x8xf32>
    %209 = arith.addf %203, %208 : vector<288x8xf32>
    %c0_142 = arith.constant 0 : index
    %c0_143 = arith.constant 0 : index
    %210 = vector.load %arg7[%c0_142, %c0_143] : memref<1x8xf32, #tpu.memory_space<vmem>>, vector<1x8xf32>
    %c0_144 = arith.constant 0 : index
    %c0_145 = arith.constant 0 : index
    %211 = vector.load %arg8[%c0_144, %c0_145] : memref<1x8xf32, #tpu.memory_space<vmem>>, vector<1x8xf32>
    %c0_146 = arith.constant 0 : index
    %c0_147 = arith.constant 0 : index
    %212 = vector.load %arg9[%c0_146, %c0_147] : memref<1x8xf32, #tpu.memory_space<vmem>>, vector<1x8xf32>
    %cst_148 = arith.constant dense<0.000000e+00> : vector<1x8xf32>
    %213 = tpu.matmul %17, %209, %cst_148 {dimension_numbers = #tpu.dot_dimension_numbers<[1], [0], [0], [1], [0, 0, 1, 1], [], []>} : vector<1x288xf32>, vector<288x8xf32>, vector<1x8xf32> -> vector<1x8xf32>
    %214 = arith.mulf %209, %209 : vector<288x8xf32>
    %cst_149 = arith.constant dense<0.000000e+00> : vector<1x8xf32>
    %215 = tpu.matmul %17, %214, %cst_149 {dimension_numbers = #tpu.dot_dimension_numbers<[1], [0], [0], [1], [0, 0, 1, 1], [], []>} : vector<1x288xf32>, vector<288x8xf32>, vector<1x8xf32> -> vector<1x8xf32>
    %cst_150 = arith.constant 2.560000e+02 : f32
    %216 = vector.broadcast %cst_150 : f32 to vector<1x8xf32>
    %217 = arith.mulf %216, %210 : vector<1x8xf32>
    %218 = arith.addf %213, %217 : vector<1x8xf32>
    %cst_151 = arith.constant 2.000000e+00 : f32
    %219 = vector.broadcast %cst_151 : f32 to vector<1x8xf32>
    %220 = arith.mulf %219, %210 : vector<1x8xf32>
    %221 = arith.mulf %220, %213 : vector<1x8xf32>
    %222 = arith.addf %215, %221 : vector<1x8xf32>
    %223 = arith.mulf %210, %210 : vector<1x8xf32>
    %cst_152 = arith.constant 2.560000e+02 : f32
    %224 = vector.broadcast %cst_152 : f32 to vector<1x8xf32>
    %225 = arith.mulf %224, %223 : vector<1x8xf32>
    %226 = arith.addf %222, %225 : vector<1x8xf32>
    %227 = tpu.concatenate %218, %226 in 0 : vector<1x8xf32>, vector<1x8xf32> -> vector<2x8xf32>
    %c0_153 = arith.constant 0 : index
    %c0_154 = arith.constant 0 : index
    %228 = vector.load %arg10[%c0_153, %c0_154] : memref<8x4xf32, #tpu.memory_space<vmem>>, vector<8x4xf32>
    %cst_155 = arith.constant dense<0.000000e+00> : vector<2x4xf32>
    %229 = tpu.matmul %227, %228, %cst_155 {dimension_numbers = #tpu.dot_dimension_numbers<[1], [0], [0], [1], [0, 0, 1, 1], [], []>} : vector<2x8xf32>, vector<8x4xf32>, vector<2x4xf32> -> vector<2x4xf32>
    %230 = vector.extract_strided_slice %229 {offsets = [0, 0], sizes = [1, 4], strides = [1, 1]} : vector<2x4xf32> to vector<1x4xf32>
    %cst_156 = arith.constant 0.001953125 : f32
    %231 = vector.broadcast %cst_156 : f32 to vector<1x4xf32>
    %232 = arith.mulf %230, %231 : vector<1x4xf32>
    %233 = vector.extract_strided_slice %229 {offsets = [1, 0], sizes = [1, 4], strides = [1, 1]} : vector<2x4xf32> to vector<1x4xf32>
    %cst_157 = arith.constant 0.001953125 : f32
    %234 = vector.broadcast %cst_157 : f32 to vector<1x4xf32>
    %235 = arith.mulf %233, %234 : vector<1x4xf32>
    %236 = arith.mulf %232, %232 : vector<1x4xf32>
    %237 = arith.subf %235, %236 : vector<1x4xf32>
    %cst_158 = arith.constant 0.000000e+00 : f32
    %238 = vector.broadcast %cst_158 : f32 to vector<1x4xf32>
    %239 = arith.maximumf %237, %238 : vector<1x4xf32>
    %cst_159 = arith.constant 9.99999974E-6 : f32
    %240 = vector.broadcast %cst_159 : f32 to vector<1x4xf32>
    %241 = arith.addf %239, %240 : vector<1x4xf32>
    %242 = math.rsqrt %241 : vector<1x4xf32>
    %243 = tpu.concatenate %232, %242 in 0 : vector<1x4xf32>, vector<1x4xf32> -> vector<2x4xf32>
    %c0_160 = arith.constant 0 : index
    %c0_161 = arith.constant 0 : index
    %244 = vector.load %arg11[%c0_160, %c0_161] : memref<4x8xf32, #tpu.memory_space<vmem>>, vector<4x8xf32>
    %cst_162 = arith.constant dense<0.000000e+00> : vector<2x8xf32>
    %245 = tpu.matmul %243, %244, %cst_162 {dimension_numbers = #tpu.dot_dimension_numbers<[1], [0], [0], [1], [0, 0, 1, 1], [], []>} : vector<2x4xf32>, vector<4x8xf32>, vector<2x8xf32> -> vector<2x8xf32>
    %246 = vector.extract_strided_slice %245 {offsets = [0, 0], sizes = [1, 8], strides = [1, 1]} : vector<2x8xf32> to vector<1x8xf32>
    %247 = vector.extract_strided_slice %245 {offsets = [1, 0], sizes = [1, 8], strides = [1, 1]} : vector<2x8xf32> to vector<1x8xf32>
    %248 = arith.mulf %247, %211 : vector<1x8xf32>
    %249 = arith.mulf %246, %248 : vector<1x8xf32>
    %250 = arith.subf %212, %249 : vector<1x8xf32>
    %251 = arith.mulf %210, %248 : vector<1x8xf32>
    %252 = arith.addf %250, %251 : vector<1x8xf32>
    %253 = vector.broadcast %248 : vector<1x8xf32> to vector<288x8xf32>
    %254 = arith.mulf %209, %253 : vector<288x8xf32>
    %255 = vector.broadcast %252 : vector<1x8xf32> to vector<288x8xf32>
    %256 = arith.addf %254, %255 : vector<288x8xf32>
    %cst_163 = arith.constant 0.000000e+00 : f32
    %257 = vector.broadcast %cst_163 : f32 to vector<288x8xf32>
    %258 = arith.subf %257, %256 : vector<288x8xf32>
    %259 = math.exp %258 : vector<288x8xf32>
    %cst_164 = arith.constant 1.000000e+00 : f32
    %260 = vector.broadcast %cst_164 : f32 to vector<288x8xf32>
    %261 = arith.addf %260, %259 : vector<288x8xf32>
    %262 = tpu.reciprocal %261 {approx = true} : vector<288x8xf32> -> vector<288x8xf32>
    %263 = arith.mulf %256, %262 : vector<288x8xf32>
    %c19_165 = arith.constant 19 : index
    %c0_166 = arith.constant 0 : index
    %264 = vector.load %arg17[%c19_165, %c0_166] : memref<328x4xf32, #tpu.memory_space<vmem>>, vector<288x4xf32>
    %265 = arith.truncf %264 : vector<288x4xf32> to vector<288x4xbf16>
    %c0_167 = arith.constant 0 : index
    %c0_168 = arith.constant 0 : index
    %266 = vector.load %arg14[%c0_167, %c0_168] : memref<4x8xbf16, #tpu.memory_space<vmem>>, vector<4x8xbf16>
    %cst_169 = arith.constant dense<0.000000e+00> : vector<288x8xf32>
    %267 = tpu.matmul %265, %266, %cst_169 {dimension_numbers = #tpu.dot_dimension_numbers<[1], [0], [0], [1], [0, 0, 1, 1], [], []>} : vector<288x4xbf16>, vector<4x8xbf16>, vector<288x8xf32> -> vector<288x8xf32>
    %c0_170 = arith.constant 0 : index
    %c0_171 = arith.constant 0 : index
    %268 = vector.load %arg15[%c0_170, %c0_171] : memref<1x8xf32, #tpu.memory_space<vmem>>, vector<1x8xf32>
    %269 = vector.broadcast %268 : vector<1x8xf32> to vector<288x8xf32>
    %270 = arith.addf %267, %269 : vector<288x8xf32>
    %271 = arith.addf %263, %270 : vector<288x8xf32>
    %c0_172 = arith.constant 0 : index
    %c0_173 = arith.constant 0 : index
    %c0_174 = arith.constant 0 : index
    %272 = vector.load %arg16[%c0_172, %c0_173, %c0_174] : memref<1x288x8xf32, #tpu.memory_space<vmem>>, vector<1x288x8xf32>
    %273 = vector.shape_cast %272 : vector<1x288x8xf32> to vector<288x8xf32>
    %274 = vector.shape_cast %271 : vector<288x8xf32> to vector<1x288x8xf32>
    tpu.vector_store %arg16[%c0_172, %c0_173, %c0_174], %274 {strides = array<i32>} : memref<1x288x8xf32, #tpu.memory_space<vmem>>, vector<1x288x8xf32>,
    return
  }
  func.func @transform_0(%arg0: i32) -> (i32, i32, i32) {
    %c0_i32 = arith.constant 0 : i32
    %c0_i32_0 = arith.constant 0 : i32
    %c0_i32_1 = arith.constant 0 : i32
    return %arg0, %c0_i32, %c0_i32_0 : i32, i32, i32
  }
  func.func @transform_1(%arg0: i32) -> (i32, i32, i32) {
    %c0_i32 = arith.constant 0 : i32
    %c0_i32_0 = arith.constant 0 : i32
    %c0_i32_1 = arith.constant 0 : i32
    %c0_i32_2 = arith.constant 0 : i32
    return %c0_i32, %c0_i32_0, %c0_i32_1 : i32, i32, i32
  }
  func.func @transform_2(%arg0: i32) -> (i32, i32) {
    %c0_i32 = arith.constant 0 : i32
    %c0_i32_0 = arith.constant 0 : i32
    %c0_i32_1 = arith.constant 0 : i32
    return %c0_i32, %c0_i32_0 : i32, i32
  }
  func.func @transform_3(%arg0: i32) -> (i32, i32) {
    %c0_i32 = arith.constant 0 : i32
    %c0_i32_0 = arith.constant 0 : i32
    %c0_i32_1 = arith.constant 0 : i32
    return %c0_i32, %c0_i32_0 : i32, i32
  }
  func.func @transform_4(%arg0: i32) -> (i32, i32) {
    %c0_i32 = arith.constant 0 : i32
    %c0_i32_0 = arith.constant 0 : i32
    %c0_i32_1 = arith.constant 0 : i32
    return %c0_i32, %c0_i32_0 : i32, i32
  }
  func.func @transform_5(%arg0: i32) -> (i32, i32, i32) {
    %c0_i32 = arith.constant 0 : i32
    %c0_i32_0 = arith.constant 0 : i32
    %c0_i32_1 = arith.constant 0 : i32
    %c0_i32_2 = arith.constant 0 : i32
    return %c0_i32, %c0_i32_0, %c0_i32_1 : i32, i32, i32
  }
  func.func @transform_6(%arg0: i32) -> (i32, i32) {
    %c0_i32 = arith.constant 0 : i32
    %c0_i32_0 = arith.constant 0 : i32
    %c0_i32_1 = arith.constant 0 : i32
    return %c0_i32, %c0_i32_0 : i32, i32
  }
  func.func @transform_7(%arg0: i32) -> (i32, i32) {
    %c0_i32 = arith.constant 0 : i32
    %c0_i32_0 = arith.constant 0 : i32
    %c0_i32_1 = arith.constant 0 : i32
    return %c0_i32, %c0_i32_0 : i32, i32
  }
  func.func @transform_8(%arg0: i32) -> (i32, i32) {
    %c0_i32 = arith.constant 0 : i32
    %c0_i32_0 = arith.constant 0 : i32
    %c0_i32_1 = arith.constant 0 : i32
    return %c0_i32, %c0_i32_0 : i32, i32
  }
  func.func @transform_9(%arg0: i32) -> (i32, i32) {
    %c0_i32 = arith.constant 0 : i32
    %c0_i32_0 = arith.constant 0 : i32
    %c0_i32_1 = arith.constant 0 : i32
    return %c0_i32, %c0_i32_0 : i32, i32
  }
  func.func @transform_10(%arg0: i32) -> (i32, i32) {
    %c0_i32 = arith.constant 0 : i32
    %c0_i32_0 = arith.constant 0 : i32
    %c0_i32_1 = arith.constant 0 : i32
    return %c0_i32, %c0_i32_0 : i32, i32
  }
  func.func @transform_11(%arg0: i32) -> (i32, i32, i32) {
    %c0_i32 = arith.constant 0 : i32
    %c0_i32_0 = arith.constant 0 : i32
    %c0_i32_1 = arith.constant 0 : i32
    return %arg0, %c0_i32, %c0_i32_0 : i32, i32, i32
  }
  func.func @transform_12(%arg0: i32) -> (i32, i32, i32) {
    %c0_i32 = arith.constant 0 : i32
    %c0_i32_0 = arith.constant 0 : i32
    %c0_i32_1 = arith.constant 0 : i32
    return %arg0, %c0_i32, %c0_i32_0 : i32, i32, i32
  }
  func.func @transform_13(%arg0: i32) -> (i32, i32) {
    %c0_i32 = arith.constant 0 : i32
    %c0_i32_0 = arith.constant 0 : i32
    %c0_i32_1 = arith.constant 0 : i32
    return %c0_i32, %c0_i32_0 : i32, i32
  }
  func.func @transform_14(%arg0: i32) -> (i32, i32) {
    %c0_i32 = arith.constant 0 : i32
    %c0_i32_0 = arith.constant 0 : i32
    %c0_i32_1 = arith.constant 0 : i32
    return %c0_i32, %c0_i32_0 : i32, i32
  }
  func.func @transform_15(%arg0: i32) -> (i32, i32, i32) {
    %c0_i32 = arith.constant 0 : i32
    %c0_i32_0 = arith.constant 0 : i32
    %c0_i32_1 = arith.constant 0 : i32
    return %arg0, %c0_i32, %c0_i32_0 : i32, i32, i32
  }
}

</mosaic_0001>

<llo_original>
// kernel: resnet_block_forward.1
$region0: #{resnet_block_forward.1}
  #allocation0 [shape = 'u32[]', space=smem, size = 0x4, offset = 0x4, fixed_abs, tag = 'smem constant byte address 0x4 - core index']
  #allocation1 [shape = 'u32[144,128]{1,0:T(1,128)}', space=vmem, size = 0x12000, scoped, tag = 'internal scratch']
  #allocation2 [shape = 'f32[328,4]{1,0:T(8,128)}', space=vmem, size = 0x29000, scoped, tag = 'scratch operand']
  #allocation3 [shape = 'f32[328,8]{1,0:T(8,128)}', space=vmem, size = 0x29000, scoped, tag = 'scratch operand']
  %s0 = inlined_call_operand.vmem [shape: bf16[2,328,4], index: 0, kind: input, shape index: {}]
  %s1 = inlined_call_operand.vmem [shape: bf16[9,4,8], index: 1, kind: input, shape index: {}]
  %s2 = inlined_call_operand.vmem [shape: f32[1,8], index: 2, kind: input, shape index: {}]
  %s3 = inlined_call_operand.vmem [shape: f32[1,8], index: 3, kind: input, shape index: {}]
  %s4 = inlined_call_operand.vmem [shape: f32[1,8], index: 4, kind: input, shape index: {}]
  %s5 = inlined_call_operand.vmem [shape: bf16[9,8,8], index: 5, kind: input, shape index: {}]
  %s6 = inlined_call_operand.vmem [shape: f32[1,8], index: 6, kind: input, shape index: {}]
  %s7 = inlined_call_operand.vmem [shape: f32[1,8], index: 7, kind: input, shape index: {}]
  %s8 = inlined_call_operand.vmem [shape: f32[1,8], index: 8, kind: input, shape index: {}]
  %s9 = inlined_call_operand.vmem [shape: f32[8,4], index: 9, kind: input, shape index: {}]
  %s10 = inlined_call_operand.vmem [shape: f32[4,8], index: 10, kind: input, shape index: {}]
  %s11 = inlined_call_operand.vmem [shape: f32[2,1,8], index: 11, kind: input, shape index: {}]
  %s12 = inlined_call_operand.vmem [shape: f32[2,1,8], index: 12, kind: input, shape index: {}]
  %s13 = inlined_call_operand.vmem [shape: bf16[4,8], index: 13, kind: input, shape index: {}]
  %s14 = inlined_call_operand.vmem [shape: f32[1,8], index: 14, kind: input, shape index: {}]
  %s15 = inlined_call_operand.vmem [shape: f32[2,288,8], index: 15, kind: output, shape index: {}]
  %s16 = sld [smem:[#allocation0]]
  $region93: #{resnet_block_forward.1} parent=0
    _
  %s18 = ssub.s32 1, %s16
  %s19 = scalar_select 0, %s18, %s16
  loop: start=0, step=1, limit=4
  $region2: #{resnet_block_forward.1} parent=0 // loop_pre_header
    _
  $region3: #{resnet_block_forward.1} parent=0 // loop_header
    %s21 = sphi 0, %s25
    %p22 = scmp.ge.s32.totalorder %s21, 4
    %s31 = sphi 0, %s33
    %s34 = sphi 0, %s31
    %s35 = sphi 0, %s34
    %s51 = sphi 0, %s35
    %s55 = sphi 0, %s55
    %s57 = sphi 0, %s55
    %s58 = sphi 0, %s57
    %s72 = sphi 0, %s58
    %s76 = sphi 0, %s76
    %s78 = sphi 0, %s76
    %s79 = sphi 0, %s78
    %s93 = sphi 0, %s79
    %s97 = sphi 0, %s97
    %s99 = sphi 0, %s97
    %s100 = sphi 0, %s99
    %s114 = sphi 0, %s100
    %s118 = sphi 0, %s118
    %s120 = sphi 0, %s118
    %s121 = sphi 0, %s120
    %s135 = sphi 0, %s121
    %s139 = sphi 0, %s139
    %s141 = sphi 0, %s139
    %s142 = sphi 0, %s141
    %s156 = sphi 0, %s142
    %s160 = sphi 0, %s160
    %s162 = sphi 0, %s160
    %s163 = sphi 0, %s162
    %s177 = sphi 0, %s163
    %s181 = sphi 0, %s181
    %s183 = sphi 0, %s181
    %s184 = sphi 0, %s183
    %s198 = sphi 0, %s184
    %s202 = sphi 0, %s202
    %s204 = sphi 0, %s202
    %s205 = sphi 0, %s204
    %s219 = sphi 0, %s205
    %s223 = sphi 0, %s223
    %s225 = sphi 0, %s223
    %s226 = sphi 0, %s225
    %s240 = sphi 0, %s226
    %s244 = sphi 0, %s244
    %s246 = sphi 0, %s244
    %s247 = sphi 0, %s246
    %s261 = sphi 0, %s247
    %s267 = sphi 0, %s269
    %s270 = sphi 0, %s267
    %s271 = sphi 0, %s270
    %s287 = sphi 0, %s271
    %s293 = sphi 0, %s295
    %s296 = sphi 0, %s293
    %s297 = sphi 0, %s296
    %s313 = sphi 0, %s297
    %s317 = sphi 0, %s317
    %s319 = sphi 0, %s317
    %s320 = sphi 0, %s319
    %s334 = sphi 0, %s320
    %s338 = sphi 0, %s338
    %s340 = sphi 0, %s338
    %s341 = sphi 0, %s340
    %s355 = sphi 0, %s341
    %s361 = sphi 0, %s363
    %s364 = sphi 0, %s361
    %s365 = sphi 0, %s364
    %s381 = sphi 0, %s365
  $region4: #{resnet_block_forward.1} parent=0 // loop_header_branch
    %24 = sbr.rel (%p22) target = $region8
  $region5: #{resnet_block_forward.1} parent=0 // loop_body
    %s26 = ssub.s32 %s21, 1
    %s27 = ssub.s32 %s21, 2
    %s28 = sadd.s32 %s21, 1
    %s29 = ssub.s32 %s21, %s28
    %p30 = scmp.eq.s32.totalorder %s29, 0
    %s32 = sadd.s32 %s31, 1
    %s33 = scalar_select %p30, %s31, %s32
    %p36 = pneg %p30
    %p37 = scmp.eq.s32.totalorder %s21, 1
    %p38 = por %p36, %p37
    %p39 = scmp.ne.s32.totalorder %s31, %s34
    %p40 = scmp.eq.s32.totalorder %s21, 0
    %p41 = por %p39, %p40
    %p42 = scmp.ne.s32.totalorder %s31, %s34
    %p43 = scmp.eq.s32.totalorder %s26, 1
    %p44 = por %p42, %p43
    %p45 = scmp.ne.s32.totalorder %s34, %s35
    %p46 = scmp.eq.s32.totalorder %s26, 0
    %p47 = por %p45, %p46
    %p48 = scmp.ne.s32.totalorder %s34, %s35
    %p49 = scmp.eq.s32.totalorder %s27, 1
    %p50 = por %p48, %p49
    %p52 = scmp.ne.s32.totalorder %s35, %s51
    %p53 = scmp.eq.s32.totalorder %s27, 0
    %p54 = por %p52, %p53
    %s56 = sadd.s32 %s55, 1
    %p59 = scmp.eq.s32.totalorder %s21, 1
    %p60 = scmp.ne.s32.totalorder %s55, %s57
    %p61 = scmp.eq.s32.totalorder %s21, 0
    %p62 = por %p60, %p61
    %p63 = scmp.ne.s32.totalorder %s55, %s57
    %p64 = scmp.eq.s32.totalorder %s26, 1
    %p65 = por %p63, %p64
    %p66 = scmp.ne.s32.totalorder %s57, %s58
    %p67 = scmp.eq.s32.totalorder %s26, 0
    %p68 = por %p66, %p67
    %p69 = scmp.ne.s32.totalorder %s57, %s58
    %p70 = scmp.eq.s32.totalorder %s27, 1
    %p71 = por %p69, %p70
    %p73 = scmp.ne.s32.totalorder %s58, %s72
    %p74 = scmp.eq.s32.totalorder %s27, 0
    %p75 = por %p73, %p74
    %s77 = sadd.s32 %s76, 1
    %p80 = scmp.eq.s32.totalorder %s21, 1
    %p81 = scmp.ne.s32.totalorder %s76, %s78
    %p82 = scmp.eq.s32.totalorder %s21, 0
    %p83 = por %p81, %p82
    %p84 = scmp.ne.s32.totalorder %s76, %s78
    %p85 = scmp.eq.s32.totalorder %s26, 1
    %p86 = por %p84, %p85
    %p87 = scmp.ne.s32.totalorder %s78, %s79
    %p88 = scmp.eq.s32.totalorder %s26, 0
    %p89 = por %p87, %p88
    %p90 = scmp.ne.s32.totalorder %s78, %s79
    %p91 = scmp.eq.s32.totalorder %s27, 1
    %p92 = por %p90, %p91
    %p94 = scmp.ne.s32.totalorder %s79, %s93
    %p95 = scmp.eq.s32.totalorder %s27, 0
    %p96 = por %p94, %p95
    %s98 = sadd.s32 %s97, 1
    %p101 = scmp.eq.s32.totalorder %s21, 1
    %p102 = scmp.ne.s32.totalorder %s97, %s99
    %p103 = scmp.eq.s32.totalorder %s21, 0
    %p104 = por %p102, %p103
    %p105 = scmp.ne.s32.totalorder %s97, %s99
    %p106 = scmp.eq.s32.totalorder %s26, 1
    %p107 = por %p105, %p106
    %p108 = scmp.ne.s32.totalorder %s99, %s100
    %p109 = scmp.eq.s32.totalorder %s26, 0
    %p110 = por %p108, %p109
    %p111 = scmp.ne.s32.totalorder %s99, %s100
    %p112 = scmp.eq.s32.totalorder %s27, 1
    %p113 = por %p111, %p112
    %p115 = scmp.ne.s32.totalorder %s100, %s114
    %p116 = scmp.eq.s32.totalorder %s27, 0
    %p117 = por %p115, %p116
    %s119 = sadd.s32 %s118, 1
    %p122 = scmp.eq.s32.totalorder %s21, 1
    %p123 = scmp.ne.s32.totalorder %s118, %s120
    %p124 = scmp.eq.s32.totalorder %s21, 0
    %p125 = por %p123, %p124
    %p126 = scmp.ne.s32.totalorder %s118, %s120
    %p127 = scmp.eq.s32.totalorder %s26, 1
    %p128 = por %p126, %p127
    %p129 = scmp.ne.s32.totalorder %s120, %s121
    %p130 = scmp.eq.s32.totalorder %s26, 0
    %p131 = por %p129, %p130
    %p132 = scmp.ne.s32.totalorder %s120, %s121
    %p133 = scmp.eq.s32.totalorder %s27, 1
    %p134 = por %p132, %p133
    %p136 = scmp.ne.s32.totalorder %s121, %s135
    %p137 = scmp.eq.s32.totalorder %s27, 0
    %p138 = por %p136, %p137
    %s140 = sadd.s32 %s139, 1
    %p143 = scmp.eq.s32.totalorder %s21, 1
    %p144 = scmp.ne.s32.totalorder %s139, %s141
    %p145 = scmp.eq.s32.totalorder %s21, 0
    %p146 = por %p144, %p145
    %p147 = scmp.ne.s32.totalorder %s139, %s141
    %p148 = scmp.eq.s32.totalorder %s26, 1
    %p149 = por %p147, %p148
    %p150 = scmp.ne.s32.totalorder %s141, %s142
    %p151 = scmp.eq.s32.totalorder %s26, 0
    %p152 = por %p150, %p151
    %p153 = scmp.ne.s32.totalorder %s141, %s142
    %p154 = scmp.eq.s32.totalorder %s27, 1
    %p155 = por %p153, %p154
    %p157 = scmp.ne.s32.totalorder %s142, %s156
    %p158 = scmp.eq.s32.totalorder %s27, 0
    %p159 = por %p157, %p158
    %s161 = sadd.s32 %s160, 1
    %p164 = scmp.eq.s32.totalorder %s21, 1
    %p165 = scmp.ne.s32.totalorder %s160, %s162
    %p166 = scmp.eq.s32.totalorder %s21, 0
    %p167 = por %p165, %p166
    %p168 = scmp.ne.s32.totalorder %s160, %s162
    %p169 = scmp.eq.s32.totalorder %s26, 1
    %p170 = por %p168, %p169
    %p171 = scmp.ne.s32.totalorder %s162, %s163
    %p172 = scmp.eq.s32.totalorder %s26, 0
    %p173 = por %p171, %p172
    %p174 = scmp.ne.s32.totalorder %s162, %s163
    %p175 = scmp.eq.s32.totalorder %s27, 1
    %p176 = por %p174, %p175
    %p178 = scmp.ne.s32.totalorder %s163, %s177
    %p179 = scmp.eq.s32.totalorder %s27, 0
    %p180 = por %p178, %p179
    %s182 = sadd.s32 %s181, 1
    %p185 = scmp.eq.s32.totalorder %s21, 1
    %p186 = scmp.ne.s32.totalorder %s181, %s183
    %p187 = scmp.eq.s32.totalorder %s21, 0
    %p188 = por %p186, %p187
    %p189 = scmp.ne.s32.totalorder %s181, %s183
    %p190 = scmp.eq.s32.totalorder %s26, 1
    %p191 = por %p189, %p190
    %p192 = scmp.ne.s32.totalorder %s183, %s184
    %p193 = scmp.eq.s32.totalorder %s26, 0
    %p194 = por %p192, %p193
    %p195 = scmp.ne.s32.totalorder %s183, %s184
    %p196 = scmp.eq.s32.totalorder %s27, 1
    %p197 = por %p195, %p196
    %p199 = scmp.ne.s32.totalorder %s184, %s198
    %p200 = scmp.eq.s32.totalorder %s27, 0
    %p201 = por %p199, %p200
    %s203 = sadd.s32 %s202, 1
    %p206 = scmp.eq.s32.totalorder %s21, 1
    %p207 = scmp.ne.s32.totalorder %s202, %s204
    %p208 = scmp.eq.s32.totalorder %s21, 0
    %p209 = por %p207, %p208
    %p210 = scmp.ne.s32.totalorder %s202, %s204
    %p211 = scmp.eq.s32.totalorder %s26, 1
    %p212 = por %p210, %p211
    %p213 = scmp.ne.s32.totalorder %s204, %s205
    %p214 = scmp.eq.s32.totalorder %s26, 0
    %p215 = por %p213, %p214
    %p216 = scmp.ne.s32.totalorder %s204, %s205
    %p217 = scmp.eq.s32.totalorder %s27, 1
    %p218 = por %p216, %p217
    %p220 = scmp.ne.s32.totalorder %s205, %s219
    %p221 = scmp.eq.s32.totalorder %s27, 0
    %p222 = por %p220, %p221
    %s224 = sadd.s32 %s223, 1
    %p227 = scmp.eq.s32.totalorder %s21, 1
    %p228 = scmp.ne.s32.totalorder %s223, %s225
    %p229 = scmp.eq.s32.totalorder %s21, 0
    %p230 = por %p228, %p229
    %p231 = scmp.ne.s32.totalorder %s223, %s225
    %p232 = scmp.eq.s32.totalorder %s26, 1
    %p233 = por %p231, %p232
    %p234 = scmp.ne.s32.totalorder %s225, %s226
    %p235 = scmp.eq.s32.totalorder %s26, 0
    %p236 = por %p234, %p235
    %p237 = scmp.ne.s32.totalorder %s225, %s226
    %p238 = scmp.eq.s32.totalorder %s27, 1
    %p239 = por %p237, %p238
    %p241 = scmp.ne.s32.totalorder %s226, %s240
    %p242 = scmp.eq.s32.totalorder %s27, 0
    %p243 = por %p241, %p242
    %s245 = sadd.s32 %s244, 1
    %p248 = scmp.eq.s32.totalorder %s21, 1
    %p249 = scmp.ne.s32.totalorder %s244, %s246
    %p250 = scmp.eq.s32.totalorder %s21, 0
    %p251 = por %p249, %p250
    %p252 = scmp.ne.s32.totalorder %s244, %s246
    %p253 = scmp.eq.s32.totalorder %s26, 1
    %p254 = por %p252, %p253
    %p255 = scmp.ne.s32.totalorder %s246, %s247
    %p256 = scmp.eq.s32.totalorder %s26, 0
    %p257 = por %p255, %p256
    %p258 = scmp.ne.s32.totalorder %s246, %s247
    %p259 = scmp.eq.s32.totalorder %s27, 1
    %p260 = por %p258, %p259
    %p262 = scmp.ne.s32.totalorder %s247, %s261
    %p263 = scmp.eq.s32.totalorder %s27, 0
    %p264 = por %p262, %p263
    %s265 = ssub.s32 %s21, %s28
    %p266 = scmp.eq.s32.totalorder %s265, 0
    %s268 = sadd.s32 %s267, 1
    %s269 = scalar_select %p266, %s267, %s268
    %p272 = pneg %p266
    %p273 = scmp.eq.s32.totalorder %s21, 1
    %p274 = por %p272, %p273
    %p275 = scmp.ne.s32.totalorder %s267, %s270
    %p276 = scmp.eq.s32.totalorder %s21, 0
    %p277 = por %p275, %p276
    %p278 = scmp.ne.s32.totalorder %s267, %s270
    %p279 = scmp.eq.s32.totalorder %s26, 1
    %p280 = por %p278, %p279
    %p281 = scmp.ne.s32.totalorder %s270, %s271
    %p282 = scmp.eq.s32.totalorder %s26, 0
    %p283 = por %p281, %p282
    %p284 = scmp.ne.s32.totalorder %s270, %s271
    %p285 = scmp.eq.s32.totalorder %s27, 1
    %p286 = por %p284, %p285
    %p288 = scmp.ne.s32.totalorder %s271, %s287
    %p289 = scmp.eq.s32.totalorder %s27, 0
    %p290 = por %p288, %p289
    %s291 = ssub.s32 %s21, %s28
    %p292 = scmp.eq.s32.totalorder %s291, 0
    %s294 = sadd.s32 %s293, 1
    %s295 = scalar_select %p292, %s293, %s294
    %p298 = pneg %p292
    %p299 = scmp.eq.s32.totalorder %s21, 1
    %p300 = por %p298, %p299
    %p301 = scmp.ne.s32.totalorder %s293, %s296
    %p302 = scmp.eq.s32.totalorder %s21, 0
    %p303 = por %p301, %p302
    %p304 = scmp.ne.s32.totalorder %s293, %s296
    %p305 = scmp.eq.s32.totalorder %s26, 1
    %p306 = por %p304, %p305
    %p307 = scmp.ne.s32.totalorder %s296, %s297
    %p308 = scmp.eq.s32.totalorder %s26, 0
    %p309 = por %p307, %p308
    %p310 = scmp.ne.s32.totalorder %s296, %s297
    %p311 = scmp.eq.s32.totalorder %s27, 1
    %p312 = por %p310, %p311
    %p314 = scmp.ne.s32.totalorder %s297, %s313
    %p315 = scmp.eq.s32.totalorder %s27, 0
    %p316 = por %p314, %p315
    %s318 = sadd.s32 %s317, 1
    %p321 = scmp.eq.s32.totalorder %s21, 1
    %p322 = scmp.ne.s32.totalorder %s317, %s319
    %p323 = scmp.eq.s32.totalorder %s21, 0
    %p324 = por %p322, %p323
    %p325 = scmp.ne.s32.totalorder %s317, %s319
    %p326 = scmp.eq.s32.totalorder %s26, 1
    %p327 = por %p325, %p326
    %p328 = scmp.ne.s32.totalorder %s319, %s320
    %p329 = scmp.eq.s32.totalorder %s26, 0
    %p330 = por %p328, %p329
    %p331 = scmp.ne.s32.totalorder %s319, %s320
    %p332 = scmp.eq.s32.totalorder %s27, 1
    %p333 = por %p331, %p332
    %p335 = scmp.ne.s32.totalorder %s320, %s334
    %p336 = scmp.eq.s32.totalorder %s27, 0
    %p337 = por %p335, %p336
    %s339 = sadd.s32 %s338, 1
    %p342 = scmp.eq.s32.totalorder %s21, 1
    %p343 = scmp.ne.s32.totalorder %s338, %s340
    %p344 = scmp.eq.s32.totalorder %s21, 0
    %p345 = por %p343, %p344
    %p346 = scmp.ne.s32.totalorder %s338, %s340
    %p347 = scmp.eq.s32.totalorder %s26, 1
    %p348 = por %p346, %p347
    %p349 = scmp.ne.s32.totalorder %s340, %s341
    %p350 = scmp.eq.s32.totalorder %s26, 0
    %p351 = por %p349, %p350
    %p352 = scmp.ne.s32.totalorder %s340, %s341
    %p353 = scmp.eq.s32.totalorder %s27, 1
    %p354 = por %p352, %p353
    %p356 = scmp.ne.s32.totalorder %s341, %s355
    %p357 = scmp.eq.s32.totalorder %s27, 0
    %p358 = por %p356, %p357
    %s359 = ssub.s32 %s21, %s28
    %p360 = scmp.eq.s32.totalorder %s359, 0
    %s362 = sadd.s32 %s361, 1
    %s363 = scalar_select %p360, %s361, %s362
    %p366 = pneg %p360
    %p367 = scmp.eq.s32.totalorder %s21, 1
    %p368 = por %p366, %p367
    %p369 = scmp.ne.s32.totalorder %s361, %s364
    %p370 = scmp.eq.s32.totalorder %s21, 0
    %p371 = por %p369, %p370
    %p372 = scmp.ne.s32.totalorder %s361, %s364
    %p373 = scmp.eq.s32.totalorder %s26, 1
    %p374 = por %p372, %p373
    %p375 = scmp.ne.s32.totalorder %s364, %s365
    %p376 = scmp.eq.s32.totalorder %s26, 0
    %p377 = por %p375, %p376
    %p378 = scmp.ne.s32.totalorder %s364, %s365
    %p379 = scmp.eq.s32.totalorder %s27, 1
    %p380 = por %p378, %p379
    %p382 = scmp.ne.s32.totalorder %s365, %s381
    %p383 = scmp.eq.s32.totalorder %s27, 0
    %p384 = por %p382, %p383
    %p385 = scmp.le.s32.totalorder 1, %s21
    %p386 = scmp.lt.s32.totalorder %s21, 3
    %p387 = pnand %p385, %p386
    %p388 = pneg %p387
    // Predicated region
    $region9: #{resnet_block_forward.1} parent=5 // pred_check
      _
    $region10: #{resnet_block_forward.1} parent=5 // pred_check_branch
      %390 = sbr.rel (%p387) target = $region12
    $region11: #{resnet_block_forward.1} parent=5 // pred_region
      %s391 = ssub.s32 %s21, 1
      // Predicated region
      $region13: #{resnet_block_forward.1} parent=11 // pred_check
        %p392 = pneg %p68
      $region14: #{resnet_block_forward.1} parent=11 // pred_check_branch
        %394 = sbr.rel (%p392) target = $region16
      $region15: #{resnet_block_forward.1} parent=11 // pred_region
        _
      $region16: #{resnet_block_forward.1} parent=11 // pred_fallthru
        _
      // Predicated region
      $region17: #{resnet_block_forward.1} parent=11 // pred_check
        %p395 = pneg %p89
      $region18: #{resnet_block_forward.1} parent=11 // pred_check_branch
        %397 = sbr.rel (%p395) target = $region20
      $region19: #{resnet_block_forward.1} parent=11 // pred_region
        _
      $region20: #{resnet_block_forward.1} parent=11 // pred_fallthru
        _
      // Predicated region
      $region21: #{resnet_block_forward.1} parent=11 // pred_check
        %p398 = pneg %p110
      $region22: #{resnet_block_forward.1} parent=11 // pred_check_branch
        %400 = sbr.rel (%p398) target = $region24
      $region23: #{resnet_block_forward.1} parent=11 // pred_region
        _
      $region24: #{resnet_block_forward.1} parent=11 // pred_fallthru
        _
      // Predicated region
      $region25: #{resnet_block_forward.1} parent=11 // pred_check
        %p401 = pneg %p131
      $region26: #{resnet_block_forward.1} parent=11 // pred_check_branch
        %403 = sbr.rel (%p401) target = $region28
      $region27: #{resnet_block_forward.1} parent=11 // pred_region
        _
      $region28: #{resnet_block_forward.1} parent=11 // pred_fallthru
        _
      // Predicated region
      $region29: #{resnet_block_forward.1} parent=11 // pred_check
        %p404 = pneg %p152
      $region30: #{resnet_block_forward.1} parent=11 // pred_check_branch
        %406 = sbr.rel (%p404) target = $region32
      $region31: #{resnet_block_forward.1} parent=11 // pred_region
        _
      $region32: #{resnet_block_forward.1} parent=11 // pred_fallthru
        _
      // Predicated region
      $region33: #{resnet_block_forward.1} parent=11 // pred_check
        %p407 = pneg %p173
      $region34: #{resnet_block_forward.1} parent=11 // pred_check_branch
        %409 = sbr.rel (%p407) target = $region36
      $region35: #{resnet_block_forward.1} parent=11 // pred_region
        _
      $region36: #{resnet_block_forward.1} parent=11 // pred_fallthru
        _
      // Predicated region
      $region37: #{resnet_block_forward.1} parent=11 // pred_check
        %p410 = pneg %p194
      $region38: #{resnet_block_forward.1} parent=11 // pred_check_branch
        %412 = sbr.rel (%p410) target = $region40
      $region39: #{resnet_block_forward.1} parent=11 // pred_region
        _
      $region40: #{resnet_block_forward.1} parent=11 // pred_fallthru
        _
      // Predicated region
      $region41: #{resnet_block_forward.1} parent=11 // pred_check
        %p413 = pneg %p215
      $region42: #{resnet_block_forward.1} parent=11 // pred_check_branch
        %415 = sbr.rel (%p413) target = $region44
      $region43: #{resnet_block_forward.1} parent=11 // pred_region
        _
      $region44: #{resnet_block_forward.1} parent=11 // pred_fallthru
        _
      // Predicated region
      $region45: #{resnet_block_forward.1} parent=11 // pred_check
        %p416 = pneg %p236
      $region46: #{resnet_block_forward.1} parent=11 // pred_check_branch
        %418 = sbr.rel (%p416) target = $region48
      $region47: #{resnet_block_forward.1} parent=11 // pred_region
        _
      $region48: #{resnet_block_forward.1} parent=11 // pred_fallthru
        _
      // Predicated region
      $region49: #{resnet_block_forward.1} parent=11 // pred_check
        %p419 = pneg %p257
      $region50: #{resnet_block_forward.1} parent=11 // pred_check_branch
        %421 = sbr.rel (%p419) target = $region52
      $region51: #{resnet_block_forward.1} parent=11 // pred_region
        _
      $region52: #{resnet_block_forward.1} parent=11 // pred_fallthru
        _
      // Predicated region
      $region53: #{resnet_block_forward.1} parent=11 // pred_check
        %p422 = pneg %p330
      $region54: #{resnet_block_forward.1} parent=11 // pred_check_branch
        %424 = sbr.rel (%p422) target = $region56
      $region55: #{resnet_block_forward.1} parent=11 // pred_region
        _
      $region56: #{resnet_block_forward.1} parent=11 // pred_fallthru
        _
      // Predicated region
      $region57: #{resnet_block_forward.1} parent=11 // pred_check
        %p425 = pneg %p351
      $region58: #{resnet_block_forward.1} parent=11 // pred_check_branch
        %427 = sbr.rel (%p425) target = $region60
      $region59: #{resnet_block_forward.1} parent=11 // pred_region
        _
      $region60: #{resnet_block_forward.1} parent=11 // pred_fallthru
        _
    $region12: #{resnet_block_forward.1} parent=5 // pred_fallthru
      _
    %p428 = scmp.lt.s32.totalorder %s21, 2
    // Predicated region
    $region61: #{resnet_block_forward.1} parent=5 // pred_check
      %p429 = pneg %p428
    $region62: #{resnet_block_forward.1} parent=5 // pred_check_branch
      %431 = sbr.rel (%p429) target = $region64
    $region63: #{resnet_block_forward.1} parent=5 // pred_region
      // Predicated region
      $region65: #{resnet_block_forward.1} parent=63 // pred_check
        %p432 = pneg %p41
      $region66: #{resnet_block_forward.1} parent=63 // pred_check_branch
        %434 = sbr.rel (%p432) target = $region68
      $region67: #{resnet_block_forward.1} parent=63 // pred_region
        %p435 = scmp.lt.s32.totalorder %s21, 1
        %s436 = scalar_select %p435, %s21, 1
        %s437 = smul.addr %s436, 41
        %s438 = smul.addr %s437, 4
        %s439 = scalar_lea.vmem %s0, %s438
      $region68: #{resnet_block_forward.1} parent=63 // pred_fallthru
        _
      // Predicated region
      $region69: #{resnet_block_forward.1} parent=63 // pred_check
        %p440 = pneg %p277
      $region70: #{resnet_block_forward.1} parent=63 // pred_check_branch
        %442 = sbr.rel (%p440) target = $region72
      $region71: #{resnet_block_forward.1} parent=63 // pred_region
        %p443 = scmp.lt.s32.totalorder %s21, 1
        %s444 = scalar_select %p443, %s21, 1
        %s445 = scalar_lea.vmem %s11, %s444
      $region72: #{resnet_block_forward.1} parent=63 // pred_fallthru
        _
      // Predicated region
      $region73: #{resnet_block_forward.1} parent=63 // pred_check
        %p446 = pneg %p303
      $region74: #{resnet_block_forward.1} parent=63 // pred_check_branch
        %448 = sbr.rel (%p446) target = $region76
      $region75: #{resnet_block_forward.1} parent=63 // pred_region
        %p449 = scmp.lt.s32.totalorder %s21, 1
        %s450 = scalar_select %p449, %s21, 1
        %s451 = scalar_lea.vmem %s12, %s450
      $region76: #{resnet_block_forward.1} parent=63 // pred_fallthru
        _
    $region64: #{resnet_block_forward.1} parent=5 // pred_fallthru
      _
    %p452 = scmp.le.s32.totalorder 1, %s21
    %p453 = scmp.lt.s32.totalorder %s21, 3
    %p454 = pnand %p452, %p453
    %p455 = pneg %p454
    // Predicated region
    $region77: #{resnet_block_forward.1} parent=5 // pred_check
      _
    $region78: #{resnet_block_forward.1} parent=5 // pred_check_branch
      %457 = sbr.rel (%p454) target = $region80
    $region79: #{resnet_block_forward.1} parent=5 // pred_region
      %s458 = ssub.s32 %s21, 1
      %p459 = scmp.lt.s32.totalorder %s26, 1
      %s460 = scalar_select %p459, %s26, 1
      %s461 = smul.addr %s460, 41
      %s462 = smul.addr %s461, 4
      %s463 = scalar_lea.vmem %s0, %s462
      %p464 = pneg %p47
      %p465 = pneg %p44
      %p466 = pneg %p68
      %p467 = pneg %p65
      %p468 = pneg %p89
      %p469 = pneg %p86
      %p470 = pneg %p110
      %p471 = pneg %p107
      %p472 = pneg %p131
      %p473 = pneg %p128
      %p474 = pneg %p152
      %p475 = pneg %p149
      %p476 = pneg %p173
      %p477 = pneg %p170
      %p478 = pneg %p194
      %p479 = pneg %p191
      %p480 = pneg %p215
      %p481 = pneg %p212
      %p482 = pneg %p236
      %p483 = pneg %p233
      %p484 = pneg %p257
      %p485 = pneg %p254
      %p486 = scmp.lt.s32.totalorder %s26, 1
      %s487 = scalar_select %p486, %s26, 1
      %s488 = scalar_lea.vmem %s11, %s487
      %p489 = pneg %p283
      %p490 = pneg %p280
      %p491 = scmp.lt.s32.totalorder %s26, 1
      %s492 = scalar_select %p491, %s26, 1
      %s493 = scalar_lea.vmem %s12, %s492
      %p494 = pneg %p309
      %p495 = pneg %p306
      %p496 = pneg %p330
      %p497 = pneg %p327
      %p498 = pneg %p351
      %p499 = pneg %p348
      %p500 = pneg %p377
      %p501 = pneg %p374
      %p502 = scmp.lt.s32.totalorder %s26, 1
      %s503 = scalar_select %p502, %s26, 1
      %s504 = smul.addr %s503, 36
      %s505 = smul.addr %s504, 8
      %s506 = scalar_lea.vmem %s15, %s505
      %p507 = scmp.lt.s32.totalorder %s26, 1
      %s508 = scalar_select %p507, %s26, 1
      %s509 = smul.addr %s508, 41
      %s510 = smul.addr %s509, 4
      %s511 = scalar_lea.vmem %s0, %s510
      %p512 = scmp.lt.s32.totalorder %s26, 1
      %s513 = scalar_select %p512, %s26, 1
      %s514 = scalar_lea.vmem %s11, %s513
      %p515 = scmp.lt.s32.totalorder %s26, 1
      %s516 = scalar_select %p515, %s26, 1
      %s517 = scalar_lea.vmem %s12, %s516
      %p518 = scmp.lt.s32.totalorder %s26, 1
      %s519 = scalar_select %p518, %s26, 1
      %s520 = smul.addr %s519, 36
      %s521 = smul.addr %s520, 8
      %s522 = scalar_lea.vmem %s15, %s521
      %v524 = vld [vmem:[%s511] sm:$0xf]
      %v525 = vld [vmem:[%s511 + $0x4] sm:$0xf]
      %v526 = vld [vmem:[%s511 + $0x8] sm:$0xf]
      %v527 = vld [vmem:[%s511 + $0xc] sm:$0xf]
      %v528 = vld [vmem:[%s511 + $0x10] sm:$0xf]
      %v529 = vld [vmem:[%s511 + $0x14] sm:$0xf]
      %v530 = vld [vmem:[%s511 + $0x18] sm:$0xf]
      %v531 = vld [vmem:[%s511 + $0x1c] sm:$0xf]
      %v532 = vld [vmem:[%s511 + $0x20] sm:$0xf]
      %v533 = vld [vmem:[%s511 + $0x24] sm:$0xf]
      %v534 = vld [vmem:[%s511 + $0x28] sm:$0xf]
      %v535 = vld [vmem:[%s511 + $0x2c] sm:$0xf]
      %v536 = vld [vmem:[%s511 + $0x30] sm:$0xf]
      %v537 = vld [vmem:[%s511 + $0x34] sm:$0xf]
      %v538 = vld [vmem:[%s511 + $0x38] sm:$0xf]
      %v539 = vld [vmem:[%s511 + $0x3c] sm:$0xf]
      %v540 = vld [vmem:[%s511 + $0x40] sm:$0xf]
      %v541 = vld [vmem:[%s511 + $0x44] sm:$0xf]
      %v542 = vld [vmem:[%s511 + $0x48] sm:$0xf]
      %v543 = vld [vmem:[%s511 + $0x4c] sm:$0xf]
      %v544 = vld [vmem:[%s511 + $0x50] sm:$0xf]
      %v545 = vld [vmem:[%s511 + $0x54] sm:$0xf]
      %v546 = vld [vmem:[%s511 + $0x58] sm:$0xf]
      %v547 = vld [vmem:[%s511 + $0x5c] sm:$0xf]
      %v548 = vld [vmem:[%s511 + $0x60] sm:$0xf]
      %v549 = vld [vmem:[%s511 + $0x64] sm:$0xf]
      %v550 = vld [vmem:[%s511 + $0x68] sm:$0xf]
      %v551 = vld [vmem:[%s511 + $0x6c] sm:$0xf]
      %v552 = vld [vmem:[%s511 + $0x70] sm:$0xf]
      %v553 = vld [vmem:[%s511 + $0x74] sm:$0xf]
      %v554 = vld [vmem:[%s511 + $0x78] sm:$0xf]
      %v555 = vld [vmem:[%s511 + $0x7c] sm:$0xf]
      %v556 = vld [vmem:[%s511 + $0x80] sm:$0xf]
      %v557 = vld [vmem:[%s511 + $0x84] sm:$0xf]
      %v558 = vld [vmem:[%s511 + $0x88] sm:$0xf]
      %v559 = vld [vmem:[%s511 + $0x8c] sm:$0xf]
      %v560 = vld [vmem:[%s511 + $0x90] sm:$0xf]
      %v561 = vld [vmem:[%s511 + $0x94] sm:$0xf]
      %v562 = vld [vmem:[%s511 + $0x98] sm:$0xf]
      %v563 = vld [vmem:[%s511 + $0x9c] sm:$0xf]
      %v564 = vld [vmem:[%s511 + $0xa0] sm:$0xf]
      %v565 = vunpack.c.l.bf16 %v524
      %v566 = vunpack.c.l.bf16 %v525
      %v567 = vunpack.c.l.bf16 %v526
      %v568 = vunpack.c.l.bf16 %v527
      %v569 = vunpack.c.l.bf16 %v528
      %v570 = vunpack.c.l.bf16 %v529
      %v571 = vunpack.c.l.bf16 %v530
      %v572 = vunpack.c.l.bf16 %v531
      %v573 = vunpack.c.l.bf16 %v532
      %v574 = vunpack.c.l.bf16 %v533
      %v575 = vunpack.c.l.bf16 %v534
      %v576 = vunpack.c.l.bf16 %v535
      %v577 = vunpack.c.l.bf16 %v536
      %v578 = vunpack.c.l.bf16 %v537
      %v579 = vunpack.c.l.bf16 %v538
      %v580 = vunpack.c.l.bf16 %v539
      %v581 = vunpack.c.l.bf16 %v540
      %v582 = vunpack.c.l.bf16 %v541
      %v583 = vunpack.c.l.bf16 %v542
      %v584 = vunpack.c.l.bf16 %v543
      %v585 = vunpack.c.l.bf16 %v544
      %v586 = vunpack.c.l.bf16 %v545
      %v587 = vunpack.c.l.bf16 %v546
      %v588 = vunpack.c.l.bf16 %v547
      %v589 = vunpack.c.l.bf16 %v548
      %v590 = vunpack.c.l.bf16 %v549
      %v591 = vunpack.c.l.bf16 %v550
      %v592 = vunpack.c.l.bf16 %v551
      %v593 = vunpack.c.l.bf16 %v552
      %v594 = vunpack.c.l.bf16 %v553
      %v595 = vunpack.c.l.bf16 %v554
      %v596 = vunpack.c.l.bf16 %v555
      %v597 = vunpack.c.l.bf16 %v556
      %v598 = vunpack.c.l.bf16 %v557
      %v599 = vunpack.c.l.bf16 %v558
      %v600 = vunpack.c.l.bf16 %v559
      %v601 = vunpack.c.l.bf16 %v560
      %v602 = vunpack.c.l.bf16 %v561
      %v603 = vunpack.c.l.bf16 %v562
      %v604 = vunpack.c.l.bf16 %v563
      %v605 = vunpack.c.l.bf16 %v564
      %vm606 = vcmask 31744
      %607 = vst.msk [vmem:[#allocation2] sm:$0xff] %vm606, %v565
      %608 = vst.msk [vmem:[#allocation2 + $0x8] sm:$0xff] %vm606, %v566
      %609 = vst.msk [vmem:[#allocation2 + $0x10] sm:$0xff] %vm606, %v567
      %610 = vst.msk [vmem:[#allocation2 + $0x18] sm:$0xff] %vm606, %v568
      %611 = vst.msk [vmem:[#allocation2 + $0x20] sm:$0xff] %vm606, %v569
      %612 = vst.msk [vmem:[#allocation2 + $0x28] sm:$0xff] %vm606, %v570
      %613 = vst.msk [vmem:[#allocation2 + $0x30] sm:$0xff] %vm606, %v571
      %614 = vst.msk [vmem:[#allocation2 + $0x38] sm:$0xff] %vm606, %v572
      %615 = vst.msk [vmem:[#allocation2 + $0x40] sm:$0xff] %vm606, %v573
      %616 = vst.msk [vmem:[#allocation2 + $0x48] sm:$0xff] %vm606, %v574
      %617 = vst.msk [vmem:[#allocation2 + $0x50] sm:$0xff] %vm606, %v575
      %618 = vst.msk [vmem:[#allocation2 + $0x58] sm:$0xff] %vm606, %v576
      %619 = vst.msk [vmem:[#allocation2 + $0x60] sm:$0xff] %vm606, %v577
      %620 = vst.msk [vmem:[#allocation2 + $0x68] sm:$0xff] %vm606, %v578
      %621 = vst.msk [vmem:[#allocation2 + $0x70] sm:$0xff] %vm606, %v579
      %622 = vst.msk [vmem:[#allocation2 + $0x78] sm:$0xff] %vm606, %v580
      %623 = vst.msk [vmem:[#allocation2 + $0x80] sm:$0xff] %vm606, %v581
      %624 = vst.msk [vmem:[#allocation2 + $0x88] sm:$0xff] %vm606, %v582
      %625 = vst.msk [vmem:[#allocation2 + $0x90] sm:$0xff] %vm606, %v583
      %626 = vst.msk [vmem:[#allocation2 + $0x98] sm:$0xff] %vm606, %v584
      %627 = vst.msk [vmem:[#allocation2 + $0xa0] sm:$0xff] %vm606, %v585
      %628 = vst.msk [vmem:[#allocation2 + $0xa8] sm:$0xff] %vm606, %v586
      %629 = vst.msk [vmem:[#allocation2 + $0xb0] sm:$0xff] %vm606, %v587
      %630 = vst.msk [vmem:[#allocation2 + $0xb8] sm:$0xff] %vm606, %v588
      %631 = vst.msk [vmem:[#allocation2 + $0xc0] sm:$0xff] %vm606, %v589
      %632 = vst.msk [vmem:[#allocation2 + $0xc8] sm:$0xff] %vm606, %v590
      %633 = vst.msk [vmem:[#allocation2 + $0xd0] sm:$0xff] %vm606, %v591
      %634 = vst.msk [vmem:[#allocation2 + $0xd8] sm:$0xff] %vm606, %v592
      %635 = vst.msk [vmem:[#allocation2 + $0xe0] sm:$0xff] %vm606, %v593
      %636 = vst.msk [vmem:[#allocation2 + $0xe8] sm:$0xff] %vm606, %v594
      %637 = vst.msk [vmem:[#allocation2 + $0xf0] sm:$0xff] %vm606, %v595
      %638 = vst.msk [vmem:[#allocation2 + $0xf8] sm:$0xff] %vm606, %v596
      %639 = vst.msk [vmem:[#allocation2 + $0x100] sm:$0xff] %vm606, %v597
      %640 = vst.msk [vmem:[#allocation2 + $0x108] sm:$0xff] %vm606, %v598
      %641 = vst.msk [vmem:[#allocation2 + $0x110] sm:$0xff] %vm606, %v599
      %642 = vst.msk [vmem:[#allocation2 + $0x118] sm:$0xff] %vm606, %v600
      %643 = vst.msk [vmem:[#allocation2 + $0x120] sm:$0xff] %vm606, %v601
      %644 = vst.msk [vmem:[#allocation2 + $0x128] sm:$0xff] %vm606, %v602
      %645 = vst.msk [vmem:[#allocation2 + $0x130] sm:$0xff] %vm606, %v603
      %646 = vst.msk [vmem:[#allocation2 + $0x138] sm:$0xff] %vm606, %v604
      %647 = vst.msk [vmem:[#allocation2 + $0x140] sm:$0xff] %vm606, %v605
      %v648 = vlaneseq
      %v649 = vand.u32 %v648, 127
      %v650 = vadd.s32 %v649, 128
      %v651 = vadd.s32 %v649, 256
      %v652 = vcvt.s32.f32 %v649
      %v653 = vcvt.s32.f32 %v650
      %v654 = vcvt.s32.f32 %v651
      %v655 = vadd.f32 %v652, 0.5
      %v656 = vadd.f32 %v653, 0.5
      %v657 = vadd.f32 %v654, 0.5
      %v658 = vmul.f32 %v655, 0.055555556
      %v659 = vmul.f32 %v656, 0.055555556
      %v660 = vmul.f32 %v657, 0.055555556
      %v661 = vfloor.f32 %v658
      %v662 = vfloor.f32 %v659
      %v663 = vfloor.f32 %v660
      %v664 = vmul.f32 %v661, 18.0
      %v665 = vmul.f32 %v662, 18.0
      %v666 = vmul.f32 %v663, 18.0
      %v667 = vsub.f32 %v652, %v664
      %v668 = vsub.f32 %v653, %v665
      %v669 = vsub.f32 %v654, %v666
      %vm670 = vcmp.lt.f32.partialorder %v667, 15.5
      %vm671 = vcmp.lt.f32.partialorder %v668, 15.5
      %vm672 = vcmp.lt.f32.partialorder %v669, 15.5
      %v673 = vsel %vm670, 1, 0
      %v674 = vsel %vm671, 1, 0
      %v675 = vsel %vm672, 1, 0
      %v676 = vcvt.s32.f32 %v673
      %v677 = vcvt.s32.f32 %v674
      %v678 = vcvt.s32.f32 %v675
      %v679 = vlaneseq
      %v680 = vshrl.u32 %v679, 7
      %v681 = vadd.s32 %v680, 8
      %v682 = vadd.s32 %v680, 16
      %v683 = vadd.s32 %v680, 24
      %v684 = vadd.s32 %v680, 32
      %v685 = vadd.s32 %v680, 40
      %v686 = vadd.s32 %v680, 48
      %v687 = vadd.s32 %v680, 56
      %v688 = vadd.s32 %v680, 64
      %v689 = vadd.s32 %v680, 72
      %v690 = vadd.s32 %v680, 80
      %v691 = vadd.s32 %v680, 88
      %v692 = vadd.s32 %v680, 96
      %v693 = vadd.s32 %v680, 104
      %v694 = vadd.s32 %v680, 112
      %v695 = vadd.s32 %v680, 120
      %v696 = vadd.s32 %v680, 128
      %v697 = vadd.s32 %v680, 136
      %v698 = vadd.s32 %v680, 144
      %v699 = vadd.s32 %v680, 152
      %v700 = vadd.s32 %v680, 160
      %v701 = vadd.s32 %v680, 168
      %v702 = vadd.s32 %v680, 176
      %v703 = vadd.s32 %v680, 184
      %v704 = vadd.s32 %v680, 192
      %v705 = vadd.s32 %v680, 200
      %v706 = vadd.s32 %v680, 208
      %v707 = vadd.s32 %v680, 216
      %v708 = vadd.s32 %v680, 224
      %v709 = vadd.s32 %v680, 232
      %v710 = vadd.s32 %v680, 240
      %v711 = vadd.s32 %v680, 248
      %v712 = vadd.s32 %v680, 256
      %v713 = vadd.s32 %v680, 264
      %v714 = vadd.s32 %v680, 272
      %v715 = vadd.s32 %v680, 280
      %v716 = vcvt.s32.f32 %v680
      %v717 = vcvt.s32.f32 %v681
      %v718 = vcvt.s32.f32 %v682
      %v719 = vcvt.s32.f32 %v683
      %v720 = vcvt.s32.f32 %v684
      %v721 = vcvt.s32.f32 %v685
      %v722 = vcvt.s32.f32 %v686
      %v723 = vcvt.s32.f32 %v687
      %v724 = vcvt.s32.f32 %v688
      %v725 = vcvt.s32.f32 %v689
      %v726 = vcvt.s32.f32 %v690
      %v727 = vcvt.s32.f32 %v691
      %v728 = vcvt.s32.f32 %v692
      %v729 = vcvt.s32.f32 %v693
      %v730 = vcvt.s32.f32 %v694
      %v731 = vcvt.s32.f32 %v695
      %v732 = vcvt.s32.f32 %v696
      %v733 = vcvt.s32.f32 %v697
      %v734 = vcvt.s32.f32 %v698
      %v735 = vcvt.s32.f32 %v699
      %v736 = vcvt.s32.f32 %v700
      %v737 = vcvt.s32.f32 %v701
      %v738 = vcvt.s32.f32 %v702
      %v739 = vcvt.s32.f32 %v703
      %v740 = vcvt.s32.f32 %v704
      %v741 = vcvt.s32.f32 %v705
      %v742 = vcvt.s32.f32 %v706
      %v743 = vcvt.s32.f32 %v707
      %v744 = vcvt.s32.f32 %v708
      %v745 = vcvt.s32.f32 %v709
      %v746 = vcvt.s32.f32 %v710
      %v747 = vcvt.s32.f32 %v711
      %v748 = vcvt.s32.f32 %v712
      %v749 = vcvt.s32.f32 %v713
      %v750 = vcvt.s32.f32 %v714
      %v751 = vcvt.s32.f32 %v715
      %v752 = vadd.f32 %v716, 0.5
      %v753 = vadd.f32 %v717, 0.5
      %v754 = vadd.f32 %v718, 0.5
      %v755 = vadd.f32 %v719, 0.5
      %v756 = vadd.f32 %v720, 0.5
      %v757 = vadd.f32 %v721, 0.5
      %v758 = vadd.f32 %v722, 0.5
      %v759 = vadd.f32 %v723, 0.5
      %v760 = vadd.f32 %v724, 0.5
      %v761 = vadd.f32 %v725, 0.5
      %v762 = vadd.f32 %v726, 0.5
      %v763 = vadd.f32 %v727, 0.5
      %v764 = vadd.f32 %v728, 0.5
      %v765 = vadd.f32 %v729, 0.5
      %v766 = vadd.f32 %v730, 0.5
      %v767 = vadd.f32 %v731, 0.5
      %v768 = vadd.f32 %v732, 0.5
      %v769 = vadd.f32 %v733, 0.5
      %v770 = vadd.f32 %v734, 0.5
      %v771 = vadd.f32 %v735, 0.5
      %v772 = vadd.f32 %v736, 0.5
      %v773 = vadd.f32 %v737, 0.5
      %v774 = vadd.f32 %v738, 0.5
      %v775 = vadd.f32 %v739, 0.5
      %v776 = vadd.f32 %v740, 0.5
      %v777 = vadd.f32 %v741, 0.5
      %v778 = vadd.f32 %v742, 0.5
      %v779 = vadd.f32 %v743, 0.5
      %v780 = vadd.f32 %v744, 0.5
      %v781 = vadd.f32 %v745, 0.5
      %v782 = vadd.f32 %v746, 0.5
      %v783 = vadd.f32 %v747, 0.5
      %v784 = vadd.f32 %v748, 0.5
      %v785 = vadd.f32 %v749, 0.5
      %v786 = vadd.f32 %v750, 0.5
      %v787 = vadd.f32 %v751, 0.5
      %v788 = vmul.f32 %v752, 0.055555556
      %v789 = vmul.f32 %v753, 0.055555556
      %v790 = vmul.f32 %v754, 0.055555556
      %v791 = vmul.f32 %v755, 0.055555556
      %v792 = vmul.f32 %v756, 0.055555556
      %v793 = vmul.f32 %v757, 0.055555556
      %v794 = vmul.f32 %v758, 0.055555556
      %v795 = vmul.f32 %v759, 0.055555556
      %v796 = vmul.f32 %v760, 0.055555556
      %v797 = vmul.f32 %v761, 0.055555556
      %v798 = vmul.f32 %v762, 0.055555556
      %v799 = vmul.f32 %v763, 0.055555556
      %v800 = vmul.f32 %v764, 0.055555556
      %v801 = vmul.f32 %v765, 0.055555556
      %v802 = vmul.f32 %v766, 0.055555556
      %v803 = vmul.f32 %v767, 0.055555556
      %v804 = vmul.f32 %v768, 0.055555556
      %v805 = vmul.f32 %v769, 0.055555556
      %v806 = vmul.f32 %v770, 0.055555556
      %v807 = vmul.f32 %v771, 0.055555556
      %v808 = vmul.f32 %v772, 0.055555556
      %v809 = vmul.f32 %v773, 0.055555556
      %v810 = vmul.f32 %v774, 0.055555556
      %v811 = vmul.f32 %v775, 0.055555556
      %v812 = vmul.f32 %v776, 0.055555556
      %v813 = vmul.f32 %v777, 0.055555556
      %v814 = vmul.f32 %v778, 0.055555556
      %v815 = vmul.f32 %v779, 0.055555556
      %v816 = vmul.f32 %v780, 0.055555556
      %v817 = vmul.f32 %v781, 0.055555556
      %v818 = vmul.f32 %v782, 0.055555556
      %v819 = vmul.f32 %v783, 0.055555556
      %v820 = vmul.f32 %v784, 0.055555556
      %v821 = vmul.f32 %v785, 0.055555556
      %v822 = vmul.f32 %v786, 0.055555556
      %v823 = vmul.f32 %v787, 0.055555556
      %v824 = vfloor.f32 %v788
      %v825 = vfloor.f32 %v789
      %v826 = vfloor.f32 %v790
      %v827 = vfloor.f32 %v791
      %v828 = vfloor.f32 %v792
      %v829 = vfloor.f32 %v793
      %v830 = vfloor.f32 %v794
      %v831 = vfloor.f32 %v795
      %v832 = vfloor.f32 %v796
      %v833 = vfloor.f32 %v797
      %v834 = vfloor.f32 %v798
      %v835 = vfloor.f32 %v799
      %v836 = vfloor.f32 %v800
      %v837 = vfloor.f32 %v801
      %v838 = vfloor.f32 %v802
      %v839 = vfloor.f32 %v803
      %v840 = vfloor.f32 %v804
      %v841 = vfloor.f32 %v805
      %v842 = vfloor.f32 %v806
      %v843 = vfloor.f32 %v807
      %v844 = vfloor.f32 %v808
      %v845 = vfloor.f32 %v809
      %v846 = vfloor.f32 %v810
      %v847 = vfloor.f32 %v811
      %v848 = vfloor.f32 %v812
      %v849 = vfloor.f32 %v813
      %v850 = vfloor.f32 %v814
      %v851 = vfloor.f32 %v815
      %v852 = vfloor.f32 %v816
      %v853 = vfloor.f32 %v817
      %v854 = vfloor.f32 %v818
      %v855 = vfloor.f32 %v819
      %v856 = vfloor.f32 %v820
      %v857 = vfloor.f32 %v821
      %v858 = vfloor.f32 %v822
      %v859 = vfloor.f32 %v823
      %v860 = vmul.f32 %v824, 18.0
      %v861 = vmul.f32 %v825, 18.0
      %v862 = vmul.f32 %v826, 18.0
      %v863 = vmul.f32 %v827, 18.0
      %v864 = vmul.f32 %v828, 18.0
      %v865 = vmul.f32 %v829, 18.0
      %v866 = vmul.f32 %v830, 18.0
      %v867 = vmul.f32 %v831, 18.0
      %v868 = vmul.f32 %v832, 18.0
      %v869 = vmul.f32 %v833, 18.0
      %v870 = vmul.f32 %v834, 18.0
      %v871 = vmul.f32 %v835, 18.0
      %v872 = vmul.f32 %v836, 18.0
      %v873 = vmul.f32 %v837, 18.0
      %v874 = vmul.f32 %v838, 18.0
      %v875 = vmul.f32 %v839, 18.0
      %v876 = vmul.f32 %v840, 18.0
      %v877 = vmul.f32 %v841, 18.0
      %v878 = vmul.f32 %v842, 18.0
      %v879 = vmul.f32 %v843, 18.0
      %v880 = vmul.f32 %v844, 18.0
      %v881 = vmul.f32 %v845, 18.0
      %v882 = vmul.f32 %v846, 18.0
      %v883 = vmul.f32 %v847, 18.0
      %v884 = vmul.f32 %v848, 18.0
      %v885 = vmul.f32 %v849, 18.0
      %v886 = vmul.f32 %v850, 18.0
      %v887 = vmul.f32 %v851, 18.0
      %v888 = vmul.f32 %v852, 18.0
      %v889 = vmul.f32 %v853, 18.0
      %v890 = vmul.f32 %v854, 18.0
      %v891 = vmul.f32 %v855, 18.0
      %v892 = vmul.f32 %v856, 18.0
      %v893 = vmul.f32 %v857, 18.0
      %v894 = vmul.f32 %v858, 18.0
      %v895 = vmul.f32 %v859, 18.0
      %v896 = vsub.f32 %v716, %v860
      %v897 = vsub.f32 %v717, %v861
      %v898 = vsub.f32 %v718, %v862
      %v899 = vsub.f32 %v719, %v863
      %v900 = vsub.f32 %v720, %v864
      %v901 = vsub.f32 %v721, %v865
      %v902 = vsub.f32 %v722, %v866
      %v903 = vsub.f32 %v723, %v867
      %v904 = vsub.f32 %v724, %v868
      %v905 = vsub.f32 %v725, %v869
      %v906 = vsub.f32 %v726, %v870
      %v907 = vsub.f32 %v727, %v871
      %v908 = vsub.f32 %v728, %v872
      %v909 = vsub.f32 %v729, %v873
      %v910 = vsub.f32 %v730, %v874
      %v911 = vsub.f32 %v731, %v875
      %v912 = vsub.f32 %v732, %v876
      %v913 = vsub.f32 %v733, %v877
      %v914 = vsub.f32 %v734, %v878
      %v915 = vsub.f32 %v735, %v879
      %v916 = vsub.f32 %v736, %v880
      %v917 = vsub.f32 %v737, %v881
      %v918 = vsub.f32 %v738, %v882
      %v919 = vsub.f32 %v739, %v883
      %v920 = vsub.f32 %v740, %v884
      %v921 = vsub.f32 %v741, %v885
      %v922 = vsub.f32 %v742, %v886
      %v923 = vsub.f32 %v743, %v887
      %v924 = vsub.f32 %v744, %v888
      %v925 = vsub.f32 %v745, %v889
      %v926 = vsub.f32 %v746, %v890
      %v927 = vsub.f32 %v747, %v891
      %v928 = vsub.f32 %v748, %v892
      %v929 = vsub.f32 %v749, %v893
      %v930 = vsub.f32 %v750, %v894
      %v931 = vsub.f32 %v751, %v895
      %vm932 = vcmp.lt.f32.partialorder %v896, 15.5
      %vm933 = vcmp.lt.f32.partialorder %v897, 15.5
      %vm934 = vcmp.lt.f32.partialorder %v898, 15.5
      %vm935 = vcmp.lt.f32.partialorder %v899, 15.5
      %vm936 = vcmp.lt.f32.partialorder %v900, 15.5
      %vm937 = vcmp.lt.f32.partialorder %v901, 15.5
      %vm938 = vcmp.lt.f32.partialorder %v902, 15.5
      %vm939 = vcmp.lt.f32.partialorder %v903, 15.5
      %vm940 = vcmp.lt.f32.partialorder %v904, 15.5
      %vm941 = vcmp.lt.f32.partialorder %v905, 15.5
      %vm942 = vcmp.lt.f32.partialorder %v906, 15.5
      %vm943 = vcmp.lt.f32.partialorder %v907, 15.5
      %vm944 = vcmp.lt.f32.partialorder %v908, 15.5
      %vm945 = vcmp.lt.f32.partialorder %v909, 15.5
      %vm946 = vcmp.lt.f32.partialorder %v910, 15.5
      %vm947 = vcmp.lt.f32.partialorder %v911, 15.5
      %vm948 = vcmp.lt.f32.partialorder %v912, 15.5
      %vm949 = vcmp.lt.f32.partialorder %v913, 15.5
      %vm950 = vcmp.lt.f32.partialorder %v914, 15.5
      %vm951 = vcmp.lt.f32.partialorder %v915, 15.5
      %vm952 = vcmp.lt.f32.partialorder %v916, 15.5
      %vm953 = vcmp.lt.f32.partialorder %v917, 15.5
      %vm954 = vcmp.lt.f32.partialorder %v918, 15.5
      %vm955 = vcmp.lt.f32.partialorder %v919, 15.5
      %vm956 = vcmp.lt.f32.partialorder %v920, 15.5
      %vm957 = vcmp.lt.f32.partialorder %v921, 15.5
      %vm958 = vcmp.lt.f32.partialorder %v922, 15.5
      %vm959 = vcmp.lt.f32.partialorder %v923, 15.5
      %vm960 = vcmp.lt.f32.partialorder %v924, 15.5
      %vm961 = vcmp.lt.f32.partialorder %v925, 15.5
      %vm962 = vcmp.lt.f32.partialorder %v926, 15.5
      %vm963 = vcmp.lt.f32.partialorder %v927, 15.5
      %vm964 = vcmp.lt.f32.partialorder %v928, 15.5
      %vm965 = vcmp.lt.f32.partialorder %v929, 15.5
      %vm966 = vcmp.lt.f32.partialorder %v930, 15.5
      %vm967 = vcmp.lt.f32.partialorder %v931, 15.5
      %v968 = vsel %vm932, 1, 0
      %v969 = vsel %vm933, 1, 0
      %v970 = vsel %vm934, 1, 0
      %v971 = vsel %vm935, 1, 0
      %v972 = vsel %vm936, 1, 0
      %v973 = vsel %vm937, 1, 0
      %v974 = vsel %vm938, 1, 0
      %v975 = vsel %vm939, 1, 0
      %v976 = vsel %vm940, 1, 0
      %v977 = vsel %vm941, 1, 0
      %v978 = vsel %vm942, 1, 0
      %v979 = vsel %vm943, 1, 0
      %v980 = vsel %vm944, 1, 0
      %v981 = vsel %vm945, 1, 0
      %v982 = vsel %vm946, 1, 0
      %v983 = vsel %vm947, 1, 0
      %v984 = vsel %vm948, 1, 0
      %v985 = vsel %vm949, 1, 0
      %v986 = vsel %vm950, 1, 0
      %v987 = vsel %vm951, 1, 0
      %v988 = vsel %vm952, 1, 0
      %v989 = vsel %vm953, 1, 0
      %v990 = vsel %vm954, 1, 0
      %v991 = vsel %vm955, 1, 0
      %v992 = vsel %vm956, 1, 0
      %v993 = vsel %vm957, 1, 0
      %v994 = vsel %vm958, 1, 0
      %v995 = vsel %vm959, 1, 0
      %v996 = vsel %vm960, 1, 0
      %v997 = vsel %vm961, 1, 0
      %v998 = vsel %vm962, 1, 0
      %v999 = vsel %vm963, 1, 0
      %v1000 = vsel %vm964, 1, 0
      %v1001 = vsel %vm965, 1, 0
      %v1002 = vsel %vm966, 1, 0
      %v1003 = vsel %vm967, 1, 0
      %v1004 = vcvt.s32.f32 %v968
      %v1005 = vcvt.s32.f32 %v969
      %v1006 = vcvt.s32.f32 %v970
      %v1007 = vcvt.s32.f32 %v971
      %v1008 = vcvt.s32.f32 %v972
      %v1009 = vcvt.s32.f32 %v973
      %v1010 = vcvt.s32.f32 %v974
      %v1011 = vcvt.s32.f32 %v975
      %v1012 = vcvt.s32.f32 %v976
      %v1013 = vcvt.s32.f32 %v977
      %v1014 = vcvt.s32.f32 %v978
      %v1015 = vcvt.s32.f32 %v979
      %v1016 = vcvt.s32.f32 %v980
      %v1017 = vcvt.s32.f32 %v981
      %v1018 = vcvt.s32.f32 %v982
      %v1019 = vcvt.s32.f32 %v983
      %v1020 = vcvt.s32.f32 %v984
      %v1021 = vcvt.s32.f32 %v985
      %v1022 = vcvt.s32.f32 %v986
      %v1023 = vcvt.s32.f32 %v987
      %v1024 = vcvt.s32.f32 %v988
      %v1025 = vcvt.s32.f32 %v989
      %v1026 = vcvt.s32.f32 %v990
      %v1027 = vcvt.s32.f32 %v991
      %v1028 = vcvt.s32.f32 %v992
      %v1029 = vcvt.s32.f32 %v993
      %v1030 = vcvt.s32.f32 %v994
      %v1031 = vcvt.s32.f32 %v995
      %v1032 = vcvt.s32.f32 %v996
      %v1033 = vcvt.s32.f32 %v997
      %v1034 = vcvt.s32.f32 %v998
      %v1035 = vcvt.s32.f32 %v999
      %v1036 = vcvt.s32.f32 %v1000
      %v1037 = vcvt.s32.f32 %v1001
      %v1038 = vcvt.s32.f32 %v1002
      %v1039 = vcvt.s32.f32 %v1003
      %v1040 = vld [vmem:[#allocation2] sm:$0xff]
      %v1041 = vld [vmem:[#allocation2 + $0x8] sm:$0xff]
      %v1042 = vld [vmem:[#allocation2 + $0x10] sm:$0xff]
      %v1043 = vld [vmem:[#allocation2 + $0x18] sm:$0xff]
      %v1044 = vld [vmem:[#allocation2 + $0x20] sm:$0xff]
      %v1045 = vld [vmem:[#allocation2 + $0x28] sm:$0xff]
      %v1046 = vld [vmem:[#allocation2 + $0x30] sm:$0xff]
      %v1047 = vld [vmem:[#allocation2 + $0x38] sm:$0xff]
      %v1048 = vld [vmem:[#allocation2 + $0x40] sm:$0xff]
      %v1049 = vld [vmem:[#allocation2 + $0x48] sm:$0xff]
      %v1050 = vld [vmem:[#allocation2 + $0x50] sm:$0xff]
      %v1051 = vld [vmem:[#allocation2 + $0x58] sm:$0xff]
      %v1052 = vld [vmem:[#allocation2 + $0x60] sm:$0xff]
      %v1053 = vld [vmem:[#allocation2 + $0x68] sm:$0xff]
      %v1054 = vld [vmem:[#allocation2 + $0x70] sm:$0xff]
      %v1055 = vld [vmem:[#allocation2 + $0x78] sm:$0xff]
      %v1056 = vld [vmem:[#allocation2 + $0x80] sm:$0xff]
      %v1057 = vld [vmem:[#allocation2 + $0x88] sm:$0xff]
      %v1058 = vld [vmem:[#allocation2 + $0x90] sm:$0xff]
      %v1059 = vld [vmem:[#allocation2 + $0x98] sm:$0xff]
      %v1060 = vld [vmem:[#allocation2 + $0xa0] sm:$0xff]
      %v1061 = vld [vmem:[#allocation2 + $0xa8] sm:$0xff]
      %v1062 = vld [vmem:[#allocation2 + $0xb0] sm:$0xff]
      %v1063 = vld [vmem:[#allocation2 + $0xb8] sm:$0xff]
      %v1064 = vld [vmem:[#allocation2 + $0xc0] sm:$0xff]
      %v1065 = vld [vmem:[#allocation2 + $0xc8] sm:$0xff]
      %v1066 = vld [vmem:[#allocation2 + $0xd0] sm:$0xff]
      %v1067 = vld [vmem:[#allocation2 + $0xd8] sm:$0xff]
      %v1068 = vld [vmem:[#allocation2 + $0xe0] sm:$0xff]
      %v1069 = vld [vmem:[#allocation2 + $0xe8] sm:$0xff]
      %v1070 = vld [vmem:[#allocation2 + $0xf0] sm:$0xff]
      %v1071 = vld [vmem:[#allocation2 + $0xf8] sm:$0xff]
      %v1072 = vld [vmem:[#allocation2 + $0x100] sm:$0xff]
      %v1073 = vld [vmem:[#allocation2 + $0x108] sm:$0xff]
      %v1074 = vld [vmem:[#allocation2 + $0x110] sm:$0xff]
      %v1075 = vld [vmem:[#allocation2 + $0x118] sm:$0xff]
      %v1076 = vpack.c.bf16 %v1041, %v1040
      %v1077 = vpack.c.bf16 %v1043, %v1042
      %v1078 = vpack.c.bf16 %v1045, %v1044
      %v1079 = vpack.c.bf16 %v1047, %v1046
      %v1080 = vpack.c.bf16 %v1049, %v1048
      %v1081 = vpack.c.bf16 %v1051, %v1050
      %v1082 = vpack.c.bf16 %v1053, %v1052
      %v1083 = vpack.c.bf16 %v1055, %v1054
      %v1084 = vpack.c.bf16 %v1057, %v1056
      %v1085 = vpack.c.bf16 %v1059, %v1058
      %v1086 = vpack.c.bf16 %v1061, %v1060
      %v1087 = vpack.c.bf16 %v1063, %v1062
      %v1088 = vpack.c.bf16 %v1065, %v1064
      %v1089 = vpack.c.bf16 %v1067, %v1066
      %v1090 = vpack.c.bf16 %v1069, %v1068
      %v1091 = vpack.c.bf16 %v1071, %v1070
      %v1092 = vpack.c.bf16 %v1073, %v1072
      %v1093 = vpack.c.bf16 %v1075, %v1074
      %v1094 = vld [vmem:[%s1] sm:$0x3]
      %v1095 = vld [vmem:[#allocation2 + $0x1] sm:$0xff]
      %v1096 = vld [vmem:[#allocation2 + $0x9] sm:$0xff]
      %v1097 = vld [vmem:[#allocation2 + $0x11] sm:$0xff]
      %v1098 = vld [vmem:[#allocation2 + $0x19] sm:$0xff]
      %v1099 = vld [vmem:[#allocation2 + $0x21] sm:$0xff]
      %v1100 = vld [vmem:[#allocation2 + $0x29] sm:$0xff]
      %v1101 = vld [vmem:[#allocation2 + $0x31] sm:$0xff]
      %v1102 = vld [vmem:[#allocation2 + $0x39] sm:$0xff]
      %v1103 = vld [vmem:[#allocation2 + $0x41] sm:$0xff]
      %v1104 = vld [vmem:[#allocation2 + $0x49] sm:$0xff]
      %v1105 = vld [vmem:[#allocation2 + $0x51] sm:$0xff]
      %v1106 = vld [vmem:[#allocation2 + $0x59] sm:$0xff]
      %v1107 = vld [vmem:[#allocation2 + $0x61] sm:$0xff]
      %v1108 = vld [vmem:[#allocation2 + $0x69] sm:$0xff]
      %v1109 = vld [vmem:[#allocation2 + $0x71] sm:$0xff]
      %v1110 = vld [vmem:[#allocation2 + $0x79] sm:$0xff]
      %v1111 = vld [vmem:[#allocation2 + $0x81] sm:$0xff]
      %v1112 = vld [vmem:[#allocation2 + $0x89] sm:$0xff]
      %v1113 = vld [vmem:[#allocation2 + $0x91] sm:$0xff]
      %v1114 = vld [vmem:[#allocation2 + $0x99] sm:$0xff]
      %v1115 = vld [vmem:[#allocation2 + $0xa1] sm:$0xff]
      %v1116 = vld [vmem:[#allocation2 + $0xa9] sm:$0xff]
      %v1117 = vld [vmem:[#allocation2 + $0xb1] sm:$0xff]
      %v1118 = vld [vmem:[#allocation2 + $0xb9] sm:$0xff]
      %v1119 = vld [vmem:[#allocation2 + $0xc1] sm:$0xff]
      %v1120 = vld [vmem:[#allocation2 + $0xc9] sm:$0xff]
      %v1121 = vld [vmem:[#allocation2 + $0xd1] sm:$0xff]
      %v1122 = vld [vmem:[#allocation2 + $0xd9] sm:$0xff]
      %v1123 = vld [vmem:[#allocation2 + $0xe1] sm:$0xff]
      %v1124 = vld [vmem:[#allocation2 + $0xe9] sm:$0xff]
      %v1125 = vld [vmem:[#allocation2 + $0xf1] sm:$0xff]
      %v1126 = vld [vmem:[#allocation2 + $0xf9] sm:$0xff]
      %v1127 = vld [vmem:[#allocation2 + $0x101] sm:$0xff]
      %v1128 = vld [vmem:[#allocation2 + $0x109] sm:$0xff]
      %v1129 = vld [vmem:[#allocation2 + $0x111] sm:$0xff]
      %v1130 = vld [vmem:[#allocation2 + $0x119] sm:$0xff]
      %v1131 = vpack.c.bf16 %v1096, %v1095
      %v1132 = vpack.c.bf16 %v1098, %v1097
      %v1133 = vpack.c.bf16 %v1100, %v1099
      %v1134 = vpack.c.bf16 %v1102, %v1101
      %v1135 = vpack.c.bf16 %v1104, %v1103
      %v1136 = vpack.c.bf16 %v1106, %v1105
      %v1137 = vpack.c.bf16 %v1108, %v1107
      %v1138 = vpack.c.bf16 %v1110, %v1109
      %v1139 = vpack.c.bf16 %v1112, %v1111
      %v1140 = vpack.c.bf16 %v1114, %v1113
      %v1141 = vpack.c.bf16 %v1116, %v1115
      %v1142 = vpack.c.bf16 %v1118, %v1117
      %v1143 = vpack.c.bf16 %v1120, %v1119
      %v1144 = vpack.c.bf16 %v1122, %v1121
      %v1145 = vpack.c.bf16 %v1124, %v1123
      %v1146 = vpack.c.bf16 %v1126, %v1125
      %v1147 = vpack.c.bf16 %v1128, %v1127
      %v1148 = vpack.c.bf16 %v1130, %v1129
      %s1149 = scalar_lea.vmem %s1, 2
      %v1150 = vld [vmem:[%s1149] sm:$0x3]
      %v1152 = vsel %vm606, %v1131, 0
      %v1155 = vsel %vm606, %v1132, 0
      %v1158 = vsel %vm606, %v1133, 0
      %v1161 = vsel %vm606, %v1134, 0
      %v1164 = vsel %vm606, %v1135, 0
      %v1167 = vsel %vm606, %v1136, 0
      %v1170 = vsel %vm606, %v1137, 0
      %v1173 = vsel %vm606, %v1138, 0
      %v1176 = vsel %vm606, %v1139, 0
      %v1179 = vsel %vm606, %v1140, 0
      %v1182 = vsel %vm606, %v1141, 0
      %v1185 = vsel %vm606, %v1142, 0
      %v1188 = vsel %vm606, %v1143, 0
      %v1191 = vsel %vm606, %v1144, 0
      %v1194 = vsel %vm606, %v1145, 0
      %v1197 = vsel %vm606, %v1146, 0
      %v1200 = vsel %vm606, %v1147, 0
      %v1203 = vsel %vm606, %v1148, 0
      %vm1205 = vcmask 1041408
      %v1207 = vsel %vm1205, %v1150, 0
      %1209 = vmatprep.subr.bf16.mxu0 0
      %1210 = vmatpush1.bf16.msra.mxu0 %v1207
      %1211 = vmatprep.subr.bf16.mxu0 0
      %1212 = vmatpush1.bf16.msra.mxu0 0
      %1213 = vmatprep.subr.bf16.mxu0 0
      %1214 = vmatpush1.bf16.msra.mxu0 0
      %1215 = vmatprep.subr.bf16.mxu0 0
      %1216 = vmatpush1.bf16.msra.mxu0 0
      %1217 = vmatprep.subr.bf16.mxu0 0
      %1218 = vmatpush1.bf16.msra.mxu0 0
      %1219 = vmatprep.subr.bf16.mxu0 0
      %1220 = vmatpush1.bf16.msra.mxu0 0
      %1221 = vmatprep.subr.bf16.mxu0 0
      %1222 = vmatpush1.bf16.msra.mxu0 0
      %1223 = vmatprep.subr.bf16.mxu0 0
      %1224 = vmatpush1.bf16.msra.mxu0 0
      %1225 = vmatprep.subr.bf16.mxu0 0
      %1226 = vmatpush1.bf16.msra.mxu0 0
      %1227 = vmatprep.subr.bf16.mxu0 0
      %1228 = vmatpush1.bf16.msra.mxu0 0
      %1229 = vmatprep.subr.bf16.mxu0 0
      %1230 = vmatpush1.bf16.msra.mxu0 0
      %1231 = vmatprep.subr.bf16.mxu0 0
      %1232 = vmatpush1.bf16.msra.mxu0 0
      %1233 = vmatprep.subr.bf16.mxu0 0
      %1234 = vmatpush1.bf16.msra.mxu0 0
      %1235 = vmatprep.subr.bf16.mxu0 0
      %1236 = vmatpush1.bf16.msra.mxu0 0
      %1237 = vmatprep.subr.bf16.mxu0 0
      %1238 = vmatpush1.bf16.msra.mxu0 0
      %1239 = vmatprep.subr.bf16.mxu0 0
      %1240 = vmatpush1.bf16.msra.mxu0 0
      %1241 = vmatprep.mubr.bf16.mxu0 0
      %1242 = vmatmul.mubr.bf16.gmra.mrb[0].mxu0 %v1152
      %v1243 = vpop.f32.mrb[0].mxu0
      %v1244 = vadd.f32 0.0, %v1243
      %v1245 = vpop.f32.mrb[0].mxu0
      %v1246 = vpop.f32.mrb[0].mxu0
      %v1247 = vadd.f32 0.0, %v1246
      %v1248 = vpop.f32.mrb[0].mxu0
      %1249 = vmatprep.mubr.bf16.mxu0 0
      %1250 = vmatmul.mubr.bf16.gmra.mrb[0].mxu0 %v1155
      %v1251 = vpop.f32.mrb[0].mxu0
      %v1252 = vadd.f32 0.0, %v1251
      %v1253 = vpop.f32.mrb[0].mxu0
      %v1254 = vpop.f32.mrb[0].mxu0
      %v1255 = vadd.f32 0.0, %v1254
      %v1256 = vpop.f32.mrb[0].mxu0
      %1257 = vmatprep.mubr.bf16.mxu0 0
      %1258 = vmatmul.mubr.bf16.gmra.mrb[0].mxu0 %v1158
      %v1259 = vpop.f32.mrb[0].mxu0
      %v1260 = vadd.f32 0.0, %v1259
      %v1261 = vpop.f32.mrb[0].mxu0
      %v1262 = vpop.f32.mrb[0].mxu0
      %v1263 = vadd.f32 0.0, %v1262
      %v1264 = vpop.f32.mrb[0].mxu0
      %1265 = vmatprep.mubr.bf16.mxu0 0
      %1266 = vmatmul.mubr.bf16.gmra.mrb[0].mxu0 %v1161
      %v1267 = vpop.f32.mrb[0].mxu0
      %v1268 = vadd.f32 0.0, %v1267
      %v1269 = vpop.f32.mrb[0].mxu0
      %v1270 = vpop.f32.mrb[0].mxu0
      %v1271 = vadd.f32 0.0, %v1270
      %v1272 = vpop.f32.mrb[0].mxu0
      %1273 = vmatprep.mubr.bf16.mxu0 0
      %1274 = vmatmul.mubr.bf16.gmra.mrb[0].mxu0 %v1164
      %v1275 = vpop.f32.mrb[0].mxu0
      %v1276 = vadd.f32 0.0, %v1275
      %v1277 = vpop.f32.mrb[0].mxu0
      %v1278 = vpop.f32.mrb[0].mxu0
      %v1279 = vadd.f32 0.0, %v1278
      %v1280 = vpop.f32.mrb[0].mxu0
      %1281 = vmatprep.mubr.bf16.mxu0 0
      %1282 = vmatmul.mubr.bf16.gmra.mrb[0].mxu0 %v1167
      %v1283 = vpop.f32.mrb[0].mxu0
      %v1284 = vadd.f32 0.0, %v1283
      %v1285 = vpop.f32.mrb[0].mxu0
      %v1286 = vpop.f32.mrb[0].mxu0
      %v1287 = vadd.f32 0.0, %v1286
      %v1288 = vpop.f32.mrb[0].mxu0
      %1289 = vmatprep.mubr.bf16.mxu0 0
      %1290 = vmatmul.mubr.bf16.gmra.mrb[0].mxu0 %v1170
      %v1291 = vpop.f32.mrb[0].mxu0
      %v1292 = vadd.f32 0.0, %v1291
      %v1293 = vpop.f32.mrb[0].mxu0
      %v1294 = vpop.f32.mrb[0].mxu0
      %v1295 = vadd.f32 0.0, %v1294
      %v1296 = vpop.f32.mrb[0].mxu0
      %1297 = vmatprep.mubr.bf16.mxu0 0
      %1298 = vmatmul.mubr.bf16.gmra.mrb[0].mxu0 %v1173
      %v1299 = vpop.f32.mrb[0].mxu0
      %v1300 = vadd.f32 0.0, %v1299
      %v1301 = vpop.f32.mrb[0].mxu0
      %v1302 = vpop.f32.mrb[0].mxu0
      %v1303 = vadd.f32 0.0, %v1302
      %v1304 = vpop.f32.mrb[0].mxu0
      %1305 = vmatprep.mubr.bf16.mxu0 0
      %1306 = vmatmul.mubr.bf16.gmra.mrb[0].mxu0 %v1176
      %v1307 = vpop.f32.mrb[0].mxu0
      %v1308 = vadd.f32 0.0, %v1307
      %v1309 = vpop.f32.mrb[0].mxu0
      %v1310 = vpop.f32.mrb[0].mxu0
      %v1311 = vadd.f32 0.0, %v1310
      %v1312 = vpop.f32.mrb[0].mxu0
      %1313 = vmatprep.mubr.bf16.mxu0 0
      %1314 = vmatmul.mubr.bf16.gmra.mrb[0].mxu0 %v1179
      %v1315 = vpop.f32.mrb[0].mxu0
      %v1316 = vadd.f32 0.0, %v1315
      %v1317 = vpop.f32.mrb[0].mxu0
      %v1318 = vpop.f32.mrb[0].mxu0
      %v1319 = vadd.f32 0.0, %v1318
      %v1320 = vpop.f32.mrb[0].mxu0
      %1321 = vmatprep.mubr.bf16.mxu0 0
      %1322 = vmatmul.mubr.bf16.gmra.mrb[0].mxu0 %v1182
      %v1323 = vpop.f32.mrb[0].mxu0
      %v1324 = vadd.f32 0.0, %v1323
      %v1325 = vpop.f32.mrb[0].mxu0
      %v1326 = vpop.f32.mrb[0].mxu0
      %v1327 = vadd.f32 0.0, %v1326
      %v1328 = vpop.f32.mrb[0].mxu0
      %1329 = vmatprep.mubr.bf16.mxu0 0
      %1330 = vmatmul.mubr.bf16.gmra.mrb[0].mxu0 %v1185
      %v1331 = vpop.f32.mrb[0].mxu0
      %v1332 = vadd.f32 0.0, %v1331
      %v1333 = vpop.f32.mrb[0].mxu0
      %v1334 = vpop.f32.mrb[0].mxu0
      %v1335 = vadd.f32 0.0, %v1334
      %v1336 = vpop.f32.mrb[0].mxu0
      %1337 = vmatprep.mubr.bf16.mxu0 0
      %1338 = vmatmul.mubr.bf16.gmra.mrb[0].mxu0 %v1188
      %v1339 = vpop.f32.mrb[0].mxu0
      %v1340 = vadd.f32 0.0, %v1339
      %v1341 = vpop.f32.mrb[0].mxu0
      %v1342 = vpop.f32.mrb[0].mxu0
      %v1343 = vadd.f32 0.0, %v1342
      %v1344 = vpop.f32.mrb[0].mxu0
      %1345 = vmatprep.mubr.bf16.mxu0 0
      %1346 = vmatmul.mubr.bf16.gmra.mrb[0].mxu0 %v1191
      %v1347 = vpop.f32.mrb[0].mxu0
      %v1348 = vadd.f32 0.0, %v1347
      %v1349 = vpop.f32.mrb[0].mxu0
      %v1350 = vpop.f32.mrb[0].mxu0
      %v1351 = vadd.f32 0.0, %v1350
      %v1352 = vpop.f32.mrb[0].mxu0
      %1353 = vmatprep.mubr.bf16.mxu0 0
      %1354 = vmatmul.mubr.bf16.gmra.mrb[0].mxu0 %v1194
      %v1355 = vpop.f32.mrb[0].mxu0
      %v1356 = vadd.f32 0.0, %v1355
      %v1357 = vpop.f32.mrb[0].mxu0
      %v1358 = vpop.f32.mrb[0].mxu0
      %v1359 = vadd.f32 0.0, %v1358
      %v1360 = vpop.f32.mrb[0].mxu0
      %1361 = vmatprep.mubr.bf16.mxu0 0
      %1362 = vmatmul.mubr.bf16.gmra.mrb[0].mxu0 %v1197
      %v1363 = vpop.f32.mrb[0].mxu0
      %v1364 = vadd.f32 0.0, %v1363
      %v1365 = vpop.f32.mrb[0].mxu0
      %v1366 = vpop.f32.mrb[0].mxu0
      %v1367 = vadd.f32 0.0, %v1366
      %v1368 = vpop.f32.mrb[0].mxu0
      %1369 = vmatprep.mubr.bf16.mxu0 0
      %1370 = vmatmul.mubr.bf16.gmra.mrb[0].mxu0 %v1200
      %v1371 = vpop.f32.mrb[0].mxu0
      %v1372 = vadd.f32 0.0, %v1371
      %v1373 = vpop.f32.mrb[0].mxu0
      %v1374 = vpop.f32.mrb[0].mxu0
      %v1375 = vadd.f32 0.0, %v1374
      %v1376 = vpop.f32.mrb[0].mxu0
      %1377 = vmatprep.mubr.bf16.mxu0 0
      %1378 = vmatmul.mubr.bf16.gmra.mrb[0].mxu0 %v1203
      %v1379 = vpop.f32.mrb[0].mxu0
      %v1380 = vadd.f32 0.0, %v1379
      %v1381 = vpop.f32.mrb[0].mxu0
      %v1382 = vpop.f32.mrb[0].mxu0
      %v1383 = vadd.f32 0.0, %v1382
      %v1384 = vpop.f32.mrb[0].mxu0
      %1385 = vdwg.mxu0
      %v1387 = vsel %vm606, %v1076, 0
      %v1390 = vsel %vm606, %v1077, 0
      %v1393 = vsel %vm606, %v1078, 0
      %v1396 = vsel %vm606, %v1079, 0
      %v1399 = vsel %vm606, %v1080, 0
      %v1402 = vsel %vm606, %v1081, 0
      %v1405 = vsel %vm606, %v1082, 0
      %v1408 = vsel %vm606, %v1083, 0
      %v1411 = vsel %vm606, %v1084, 0
      %v1414 = vsel %vm606, %v1085, 0
      %v1417 = vsel %vm606, %v1086, 0
      %v1420 = vsel %vm606, %v1087, 0
      %v1423 = vsel %vm606, %v1088, 0
      %v1426 = vsel %vm606, %v1089, 0
      %v1429 = vsel %vm606, %v1090, 0
      %v1432 = vsel %vm606, %v1091, 0
      %v1435 = vsel %vm606, %v1092, 0
      %v1438 = vsel %vm606, %v1093, 0
      %v1441 = vsel %vm1205, %v1094, 0
      %1443 = vmatprep.subr.bf16.mxu0 0
      %1444 = vmatpush1.bf16.msra.mxu0 %v1441
      %1445 = vmatprep.subr.bf16.mxu0 0
      %1446 = vmatpush1.bf16.msra.mxu0 0
      %1447 = vmatprep.subr.bf16.mxu0 0
      %1448 = vmatpush1.bf16.msra.mxu0 0
      %1449 = vmatprep.subr.bf16.mxu0 0
      %1450 = vmatpush1.bf16.msra.mxu0 0
      %1451 = vmatprep.subr.bf16.mxu0 0
      %1452 = vmatpush1.bf16.msra.mxu0 0
      %1453 = vmatprep.subr.bf16.mxu0 0
      %1454 = vmatpush1.bf16.msra.mxu0 0
      %1455 = vmatprep.subr.bf16.mxu0 0
      %1456 = vmatpush1.bf16.msra.mxu0 0
      %1457 = vmatprep.subr.bf16.mxu0 0
      %1458 = vmatpush1.bf16.msra.mxu0 0
      %1459 = vmatprep.subr.bf16.mxu0 0
      %1460 = vmatpush1.bf16.msra.mxu0 0
      %1461 = vmatprep.subr.bf16.mxu0 0
      %1462 = vmatpush1.bf16.msra.mxu0 0
      %1463 = vmatprep.subr.bf16.mxu0 0
      %1464 = vmatpush1.bf16.msra.mxu0 0
      %1465 = vmatprep.subr.bf16.mxu0 0
      %1466 = vmatpush1.bf16.msra.mxu0 0
      %1467 = vmatprep.subr.bf16.mxu0 0
      %1468 = vmatpush1.bf16.msra.mxu0 0
      %1469 = vmatprep.subr.bf16.mxu0 0
      %1470 = vmatpush1.bf16.msra.mxu0 0
      %1471 = vmatprep.subr.bf16.mxu0 0
      %1472 = vmatpush1.bf16.msra.mxu0 0
      %1473 = vmatprep.subr.bf16.mxu0 0
      %1474 = vmatpush1.bf16.msra.mxu0 0
      %1475 = vmatprep.mubr.bf16.mxu0 0
      %1476 = vmatmul.mubr.bf16.gmra.mrb[0].mxu0 %v1387
      %v1477 = vpop.f32.mrb[0].mxu0
      %v1478 = vadd.f32 %v1244, %v1477
      %v1479 = vpop.f32.mrb[0].mxu0
      %v1480 = vpop.f32.mrb[0].mxu0
      %v1481 = vadd.f32 %v1247, %v1480
      %v1482 = vpop.f32.mrb[0].mxu0
      %1483 = vmatprep.mubr.bf16.mxu0 0
      %1484 = vmatmul.mubr.bf16.gmra.mrb[0].mxu0 %v1390
      %v1485 = vpop.f32.mrb[0].mxu0
      %v1486 = vadd.f32 %v1252, %v1485
      %v1487 = vpop.f32.mrb[0].mxu0
      %v1488 = vpop.f32.mrb[0].mxu0
      %v1489 = vadd.f32 %v1255, %v1488
      %v1490 = vpop.f32.mrb[0].mxu0
      %1491 = vmatprep.mubr.bf16.mxu0 0
      %1492 = vmatmul.mubr.bf16.gmra.mrb[0].mxu0 %v1393
      %v1493 = vpop.f32.mrb[0].mxu0
      %v1494 = vadd.f32 %v1260, %v1493
      %v1495 = vpop.f32.mrb[0].mxu0
      %v1496 = vpop.f32.mrb[0].mxu0
      %v1497 = vadd.f32 %v1263, %v1496
      %v1498 = vpop.f32.mrb[0].mxu0
      %1499 = vmatprep.mubr.bf16.mxu0 0
      %1500 = vmatmul.mubr.bf16.gmra.mrb[0].mxu0 %v1396
      %v1501 = vpop.f32.mrb[0].mxu0
      %v1502 = vadd.f32 %v1268, %v1501
      %v1503 = vpop.f32.mrb[0].mxu0
      %v1504 = vpop.f32.mrb[0].mxu0
      %v1505 = vadd.f32 %v1271, %v1504
      %v1506 = vpop.f32.mrb[0].mxu0
      %1507 = vmatprep.mubr.bf16.mxu0 0
      %1508 = vmatmul.mubr.bf16.gmra.mrb[0].mxu0 %v1399
      %v1509 = vpop.f32.mrb[0].mxu0
      %v1510 = vadd.f32 %v1276, %v1509
      %v1511 = vpop.f32.mrb[0].mxu0
      %v1512 = vpop.f32.mrb[0].mxu0
      %v1513 = vadd.f32 %v1279, %v1512
      %v1514 = vpop.f32.mrb[0].mxu0
      %1515 = vmatprep.mubr.bf16.mxu0 0
      %1516 = vmatmul.mubr.bf16.gmra.mrb[0].mxu0 %v1402
      %v1517 = vpop.f32.mrb[0].mxu0
      %v1518 = vadd.f32 %v1284, %v1517
      %v1519 = vpop.f32.mrb[0].mxu0
      %v1520 = vpop.f32.mrb[0].mxu0
      %v1521 = vadd.f32 %v1287, %v1520
      %v1522 = vpop.f32.mrb[0].mxu0
      %1523 = vmatprep.mubr.bf16.mxu0 0
      %1524 = vmatmul.mubr.bf16.gmra.mrb[0].mxu0 %v1405
      %v1525 = vpop.f32.mrb[0].mxu0
      %v1526 = vadd.f32 %v1292, %v1525
      %v1527 = vpop.f32.mrb[0].mxu0
      %v1528 = vpop.f32.mrb[0].mxu0
      %v1529 = vadd.f32 %v1295, %v1528
      %v1530 = vpop.f32.mrb[0].mxu0
      %1531 = vmatprep.mubr.bf16.mxu0 0
      %1532 = vmatmul.mubr.bf16.gmra.mrb[0].mxu0 %v1408
      %v1533 = vpop.f32.mrb[0].mxu0
      %v1534 = vadd.f32 %v1300, %v1533
      %v1535 = vpop.f32.mrb[0].mxu0
      %v1536 = vpop.f32.mrb[0].mxu0
      %v1537 = vadd.f32 %v1303, %v1536
      %v1538 = vpop.f32.mrb[0].mxu0
      %1539 = vmatprep.mubr.bf16.mxu0 0
      %1540 = vmatmul.mubr.bf16.gmra.mrb[0].mxu0 %v1411
      %v1541 = vpop.f32.mrb[0].mxu0
      %v1542 = vadd.f32 %v1308, %v1541
      %v1543 = vpop.f32.mrb[0].mxu0
      %v1544 = vpop.f32.mrb[0].mxu0
      %v1545 = vadd.f32 %v1311, %v1544
      %v1546 = vpop.f32.mrb[0].mxu0
      %1547 = vmatprep.mubr.bf16.mxu0 0
      %1548 = vmatmul.mubr.bf16.gmra.mrb[0].mxu0 %v1414
      %v1549 = vpop.f32.mrb[0].mxu0
      %v1550 = vadd.f32 %v1316, %v1549
      %v1551 = vpop.f32.mrb[0].mxu0
      %v1552 = vpop.f32.mrb[0].mxu0
      %v1553 = vadd.f32 %v1319, %v1552
      %v1554 = vpop.f32.mrb[0].mxu0
      %1555 = vmatprep.mubr.bf16.mxu0 0
      %1556 = vmatmul.mubr.bf16.gmra.mrb[0].mxu0 %v1417
      %v1557 = vpop.f32.mrb[0].mxu0
      %v1558 = vadd.f32 %v1324, %v1557
      %v1559 = vpop.f32.mrb[0].mxu0
      %v1560 = vpop.f32.mrb[0].mxu0
      %v1561 = vadd.f32 %v1327, %v1560
      %v1562 = vpop.f32.mrb[0].mxu0
      %1563 = vmatprep.mubr.bf16.mxu0 0
      %1564 = vmatmul.mubr.bf16.gmra.mrb[0].mxu0 %v1420
      %v1565 = vpop.f32.mrb[0].mxu0
      %v1566 = vadd.f32 %v1332, %v1565
      %v1567 = vpop.f32.mrb[0].mxu0
      %v1568 = vpop.f32.mrb[0].mxu0
      %v1569 = vadd.f32 %v1335, %v1568
      %v1570 = vpop.f32.mrb[0].mxu0
      %1571 = vmatprep.mubr.bf16.mxu0 0
      %1572 = vmatmul.mubr.bf16.gmra.mrb[0].mxu0 %v1423
      %v1573 = vpop.f32.mrb[0].mxu0
      %v1574 = vadd.f32 %v1340, %v1573
      %v1575 = vpop.f32.mrb[0].mxu0
      %v1576 = vpop.f32.mrb[0].mxu0
      %v1577 = vadd.f32 %v1343, %v1576
      %v1578 = vpop.f32.mrb[0].mxu0
      %1579 = vmatprep.mubr.bf16.mxu0 0
      %1580 = vmatmul.mubr.bf16.gmra.mrb[0].mxu0 %v1426
      %v1581 = vpop.f32.mrb[0].mxu0
      %v1582 = vadd.f32 %v1348, %v1581
      %v1583 = vpop.f32.mrb[0].mxu0
      %v1584 = vpop.f32.mrb[0].mxu0
      %v1585 = vadd.f32 %v1351, %v1584
      %v1586 = vpop.f32.mrb[0].mxu0
      %1587 = vmatprep.mubr.bf16.mxu0 0
      %1588 = vmatmul.mubr.bf16.gmra.mrb[0].mxu0 %v1429
      %v1589 = vpop.f32.mrb[0].mxu0
      %v1590 = vadd.f32 %v1356, %v1589
      %v1591 = vpop.f32.mrb[0].mxu0
      %v1592 = vpop.f32.mrb[0].mxu0
      %v1593 = vadd.f32 %v1359, %v1592
      %v1594 = vpop.f32.mrb[0].mxu0
      %1595 = vmatprep.mubr.bf16.mxu0 0
      %1596 = vmatmul.mubr.bf16.gmra.mrb[0].mxu0 %v1432
      %v1597 = vpop.f32.mrb[0].mxu0
      %v1598 = vadd.f32 %v1364, %v1597
      %v1599 = vpop.f32.mrb[0].mxu0
      %v1600 = vpop.f32.mrb[0].mxu0
      %v1601 = vadd.f32 %v1367, %v1600
      %v1602 = vpop.f32.mrb[0].mxu0
      %1603 = vmatprep.mubr.bf16.mxu0 0
      %1604 = vmatmul.mubr.bf16.gmra.mrb[0].mxu0 %v1435
      %v1605 = vpop.f32.mrb[0].mxu0
      %v1606 = vadd.f32 %v1372, %v1605
      %v1607 = vpop.f32.mrb[0].mxu0
      %v1608 = vpop.f32.mrb[0].mxu0
      %v1609 = vadd.f32 %v1375, %v1608
      %v1610 = vpop.f32.mrb[0].mxu0
      %1611 = vmatprep.mubr.bf16.mxu0 0
      %1612 = vmatmul.mubr.bf16.gmra.mrb[0].mxu0 %v1438
      %v1613 = vpop.f32.mrb[0].mxu0
      %v1614 = vadd.f32 %v1380, %v1613
      %v1615 = vpop.f32.mrb[0].mxu0
      %v1616 = vpop.f32.mrb[0].mxu0
      %v1617 = vadd.f32 %v1383, %v1616
      %v1618 = vpop.f32.mrb[0].mxu0
      %1619 = vdwg.mxu0
      %v1620 = vld [vmem:[#allocation2 + $0x2] sm:$0xff]
      %v1621 = vld [vmem:[#allocation2 + $0xa] sm:$0xff]
      %v1622 = vld [vmem:[#allocation2 + $0x12] sm:$0xff]
      %v1623 = vld [vmem:[#allocation2 + $0x1a] sm:$0xff]
      %v1624 = vld [vmem:[#allocation2 + $0x22] sm:$0xff]
      %v1625 = vld [vmem:[#allocation2 + $0x2a] sm:$0xff]
      %v1626 = vld [vmem:[#allocation2 + $0x32] sm:$0xff]
      %v1627 = vld [vmem:[#allocation2 + $0x3a] sm:$0xff]
      %v1628 = vld [vmem:[#allocation2 + $0x42] sm:$0xff]
      %v1629 = vld [vmem:[#allocation2 + $0x4a] sm:$0xff]
      %v1630 = vld [vmem:[#allocation2 + $0x52] sm:$0xff]
      %v1631 = vld [vmem:[#allocation2 + $0x5a] sm:$0xff]
      %v1632 = vld [vmem:[#allocation2 + $0x62] sm:$0xff]
      %v1633 = vld [vmem:[#allocation2 + $0x6a] sm:$0xff]
      %v1634 = vld [vmem:[#allocation2 + $0x72] sm:$0xff]
      %v1635 = vld [vmem:[#allocation2 + $0x7a] sm:$0xff]
      %v1636 = vld [vmem:[#allocation2 + $0x82] sm:$0xff]
      %v1637 = vld [vmem:[#allocation2 + $0x8a] sm:$0xff]
      %v1638 = vld [vmem:[#allocation2 + $0x92] sm:$0xff]
      %v1639 = vld [vmem:[#allocation2 + $0x9a] sm:$0xff]
      %v1640 = vld [vmem:[#allocation2 + $0xa2] sm:$0xff]
      %v1641 = vld [vmem:[#allocation2 + $0xaa] sm:$0xff]
      %v1642 = vld [vmem:[#allocation2 + $0xb2] sm:$0xff]
      %v1643 = vld [vmem:[#allocation2 + $0xba] sm:$0xff]
      %v1644 = vld [vmem:[#allocation2 + $0xc2] sm:$0xff]
      %v1645 = vld [vmem:[#allocation2 + $0xca] sm:$0xff]
      %v1646 = vld [vmem:[#allocation2 + $0xd2] sm:$0xff]
      %v1647 = vld [vmem:[#allocation2 + $0xda] sm:$0xff]
      %v1648 = vld [vmem:[#allocation2 + $0xe2] sm:$0xff]
      %v1649 = vld [vmem:[#allocation2 + $0xea] sm:$0xff]
      %v1650 = vld [vmem:[#allocation2 + $0xf2] sm:$0xff]
      %v1651 = vld [vmem:[#allocation2 + $0xfa] sm:$0xff]
      %v1652 = vld [vmem:[#allocation2 + $0x102] sm:$0xff]
      %v1653 = vld [vmem:[#allocation2 + $0x10a] sm:$0xff]
      %v1654 = vld [vmem:[#allocation2 + $0x112] sm:$0xff]
      %v1655 = vld [vmem:[#allocation2 + $0x11a] sm:$0xff]
      %v1656 = vpack.c.bf16 %v1621, %v1620
      %v1657 = vpack.c.bf16 %v1623, %v1622
      %v1658 = vpack.c.bf16 %v1625, %v1624
      %v1659 = vpack.c.bf16 %v1627, %v1626
      %v1660 = vpack.c.bf16 %v1629, %v1628
      %v1661 = vpack.c.bf16 %v1631, %v1630
      %v1662 = vpack.c.bf16 %v1633, %v1632
      %v1663 = vpack.c.bf16 %v1635, %v1634
      %v1664 = vpack.c.bf16 %v1637, %v1636
      %v1665 = vpack.c.bf16 %v1639, %v1638
      %v1666 = vpack.c.bf16 %v1641, %v1640
      %v1667 = vpack.c.bf16 %v1643, %v1642
      %v1668 = vpack.c.bf16 %v1645, %v1644
      %v1669 = vpack.c.bf16 %v1647, %v1646
      %v1670 = vpack.c.bf16 %v1649, %v1648
      %v1671 = vpack.c.bf16 %v1651, %v1650
      %v1672 = vpack.c.bf16 %v1653, %v1652
      %v1673 = vpack.c.bf16 %v1655, %v1654
      %s1674 = scalar_lea.vmem %s1, 4
      %v1675 = vld [vmem:[%s1674] sm:$0x3]
      %v1677 = vsel %vm606, %v1656, 0
      %v1680 = vsel %vm606, %v1657, 0
      %v1683 = vsel %vm606, %v1658, 0
      %v1686 = vsel %vm606, %v1659, 0
      %v1689 = vsel %vm606, %v1660, 0
      %v1692 = vsel %vm606, %v1661, 0
      %v1695 = vsel %vm606, %v1662, 0
      %v1698 = vsel %vm606, %v1663, 0
      %v1701 = vsel %vm606, %v1664, 0
      %v1704 = vsel %vm606, %v1665, 0
      %v1707 = vsel %vm606, %v1666, 0
      %v1710 = vsel %vm606, %v1667, 0
      %v1713 = vsel %vm606, %v1668, 0
      %v1716 = vsel %vm606, %v1669, 0
      %v1719 = vsel %vm606, %v1670, 0
      %v1722 = vsel %vm606, %v1671, 0
      %v1725 = vsel %vm606, %v1672, 0
      %v1728 = vsel %vm606, %v1673, 0
      %v1731 = vsel %vm1205, %v1675, 0
      %1733 = vmatprep.subr.bf16.mxu0 0
      %1734 = vmatpush1.bf16.msra.mxu0 %v1731
      %1735 = vmatprep.subr.bf16.mxu0 0
      %1736 = vmatpush1.bf16.msra.mxu0 0
      %1737 = vmatprep.subr.bf16.mxu0 0
      %1738 = vmatpush1.bf16.msra.mxu0 0
      %1739 = vmatprep.subr.bf16.mxu0 0
      %1740 = vmatpush1.bf16.msra.mxu0 0
      %1741 = vmatprep.subr.bf16.mxu0 0
      %1742 = vmatpush1.bf16.msra.mxu0 0
      %1743 = vmatprep.subr.bf16.mxu0 0
      %1744 = vmatpush1.bf16.msra.mxu0 0
      %1745 = vmatprep.subr.bf16.mxu0 0
      %1746 = vmatpush1.bf16.msra.mxu0 0
      %1747 = vmatprep.subr.bf16.mxu0 0
      %1748 = vmatpush1.bf16.msra.mxu0 0
      %1749 = vmatprep.subr.bf16.mxu0 0
      %1750 = vmatpush1.bf16.msra.mxu0 0
      %1751 = vmatprep.subr.bf16.mxu0 0
      %1752 = vmatpush1.bf16.msra.mxu0 0
      %1753 = vmatprep.subr.bf16.mxu0 0
      %1754 = vmatpush1.bf16.msra.mxu0 0
      %1755 = vmatprep.subr.bf16.mxu0 0
      %1756 = vmatpush1.bf16.msra.mxu0 0
      %1757 = vmatprep.subr.bf16.mxu0 0
      %1758 = vmatpush1.bf16.msra.mxu0 0
      %1759 = vmatprep.subr.bf16.mxu0 0
      %1760 = vmatpush1.bf16.msra.mxu0 0
      %1761 = vmatprep.subr.bf16.mxu0 0
      %1762 = vmatpush1.bf16.msra.mxu0 0
      %1763 = vmatprep.subr.bf16.mxu0 0
      %1764 = vmatpush1.bf16.msra.mxu0 0
      %1765 = vmatprep.mubr.bf16.mxu0 0
      %1766 = vmatmul.mubr.bf16.gmra.mrb[0].mxu0 %v1677
      %v1767 = vpop.f32.mrb[0].mxu0
      %v1768 = vadd.f32 0.0, %v1767
      %v1769 = vpop.f32.mrb[0].mxu0
      %v1770 = vpop.f32.mrb[0].mxu0
      %v1771 = vadd.f32 0.0, %v1770
      %v1772 = vpop.f32.mrb[0].mxu0
      %1773 = vmatprep.mubr.bf16.mxu0 0
      %1774 = vmatmul.mubr.bf16.gmra.mrb[0].mxu0 %v1680
      %v1775 = vpop.f32.mrb[0].mxu0
      %v1776 = vadd.f32 0.0, %v1775
      %v1777 = vpop.f32.mrb[0].mxu0
      %v1778 = vpop.f32.mrb[0].mxu0
      %v1779 = vadd.f32 0.0, %v1778
      %v1780 = vpop.f32.mrb[0].mxu0
      %1781 = vmatprep.mubr.bf16.mxu0 0
      %1782 = vmatmul.mubr.bf16.gmra.mrb[0].mxu0 %v1683
      %v1783 = vpop.f32.mrb[0].mxu0
      %v1784 = vadd.f32 0.0, %v1783
      %v1785 = vpop.f32.mrb[0].mxu0
      %v1786 = vpop.f32.mrb[0].mxu0
      %v1787 = vadd.f32 0.0, %v1786
      %v1788 = vpop.f32.mrb[0].mxu0
      %1789 = vmatprep.mubr.bf16.mxu0 0
      %1790 = vmatmul.mubr.bf16.gmra.mrb[0].mxu0 %v1686
      %v1791 = vpop.f32.mrb[0].mxu0
      %v1792 = vadd.f32 0.0, %v1791
      %v1793 = vpop.f32.mrb[0].mxu0
      %v1794 = vpop.f32.mrb[0].mxu0
      %v1795 = vadd.f32 0.0, %v1794
      %v1796 = vpop.f32.mrb[0].mxu0
      %1797 = vmatprep.mubr.bf16.mxu0 0
      %1798 = vmatmul.mubr.bf16.gmra.mrb[0].mxu0 %v1689
      %v1799 = vpop.f32.mrb[0].mxu0
      %v1800 = vadd.f32 0.0, %v1799
      %v1801 = vpop.f32.mrb[0].mxu0
      %v1802 = vpop.f32.mrb[0].mxu0
      %v1803 = vadd.f32 0.0, %v1802
      %v1804 = vpop.f32.mrb[0].mxu0
      %1805 = vmatprep.mubr.bf16.mxu0 0
      %1806 = vmatmul.mubr.bf16.gmra.mrb[0].mxu0 %v1692
      %v1807 = vpop.f32.mrb[0].mxu0
      %v1808 = vadd.f32 0.0, %v1807
      %v1809 = vpop.f32.mrb[0].mxu0
      %v1810 = vpop.f32.mrb[0].mxu0
      %v1811 = vadd.f32 0.0, %v1810
      %v1812 = vpop.f32.mrb[0].mxu0
      %1813 = vmatprep.mubr.bf16.mxu0 0
      %1814 = vmatmul.mubr.bf16.gmra.mrb[0].mxu0 %v1695
      %v1815 = vpop.f32.mrb[0].mxu0
      %v1816 = vadd.f32 0.0, %v1815
      %v1817 = vpop.f32.mrb[0].mxu0
      %v1818 = vpop.f32.mrb[0].mxu0
      %v1819 = vadd.f32 0.0, %v1818
      %v1820 = vpop.f32.mrb[0].mxu0
      %1821 = vmatprep.mubr.bf16.mxu0 0
      %1822 = vmatmul.mubr.bf16.gmra.mrb[0].mxu0 %v1698
      %v1823 = vpop.f32.mrb[0].mxu0
      %v1824 = vadd.f32 0.0, %v1823
      %v1825 = vpop.f32.mrb[0].mxu0
      %v1826 = vpop.f32.mrb[0].mxu0
      %v1827 = vadd.f32 0.0, %v1826
      %v1828 = vpop.f32.mrb[0].mxu0
      %1829 = vmatprep.mubr.bf16.mxu0 0
      %1830 = vmatmul.mubr.bf16.gmra.mrb[0].mxu0 %v1701
      %v1831 = vpop.f32.mrb[0].mxu0
      %v1832 = vadd.f32 0.0, %v1831
      %v1833 = vpop.f32.mrb[0].mxu0
      %v1834 = vpop.f32.mrb[0].mxu0
      %v1835 = vadd.f32 0.0, %v1834
      %v1836 = vpop.f32.mrb[0].mxu0
      %1837 = vmatprep.mubr.bf16.mxu0 0
      %1838 = vmatmul.mubr.bf16.gmra.mrb[0].mxu0 %v1704
      %v1839 = vpop.f32.mrb[0].mxu0
      %v1840 = vadd.f32 0.0, %v1839
      %v1841 = vpop.f32.mrb[0].mxu0
      %v1842 = vpop.f32.mrb[0].mxu0
      %v1843 = vadd.f32 0.0, %v1842
      %v1844 = vpop.f32.mrb[0].mxu0
      %1845 = vmatprep.mubr.bf16.mxu0 0
      %1846 = vmatmul.mubr.bf16.gmra.mrb[0].mxu0 %v1707
      %v1847 = vpop.f32.mrb[0].mxu0
      %v1848 = vadd.f32 0.0, %v1847
      %v1849 = vpop.f32.mrb[0].mxu0
      %v1850 = vpop.f32.mrb[0].mxu0
      %v1851 = vadd.f32 0.0, %v1850
      %v1852 = vpop.f32.mrb[0].mxu0
      %1853 = vmatprep.mubr.bf16.mxu0 0
      %1854 = vmatmul.mubr.bf16.gmra.mrb[0].mxu0 %v1710
      %v1855 = vpop.f32.mrb[0].mxu0
      %v1856 = vadd.f32 0.0, %v1855
      %v1857 = vpop.f32.mrb[0].mxu0
      %v1858 = vpop.f32.mrb[0].mxu0
      %v1859 = vadd.f32 0.0, %v1858
      %v1860 = vpop.f32.mrb[0].mxu0
      %1861 = vmatprep.mubr.bf16.mxu0 0
      %1862 = vmatmul.mubr.bf16.gmra.mrb[0].mxu0 %v1713
      %v1863 = vpop.f32.mrb[0].mxu0
      %v1864 = vadd.f32 0.0, %v1863
      %v1865 = vpop.f32.mrb[0].mxu0
      %v1866 = vpop.f32.mrb[0].mxu0
      %v1867 = vadd.f32 0.0, %v1866
      %v1868 = vpop.f32.mrb[0].mxu0
      %1869 = vmatprep.mubr.bf16.mxu0 0
      %1870 = vmatmul.mubr.bf16.gmra.mrb[0].mxu0 %v1716
      %v1871 = vpop.f32.mrb[0].mxu0
      %v1872 = vadd.f32 0.0, %v1871
      %v1873 = vpop.f32.mrb[0].mxu0
      %v1874 = vpop.f32.mrb[0].mxu0
      %v1875 = vadd.f32 0.0, %v1874
      %v1876 = vpop.f32.mrb[0].mxu0
      %1877 = vmatprep.mubr.bf16.mxu0 0
      %1878 = vmatmul.mubr.bf16.gmra.mrb[0].mxu0 %v1719
      %v1879 = vpop.f32.mrb[0].mxu0
      %v1880 = vadd.f32 0.0, %v1879
      %v1881 = vpop.f32.mrb[0].mxu0
      %v1882 = vpop.f32.mrb[0].mxu0
      %v1883 = vadd.f32 0.0, %v1882
      %v1884 = vpop.f32.mrb[0].mxu0
      %1885 = vmatprep.mubr.bf16.mxu0 0
      %1886 = vmatmul.mubr.bf16.gmra.mrb[0].mxu0 %v1722
      %v1887 = vpop.f32.mrb[0].mxu0
      %v1888 = vadd.f32 0.0, %v1887
      %v1889 = vpop.f32.mrb[0].mxu0
      %v1890 = vpop.f32.mrb[0].mxu0
      %v1891 = vadd.f32 0.0, %v1890
      %v1892 = vpop.f32.mrb[0].mxu0
      %1893 = vmatprep.mubr.bf16.mxu0 0
      %1894 = vmatmul.mubr.bf16.gmra.mrb[0].mxu0 %v1725
      %v1895 = vpop.f32.mrb[0].mxu0
      %v1896 = vadd.f32 0.0, %v1895
      %v1897 = vpop.f32.mrb[0].mxu0
      %v1898 = vpop.f32.mrb[0].mxu0
      %v1899 = vadd.f32 0.0, %v1898
      %v1900 = vpop.f32.mrb[0].mxu0
      %1901 = vmatprep.mubr.bf16.mxu0 0
      %1902 = vmatmul.mubr.bf16.gmra.mrb[0].mxu0 %v1728
      %v1903 = vpop.f32.mrb[0].mxu0
      %v1904 = vadd.f32 0.0, %v1903
      %v1905 = vpop.f32.mrb[0].mxu0
      %v1906 = vpop.f32.mrb[0].mxu0
      %v1907 = vadd.f32 0.0, %v1906
      %v1908 = vpop.f32.mrb[0].mxu0
      %1909 = vdwg.mxu0
      %v1910 = vadd.f32 %v1478, %v1768
      %v1911 = vadd.f32 %v1481, %v1771
      %v1912 = vadd.f32 %v1486, %v1776
      %v1913 = vadd.f32 %v1489, %v1779
      %v1914 = vadd.f32 %v1494, %v1784
      %v1915 = vadd.f32 %v1497, %v1787
      %v1916 = vadd.f32 %v1502, %v1792
      %v1917 = vadd.f32 %v1505, %v1795
      %v1918 = vadd.f32 %v1510, %v1800
      %v1919 = vadd.f32 %v1513, %v1803
      %v1920 = vadd.f32 %v1518, %v1808
      %v1921 = vadd.f32 %v1521, %v1811
      %v1922 = vadd.f32 %v1526, %v1816
      %v1923 = vadd.f32 %v1529, %v1819
      %v1924 = vadd.f32 %v1534, %v1824
      %v1925 = vadd.f32 %v1537, %v1827
      %v1926 = vadd.f32 %v1542, %v1832
      %v1927 = vadd.f32 %v1545, %v1835
      %v1928 = vadd.f32 %v1550, %v1840
      %v1929 = vadd.f32 %v1553, %v1843
      %v1930 = vadd.f32 %v1558, %v1848
      %v1931 = vadd.f32 %v1561, %v1851
      %v1932 = vadd.f32 %v1566, %v1856
      %v1933 = vadd.f32 %v1569, %v1859
      %v1934 = vadd.f32 %v1574, %v1864
      %v1935 = vadd.f32 %v1577, %v1867
      %v1936 = vadd.f32 %v1582, %v1872
      %v1937 = vadd.f32 %v1585, %v1875
      %v1938 = vadd.f32 %v1590, %v1880
      %v1939 = vadd.f32 %v1593, %v1883
      %v1940 = vadd.f32 %v1598, %v1888
      %v1941 = vadd.f32 %v1601, %v1891
      %v1942 = vadd.f32 %v1606, %v1896
      %v1943 = vadd.f32 %v1609, %v1899
      %v1944 = vadd.f32 %v1614, %v1904
      %v1945 = vadd.f32 %v1617, %v1907
      %v1946 = vld [vmem:[#allocation2 + $0x12] sm:$0xff]
      %v1947 = vld [vmem:[#allocation2 + $0x1a] sm:$0xff]
      %v1948 = vld [vmem:[#allocation2 + $0x22] sm:$0xff]
      %v1949 = vld [vmem:[#allocation2 + $0x2a] sm:$0xff]
      %v1950 = vld [vmem:[#allocation2 + $0x32] sm:$0xff]
      %v1951 = vld [vmem:[#allocation2 + $0x3a] sm:$0xff]
      %v1952 = vld [vmem:[#allocation2 + $0x42] sm:$0xff]
      %v1953 = vld [vmem:[#allocation2 + $0x4a] sm:$0xff]
      %v1954 = vld [vmem:[#allocation2 + $0x52] sm:$0xff]
      %v1955 = vld [vmem:[#allocation2 + $0x5a] sm:$0xff]
      %v1956 = vld [vmem:[#allocation2 + $0x62] sm:$0xff]
      %v1957 = vld [vmem:[#allocation2 + $0x6a] sm:$0xff]
      %v1958 = vld [vmem:[#allocation2 + $0x72] sm:$0xff]
      %v1959 = vld [vmem:[#allocation2 + $0x7a] sm:$0xff]
      %v1960 = vld [vmem:[#allocation2 + $0x82] sm:$0xff]
      %v1961 = vld [vmem:[#allocation2 + $0x8a] sm:$0xff]
      %v1962 = vld [vmem:[#allocation2 + $0x92] sm:$0xff]
      %v1963 = vld [vmem:[#allocation2 + $0x9a] sm:$0xff]
      %v1964 = vld [vmem:[#allocation2 + $0xa2] sm:$0xff]
      %v1965 = vld [vmem:[#allocation2 + $0xaa] sm:$0xff]
      %v1966 = vld [vmem:[#allocation2 + $0xb2] sm:$0xff]
      %v1967 = vld [vmem:[#allocation2 + $0xba] sm:$0xff]
      %v1968 = vld [vmem:[#allocation2 + $0xc2] sm:$0xff]
      %v1969 = vld [vmem:[#allocation2 + $0xca] sm:$0xff]
      %v1970 = vld [vmem:[#allocation2 + $0xd2] sm:$0xff]
      %v1971 = vld [vmem:[#allocation2 + $0xda] sm:$0xff]
      %v1972 = vld [vmem:[#allocation2 + $0xe2] sm:$0xff]
      %v1973 = vld [vmem:[#allocation2 + $0xea] sm:$0xff]
      %v1974 = vld [vmem:[#allocation2 + $0xf2] sm:$0xff]
      %v1975 = vld [vmem:[#allocation2 + $0xfa] sm:$0xff]
      %v1976 = vld [vmem:[#allocation2 + $0x102] sm:$0xff]
      %v1977 = vld [vmem:[#allocation2 + $0x10a] sm:$0xff]
      %v1978 = vld [vmem:[#allocation2 + $0x112] sm:$0xff]
      %v1979 = vld [vmem:[#allocation2 + $0x11a] sm:$0xff]
      %v1980 = vld [vmem:[#allocation2 + $0x122] sm:$0xff]
      %v1981 = vld [vmem:[#allocation2 + $0x12a] sm:$0xff]
      %v1982 = vpack.c.bf16 %v1947, %v1946
      %v1983 = vpack.c.bf16 %v1949, %v1948
      %v1984 = vpack.c.bf16 %v1951, %v1950
      %v1985 = vpack.c.bf16 %v1953, %v1952
      %v1986 = vpack.c.bf16 %v1955, %v1954
      %v1987 = vpack.c.bf16 %v1957, %v1956
      %v1988 = vpack.c.bf16 %v1959, %v1958
      %v1989 = vpack.c.bf16 %v1961, %v1960
      %v1990 = vpack.c.bf16 %v1963, %v1962
      %v1991 = vpack.c.bf16 %v1965, %v1964
      %v1992 = vpack.c.bf16 %v1967, %v1966
      %v1993 = vpack.c.bf16 %v1969, %v1968
      %v1994 = vpack.c.bf16 %v1971, %v1970
      %v1995 = vpack.c.bf16 %v1973, %v1972
      %v1996 = vpack.c.bf16 %v1975, %v1974
      %v1997 = vpack.c.bf16 %v1977, %v1976
      %v1998 = vpack.c.bf16 %v1979, %v1978
      %v1999 = vpack.c.bf16 %v1981, %v1980
      %s2000 = scalar_lea.vmem %s1, 6
      %v2001 = vld [vmem:[%s2000] sm:$0x3]
      %v2003 = vsel %vm606, %v1982, 0
      %v2006 = vsel %vm606, %v1983, 0
      %v2009 = vsel %vm606, %v1984, 0
      %v2012 = vsel %vm606, %v1985, 0
      %v2015 = vsel %vm606, %v1986, 0
      %v2018 = vsel %vm606, %v1987, 0
      %v2021 = vsel %vm606, %v1988, 0
      %v2024 = vsel %vm606, %v1989, 0
      %v2027 = vsel %vm606, %v1990, 0
      %v2030 = vsel %vm606, %v1991, 0
      %v2033 = vsel %vm606, %v1992, 0
      %v2036 = vsel %vm606, %v1993, 0
      %v2039 = vsel %vm606, %v1994, 0
      %v2042 = vsel %vm606, %v1995, 0
      %v2045 = vsel %vm606, %v1996, 0
      %v2048 = vsel %vm606, %v1997, 0
      %v2051 = vsel %vm606, %v1998, 0
      %v2054 = vsel %vm606, %v1999, 0
      %v2057 = vsel %vm1205, %v2001, 0
      %2059 = vmatprep.subr.bf16.mxu0 0
      %2060 = vmatpush1.bf16.msra.mxu0 %v2057
      %2061 = vmatprep.subr.bf16.mxu0 0
      %2062 = vmatpush1.bf16.msra.mxu0 0
      %2063 = vmatprep.subr.bf16.mxu0 0
      %2064 = vmatpush1.bf16.msra.mxu0 0
      %2065 = vmatprep.subr.bf16.mxu0 0
      %2066 = vmatpush1.bf16.msra.mxu0 0
      %2067 = vmatprep.subr.bf16.mxu0 0
      %2068 = vmatpush1.bf16.msra.mxu0 0
      %2069 = vmatprep.subr.bf16.mxu0 0
      %2070 = vmatpush1.bf16.msra.mxu0 0
      %2071 = vmatprep.subr.bf16.mxu0 0
      %2072 = vmatpush1.bf16.msra.mxu0 0
      %2073 = vmatprep.subr.bf16.mxu0 0
      %2074 = vmatpush1.bf16.msra.mxu0 0
      %2075 = vmatprep.subr.bf16.mxu0 0
      %2076 = vmatpush1.bf16.msra.mxu0 0
      %2077 = vmatprep.subr.bf16.mxu0 0
      %2078 = vmatpush1.bf16.msra.mxu0 0
      %2079 = vmatprep.subr.bf16.mxu0 0
      %2080 = vmatpush1.bf16.msra.mxu0 0
      %2081 = vmatprep.subr.bf16.mxu0 0
      %2082 = vmatpush1.bf16.msra.mxu0 0
      %2083 = vmatprep.subr.bf16.mxu0 0
      %2084 = vmatpush1.bf16.msra.mxu0 0
      %2085 = vmatprep.subr.bf16.mxu0 0
      %2086 = vmatpush1.bf16.msra.mxu0 0
      %2087 = vmatprep.subr.bf16.mxu0 0
      %2088 = vmatpush1.bf16.msra.mxu0 0
      %2089 = vmatprep.subr.bf16.mxu0 0
      %2090 = vmatpush1.bf16.msra.mxu0 0
      %2091 = vmatprep.mubr.bf16.mxu0 0
      %2092 = vmatmul.mubr.bf16.gmra.mrb[0].mxu0 %v2003
      %v2093 = vpop.f32.mrb[0].mxu0
      %v2094 = vadd.f32 0.0, %v2093
      %v2095 = vpop.f32.mrb[0].mxu0
      %v2096 = vpop.f32.mrb[0].mxu0
      %v2097 = vadd.f32 0.0, %v2096
      %v2098 = vpop.f32.mrb[0].mxu0
      %2099 = vmatprep.mubr.bf16.mxu0 0
      %2100 = vmatmul.mubr.bf16.gmra.mrb[0].mxu0 %v2006
      %v2101 = vpop.f32.mrb[0].mxu0
      %v2102 = vadd.f32 0.0, %v2101
      %v2103 = vpop.f32.mrb[0].mxu0
      %v2104 = vpop.f32.mrb[0].mxu0
      %v2105 = vadd.f32 0.0, %v2104
      %v2106 = vpop.f32.mrb[0].mxu0
      %2107 = vmatprep.mubr.bf16.mxu0 0
      %2108 = vmatmul.mubr.bf16.gmra.mrb[0].mxu0 %v2009
      %v2109 = vpop.f32.mrb[0].mxu0
      %v2110 = vadd.f32 0.0, %v2109
      %v2111 = vpop.f32.mrb[0].mxu0
      %v2112 = vpop.f32.mrb[0].mxu0
      %v2113 = vadd.f32 0.0, %v2112
      %v2114 = vpop.f32.mrb[0].mxu0
      %2115 = vmatprep.mubr.bf16.mxu0 0
      %2116 = vmatmul.mubr.bf16.gmra.mrb[0].mxu0 %v2012
      %v2117 = vpop.f32.mrb[0].mxu0
      %v2118 = vadd.f32 0.0, %v2117
      %v2119 = vpop.f32.mrb[0].mxu0
      %v2120 = vpop.f32.mrb[0].mxu0
      %v2121 = vadd.f32 0.0, %v2120
      %v2122 = vpop.f32.mrb[0].mxu0
      %2123 = vmatprep.mubr.bf16.mxu0 0
      %2124 = vmatmul.mubr.bf16.gmra.mrb[0].mxu0 %v2015
      %v2125 = vpop.f32.mrb[0].mxu0
      %v2126 = vadd.f32 0.0, %v2125
      %v2127 = vpop.f32.mrb[0].mxu0
      %v2128 = vpop.f32.mrb[0].mxu0
      %v2129 = vadd.f32 0.0, %v2128
      %v2130 = vpop.f32.mrb[0].mxu0
      %2131 = vmatprep.mubr.bf16.mxu0 0
      %2132 = vmatmul.mubr.bf16.gmra.mrb[0].mxu0 %v2018
      %v2133 = vpop.f32.mrb[0].mxu0
      %v2134 = vadd.f32 0.0, %v2133
      %v2135 = vpop.f32.mrb[0].mxu0
      %v2136 = vpop.f32.mrb[0].mxu0
      %v2137 = vadd.f32 0.0, %v2136
      %v2138 = vpop.f32.mrb[0].mxu0
      %2139 = vmatprep.mubr.bf16.mxu0 0
      %2140 = vmatmul.mubr.bf16.gmra.mrb[0].mxu0 %v2021
      %v2141 = vpop.f32.mrb[0].mxu0
      %v2142 = vadd.f32 0.0, %v2141
      %v2143 = vpop.f32.mrb[0].mxu0
      %v2144 = vpop.f32.mrb[0].mxu0
      %v2145 = vadd.f32 0.0, %v2144
      %v2146 = vpop.f32.mrb[0].mxu0
      %2147 = vmatprep.mubr.bf16.mxu0 0
      %2148 = vmatmul.mubr.bf16.gmra.mrb[0].mxu0 %v2024
      %v2149 = vpop.f32.mrb[0].mxu0
      %v2150 = vadd.f32 0.0, %v2149
      %v2151 = vpop.f32.mrb[0].mxu0
      %v2152 = vpop.f32.mrb[0].mxu0
      %v2153 = vadd.f32 0.0, %v2152
      %v2154 = vpop.f32.mrb[0].mxu0
      %2155 = vmatprep.mubr.bf16.mxu0 0
      %2156 = vmatmul.mubr.bf16.gmra.mrb[0].mxu0 %v2027
      %v2157 = vpop.f32.mrb[0].mxu0
      %v2158 = vadd.f32 0.0, %v2157
      %v2159 = vpop.f32.mrb[0].mxu0
      %v2160 = vpop.f32.mrb[0].mxu0
      %v2161 = vadd.f32 0.0, %v2160
      %v2162 = vpop.f32.mrb[0].mxu0
      %2163 = vmatprep.mubr.bf16.mxu0 0
      %2164 = vmatmul.mubr.bf16.gmra.mrb[0].mxu0 %v2030
      %v2165 = vpop.f32.mrb[0].mxu0
      %v2166 = vadd.f32 0.0, %v2165
      %v2167 = vpop.f32.mrb[0].mxu0
      %v2168 = vpop.f32.mrb[0].mxu0
      %v2169 = vadd.f32 0.0, %v2168
      %v2170 = vpop.f32.mrb[0].mxu0
      %2171 = vmatprep.mubr.bf16.mxu0 0
      %2172 = vmatmul.mubr.bf16.gmra.mrb[0].mxu0 %v2033
      %v2173 = vpop.f32.mrb[0].mxu0
      %v2174 = vadd.f32 0.0, %v2173
      %v2175 = vpop.f32.mrb[0].mxu0
      %v2176 = vpop.f32.mrb[0].mxu0
      %v2177 = vadd.f32 0.0, %v2176
      %v2178 = vpop.f32.mrb[0].mxu0
      %2179 = vmatprep.mubr.bf16.mxu0 0
      %2180 = vmatmul.mubr.bf16.gmra.mrb[0].mxu0 %v2036
      %v2181 = vpop.f32.mrb[0].mxu0
      %v2182 = vadd.f32 0.0, %v2181
      %v2183 = vpop.f32.mrb[0].mxu0
      %v2184 = vpop.f32.mrb[0].mxu0
      %v2185 = vadd.f32 0.0, %v2184
      %v2186 = vpop.f32.mrb[0].mxu0
      %2187 = vmatprep.mubr.bf16.mxu0 0
      %2188 = vmatmul.mubr.bf16.gmra.mrb[0].mxu0 %v2039
      %v2189 = vpop.f32.mrb[0].mxu0
      %v2190 = vadd.f32 0.0, %v2189
      %v2191 = vpop.f32.mrb[0].mxu0
      %v2192 = vpop.f32.mrb[0].mxu0
      %v2193 = vadd.f32 0.0, %v2192
      %v2194 = vpop.f32.mrb[0].mxu0
      %2195 = vmatprep.mubr.bf16.mxu0 0
      %2196 = vmatmul.mubr.bf16.gmra.mrb[0].mxu0 %v2042
      %v2197 = vpop.f32.mrb[0].mxu0
      %v2198 = vadd.f32 0.0, %v2197
      %v2199 = vpop.f32.mrb[0].mxu0
      %v2200 = vpop.f32.mrb[0].mxu0
      %v2201 = vadd.f32 0.0, %v2200
      %v2202 = vpop.f32.mrb[0].mxu0
      %2203 = vmatprep.mubr.bf16.mxu0 0
      %2204 = vmatmul.mubr.bf16.gmra.mrb[0].mxu0 %v2045
      %v2205 = vpop.f32.mrb[0].mxu0
      %v2206 = vadd.f32 0.0, %v2205
      %v2207 = vpop.f32.mrb[0].mxu0
      %v2208 = vpop.f32.mrb[0].mxu0
      %v2209 = vadd.f32 0.0, %v2208
      %v2210 = vpop.f32.mrb[0].mxu0
      %2211 = vmatprep.mubr.bf16.mxu0 0
      %2212 = vmatmul.mubr.bf16.gmra.mrb[0].mxu0 %v2048
      %v2213 = vpop.f32.mrb[0].mxu0
      %v2214 = vadd.f32 0.0, %v2213
      %v2215 = vpop.f32.mrb[0].mxu0
      %v2216 = vpop.f32.mrb[0].mxu0
      %v2217 = vadd.f32 0.0, %v2216
      %v2218 = vpop.f32.mrb[0].mxu0
      %2219 = vmatprep.mubr.bf16.mxu0 0
      %2220 = vmatmul.mubr.bf16.gmra.mrb[0].mxu0 %v2051
      %v2221 = vpop.f32.mrb[0].mxu0
      %v2222 = vadd.f32 0.0, %v2221
      %v2223 = vpop.f32.mrb[0].mxu0
      %v2224 = vpop.f32.mrb[0].mxu0
      %v2225 = vadd.f32 0.0, %v2224
      %v2226 = vpop.f32.mrb[0].mxu0
      %2227 = vmatprep.mubr.bf16.mxu0 0
      %2228 = vmatmul.mubr.bf16.gmra.mrb[0].mxu0 %v2054
      %v2229 = vpop.f32.mrb[0].mxu0
      %v2230 = vadd.f32 0.0, %v2229
      %v2231 = vpop.f32.mrb[0].mxu0
      %v2232 = vpop.f32.mrb[0].mxu0
      %v2233 = vadd.f32 0.0, %v2232
      %v2234 = vpop.f32.mrb[0].mxu0
      %2235 = vdwg.mxu0
      %v2236 = vadd.f32 %v1910, %v2094
      %v2237 = vadd.f32 %v1911, %v2097
      %v2238 = vadd.f32 %v1912, %v2102
      %v2239 = vadd.f32 %v1913, %v2105
      %v2240 = vadd.f32 %v1914, %v2110
      %v2241 = vadd.f32 %v1915, %v2113
      %v2242 = vadd.f32 %v1916, %v2118
      %v2243 = vadd.f32 %v1917, %v2121
      %v2244 = vadd.f32 %v1918, %v2126
      %v2245 = vadd.f32 %v1919, %v2129
      %v2246 = vadd.f32 %v1920, %v2134
      %v2247 = vadd.f32 %v1921, %v2137
      %v2248 = vadd.f32 %v1922, %v2142
      %v2249 = vadd.f32 %v1923, %v2145
      %v2250 = vadd.f32 %v1924, %v2150
      %v2251 = vadd.f32 %v1925, %v2153
      %v2252 = vadd.f32 %v1926, %v2158
      %v2253 = vadd.f32 %v1927, %v2161
      %v2254 = vadd.f32 %v1928, %v2166
      %v2255 = vadd.f32 %v1929, %v2169
      %v2256 = vadd.f32 %v1930, %v2174
      %v2257 = vadd.f32 %v1931, %v2177
      %v2258 = vadd.f32 %v1932, %v2182
      %v2259 = vadd.f32 %v1933, %v2185
      %v2260 = vadd.f32 %v1934, %v2190
      %v2261 = vadd.f32 %v1935, %v2193
      %v2262 = vadd.f32 %v1936, %v2198
      %v2263 = vadd.f32 %v1937, %v2201
      %v2264 = vadd.f32 %v1938, %v2206
      %v2265 = vadd.f32 %v1939, %v2209
      %v2266 = vadd.f32 %v1940, %v2214
      %v2267 = vadd.f32 %v1941, %v2217
      %v2268 = vadd.f32 %v1942, %v2222
      %v2269 = vadd.f32 %v1943, %v2225
      %v2270 = vadd.f32 %v1944, %v2230
      %v2271 = vadd.f32 %v1945, %v2233
      %v2272 = vld [vmem:[#allocation2 + $0x13] sm:$0xff]
      %v2273 = vld [vmem:[#allocation2 + $0x1b] sm:$0xff]
      %v2274 = vld [vmem:[#allocation2 + $0x23] sm:$0xff]
      %v2275 = vld [vmem:[#allocation2 + $0x2b] sm:$0xff]
      %v2276 = vld [vmem:[#allocation2 + $0x33] sm:$0xff]
      %v2277 = vld [vmem:[#allocation2 + $0x3b] sm:$0xff]
      %v2278 = vld [vmem:[#allocation2 + $0x43] sm:$0xff]
      %v2279 = vld [vmem:[#allocation2 + $0x4b] sm:$0xff]
      %v2280 = vld [vmem:[#allocation2 + $0x53] sm:$0xff]
      %v2281 = vld [vmem:[#allocation2 + $0x5b] sm:$0xff]
      %v2282 = vld [vmem:[#allocation2 + $0x63] sm:$0xff]
      %v2283 = vld [vmem:[#allocation2 + $0x6b] sm:$0xff]
      %v2284 = vld [vmem:[#allocation2 + $0x73] sm:$0xff]
      %v2285 = vld [vmem:[#allocation2 + $0x7b] sm:$0xff]
      %v2286 = vld [vmem:[#allocation2 + $0x83] sm:$0xff]
      %v2287 = vld [vmem:[#allocation2 + $0x8b] sm:$0xff]
      %v2288 = vld [vmem:[#allocation2 + $0x93] sm:$0xff]
      %v2289 = vld [vmem:[#allocation2 + $0x9b] sm:$0xff]
      %v2290 = vld [vmem:[#allocation2 + $0xa3] sm:$0xff]
      %v2291 = vld [vmem:[#allocation2 + $0xab] sm:$0xff]
      %v2292 = vld [vmem:[#allocation2 + $0xb3] sm:$0xff]
      %v2293 = vld [vmem:[#allocation2 + $0xbb] sm:$0xff]
      %v2294 = vld [vmem:[#allocation2 + $0xc3] sm:$0xff]
      %v2295 = vld [vmem:[#allocation2 + $0xcb] sm:$0xff]
      %v2296 = vld [vmem:[#allocation2 + $0xd3] sm:$0xff]
      %v2297 = vld [vmem:[#allocation2 + $0xdb] sm:$0xff]
      %v2298 = vld [vmem:[#allocation2 + $0xe3] sm:$0xff]
      %v2299 = vld [vmem:[#allocation2 + $0xeb] sm:$0xff]
      %v2300 = vld [vmem:[#allocation2 + $0xf3] sm:$0xff]
      %v2301 = vld [vmem:[#allocation2 + $0xfb] sm:$0xff]
      %v2302 = vld [vmem:[#allocation2 + $0x103] sm:$0xff]
      %v2303 = vld [vmem:[#allocation2 + $0x10b] sm:$0xff]
      %v2304 = vld [vmem:[#allocation2 + $0x113] sm:$0xff]
      %v2305 = vld [vmem:[#allocation2 + $0x11b] sm:$0xff]
      %v2306 = vld [vmem:[#allocation2 + $0x123] sm:$0xff]
      %v2307 = vld [vmem:[#allocation2 + $0x12b] sm:$0xff]
      %v2308 = vpack.c.bf16 %v2273, %v2272
      %v2309 = vpack.c.bf16 %v2275, %v2274
      %v2310 = vpack.c.bf16 %v2277, %v2276
      %v2311 = vpack.c.bf16 %v2279, %v2278
      %v2312 = vpack.c.bf16 %v2281, %v2280
      %v2313 = vpack.c.bf16 %v2283, %v2282
      %v2314 = vpack.c.bf16 %v2285, %v2284
      %v2315 = vpack.c.bf16 %v2287, %v2286
      %v2316 = vpack.c.bf16 %v2289, %v2288
      %v2317 = vpack.c.bf16 %v2291, %v2290
      %v2318 = vpack.c.bf16 %v2293, %v2292
      %v2319 = vpack.c.bf16 %v2295, %v2294
      %v2320 = vpack.c.bf16 %v2297, %v2296
      %v2321 = vpack.c.bf16 %v2299, %v2298
      %v2322 = vpack.c.bf16 %v2301, %v2300
      %v2323 = vpack.c.bf16 %v2303, %v2302
      %v2324 = vpack.c.bf16 %v2305, %v2304
      %v2325 = vpack.c.bf16 %v2307, %v2306
      %s2326 = scalar_lea.vmem %s1, 8
      %v2327 = vld [vmem:[%s2326] sm:$0x3]
      %v2329 = vsel %vm606, %v2308, 0
      %v2332 = vsel %vm606, %v2309, 0
      %v2335 = vsel %vm606, %v2310, 0
      %v2338 = vsel %vm606, %v2311, 0
      %v2341 = vsel %vm606, %v2312, 0
      %v2344 = vsel %vm606, %v2313, 0
      %v2347 = vsel %vm606, %v2314, 0
      %v2350 = vsel %vm606, %v2315, 0
      %v2353 = vsel %vm606, %v2316, 0
      %v2356 = vsel %vm606, %v2317, 0
      %v2359 = vsel %vm606, %v2318, 0
      %v2362 = vsel %vm606, %v2319, 0
      %v2365 = vsel %vm606, %v2320, 0
      %v2368 = vsel %vm606, %v2321, 0
      %v2371 = vsel %vm606, %v2322, 0
      %v2374 = vsel %vm606, %v2323, 0
      %v2377 = vsel %vm606, %v2324, 0
      %v2380 = vsel %vm606, %v2325, 0
      %v2383 = vsel %vm1205, %v2327, 0
      %2385 = vmatprep.subr.bf16.mxu0 0
      %2386 = vmatpush1.bf16.msra.mxu0 %v2383
      %2387 = vmatprep.subr.bf16.mxu0 0
      %2388 = vmatpush1.bf16.msra.mxu0 0
      %2389 = vmatprep.subr.bf16.mxu0 0
      %2390 = vmatpush1.bf16.msra.mxu0 0
      %2391 = vmatprep.subr.bf16.mxu0 0
      %2392 = vmatpush1.bf16.msra.mxu0 0
      %2393 = vmatprep.subr.bf16.mxu0 0
      %2394 = vmatpush1.bf16.msra.mxu0 0
      %2395 = vmatprep.subr.bf16.mxu0 0
      %2396 = vmatpush1.bf16.msra.mxu0 0
      %2397 = vmatprep.subr.bf16.mxu0 0
      %2398 = vmatpush1.bf16.msra.mxu0 0
      %2399 = vmatprep.subr.bf16.mxu0 0
      %2400 = vmatpush1.bf16.msra.mxu0 0
      %2401 = vmatprep.subr.bf16.mxu0 0
      %2402 = vmatpush1.bf16.msra.mxu0 0
      %2403 = vmatprep.subr.bf16.mxu0 0
      %2404 = vmatpush1.bf16.msra.mxu0 0
      %2405 = vmatprep.subr.bf16.mxu0 0
      %2406 = vmatpush1.bf16.msra.mxu0 0
      %2407 = vmatprep.subr.bf16.mxu0 0
      %2408 = vmatpush1.bf16.msra.mxu0 0
      %2409 = vmatprep.subr.bf16.mxu0 0
      %2410 = vmatpush1.bf16.msra.mxu0 0
      %2411 = vmatprep.subr.bf16.mxu0 0
      %2412 = vmatpush1.bf16.msra.mxu0 0
      %2413 = vmatprep.subr.bf16.mxu0 0
      %2414 = vmatpush1.bf16.msra.mxu0 0
      %2415 = vmatprep.subr.bf16.mxu0 0
      %2416 = vmatpush1.bf16.msra.mxu0 0
      %2417 = vmatprep.mubr.bf16.mxu0 0
      %2418 = vmatmul.mubr.bf16.gmra.mrb[0].mxu0 %v2329
      %v2419 = vpop.f32.mrb[0].mxu0
      %v2420 = vadd.f32 0.0, %v2419
      %v2421 = vpop.f32.mrb[0].mxu0
      %v2422 = vpop.f32.mrb[0].mxu0
      %v2423 = vadd.f32 0.0, %v2422
      %v2424 = vpop.f32.mrb[0].mxu0
      %2425 = vmatprep.mubr.bf16.mxu0 0
      %2426 = vmatmul.mubr.bf16.gmra.mrb[0].mxu0 %v2332
      %v2427 = vpop.f32.mrb[0].mxu0
      %v2428 = vadd.f32 0.0, %v2427
      %v2429 = vpop.f32.mrb[0].mxu0
      %v2430 = vpop.f32.mrb[0].mxu0
      %v2431 = vadd.f32 0.0, %v2430
      %v2432 = vpop.f32.mrb[0].mxu0
      %2433 = vmatprep.mubr.bf16.mxu0 0
      %2434 = vmatmul.mubr.bf16.gmra.mrb[0].mxu0 %v2335
      %v2435 = vpop.f32.mrb[0].mxu0
      %v2436 = vadd.f32 0.0, %v2435
      %v2437 = vpop.f32.mrb[0].mxu0
      %v2438 = vpop.f32.mrb[0].mxu0
      %v2439 = vadd.f32 0.0, %v2438
      %v2440 = vpop.f32.mrb[0].mxu0
      %2441 = vmatprep.mubr.bf16.mxu0 0
      %2442 = vmatmul.mubr.bf16.gmra.mrb[0].mxu0 %v2338
      %v2443 = vpop.f32.mrb[0].mxu0
      %v2444 = vadd.f32 0.0, %v2443
      %v2445 = vpop.f32.mrb[0].mxu0
      %v2446 = vpop.f32.mrb[0].mxu0
      %v2447 = vadd.f32 0.0, %v2446
      %v2448 = vpop.f32.mrb[0].mxu0
      %2449 = vmatprep.mubr.bf16.mxu0 0
      %2450 = vmatmul.mubr.bf16.gmra.mrb[0].mxu0 %v2341
      %v2451 = vpop.f32.mrb[0].mxu0
      %v2452 = vadd.f32 0.0, %v2451
      %v2453 = vpop.f32.mrb[0].mxu0
      %v2454 = vpop.f32.mrb[0].mxu0
      %v2455 = vadd.f32 0.0, %v2454
      %v2456 = vpop.f32.mrb[0].mxu0
      %2457 = vmatprep.mubr.bf16.mxu0 0
      %2458 = vmatmul.mubr.bf16.gmra.mrb[0].mxu0 %v2344
      %v2459 = vpop.f32.mrb[0].mxu0
      %v2460 = vadd.f32 0.0, %v2459
      %v2461 = vpop.f32.mrb[0].mxu0
      %v2462 = vpop.f32.mrb[0].mxu0
      %v2463 = vadd.f32 0.0, %v2462
      %v2464 = vpop.f32.mrb[0].mxu0
      %2465 = vmatprep.mubr.bf16.mxu0 0
      %2466 = vmatmul.mubr.bf16.gmra.mrb[0].mxu0 %v2347
      %v2467 = vpop.f32.mrb[0].mxu0
      %v2468 = vadd.f32 0.0, %v2467
      %v2469 = vpop.f32.mrb[0].mxu0
      %v2470 = vpop.f32.mrb[0].mxu0
      %v2471 = vadd.f32 0.0, %v2470
      %v2472 = vpop.f32.mrb[0].mxu0
      %2473 = vmatprep.mubr.bf16.mxu0 0
      %2474 = vmatmul.mubr.bf16.gmra.mrb[0].mxu0 %v2350
      %v2475 = vpop.f32.mrb[0].mxu0
      %v2476 = vadd.f32 0.0, %v2475
      %v2477 = vpop.f32.mrb[0].mxu0
      %v2478 = vpop.f32.mrb[0].mxu0
      %v2479 = vadd.f32 0.0, %v2478
      %v2480 = vpop.f32.mrb[0].mxu0
      %2481 = vmatprep.mubr.bf16.mxu0 0
      %2482 = vmatmul.mubr.bf16.gmra.mrb[0].mxu0 %v2353
      %v2483 = vpop.f32.mrb[0].mxu0
      %v2484 = vadd.f32 0.0, %v2483
      %v2485 = vpop.f32.mrb[0].mxu0
      %v2486 = vpop.f32.mrb[0].mxu0
      %v2487 = vadd.f32 0.0, %v2486
      %v2488 = vpop.f32.mrb[0].mxu0
      %2489 = vmatprep.mubr.bf16.mxu0 0
      %2490 = vmatmul.mubr.bf16.gmra.mrb[0].mxu0 %v2356
      %v2491 = vpop.f32.mrb[0].mxu0
      %v2492 = vadd.f32 0.0, %v2491
      %v2493 = vpop.f32.mrb[0].mxu0
      %v2494 = vpop.f32.mrb[0].mxu0
      %v2495 = vadd.f32 0.0, %v2494
      %v2496 = vpop.f32.mrb[0].mxu0
      %2497 = vmatprep.mubr.bf16.mxu0 0
      %2498 = vmatmul.mubr.bf16.gmra.mrb[0].mxu0 %v2359
      %v2499 = vpop.f32.mrb[0].mxu0
      %v2500 = vadd.f32 0.0, %v2499
      %v2501 = vpop.f32.mrb[0].mxu0
      %v2502 = vpop.f32.mrb[0].mxu0
      %v2503 = vadd.f32 0.0, %v2502
      %v2504 = vpop.f32.mrb[0].mxu0
      %2505 = vmatprep.mubr.bf16.mxu0 0
      %2506 = vmatmul.mubr.bf16.gmra.mrb[0].mxu0 %v2362
      %v2507 = vpop.f32.mrb[0].mxu0
      %v2508 = vadd.f32 0.0, %v2507
      %v2509 = vpop.f32.mrb[0].mxu0
      %v2510 = vpop.f32.mrb[0].mxu0
      %v2511 = vadd.f32 0.0, %v2510
      %v2512 = vpop.f32.mrb[0].mxu0
      %2513 = vmatprep.mubr.bf16.mxu0 0
      %2514 = vmatmul.mubr.bf16.gmra.mrb[0].mxu0 %v2365
      %v2515 = vpop.f32.mrb[0].mxu0
      %v2516 = vadd.f32 0.0, %v2515
      %v2517 = vpop.f32.mrb[0].mxu0
      %v2518 = vpop.f32.mrb[0].mxu0
      %v2519 = vadd.f32 0.0, %v2518
      %v2520 = vpop.f32.mrb[0].mxu0
      %2521 = vmatprep.mubr.bf16.mxu0 0
      %2522 = vmatmul.mubr.bf16.gmra.mrb[0].mxu0 %v2368
      %v2523 = vpop.f32.mrb[0].mxu0
      %v2524 = vadd.f32 0.0, %v2523
      %v2525 = vpop.f32.mrb[0].mxu0
      %v2526 = vpop.f32.mrb[0].mxu0
      %v2527 = vadd.f32 0.0, %v2526
      %v2528 = vpop.f32.mrb[0].mxu0
      %2529 = vmatprep.mubr.bf16.mxu0 0
      %2530 = vmatmul.mubr.bf16.gmra.mrb[0].mxu0 %v2371
      %v2531 = vpop.f32.mrb[0].mxu0
      %v2532 = vadd.f32 0.0, %v2531
      %v2533 = vpop.f32.mrb[0].mxu0
      %v2534 = vpop.f32.mrb[0].mxu0
      %v2535 = vadd.f32 0.0, %v2534
      %v2536 = vpop.f32.mrb[0].mxu0
      %2537 = vmatprep.mubr.bf16.mxu0 0
      %2538 = vmatmul.mubr.bf16.gmra.mrb[0].mxu0 %v2374
      %v2539 = vpop.f32.mrb[0].mxu0
      %v2540 = vadd.f32 0.0, %v2539
      %v2541 = vpop.f32.mrb[0].mxu0
      %v2542 = vpop.f32.mrb[0].mxu0
      %v2543 = vadd.f32 0.0, %v2542
      %v2544 = vpop.f32.mrb[0].mxu0
      %2545 = vmatprep.mubr.bf16.mxu0 0
      %2546 = vmatmul.mubr.bf16.gmra.mrb[0].mxu0 %v2377
      %v2547 = vpop.f32.mrb[0].mxu0
      %v2548 = vadd.f32 0.0, %v2547
      %v2549 = vpop.f32.mrb[0].mxu0
      %v2550 = vpop.f32.mrb[0].mxu0
      %v2551 = vadd.f32 0.0, %v2550
      %v2552 = vpop.f32.mrb[0].mxu0
      %2553 = vmatprep.mubr.bf16.mxu0 0
      %2554 = vmatmul.mubr.bf16.gmra.mrb[0].mxu0 %v2380
      %v2555 = vpop.f32.mrb[0].mxu0
      %v2556 = vadd.f32 0.0, %v2555
      %v2557 = vpop.f32.mrb[0].mxu0
      %v2558 = vpop.f32.mrb[0].mxu0
      %v2559 = vadd.f32 0.0, %v2558
      %v2560 = vpop.f32.mrb[0].mxu0
      %2561 = vdwg.mxu0
      %v2562 = vadd.f32 %v2236, %v2420
      %v2563 = vadd.f32 %v2237, %v2423
      %v2564 = vadd.f32 %v2238, %v2428
      %v2565 = vadd.f32 %v2239, %v2431
      %v2566 = vadd.f32 %v2240, %v2436
      %v2567 = vadd.f32 %v2241, %v2439
      %v2568 = vadd.f32 %v2242, %v2444
      %v2569 = vadd.f32 %v2243, %v2447
      %v2570 = vadd.f32 %v2244, %v2452
      %v2571 = vadd.f32 %v2245, %v2455
      %v2572 = vadd.f32 %v2246, %v2460
      %v2573 = vadd.f32 %v2247, %v2463
      %v2574 = vadd.f32 %v2248, %v2468
      %v2575 = vadd.f32 %v2249, %v2471
      %v2576 = vadd.f32 %v2250, %v2476
      %v2577 = vadd.f32 %v2251, %v2479
      %v2578 = vadd.f32 %v2252, %v2484
      %v2579 = vadd.f32 %v2253, %v2487
      %v2580 = vadd.f32 %v2254, %v2492
      %v2581 = vadd.f32 %v2255, %v2495
      %v2582 = vadd.f32 %v2256, %v2500
      %v2583 = vadd.f32 %v2257, %v2503
      %v2584 = vadd.f32 %v2258, %v2508
      %v2585 = vadd.f32 %v2259, %v2511
      %v2586 = vadd.f32 %v2260, %v2516
      %v2587 = vadd.f32 %v2261, %v2519
      %v2588 = vadd.f32 %v2262, %v2524
      %v2589 = vadd.f32 %v2263, %v2527
      %v2590 = vadd.f32 %v2264, %v2532
      %v2591 = vadd.f32 %v2265, %v2535
      %v2592 = vadd.f32 %v2266, %v2540
      %v2593 = vadd.f32 %v2267, %v2543
      %v2594 = vadd.f32 %v2268, %v2548
      %v2595 = vadd.f32 %v2269, %v2551
      %v2596 = vadd.f32 %v2270, %v2556
      %v2597 = vadd.f32 %v2271, %v2559
      %v2598 = vld [vmem:[#allocation2 + $0x14] sm:$0xff]
      %v2599 = vld [vmem:[#allocation2 + $0x1c] sm:$0xff]
      %v2600 = vld [vmem:[#allocation2 + $0x24] sm:$0xff]
      %v2601 = vld [vmem:[#allocation2 + $0x2c] sm:$0xff]
      %v2602 = vld [vmem:[#allocation2 + $0x34] sm:$0xff]
      %v2603 = vld [vmem:[#allocation2 + $0x3c] sm:$0xff]
      %v2604 = vld [vmem:[#allocation2 + $0x44] sm:$0xff]
      %v2605 = vld [vmem:[#allocation2 + $0x4c] sm:$0xff]
      %v2606 = vld [vmem:[#allocation2 + $0x54] sm:$0xff]
      %v2607 = vld [vmem:[#allocation2 + $0x5c] sm:$0xff]
      %v2608 = vld [vmem:[#allocation2 + $0x64] sm:$0xff]
      %v2609 = vld [vmem:[#allocation2 + $0x6c] sm:$0xff]
      %v2610 = vld [vmem:[#allocation2 + $0x74] sm:$0xff]
      %v2611 = vld [vmem:[#allocation2 + $0x7c] sm:$0xff]
      %v2612 = vld [vmem:[#allocation2 + $0x84] sm:$0xff]
      %v2613 = vld [vmem:[#allocation2 + $0x8c] sm:$0xff]
      %v2614 = vld [vmem:[#allocation2 + $0x94] sm:$0xff]
      %v2615 = vld [vmem:[#allocation2 + $0x9c] sm:$0xff]
      %v2616 = vld [vmem:[#allocation2 + $0xa4] sm:$0xff]
      %v2617 = vld [vmem:[#allocation2 + $0xac] sm:$0xff]
      %v2618 = vld [vmem:[#allocation2 + $0xb4] sm:$0xff]
      %v2619 = vld [vmem:[#allocation2 + $0xbc] sm:$0xff]
      %v2620 = vld [vmem:[#allocation2 + $0xc4] sm:$0xff]
      %v2621 = vld [vmem:[#allocation2 + $0xcc] sm:$0xff]
      %v2622 = vld [vmem:[#allocation2 + $0xd4] sm:$0xff]
      %v2623 = vld [vmem:[#allocation2 + $0xdc] sm:$0xff]
      %v2624 = vld [vmem:[#allocation2 + $0xe4] sm:$0xff]
      %v2625 = vld [vmem:[#allocation2 + $0xec] sm:$0xff]
      %v2626 = vld [vmem:[#allocation2 + $0xf4] sm:$0xff]
      %v2627 = vld [vmem:[#allocation2 + $0xfc] sm:$0xff]
      %v2628 = vld [vmem:[#allocation2 + $0x104] sm:$0xff]
      %v2629 = vld [vmem:[#allocation2 + $0x10c] sm:$0xff]
      %v2630 = vld [vmem:[#allocation2 + $0x114] sm:$0xff]
      %v2631 = vld [vmem:[#allocation2 + $0x11c] sm:$0xff]
      %v2632 = vld [vmem:[#allocation2 + $0x124] sm:$0xff]
      %v2633 = vld [vmem:[#allocation2 + $0x12c] sm:$0xff]
      %v2634 = vpack.c.bf16 %v2599, %v2598
      %v2635 = vpack.c.bf16 %v2601, %v2600
      %v2636 = vpack.c.bf16 %v2603, %v2602
      %v2637 = vpack.c.bf16 %v2605, %v2604
      %v2638 = vpack.c.bf16 %v2607, %v2606
      %v2639 = vpack.c.bf16 %v2609, %v2608
      %v2640 = vpack.c.bf16 %v2611, %v2610
      %v2641 = vpack.c.bf16 %v2613, %v2612
      %v2642 = vpack.c.bf16 %v2615, %v2614
      %v2643 = vpack.c.bf16 %v2617, %v2616
      %v2644 = vpack.c.bf16 %v2619, %v2618
      %v2645 = vpack.c.bf16 %v2621, %v2620
      %v2646 = vpack.c.bf16 %v2623, %v2622
      %v2647 = vpack.c.bf16 %v2625, %v2624
      %v2648 = vpack.c.bf16 %v2627, %v2626
      %v2649 = vpack.c.bf16 %v2629, %v2628
      %v2650 = vpack.c.bf16 %v2631, %v2630
      %v2651 = vpack.c.bf16 %v2633, %v2632
      %s2652 = scalar_lea.vmem %s1, 10
      %v2653 = vld [vmem:[%s2652] sm:$0x3]
      %v2655 = vsel %vm606, %v2634, 0
      %v2658 = vsel %vm606, %v2635, 0
      %v2661 = vsel %vm606, %v2636, 0
      %v2664 = vsel %vm606, %v2637, 0
      %v2667 = vsel %vm606, %v2638, 0
      %v2670 = vsel %vm606, %v2639, 0
      %v2673 = vsel %vm606, %v2640, 0
      %v2676 = vsel %vm606, %v2641, 0
      %v2679 = vsel %vm606, %v2642, 0
      %v2682 = vsel %vm606, %v2643, 0
      %v2685 = vsel %vm606, %v2644, 0
      %v2688 = vsel %vm606, %v2645, 0
      %v2691 = vsel %vm606, %v2646, 0
      %v2694 = vsel %vm606, %v2647, 0
      %v2697 = vsel %vm606, %v2648, 0
      %v2700 = vsel %vm606, %v2649, 0
      %v2703 = vsel %vm606, %v2650, 0
      %v2706 = vsel %vm606, %v2651, 0
      %v2709 = vsel %vm1205, %v2653, 0
      %2711 = vmatprep.subr.bf16.mxu0 0
      %2712 = vmatpush1.bf16.msra.mxu0 %v2709
      %2713 = vmatprep.subr.bf16.mxu0 0
      %2714 = vmatpush1.bf16.msra.mxu0 0
      %2715 = vmatprep.subr.bf16.mxu0 0
      %2716 = vmatpush1.bf16.msra.mxu0 0
      %2717 = vmatprep.subr.bf16.mxu0 0
      %2718 = vmatpush1.bf16.msra.mxu0 0
      %2719 = vmatprep.subr.bf16.mxu0 0
      %2720 = vmatpush1.bf16.msra.mxu0 0
      %2721 = vmatprep.subr.bf16.mxu0 0
      %2722 = vmatpush1.bf16.msra.mxu0 0
      %2723 = vmatprep.subr.bf16.mxu0 0
      %2724 = vmatpush1.bf16.msra.mxu0 0
      %2725 = vmatprep.subr.bf16.mxu0 0
      %2726 = vmatpush1.bf16.msra.mxu0 0
      %2727 = vmatprep.subr.bf16.mxu0 0
      %2728 = vmatpush1.bf16.msra.mxu0 0
      %2729 = vmatprep.subr.bf16.mxu0 0
      %2730 = vmatpush1.bf16.msra.mxu0 0
      %2731 = vmatprep.subr.bf16.mxu0 0
      %2732 = vmatpush1.bf16.msra.mxu0 0
      %2733 = vmatprep.subr.bf16.mxu0 0
      %2734 = vmatpush1.bf16.msra.mxu0 0
      %2735 = vmatprep.subr.bf16.mxu0 0
      %2736 = vmatpush1.bf16.msra.mxu0 0
      %2737 = vmatprep.subr.bf16.mxu0 0
      %2738 = vmatpush1.bf16.msra.mxu0 0
      %2739 = vmatprep.subr.bf16.mxu0 0
      %2740 = vmatpush1.bf16.msra.mxu0 0
      %2741 = vmatprep.subr.bf16.mxu0 0
      %2742 = vmatpush1.bf16.msra.mxu0 0
      %2743 = vmatprep.mubr.bf16.mxu0 0
      %2744 = vmatmul.mubr.bf16.gmra.mrb[0].mxu0 %v2655
      %v2745 = vpop.f32.mrb[0].mxu0
      %v2746 = vadd.f32 0.0, %v2745
      %v2747 = vpop.f32.mrb[0].mxu0
      %v2748 = vpop.f32.mrb[0].mxu0
      %v2749 = vadd.f32 0.0, %v2748
      %v2750 = vpop.f32.mrb[0].mxu0
      %2751 = vmatprep.mubr.bf16.mxu0 0
      %2752 = vmatmul.mubr.bf16.gmra.mrb[0].mxu0 %v2658
      %v2753 = vpop.f32.mrb[0].mxu0
      %v2754 = vadd.f32 0.0, %v2753
      %v2755 = vpop.f32.mrb[0].mxu0
      %v2756 = vpop.f32.mrb[0].mxu0
      %v2757 = vadd.f32 0.0, %v2756
      %v2758 = vpop.f32.mrb[0].mxu0
      %2759 = vmatprep.mubr.bf16.mxu0 0
      %2760 = vmatmul.mubr.bf16.gmra.mrb[0].mxu0 %v2661
      %v2761 = vpop.f32.mrb[0].mxu0
      %v2762 = vadd.f32 0.0, %v2761
      %v2763 = vpop.f32.mrb[0].mxu0
      %v2764 = vpop.f32.mrb[0].mxu0
      %v2765 = vadd.f32 0.0, %v2764
      %v2766 = vpop.f32.mrb[0].mxu0
      %2767 = vmatprep.mubr.bf16.mxu0 0
      %2768 = vmatmul.mubr.bf16.gmra.mrb[0].mxu0 %v2664
      %v2769 = vpop.f32.mrb[0].mxu0
      %v2770 = vadd.f32 0.0, %v2769
      %v2771 = vpop.f32.mrb[0].mxu0
      %v2772 = vpop.f32.mrb[0].mxu0
      %v2773 = vadd.f32 0.0, %v2772
      %v2774 = vpop.f32.mrb[0].mxu0
      %2775 = vmatprep.mubr.bf16.mxu0 0
      %2776 = vmatmul.mubr.bf16.gmra.mrb[0].mxu0 %v2667
      %v2777 = vpop.f32.mrb[0].mxu0
      %v2778 = vadd.f32 0.0, %v2777
      %v2779 = vpop.f32.mrb[0].mxu0
      %v2780 = vpop.f32.mrb[0].mxu0
      %v2781 = vadd.f32 0.0, %v2780
      %v2782 = vpop.f32.mrb[0].mxu0
      %2783 = vmatprep.mubr.bf16.mxu0 0
      %2784 = vmatmul.mubr.bf16.gmra.mrb[0].mxu0 %v2670
      %v2785 = vpop.f32.mrb[0].mxu0
      %v2786 = vadd.f32 0.0, %v2785
      %v2787 = vpop.f32.mrb[0].mxu0
      %v2788 = vpop.f32.mrb[0].mxu0
      %v2789 = vadd.f32 0.0, %v2788
      %v2790 = vpop.f32.mrb[0].mxu0
      %2791 = vmatprep.mubr.bf16.mxu0 0
      %2792 = vmatmul.mubr.bf16.gmra.mrb[0].mxu0 %v2673
      %v2793 = vpop.f32.mrb[0].mxu0
      %v2794 = vadd.f32 0.0, %v2793
      %v2795 = vpop.f32.mrb[0].mxu0
      %v2796 = vpop.f32.mrb[0].mxu0
      %v2797 = vadd.f32 0.0, %v2796
      %v2798 = vpop.f32.mrb[0].mxu0
      %2799 = vmatprep.mubr.bf16.mxu0 0
      %2800 = vmatmul.mubr.bf16.gmra.mrb[0].mxu0 %v2676
      %v2801 = vpop.f32.mrb[0].mxu0
      %v2802 = vadd.f32 0.0, %v2801
      %v2803 = vpop.f32.mrb[0].mxu0
      %v2804 = vpop.f32.mrb[0].mxu0
      %v2805 = vadd.f32 0.0, %v2804
      %v2806 = vpop.f32.mrb[0].mxu0
      %2807 = vmatprep.mubr.bf16.mxu0 0
      %2808 = vmatmul.mubr.bf16.gmra.mrb[0].mxu0 %v2679
      %v2809 = vpop.f32.mrb[0].mxu0
      %v2810 = vadd.f32 0.0, %v2809
      %v2811 = vpop.f32.mrb[0].mxu0
      %v2812 = vpop.f32.mrb[0].mxu0
      %v2813 = vadd.f32 0.0, %v2812
      %v2814 = vpop.f32.mrb[0].mxu0
      %2815 = vmatprep.mubr.bf16.mxu0 0
      %2816 = vmatmul.mubr.bf16.gmra.mrb[0].mxu0 %v2682
      %v2817 = vpop.f32.mrb[0].mxu0
      %v2818 = vadd.f32 0.0, %v2817
      %v2819 = vpop.f32.mrb[0].mxu0
      %v2820 = vpop.f32.mrb[0].mxu0
      %v2821 = vadd.f32 0.0, %v2820
      %v2822 = vpop.f32.mrb[0].mxu0
      %2823 = vmatprep.mubr.bf16.mxu0 0
      %2824 = vmatmul.mubr.bf16.gmra.mrb[0].mxu0 %v2685
      %v2825 = vpop.f32.mrb[0].mxu0
      %v2826 = vadd.f32 0.0, %v2825
      %v2827 = vpop.f32.mrb[0].mxu0
      %v2828 = vpop.f32.mrb[0].mxu0
      %v2829 = vadd.f32 0.0, %v2828
      %v2830 = vpop.f32.mrb[0].mxu0
      %2831 = vmatprep.mubr.bf16.mxu0 0
      %2832 = vmatmul.mubr.bf16.gmra.mrb[0].mxu0 %v2688
      %v2833 = vpop.f32.mrb[0].mxu0
      %v2834 = vadd.f32 0.0, %v2833
      %v2835 = vpop.f32.mrb[0].mxu0
      %v2836 = vpop.f32.mrb[0].mxu0
      %v2837 = vadd.f32 0.0, %v2836
      %v2838 = vpop.f32.mrb[0].mxu0
      %2839 = vmatprep.mubr.bf16.mxu0 0
      %2840 = vmatmul.mubr.bf16.gmra.mrb[0].mxu0 %v2691
      %v2841 = vpop.f32.mrb[0].mxu0
      %v2842 = vadd.f32 0.0, %v2841
      %v2843 = vpop.f32.mrb[0].mxu0
      %v2844 = vpop.f32.mrb[0].mxu0
      %v2845 = vadd.f32 0.0, %v2844
      %v2846 = vpop.f32.mrb[0].mxu0
      %2847 = vmatprep.mubr.bf16.mxu0 0
      %2848 = vmatmul.mubr.bf16.gmra.mrb[0].mxu0 %v2694
      %v2849 = vpop.f32.mrb[0].mxu0
      %v2850 = vadd.f32 0.0, %v2849
      %v2851 = vpop.f32.mrb[0].mxu0
      %v2852 = vpop.f32.mrb[0].mxu0
      %v2853 = vadd.f32 0.0, %v2852
      %v2854 = vpop.f32.mrb[0].mxu0
      %2855 = vmatprep.mubr.bf16.mxu0 0
      %2856 = vmatmul.mubr.bf16.gmra.mrb[0].mxu0 %v2697
      %v2857 = vpop.f32.mrb[0].mxu0
      %v2858 = vadd.f32 0.0, %v2857
      %v2859 = vpop.f32.mrb[0].mxu0
      %v2860 = vpop.f32.mrb[0].mxu0
      %v2861 = vadd.f32 0.0, %v2860
      %v2862 = vpop.f32.mrb[0].mxu0
      %2863 = vmatprep.mubr.bf16.mxu0 0
      %2864 = vmatmul.mubr.bf16.gmra.mrb[0].mxu0 %v2700
      %v2865 = vpop.f32.mrb[0].mxu0
      %v2866 = vadd.f32 0.0, %v2865
      %v2867 = vpop.f32.mrb[0].mxu0
      %v2868 = vpop.f32.mrb[0].mxu0
      %v2869 = vadd.f32 0.0, %v2868
      %v2870 = vpop.f32.mrb[0].mxu0
      %2871 = vmatprep.mubr.bf16.mxu0 0
      %2872 = vmatmul.mubr.bf16.gmra.mrb[0].mxu0 %v2703
      %v2873 = vpop.f32.mrb[0].mxu0
      %v2874 = vadd.f32 0.0, %v2873
      %v2875 = vpop.f32.mrb[0].mxu0
      %v2876 = vpop.f32.mrb[0].mxu0
      %v2877 = vadd.f32 0.0, %v2876
      %v2878 = vpop.f32.mrb[0].mxu0
      %2879 = vmatprep.mubr.bf16.mxu0 0
      %2880 = vmatmul.mubr.bf16.gmra.mrb[0].mxu0 %v2706
      %v2881 = vpop.f32.mrb[0].mxu0
      %v2882 = vadd.f32 0.0, %v2881
      %v2883 = vpop.f32.mrb[0].mxu0
      %v2884 = vpop.f32.mrb[0].mxu0
      %v2885 = vadd.f32 0.0, %v2884
      %v2886 = vpop.f32.mrb[0].mxu0
      %2887 = vdwg.mxu0
      %v2888 = vadd.f32 %v2562, %v2746
      %v2889 = vadd.f32 %v2563, %v2749
      %v2890 = vadd.f32 %v2564, %v2754
      %v2891 = vadd.f32 %v2565, %v2757
      %v2892 = vadd.f32 %v2566, %v2762
      %v2893 = vadd.f32 %v2567, %v2765
      %v2894 = vadd.f32 %v2568, %v2770
      %v2895 = vadd.f32 %v2569, %v2773
      %v2896 = vadd.f32 %v2570, %v2778
      %v2897 = vadd.f32 %v2571, %v2781
      %v2898 = vadd.f32 %v2572, %v2786
      %v2899 = vadd.f32 %v2573, %v2789
      %v2900 = vadd.f32 %v2574, %v2794
      %v2901 = vadd.f32 %v2575, %v2797
      %v2902 = vadd.f32 %v2576, %v2802
      %v2903 = vadd.f32 %v2577, %v2805
      %v2904 = vadd.f32 %v2578, %v2810
      %v2905 = vadd.f32 %v2579, %v2813
      %v2906 = vadd.f32 %v2580, %v2818
      %v2907 = vadd.f32 %v2581, %v2821
      %v2908 = vadd.f32 %v2582, %v2826
      %v2909 = vadd.f32 %v2583, %v2829
      %v2910 = vadd.f32 %v2584, %v2834
      %v2911 = vadd.f32 %v2585, %v2837
      %v2912 = vadd.f32 %v2586, %v2842
      %v2913 = vadd.f32 %v2587, %v2845
      %v2914 = vadd.f32 %v2588, %v2850
      %v2915 = vadd.f32 %v2589, %v2853
      %v2916 = vadd.f32 %v2590, %v2858
      %v2917 = vadd.f32 %v2591, %v2861
      %v2918 = vadd.f32 %v2592, %v2866
      %v2919 = vadd.f32 %v2593, %v2869
      %v2920 = vadd.f32 %v2594, %v2874
      %v2921 = vadd.f32 %v2595, %v2877
      %v2922 = vadd.f32 %v2596, %v2882
      %v2923 = vadd.f32 %v2597, %v2885
      %v2924 = vld [vmem:[#allocation2 + $0x24] sm:$0xff]
      %v2925 = vld [vmem:[#allocation2 + $0x2c] sm:$0xff]
      %v2926 = vld [vmem:[#allocation2 + $0x34] sm:$0xff]
      %v2927 = vld [vmem:[#allocation2 + $0x3c] sm:$0xff]
      %v2928 = vld [vmem:[#allocation2 + $0x44] sm:$0xff]
      %v2929 = vld [vmem:[#allocation2 + $0x4c] sm:$0xff]
      %v2930 = vld [vmem:[#allocation2 + $0x54] sm:$0xff]
      %v2931 = vld [vmem:[#allocation2 + $0x5c] sm:$0xff]
      %v2932 = vld [vmem:[#allocation2 + $0x64] sm:$0xff]
      %v2933 = vld [vmem:[#allocation2 + $0x6c] sm:$0xff]
      %v2934 = vld [vmem:[#allocation2 + $0x74] sm:$0xff]
      %v2935 = vld [vmem:[#allocation2 + $0x7c] sm:$0xff]
      %v2936 = vld [vmem:[#allocation2 + $0x84] sm:$0xff]
      %v2937 = vld [vmem:[#allocation2 + $0x8c] sm:$0xff]
      %v2938 = vld [vmem:[#allocation2 + $0x94] sm:$0xff]
      %v2939 = vld [vmem:[#allocation2 + $0x9c] sm:$0xff]
      %v2940 = vld [vmem:[#allocation2 + $0xa4] sm:$0xff]
      %v2941 = vld [vmem:[#allocation2 + $0xac] sm:$0xff]
      %v2942 = vld [vmem:[#allocation2 + $0xb4] sm:$0xff]
      %v2943 = vld [vmem:[#allocation2 + $0xbc] sm:$0xff]
      %v2944 = vld [vmem:[#allocation2 + $0xc4] sm:$0xff]
      %v2945 = vld [vmem:[#allocation2 + $0xcc] sm:$0xff]
      %v2946 = vld [vmem:[#allocation2 + $0xd4] sm:$0xff]
      %v2947 = vld [vmem:[#allocation2 + $0xdc] sm:$0xff]
      %v2948 = vld [vmem:[#allocation2 + $0xe4] sm:$0xff]
      %v2949 = vld [vmem:[#allocation2 + $0xec] sm:$0xff]
      %v2950 = vld [vmem:[#allocation2 + $0xf4] sm:$0xff]
      %v2951 = vld [vmem:[#allocation2 + $0xfc] sm:$0xff]
      %v2952 = vld [vmem:[#allocation2 + $0x104] sm:$0xff]
      %v2953 = vld [vmem:[#allocation2 + $0x10c] sm:$0xff]
      %v2954 = vld [vmem:[#allocation2 + $0x114] sm:$0xff]
      %v2955 = vld [vmem:[#allocation2 + $0x11c] sm:$0xff]
      %v2956 = vld [vmem:[#allocation2 + $0x124] sm:$0xff]
      %v2957 = vld [vmem:[#allocation2 + $0x12c] sm:$0xff]
      %v2958 = vld [vmem:[#allocation2 + $0x134] sm:$0xff]
      %v2959 = vld [vmem:[#allocation2 + $0x13c] sm:$0xff]
      %v2960 = vpack.c.bf16 %v2925, %v2924
      %v2961 = vpack.c.bf16 %v2927, %v2926
      %v2962 = vpack.c.bf16 %v2929, %v2928
      %v2963 = vpack.c.bf16 %v2931, %v2930
      %v2964 = vpack.c.bf16 %v2933, %v2932
      %v2965 = vpack.c.bf16 %v2935, %v2934
      %v2966 = vpack.c.bf16 %v2937, %v2936
      %v2967 = vpack.c.bf16 %v2939, %v2938
      %v2968 = vpack.c.bf16 %v2941, %v2940
      %v2969 = vpack.c.bf16 %v2943, %v2942
      %v2970 = vpack.c.bf16 %v2945, %v2944
      %v2971 = vpack.c.bf16 %v2947, %v2946
      %v2972 = vpack.c.bf16 %v2949, %v2948
      %v2973 = vpack.c.bf16 %v2951, %v2950
      %v2974 = vpack.c.bf16 %v2953, %v2952
      %v2975 = vpack.c.bf16 %v2955, %v2954
      %v2976 = vpack.c.bf16 %v2957, %v2956
      %v2977 = vpack.c.bf16 %v2959, %v2958
      %s2978 = scalar_lea.vmem %s1, 12
      %v2979 = vld [vmem:[%s2978] sm:$0x3]
      %v2981 = vsel %vm606, %v2960, 0
      %v2984 = vsel %vm606, %v2961, 0
      %v2987 = vsel %vm606, %v2962, 0
      %v2990 = vsel %vm606, %v2963, 0
      %v2993 = vsel %vm606, %v2964, 0
      %v2996 = vsel %vm606, %v2965, 0
      %v2999 = vsel %vm606, %v2966, 0
      %v3002 = vsel %vm606, %v2967, 0
      %v3005 = vsel %vm606, %v2968, 0
      %v3008 = vsel %vm606, %v2969, 0
      %v3011 = vsel %vm606, %v2970, 0
      %v3014 = vsel %vm606, %v2971, 0
      %v3017 = vsel %vm606, %v2972, 0
      %v3020 = vsel %vm606, %v2973, 0
      %v3023 = vsel %vm606, %v2974, 0
      %v3026 = vsel %vm606, %v2975, 0
      %v3029 = vsel %vm606, %v2976, 0
      %v3032 = vsel %vm606, %v2977, 0
      %v3035 = vsel %vm1205, %v2979, 0
      %3037 = vmatprep.subr.bf16.mxu0 0
      %3038 = vmatpush1.bf16.msra.mxu0 %v3035
      %3039 = vmatprep.subr.bf16.mxu0 0
      %3040 = vmatpush1.bf16.msra.mxu0 0
      %3041 = vmatprep.subr.bf16.mxu0 0
      %3042 = vmatpush1.bf16.msra.mxu0 0
      %3043 = vmatprep.subr.bf16.mxu0 0
      %3044 = vmatpush1.bf16.msra.mxu0 0
      %3045 = vmatprep.subr.bf16.mxu0 0
      %3046 = vmatpush1.bf16.msra.mxu0 0
      %3047 = vmatprep.subr.bf16.mxu0 0
      %3048 = vmatpush1.bf16.msra.mxu0 0
      %3049 = vmatprep.subr.bf16.mxu0 0
      %3050 = vmatpush1.bf16.msra.mxu0 0
      %3051 = vmatprep.subr.bf16.mxu0 0
      %3052 = vmatpush1.bf16.msra.mxu0 0
      %3053 = vmatprep.subr.bf16.mxu0 0
      %3054 = vmatpush1.bf16.msra.mxu0 0
      %3055 = vmatprep.subr.bf16.mxu0 0
      %3056 = vmatpush1.bf16.msra.mxu0 0
      %3057 = vmatprep.subr.bf16.mxu0 0
      %3058 = vmatpush1.bf16.msra.mxu0 0
      %3059 = vmatprep.subr.bf16.mxu0 0
      %3060 = vmatpush1.bf16.msra.mxu0 0
      %3061 = vmatprep.subr.bf16.mxu0 0
      %3062 = vmatpush1.bf16.msra.mxu0 0
      %3063 = vmatprep.subr.bf16.mxu0 0
      %3064 = vmatpush1.bf16.msra.mxu0 0
      %3065 = vmatprep.subr.bf16.mxu0 0
      %3066 = vmatpush1.bf16.msra.mxu0 0
      %3067 = vmatprep.subr.bf16.mxu0 0
      %3068 = vmatpush1.bf16.msra.mxu0 0
      %3069 = vmatprep.mubr.bf16.mxu0 0
      %3070 = vmatmul.mubr.bf16.gmra.mrb[0].mxu0 %v2981
      %v3071 = vpop.f32.mrb[0].mxu0
      %v3072 = vadd.f32 0.0, %v3071
      %v3073 = vpop.f32.mrb[0].mxu0
      %v3074 = vpop.f32.mrb[0].mxu0
      %v3075 = vadd.f32 0.0, %v3074
      %v3076 = vpop.f32.mrb[0].mxu0
      %3077 = vmatprep.mubr.bf16.mxu0 0
      %3078 = vmatmul.mubr.bf16.gmra.mrb[0].mxu0 %v2984
      %v3079 = vpop.f32.mrb[0].mxu0
      %v3080 = vadd.f32 0.0, %v3079
      %v3081 = vpop.f32.mrb[0].mxu0
      %v3082 = vpop.f32.mrb[0].mxu0
      %v3083 = vadd.f32 0.0, %v3082
      %v3084 = vpop.f32.mrb[0].mxu0
      %3085 = vmatprep.mubr.bf16.mxu0 0
      %3086 = vmatmul.mubr.bf16.gmra.mrb[0].mxu0 %v2987
      %v3087 = vpop.f32.mrb[0].mxu0
      %v3088 = vadd.f32 0.0, %v3087
      %v3089 = vpop.f32.mrb[0].mxu0
      %v3090 = vpop.f32.mrb[0].mxu0
      %v3091 = vadd.f32 0.0, %v3090
      %v3092 = vpop.f32.mrb[0].mxu0
      %3093 = vmatprep.mubr.bf16.mxu0 0
      %3094 = vmatmul.mubr.bf16.gmra.mrb[0].mxu0 %v2990
      %v3095 = vpop.f32.mrb[0].mxu0
      %v3096 = vadd.f32 0.0, %v3095
      %v3097 = vpop.f32.mrb[0].mxu0
      %v3098 = vpop.f32.mrb[0].mxu0
      %v3099 = vadd.f32 0.0, %v3098
      %v3100 = vpop.f32.mrb[0].mxu0
      %3101 = vmatprep.mubr.bf16.mxu0 0
      %3102 = vmatmul.mubr.bf16.gmra.mrb[0].mxu0 %v2993
      %v3103 = vpop.f32.mrb[0].mxu0
      %v3104 = vadd.f32 0.0, %v3103
      %v3105 = vpop.f32.mrb[0].mxu0
      %v3106 = vpop.f32.mrb[0].mxu0
      %v3107 = vadd.f32 0.0, %v3106
      %v3108 = vpop.f32.mrb[0].mxu0
      %3109 = vmatprep.mubr.bf16.mxu0 0
      %3110 = vmatmul.mubr.bf16.gmra.mrb[0].mxu0 %v2996
      %v3111 = vpop.f32.mrb[0].mxu0
      %v3112 = vadd.f32 0.0, %v3111
      %v3113 = vpop.f32.mrb[0].mxu0
      %v3114 = vpop.f32.mrb[0].mxu0
      %v3115 = vadd.f32 0.0, %v3114
      %v3116 = vpop.f32.mrb[0].mxu0
      %3117 = vmatprep.mubr.bf16.mxu0 0
      %3118 = vmatmul.mubr.bf16.gmra.mrb[0].mxu0 %v2999
      %v3119 = vpop.f32.mrb[0].mxu0
      %v3120 = vadd.f32 0.0, %v3119
      %v3121 = vpop.f32.mrb[0].mxu0
      %v3122 = vpop.f32.mrb[0].mxu0
      %v3123 = vadd.f32 0.0, %v3122
      %v3124 = vpop.f32.mrb[0].mxu0
      %3125 = vmatprep.mubr.bf16.mxu0 0
      %3126 = vmatmul.mubr.bf16.gmra.mrb[0].mxu0 %v3002
      %v3127 = vpop.f32.mrb[0].mxu0
      %v3128 = vadd.f32 0.0, %v3127
      %v3129 = vpop.f32.mrb[0].mxu0
      %v3130 = vpop.f32.mrb[0].mxu0
      %v3131 = vadd.f32 0.0, %v3130
      %v3132 = vpop.f32.mrb[0].mxu0
      %3133 = vmatprep.mubr.bf16.mxu0 0
      %3134 = vmatmul.mubr.bf16.gmra.mrb[0].mxu0 %v3005
      %v3135 = vpop.f32.mrb[0].mxu0
      %v3136 = vadd.f32 0.0, %v3135
      %v3137 = vpop.f32.mrb[0].mxu0
      %v3138 = vpop.f32.mrb[0].mxu0
      %v3139 = vadd.f32 0.0, %v3138
      %v3140 = vpop.f32.mrb[0].mxu0
      %3141 = vmatprep.mubr.bf16.mxu0 0
      %3142 = vmatmul.mubr.bf16.gmra.mrb[0].mxu0 %v3008
      %v3143 = vpop.f32.mrb[0].mxu0
      %v3144 = vadd.f32 0.0, %v3143
      %v3145 = vpop.f32.mrb[0].mxu0
      %v3146 = vpop.f32.mrb[0].mxu0
      %v3147 = vadd.f32 0.0, %v3146
      %v3148 = vpop.f32.mrb[0].mxu0
      %3149 = vmatprep.mubr.bf16.mxu0 0
      %3150 = vmatmul.mubr.bf16.gmra.mrb[0].mxu0 %v3011
      %v3151 = vpop.f32.mrb[0].mxu0
      %v3152 = vadd.f32 0.0, %v3151
      %v3153 = vpop.f32.mrb[0].mxu0
      %v3154 = vpop.f32.mrb[0].mxu0
      %v3155 = vadd.f32 0.0, %v3154
      %v3156 = vpop.f32.mrb[0].mxu0
      %3157 = vmatprep.mubr.bf16.mxu0 0
      %3158 = vmatmul.mubr.bf16.gmra.mrb[0].mxu0 %v3014
      %v3159 = vpop.f32.mrb[0].mxu0
      %v3160 = vadd.f32 0.0, %v3159
      %v3161 = vpop.f32.mrb[0].mxu0
      %v3162 = vpop.f32.mrb[0].mxu0
      %v3163 = vadd.f32 0.0, %v3162
      %v3164 = vpop.f32.mrb[0].mxu0
      %3165 = vmatprep.mubr.bf16.mxu0 0
      %3166 = vmatmul.mubr.bf16.gmra.mrb[0].mxu0 %v3017
      %v3167 = vpop.f32.mrb[0].mxu0
      %v3168 = vadd.f32 0.0, %v3167
      %v3169 = vpop.f32.mrb[0].mxu0
      %v3170 = vpop.f32.mrb[0].mxu0
      %v3171 = vadd.f32 0.0, %v3170
      %v3172 = vpop.f32.mrb[0].mxu0
      %3173 = vmatprep.mubr.bf16.mxu0 0
      %3174 = vmatmul.mubr.bf16.gmra.mrb[0].mxu0 %v3020
      %v3175 = vpop.f32.mrb[0].mxu0
      %v3176 = vadd.f32 0.0, %v3175
      %v3177 = vpop.f32.mrb[0].mxu0
      %v3178 = vpop.f32.mrb[0].mxu0
      %v3179 = vadd.f32 0.0, %v3178
      %v3180 = vpop.f32.mrb[0].mxu0
      %3181 = vmatprep.mubr.bf16.mxu0 0
      %3182 = vmatmul.mubr.bf16.gmra.mrb[0].mxu0 %v3023
      %v3183 = vpop.f32.mrb[0].mxu0
      %v3184 = vadd.f32 0.0, %v3183
      %v3185 = vpop.f32.mrb[0].mxu0
      %v3186 = vpop.f32.mrb[0].mxu0
      %v3187 = vadd.f32 0.0, %v3186
      %v3188 = vpop.f32.mrb[0].mxu0
      %3189 = vmatprep.mubr.bf16.mxu0 0
      %3190 = vmatmul.mubr.bf16.gmra.mrb[0].mxu0 %v3026
      %v3191 = vpop.f32.mrb[0].mxu0
      %v3192 = vadd.f32 0.0, %v3191
      %v3193 = vpop.f32.mrb[0].mxu0
      %v3194 = vpop.f32.mrb[0].mxu0
      %v3195 = vadd.f32 0.0, %v3194
      %v3196 = vpop.f32.mrb[0].mxu0
      %3197 = vmatprep.mubr.bf16.mxu0 0
      %3198 = vmatmul.mubr.bf16.gmra.mrb[0].mxu0 %v3029
      %v3199 = vpop.f32.mrb[0].mxu0
      %v3200 = vadd.f32 0.0, %v3199
      %v3201 = vpop.f32.mrb[0].mxu0
      %v3202 = vpop.f32.mrb[0].mxu0
      %v3203 = vadd.f32 0.0, %v3202
      %v3204 = vpop.f32.mrb[0].mxu0
      %3205 = vmatprep.mubr.bf16.mxu0 0
      %3206 = vmatmul.mubr.bf16.gmra.mrb[0].mxu0 %v3032
      %v3207 = vpop.f32.mrb[0].mxu0
      %v3208 = vadd.f32 0.0, %v3207
      %v3209 = vpop.f32.mrb[0].mxu0
      %v3210 = vpop.f32.mrb[0].mxu0
      %v3211 = vadd.f32 0.0, %v3210
      %v3212 = vpop.f32.mrb[0].mxu0
      %3213 = vdwg.mxu0
      %v3214 = vadd.f32 %v2888, %v3072
      %v3215 = vadd.f32 %v2889, %v3075
      %v3216 = vadd.f32 %v2890, %v3080
      %v3217 = vadd.f32 %v2891, %v3083
      %v3218 = vadd.f32 %v2892, %v3088
      %v3219 = vadd.f32 %v2893, %v3091
      %v3220 = vadd.f32 %v2894, %v3096
      %v3221 = vadd.f32 %v2895, %v3099
      %v3222 = vadd.f32 %v2896, %v3104
      %v3223 = vadd.f32 %v2897, %v3107
      %v3224 = vadd.f32 %v2898, %v3112
      %v3225 = vadd.f32 %v2899, %v3115
      %v3226 = vadd.f32 %v2900, %v3120
      %v3227 = vadd.f32 %v2901, %v3123
      %v3228 = vadd.f32 %v2902, %v3128
      %v3229 = vadd.f32 %v2903, %v3131
      %v3230 = vadd.f32 %v2904, %v3136
      %v3231 = vadd.f32 %v2905, %v3139
      %v3232 = vadd.f32 %v2906, %v3144
      %v3233 = vadd.f32 %v2907, %v3147
      %v3234 = vadd.f32 %v2908, %v3152
      %v3235 = vadd.f32 %v2909, %v3155
      %v3236 = vadd.f32 %v2910, %v3160
      %v3237 = vadd.f32 %v2911, %v3163
      %v3238 = vadd.f32 %v2912, %v3168
      %v3239 = vadd.f32 %v2913, %v3171
      %v3240 = vadd.f32 %v2914, %v3176
      %v3241 = vadd.f32 %v2915, %v3179
      %v3242 = vadd.f32 %v2916, %v3184
      %v3243 = vadd.f32 %v2917, %v3187
      %v3244 = vadd.f32 %v2918, %v3192
      %v3245 = vadd.f32 %v2919, %v3195
      %v3246 = vadd.f32 %v2920, %v3200
      %v3247 = vadd.f32 %v2921, %v3203
      %v3248 = vadd.f32 %v2922, %v3208
      %v3249 = vadd.f32 %v2923, %v3211
      %v3250 = vld [vmem:[#allocation2 + $0x25] sm:$0xff]
      %v3251 = vld [vmem:[#allocation2 + $0x2d] sm:$0xff]
      %v3252 = vld [vmem:[#allocation2 + $0x35] sm:$0xff]
      %v3253 = vld [vmem:[#allocation2 + $0x3d] sm:$0xff]
      %v3254 = vld [vmem:[#allocation2 + $0x45] sm:$0xff]
      %v3255 = vld [vmem:[#allocation2 + $0x4d] sm:$0xff]
      %v3256 = vld [vmem:[#allocation2 + $0x55] sm:$0xff]
      %v3257 = vld [vmem:[#allocation2 + $0x5d] sm:$0xff]
      %v3258 = vld [vmem:[#allocation2 + $0x65] sm:$0xff]
      %v3259 = vld [vmem:[#allocation2 + $0x6d] sm:$0xff]
      %v3260 = vld [vmem:[#allocation2 + $0x75] sm:$0xff]
      %v3261 = vld [vmem:[#allocation2 + $0x7d] sm:$0xff]
      %v3262 = vld [vmem:[#allocation2 + $0x85] sm:$0xff]
      %v3263 = vld [vmem:[#allocation2 + $0x8d] sm:$0xff]
      %v3264 = vld [vmem:[#allocation2 + $0x95] sm:$0xff]
      %v3265 = vld [vmem:[#allocation2 + $0x9d] sm:$0xff]
      %v3266 = vld [vmem:[#allocation2 + $0xa5] sm:$0xff]
      %v3267 = vld [vmem:[#allocation2 + $0xad] sm:$0xff]
      %v3268 = vld [vmem:[#allocation2 + $0xb5] sm:$0xff]
      %v3269 = vld [vmem:[#allocation2 + $0xbd] sm:$0xff]
      %v3270 = vld [vmem:[#allocation2 + $0xc5] sm:$0xff]
      %v3271 = vld [vmem:[#allocation2 + $0xcd] sm:$0xff]
      %v3272 = vld [vmem:[#allocation2 + $0xd5] sm:$0xff]
      %v3273 = vld [vmem:[#allocation2 + $0xdd] sm:$0xff]
      %v3274 = vld [vmem:[#allocation2 + $0xe5] sm:$0xff]
      %v3275 = vld [vmem:[#allocation2 + $0xed] sm:$0xff]
      %v3276 = vld [vmem:[#allocation2 + $0xf5] sm:$0xff]
      %v3277 = vld [vmem:[#allocation2 + $0xfd] sm:$0xff]
      %v3278 = vld [vmem:[#allocation2 + $0x105] sm:$0xff]
      %v3279 = vld [vmem:[#allocation2 + $0x10d] sm:$0xff]
      %v3280 = vld [vmem:[#allocation2 + $0x115] sm:$0xff]
      %v3281 = vld [vmem:[#allocation2 + $0x11d] sm:$0xff]
      %v3282 = vld [vmem:[#allocation2 + $0x125] sm:$0xff]
      %v3283 = vld [vmem:[#allocation2 + $0x12d] sm:$0xff]
      %v3284 = vld [vmem:[#allocation2 + $0x135] sm:$0xff]
      %v3285 = vld [vmem:[#allocation2 + $0x13d] sm:$0xff]
      %v3286 = vpack.c.bf16 %v3251, %v3250
      %v3287 = vpack.c.bf16 %v3253, %v3252
      %v3288 = vpack.c.bf16 %v3255, %v3254
      %v3289 = vpack.c.bf16 %v3257, %v3256
      %v3290 = vpack.c.bf16 %v3259, %v3258
      %v3291 = vpack.c.bf16 %v3261, %v3260
      %v3292 = vpack.c.bf16 %v3263, %v3262
      %v3293 = vpack.c.bf16 %v3265, %v3264
      %v3294 = vpack.c.bf16 %v3267, %v3266
      %v3295 = vpack.c.bf16 %v3269, %v3268
      %v3296 = vpack.c.bf16 %v3271, %v3270
      %v3297 = vpack.c.bf16 %v3273, %v3272
      %v3298 = vpack.c.bf16 %v3275, %v3274
      %v3299 = vpack.c.bf16 %v3277, %v3276
      %v3300 = vpack.c.bf16 %v3279, %v3278
      %v3301 = vpack.c.bf16 %v3281, %v3280
      %v3302 = vpack.c.bf16 %v3283, %v3282
      %v3303 = vpack.c.bf16 %v3285, %v3284
      %s3304 = scalar_lea.vmem %s1, 14
      %v3305 = vld [vmem:[%s3304] sm:$0x3]
      %v3307 = vsel %vm606, %v3286, 0
      %v3310 = vsel %vm606, %v3287, 0
      %v3313 = vsel %vm606, %v3288, 0
      %v3316 = vsel %vm606, %v3289, 0
      %v3319 = vsel %vm606, %v3290, 0
      %v3322 = vsel %vm606, %v3291, 0
      %v3325 = vsel %vm606, %v3292, 0
      %v3328 = vsel %vm606, %v3293, 0
      %v3331 = vsel %vm606, %v3294, 0
      %v3334 = vsel %vm606, %v3295, 0
      %v3337 = vsel %vm606, %v3296, 0
      %v3340 = vsel %vm606, %v3297, 0
      %v3343 = vsel %vm606, %v3298, 0
      %v3346 = vsel %vm606, %v3299, 0
      %v3349 = vsel %vm606, %v3300, 0
      %v3352 = vsel %vm606, %v3301, 0
      %v3355 = vsel %vm606, %v3302, 0
      %v3358 = vsel %vm606, %v3303, 0
      %v3361 = vsel %vm1205, %v3305, 0
      %3363 = vmatprep.subr.bf16.mxu0 0
      %3364 = vmatpush1.bf16.msra.mxu0 %v3361
      %3365 = vmatprep.subr.bf16.mxu0 0
      %3366 = vmatpush1.bf16.msra.mxu0 0
      %3367 = vmatprep.subr.bf16.mxu0 0
      %3368 = vmatpush1.bf16.msra.mxu0 0
      %3369 = vmatprep.subr.bf16.mxu0 0
      %3370 = vmatpush1.bf16.msra.mxu0 0
      %3371 = vmatprep.subr.bf16.mxu0 0
      %3372 = vmatpush1.bf16.msra.mxu0 0
      %3373 = vmatprep.subr.bf16.mxu0 0
      %3374 = vmatpush1.bf16.msra.mxu0 0
      %3375 = vmatprep.subr.bf16.mxu0 0
      %3376 = vmatpush1.bf16.msra.mxu0 0
      %3377 = vmatprep.subr.bf16.mxu0 0
      %3378 = vmatpush1.bf16.msra.mxu0 0
      %3379 = vmatprep.subr.bf16.mxu0 0
      %3380 = vmatpush1.bf16.msra.mxu0 0
      %3381 = vmatprep.subr.bf16.mxu0 0
      %3382 = vmatpush1.bf16.msra.mxu0 0
      %3383 = vmatprep.subr.bf16.mxu0 0
      %3384 = vmatpush1.bf16.msra.mxu0 0
      %3385 = vmatprep.subr.bf16.mxu0 0
      %3386 = vmatpush1.bf16.msra.mxu0 0
      %3387 = vmatprep.subr.bf16.mxu0 0
      %3388 = vmatpush1.bf16.msra.mxu0 0
      %3389 = vmatprep.subr.bf16.mxu0 0
      %3390 = vmatpush1.bf16.msra.mxu0 0
      %3391 = vmatprep.subr.bf16.mxu0 0
      %3392 = vmatpush1.bf16.msra.mxu0 0
      %3393 = vmatprep.subr.bf16.mxu0 0
      %3394 = vmatpush1.bf16.msra.mxu0 0
      %3395 = vmatprep.mubr.bf16.mxu0 0
      %3396 = vmatmul.mubr.bf16.gmra.mrb[0].mxu0 %v3307
      %v3397 = vpop.f32.mrb[0].mxu0
      %v3398 = vadd.f32 0.0, %v3397
      %v3399 = vpop.f32.mrb[0].mxu0
      %v3400 = vpop.f32.mrb[0].mxu0
      %v3401 = vadd.f32 0.0, %v3400
      %v3402 = vpop.f32.mrb[0].mxu0
      %3403 = vmatprep.mubr.bf16.mxu0 0
      %3404 = vmatmul.mubr.bf16.gmra.mrb[0].mxu0 %v3310
      %v3405 = vpop.f32.mrb[0].mxu0
      %v3406 = vadd.f32 0.0, %v3405
      %v3407 = vpop.f32.mrb[0].mxu0
      %v3408 = vpop.f32.mrb[0].mxu0
      %v3409 = vadd.f32 0.0, %v3408
      %v3410 = vpop.f32.mrb[0].mxu0
      %3411 = vmatprep.mubr.bf16.mxu0 0
      %3412 = vmatmul.mubr.bf16.gmra.mrb[0].mxu0 %v3313
      %v3413 = vpop.f32.mrb[0].mxu0
      %v3414 = vadd.f32 0.0, %v3413
      %v3415 = vpop.f32.mrb[0].mxu0
      %v3416 = vpop.f32.mrb[0].mxu0
      %v3417 = vadd.f32 0.0, %v3416
      %v3418 = vpop.f32.mrb[0].mxu0
      %3419 = vmatprep.mubr.bf16.mxu0 0
      %3420 = vmatmul.mubr.bf16.gmra.mrb[0].mxu0 %v3316
      %v3421 = vpop.f32.mrb[0].mxu0
      %v3422 = vadd.f32 0.0, %v3421
      %v3423 = vpop.f32.mrb[0].mxu0
      %v3424 = vpop.f32.mrb[0].mxu0
      %v3425 = vadd.f32 0.0, %v3424
      %v3426 = vpop.f32.mrb[0].mxu0
      %3427 = vmatprep.mubr.bf16.mxu0 0
      %3428 = vmatmul.mubr.bf16.gmra.mrb[0].mxu0 %v3319
      %v3429 = vpop.f32.mrb[0].mxu0
      %v3430 = vadd.f32 0.0, %v3429
      %v3431 = vpop.f32.mrb[0].mxu0
      %v3432 = vpop.f32.mrb[0].mxu0
      %v3433 = vadd.f32 0.0, %v3432
      %v3434 = vpop.f32.mrb[0].mxu0
      %3435 = vmatprep.mubr.bf16.mxu0 0
      %3436 = vmatmul.mubr.bf16.gmra.mrb[0].mxu0 %v3322
      %v3437 = vpop.f32.mrb[0].mxu0
      %v3438 = vadd.f32 0.0, %v3437
      %v3439 = vpop.f32.mrb[0].mxu0
      %v3440 = vpop.f32.mrb[0].mxu0
      %v3441 = vadd.f32 0.0, %v3440
      %v3442 = vpop.f32.mrb[0].mxu0
      %3443 = vmatprep.mubr.bf16.mxu0 0
      %3444 = vmatmul.mubr.bf16.gmra.mrb[0].mxu0 %v3325
      %v3445 = vpop.f32.mrb[0].mxu0
      %v3446 = vadd.f32 0.0, %v3445
      %v3447 = vpop.f32.mrb[0].mxu0
      %v3448 = vpop.f32.mrb[0].mxu0
      %v3449 = vadd.f32 0.0, %v3448
      %v3450 = vpop.f32.mrb[0].mxu0
      %3451 = vmatprep.mubr.bf16.mxu0 0
      %3452 = vmatmul.mubr.bf16.gmra.mrb[0].mxu0 %v3328
      %v3453 = vpop.f32.mrb[0].mxu0
      %v3454 = vadd.f32 0.0, %v3453
      %v3455 = vpop.f32.mrb[0].mxu0
      %v3456 = vpop.f32.mrb[0].mxu0
      %v3457 = vadd.f32 0.0, %v3456
      %v3458 = vpop.f32.mrb[0].mxu0
      %3459 = vmatprep.mubr.bf16.mxu0 0
      %3460 = vmatmul.mubr.bf16.gmra.mrb[0].mxu0 %v3331
      %v3461 = vpop.f32.mrb[0].mxu0
      %v3462 = vadd.f32 0.0, %v3461
      %v3463 = vpop.f32.mrb[0].mxu0
      %v3464 = vpop.f32.mrb[0].mxu0
      %v3465 = vadd.f32 0.0, %v3464
      %v3466 = vpop.f32.mrb[0].mxu0
      %3467 = vmatprep.mubr.bf16.mxu0 0
      %3468 = vmatmul.mubr.bf16.gmra.mrb[0].mxu0 %v3334
      %v3469 = vpop.f32.mrb[0].mxu0
      %v3470 = vadd.f32 0.0, %v3469
      %v3471 = vpop.f32.mrb[0].mxu0
      %v3472 = vpop.f32.mrb[0].mxu0
      %v3473 = vadd.f32 0.0, %v3472
      %v3474 = vpop.f32.mrb[0].mxu0
      %3475 = vmatprep.mubr.bf16.mxu0 0
      %3476 = vmatmul.mubr.bf16.gmra.mrb[0].mxu0 %v3337
      %v3477 = vpop.f32.mrb[0].mxu0
      %v3478 = vadd.f32 0.0, %v3477
      %v3479 = vpop.f32.mrb[0].mxu0
      %v3480 = vpop.f32.mrb[0].mxu0
      %v3481 = vadd.f32 0.0, %v3480
      %v3482 = vpop.f32.mrb[0].mxu0
      %3483 = vmatprep.mubr.bf16.mxu0 0
      %3484 = vmatmul.mubr.bf16.gmra.mrb[0].mxu0 %v3340
      %v3485 = vpop.f32.mrb[0].mxu0
      %v3486 = vadd.f32 0.0, %v3485
      %v3487 = vpop.f32.mrb[0].mxu0
      %v3488 = vpop.f32.mrb[0].mxu0
      %v3489 = vadd.f32 0.0, %v3488
      %v3490 = vpop.f32.mrb[0].mxu0
      %3491 = vmatprep.mubr.bf16.mxu0 0
      %3492 = vmatmul.mubr.bf16.gmra.mrb[0].mxu0 %v3343
      %v3493 = vpop.f32.mrb[0].mxu0
      %v3494 = vadd.f32 0.0, %v3493
      %v3495 = vpop.f32.mrb[0].mxu0
      %v3496 = vpop.f32.mrb[0].mxu0
      %v3497 = vadd.f32 0.0, %v3496
      %v3498 = vpop.f32.mrb[0].mxu0
      %3499 = vmatprep.mubr.bf16.mxu0 0
      %3500 = vmatmul.mubr.bf16.gmra.mrb[0].mxu0 %v3346
      %v3501 = vpop.f32.mrb[0].mxu0
      %v3502 = vadd.f32 0.0, %v3501
      %v3503 = vpop.f32.mrb[0].mxu0
      %v3504 = vpop.f32.mrb[0].mxu0
      %v3505 = vadd.f32 0.0, %v3504
      %v3506 = vpop.f32.mrb[0].mxu0
      %3507 = vmatprep.mubr.bf16.mxu0 0
      %3508 = vmatmul.mubr.bf16.gmra.mrb[0].mxu0 %v3349
      %v3509 = vpop.f32.mrb[0].mxu0
      %v3510 = vadd.f32 0.0, %v3509
      %v3511 = vpop.f32.mrb[0].mxu0
      %v3512 = vpop.f32.mrb[0].mxu0
      %v3513 = vadd.f32 0.0, %v3512
      %v3514 = vpop.f32.mrb[0].mxu0
      %3515 = vmatprep.mubr.bf16.mxu0 0
      %3516 = vmatmul.mubr.bf16.gmra.mrb[0].mxu0 %v3352
      %v3517 = vpop.f32.mrb[0].mxu0
      %v3518 = vadd.f32 0.0, %v3517
      %v3519 = vpop.f32.mrb[0].mxu0
      %v3520 = vpop.f32.mrb[0].mxu0
      %v3521 = vadd.f32 0.0, %v3520
      %v3522 = vpop.f32.mrb[0].mxu0
      %3523 = vmatprep.mubr.bf16.mxu0 0
      %3524 = vmatmul.mubr.bf16.gmra.mrb[0].mxu0 %v3355
      %v3525 = vpop.f32.mrb[0].mxu0
      %v3526 = vadd.f32 0.0, %v3525
      %v3527 = vpop.f32.mrb[0].mxu0
      %v3528 = vpop.f32.mrb[0].mxu0
      %v3529 = vadd.f32 0.0, %v3528
      %v3530 = vpop.f32.mrb[0].mxu0
      %3531 = vmatprep.mubr.bf16.mxu0 0
      %3532 = vmatmul.mubr.bf16.gmra.mrb[0].mxu0 %v3358
      %v3533 = vpop.f32.mrb[0].mxu0
      %v3534 = vadd.f32 0.0, %v3533
      %v3535 = vpop.f32.mrb[0].mxu0
      %v3536 = vpop.f32.mrb[0].mxu0
      %v3537 = vadd.f32 0.0, %v3536
      %v3538 = vpop.f32.mrb[0].mxu0
      %3539 = vdwg.mxu0
      %v3540 = vadd.f32 %v3214, %v3398
      %v3541 = vadd.f32 %v3215, %v3401
      %v3542 = vadd.f32 %v3216, %v3406
      %v3543 = vadd.f32 %v3217, %v3409
      %v3544 = vadd.f32 %v3218, %v3414
      %v3545 = vadd.f32 %v3219, %v3417
      %v3546 = vadd.f32 %v3220, %v3422
      %v3547 = vadd.f32 %v3221, %v3425
      %v3548 = vadd.f32 %v3222, %v3430
      %v3549 = vadd.f32 %v3223, %v3433
      %v3550 = vadd.f32 %v3224, %v3438
      %v3551 = vadd.f32 %v3225, %v3441
      %v3552 = vadd.f32 %v3226, %v3446
      %v3553 = vadd.f32 %v3227, %v3449
      %v3554 = vadd.f32 %v3228, %v3454
      %v3555 = vadd.f32 %v3229, %v3457
      %v3556 = vadd.f32 %v3230, %v3462
      %v3557 = vadd.f32 %v3231, %v3465
      %v3558 = vadd.f32 %v3232, %v3470
      %v3559 = vadd.f32 %v3233, %v3473
      %v3560 = vadd.f32 %v3234, %v3478
      %v3561 = vadd.f32 %v3235, %v3481
      %v3562 = vadd.f32 %v3236, %v3486
      %v3563 = vadd.f32 %v3237, %v3489
      %v3564 = vadd.f32 %v3238, %v3494
      %v3565 = vadd.f32 %v3239, %v3497
      %v3566 = vadd.f32 %v3240, %v3502
      %v3567 = vadd.f32 %v3241, %v3505
      %v3568 = vadd.f32 %v3242, %v3510
      %v3569 = vadd.f32 %v3243, %v3513
      %v3570 = vadd.f32 %v3244, %v3518
      %v3571 = vadd.f32 %v3245, %v3521
      %v3572 = vadd.f32 %v3246, %v3526
      %v3573 = vadd.f32 %v3247, %v3529
      %v3574 = vadd.f32 %v3248, %v3534
      %v3575 = vadd.f32 %v3249, %v3537
      %v3576 = vld [vmem:[#allocation2 + $0x26] sm:$0xff]
      %v3577 = vld [vmem:[#allocation2 + $0x2e] sm:$0xff]
      %v3578 = vld [vmem:[#allocation2 + $0x36] sm:$0xff]
      %v3579 = vld [vmem:[#allocation2 + $0x3e] sm:$0xff]
      %v3580 = vld [vmem:[#allocation2 + $0x46] sm:$0xff]
      %v3581 = vld [vmem:[#allocation2 + $0x4e] sm:$0xff]
      %v3582 = vld [vmem:[#allocation2 + $0x56] sm:$0xff]
      %v3583 = vld [vmem:[#allocation2 + $0x5e] sm:$0xff]
      %v3584 = vld [vmem:[#allocation2 + $0x66] sm:$0xff]
      %v3585 = vld [vmem:[#allocation2 + $0x6e] sm:$0xff]
      %v3586 = vld [vmem:[#allocation2 + $0x76] sm:$0xff]
      %v3587 = vld [vmem:[#allocation2 + $0x7e] sm:$0xff]
      %v3588 = vld [vmem:[#allocation2 + $0x86] sm:$0xff]
      %v3589 = vld [vmem:[#allocation2 + $0x8e] sm:$0xff]
      %v3590 = vld [vmem:[#allocation2 + $0x96] sm:$0xff]
      %v3591 = vld [vmem:[#allocation2 + $0x9e] sm:$0xff]
      %v3592 = vld [vmem:[#allocation2 + $0xa6] sm:$0xff]
      %v3593 = vld [vmem:[#allocation2 + $0xae] sm:$0xff]
      %v3594 = vld [vmem:[#allocation2 + $0xb6] sm:$0xff]
      %v3595 = vld [vmem:[#allocation2 + $0xbe] sm:$0xff]
      %v3596 = vld [vmem:[#allocation2 + $0xc6] sm:$0xff]
      %v3597 = vld [vmem:[#allocation2 + $0xce] sm:$0xff]
      %v3598 = vld [vmem:[#allocation2 + $0xd6] sm:$0xff]
      %v3599 = vld [vmem:[#allocation2 + $0xde] sm:$0xff]
      %v3600 = vld [vmem:[#allocation2 + $0xe6] sm:$0xff]
      %v3601 = vld [vmem:[#allocation2 + $0xee] sm:$0xff]
      %v3602 = vld [vmem:[#allocation2 + $0xf6] sm:$0xff]
      %v3603 = vld [vmem:[#allocation2 + $0xfe] sm:$0xff]
      %v3604 = vld [vmem:[#allocation2 + $0x106] sm:$0xff]
      %v3605 = vld [vmem:[#allocation2 + $0x10e] sm:$0xff]
      %v3606 = vld [vmem:[#allocation2 + $0x116] sm:$0xff]
      %v3607 = vld [vmem:[#allocation2 + $0x11e] sm:$0xff]
      %v3608 = vld [vmem:[#allocation2 + $0x126] sm:$0xff]
      %v3609 = vld [vmem:[#allocation2 + $0x12e] sm:$0xff]
      %v3610 = vld [vmem:[#allocation2 + $0x136] sm:$0xff]
      %v3611 = vld [vmem:[#allocation2 + $0x13e] sm:$0xff]
      %v3612 = vpack.c.bf16 %v3577, %v3576
      %v3613 = vpack.c.bf16 %v3579, %v3578
      %v3614 = vpack.c.bf16 %v3581, %v3580
      %v3615 = vpack.c.bf16 %v3583, %v3582
      %v3616 = vpack.c.bf16 %v3585, %v3584
      %v3617 = vpack.c.bf16 %v3587, %v3586
      %v3618 = vpack.c.bf16 %v3589, %v3588
      %v3619 = vpack.c.bf16 %v3591, %v3590
      %v3620 = vpack.c.bf16 %v3593, %v3592
      %v3621 = vpack.c.bf16 %v3595, %v3594
      %v3622 = vpack.c.bf16 %v3597, %v3596
      %v3623 = vpack.c.bf16 %v3599, %v3598
      %v3624 = vpack.c.bf16 %v3601, %v3600
      %v3625 = vpack.c.bf16 %v3603, %v3602
      %v3626 = vpack.c.bf16 %v3605, %v3604
      %v3627 = vpack.c.bf16 %v3607, %v3606
      %v3628 = vpack.c.bf16 %v3609, %v3608
      %v3629 = vpack.c.bf16 %v3611, %v3610
      %s3630 = scalar_lea.vmem %s1, 16
      %v3631 = vld [vmem:[%s3630] sm:$0x3]
      %v3633 = vsel %vm606, %v3612, 0
      %v3636 = vsel %vm606, %v3613, 0
      %v3639 = vsel %vm606, %v3614, 0
      %v3642 = vsel %vm606, %v3615, 0
      %v3645 = vsel %vm606, %v3616, 0
      %v3648 = vsel %vm606, %v3617, 0
      %v3651 = vsel %vm606, %v3618, 0
      %v3654 = vsel %vm606, %v3619, 0
      %v3657 = vsel %vm606, %v3620, 0
      %v3660 = vsel %vm606, %v3621, 0
      %v3663 = vsel %vm606, %v3622, 0
      %v3666 = vsel %vm606, %v3623, 0
      %v3669 = vsel %vm606, %v3624, 0
      %v3672 = vsel %vm606, %v3625, 0
      %v3675 = vsel %vm606, %v3626, 0
      %v3678 = vsel %vm606, %v3627, 0
      %v3681 = vsel %vm606, %v3628, 0
      %v3684 = vsel %vm606, %v3629, 0
      %v3687 = vsel %vm1205, %v3631, 0
      %3689 = vmatprep.subr.bf16.mxu0 0
      %3690 = vmatpush1.bf16.msra.mxu0 %v3687
      %3691 = vmatprep.subr.bf16.mxu0 0
      %3692 = vmatpush1.bf16.msra.mxu0 0
      %3693 = vmatprep.subr.bf16.mxu0 0
      %3694 = vmatpush1.bf16.msra.mxu0 0
      %3695 = vmatprep.subr.bf16.mxu0 0
      %3696 = vmatpush1.bf16.msra.mxu0 0
      %3697 = vmatprep.subr.bf16.mxu0 0
      %3698 = vmatpush1.bf16.msra.mxu0 0
      %3699 = vmatprep.subr.bf16.mxu0 0
      %3700 = vmatpush1.bf16.msra.mxu0 0
      %3701 = vmatprep.subr.bf16.mxu0 0
      %3702 = vmatpush1.bf16.msra.mxu0 0
      %3703 = vmatprep.subr.bf16.mxu0 0
      %3704 = vmatpush1.bf16.msra.mxu0 0
      %3705 = vmatprep.subr.bf16.mxu0 0
      %3706 = vmatpush1.bf16.msra.mxu0 0
      %3707 = vmatprep.subr.bf16.mxu0 0
      %3708 = vmatpush1.bf16.msra.mxu0 0
      %3709 = vmatprep.subr.bf16.mxu0 0
      %3710 = vmatpush1.bf16.msra.mxu0 0
      %3711 = vmatprep.subr.bf16.mxu0 0
      %3712 = vmatpush1.bf16.msra.mxu0 0
      %3713 = vmatprep.subr.bf16.mxu0 0
      %3714 = vmatpush1.bf16.msra.mxu0 0
      %3715 = vmatprep.subr.bf16.mxu0 0
      %3716 = vmatpush1.bf16.msra.mxu0 0
      %3717 = vmatprep.subr.bf16.mxu0 0
      %3718 = vmatpush1.bf16.msra.mxu0 0
      %3719 = vmatprep.subr.bf16.mxu0 0
      %3720 = vmatpush1.bf16.msra.mxu0 0
      %3721 = vmatprep.mubr.bf16.mxu0 0
      %3722 = vmatmul.mubr.bf16.gmra.mrb[0].mxu0 %v3633
      %v3723 = vpop.f32.mrb[0].mxu0
      %v3724 = vadd.f32 0.0, %v3723
      %v3725 = vpop.f32.mrb[0].mxu0
      %v3726 = vpop.f32.mrb[0].mxu0
      %v3727 = vadd.f32 0.0, %v3726
      %v3728 = vpop.f32.mrb[0].mxu0
      %3729 = vmatprep.mubr.bf16.mxu0 0
      %3730 = vmatmul.mubr.bf16.gmra.mrb[0].mxu0 %v3636
      %v3731 = vpop.f32.mrb[0].mxu0
      %v3732 = vadd.f32 0.0, %v3731
      %v3733 = vpop.f32.mrb[0].mxu0
      %v3734 = vpop.f32.mrb[0].mxu0
      %v3735 = vadd.f32 0.0, %v3734
      %v3736 = vpop.f32.mrb[0].mxu0
      %3737 = vmatprep.mubr.bf16.mxu0 0
      %3738 = vmatmul.mubr.bf16.gmra.mrb[0].mxu0 %v3639
      %v3739 = vpop.f32.mrb[0].mxu0
      %v3740 = vadd.f32 0.0, %v3739
      %v3741 = vpop.f32.mrb[0].mxu0
      %v3742 = vpop.f32.mrb[0].mxu0
      %v3743 = vadd.f32 0.0, %v3742
      %v3744 = vpop.f32.mrb[0].mxu0
      %3745 = vmatprep.mubr.bf16.mxu0 0
      %3746 = vmatmul.mubr.bf16.gmra.mrb[0].mxu0 %v3642
      %v3747 = vpop.f32.mrb[0].mxu0
      %v3748 = vadd.f32 0.0, %v3747
      %v3749 = vpop.f32.mrb[0].mxu0
      %v3750 = vpop.f32.mrb[0].mxu0
      %v3751 = vadd.f32 0.0, %v3750
      %v3752 = vpop.f32.mrb[0].mxu0
      %3753 = vmatprep.mubr.bf16.mxu0 0
      %3754 = vmatmul.mubr.bf16.gmra.mrb[0].mxu0 %v3645
      %v3755 = vpop.f32.mrb[0].mxu0
      %v3756 = vadd.f32 0.0, %v3755
      %v3757 = vpop.f32.mrb[0].mxu0
      %v3758 = vpop.f32.mrb[0].mxu0
      %v3759 = vadd.f32 0.0, %v3758
      %v3760 = vpop.f32.mrb[0].mxu0
      %3761 = vmatprep.mubr.bf16.mxu0 0
      %3762 = vmatmul.mubr.bf16.gmra.mrb[0].mxu0 %v3648
      %v3763 = vpop.f32.mrb[0].mxu0
      %v3764 = vadd.f32 0.0, %v3763
      %v3765 = vpop.f32.mrb[0].mxu0
      %v3766 = vpop.f32.mrb[0].mxu0
      %v3767 = vadd.f32 0.0, %v3766
      %v3768 = vpop.f32.mrb[0].mxu0
      %3769 = vmatprep.mubr.bf16.mxu0 0
      %3770 = vmatmul.mubr.bf16.gmra.mrb[0].mxu0 %v3651
      %v3771 = vpop.f32.mrb[0].mxu0
      %v3772 = vadd.f32 0.0, %v3771
      %v3773 = vpop.f32.mrb[0].mxu0
      %v3774 = vpop.f32.mrb[0].mxu0
      %v3775 = vadd.f32 0.0, %v3774
      %v3776 = vpop.f32.mrb[0].mxu0
      %3777 = vmatprep.mubr.bf16.mxu0 0
      %3778 = vmatmul.mubr.bf16.gmra.mrb[0].mxu0 %v3654
      %v3779 = vpop.f32.mrb[0].mxu0
      %v3780 = vadd.f32 0.0, %v3779
      %v3781 = vpop.f32.mrb[0].mxu0
      %v3782 = vpop.f32.mrb[0].mxu0
      %v3783 = vadd.f32 0.0, %v3782
      %v3784 = vpop.f32.mrb[0].mxu0
      %3785 = vmatprep.mubr.bf16.mxu0 0
      %3786 = vmatmul.mubr.bf16.gmra.mrb[0].mxu0 %v3657
      %v3787 = vpop.f32.mrb[0].mxu0
      %v3788 = vadd.f32 0.0, %v3787
      %v3789 = vpop.f32.mrb[0].mxu0
      %v3790 = vpop.f32.mrb[0].mxu0
      %v3791 = vadd.f32 0.0, %v3790
      %v3792 = vpop.f32.mrb[0].mxu0
      %3793 = vmatprep.mubr.bf16.mxu0 0
      %3794 = vmatmul.mubr.bf16.gmra.mrb[0].mxu0 %v3660
      %v3795 = vpop.f32.mrb[0].mxu0
      %v3796 = vadd.f32 0.0, %v3795
      %v3797 = vpop.f32.mrb[0].mxu0
      %v3798 = vpop.f32.mrb[0].mxu0
      %v3799 = vadd.f32 0.0, %v3798
      %v3800 = vpop.f32.mrb[0].mxu0
      %3801 = vmatprep.mubr.bf16.mxu0 0
      %3802 = vmatmul.mubr.bf16.gmra.mrb[0].mxu0 %v3663
      %v3803 = vpop.f32.mrb[0].mxu0
      %v3804 = vadd.f32 0.0, %v3803
      %v3805 = vpop.f32.mrb[0].mxu0
      %v3806 = vpop.f32.mrb[0].mxu0
      %v3807 = vadd.f32 0.0, %v3806
      %v3808 = vpop.f32.mrb[0].mxu0
      %3809 = vmatprep.mubr.bf16.mxu0 0
      %3810 = vmatmul.mubr.bf16.gmra.mrb[0].mxu0 %v3666
      %v3811 = vpop.f32.mrb[0].mxu0
      %v3812 = vadd.f32 0.0, %v3811
      %v3813 = vpop.f32.mrb[0].mxu0
      %v3814 = vpop.f32.mrb[0].mxu0
      %v3815 = vadd.f32 0.0, %v3814
      %v3816 = vpop.f32.mrb[0].mxu0
      %3817 = vmatprep.mubr.bf16.mxu0 0
      %3818 = vmatmul.mubr.bf16.gmra.mrb[0].mxu0 %v3669
      %v3819 = vpop.f32.mrb[0].mxu0
      %v3820 = vadd.f32 0.0, %v3819
      %v3821 = vpop.f32.mrb[0].mxu0
      %v3822 = vpop.f32.mrb[0].mxu0
      %v3823 = vadd.f32 0.0, %v3822
      %v3824 = vpop.f32.mrb[0].mxu0
      %3825 = vmatprep.mubr.bf16.mxu0 0
      %3826 = vmatmul.mubr.bf16.gmra.mrb[0].mxu0 %v3672
      %v3827 = vpop.f32.mrb[0].mxu0
      %v3828 = vadd.f32 0.0, %v3827
      %v3829 = vpop.f32.mrb[0].mxu0
      %v3830 = vpop.f32.mrb[0].mxu0
      %v3831 = vadd.f32 0.0, %v3830
      %v3832 = vpop.f32.mrb[0].mxu0
      %3833 = vmatprep.mubr.bf16.mxu0 0
      %3834 = vmatmul.mubr.bf16.gmra.mrb[0].mxu0 %v3675
      %v3835 = vpop.f32.mrb[0].mxu0
      %v3836 = vadd.f32 0.0, %v3835
      %v3837 = vpop.f32.mrb[0].mxu0
      %v3838 = vpop.f32.mrb[0].mxu0
      %v3839 = vadd.f32 0.0, %v3838
      %v3840 = vpop.f32.mrb[0].mxu0
      %3841 = vmatprep.mubr.bf16.mxu0 0
      %3842 = vmatmul.mubr.bf16.gmra.mrb[0].mxu0 %v3678
      %v3843 = vpop.f32.mrb[0].mxu0
      %v3844 = vadd.f32 0.0, %v3843
      %v3845 = vpop.f32.mrb[0].mxu0
      %v3846 = vpop.f32.mrb[0].mxu0
      %v3847 = vadd.f32 0.0, %v3846
      %v3848 = vpop.f32.mrb[0].mxu0
      %3849 = vmatprep.mubr.bf16.mxu0 0
      %3850 = vmatmul.mubr.bf16.gmra.mrb[0].mxu0 %v3681
      %v3851 = vpop.f32.mrb[0].mxu0
      %v3852 = vadd.f32 0.0, %v3851
      %v3853 = vpop.f32.mrb[0].mxu0
      %v3854 = vpop.f32.mrb[0].mxu0
      %v3855 = vadd.f32 0.0, %v3854
      %v3856 = vpop.f32.mrb[0].mxu0
      %3857 = vmatprep.mubr.bf16.mxu0 0
      %3858 = vmatmul.mubr.bf16.gmra.mrb[0].mxu0 %v3684
      %v3859 = vpop.f32.mrb[0].mxu0
      %v3860 = vadd.f32 0.0, %v3859
      %v3861 = vpop.f32.mrb[0].mxu0
      %v3862 = vpop.f32.mrb[0].mxu0
      %v3863 = vadd.f32 0.0, %v3862
      %v3864 = vpop.f32.mrb[0].mxu0
      %3865 = vdwg.mxu0
      %v3866 = vadd.f32 %v3540, %v3724
      %v3867 = vadd.f32 %v3541, %v3727
      %v3868 = vadd.f32 %v3542, %v3732
      %v3869 = vadd.f32 %v3543, %v3735
      %v3870 = vadd.f32 %v3544, %v3740
      %v3871 = vadd.f32 %v3545, %v3743
      %v3872 = vadd.f32 %v3546, %v3748
      %v3873 = vadd.f32 %v3547, %v3751
      %v3874 = vadd.f32 %v3548, %v3756
      %v3875 = vadd.f32 %v3549, %v3759
      %v3876 = vadd.f32 %v3550, %v3764
      %v3877 = vadd.f32 %v3551, %v3767
      %v3878 = vadd.f32 %v3552, %v3772
      %v3879 = vadd.f32 %v3553, %v3775
      %v3880 = vadd.f32 %v3554, %v3780
      %v3881 = vadd.f32 %v3555, %v3783
      %v3882 = vadd.f32 %v3556, %v3788
      %v3883 = vadd.f32 %v3557, %v3791
      %v3884 = vadd.f32 %v3558, %v3796
      %v3885 = vadd.f32 %v3559, %v3799
      %v3886 = vadd.f32 %v3560, %v3804
      %v3887 = vadd.f32 %v3561, %v3807
      %v3888 = vadd.f32 %v3562, %v3812
      %v3889 = vadd.f32 %v3563, %v3815
      %v3890 = vadd.f32 %v3564, %v3820
      %v3891 = vadd.f32 %v3565, %v3823
      %v3892 = vadd.f32 %v3566, %v3828
      %v3893 = vadd.f32 %v3567, %v3831
      %v3894 = vadd.f32 %v3568, %v3836
      %v3895 = vadd.f32 %v3569, %v3839
      %v3896 = vadd.f32 %v3570, %v3844
      %v3897 = vadd.f32 %v3571, %v3847
      %v3898 = vadd.f32 %v3572, %v3852
      %v3899 = vadd.f32 %v3573, %v3855
      %v3900 = vadd.f32 %v3574, %v3860
      %v3901 = vadd.f32 %v3575, %v3863
      %v3902 = vld [vmem:[%s2] sm:$0x1]
      %v3903 = vld [vmem:[%s3] sm:$0x1]
      %v3904 = vld [vmem:[%s4] sm:$0x1]
      %v3905 = vld [vmem:[%s514] sm:$0x1]
      %v3906 = vld [vmem:[%s517] sm:$0x1]
      %vm3907 = vcmask 261120
      %v3909 = vsel %vm3907, %v678, 0
      %3911 = vmatprep.subr.mxu0 0.0
      %3912 = vmatpush1.msra.mxu0 %v3866
      %3913 = vmatprep.subr.mxu0 0.0
      %3914 = vmatpush1.msra.mxu0 %v3867
      %3915 = vmatprep.subr.mxu0 0.0
      %3916 = vmatpush1.msra.mxu0 %v3868
      %3917 = vmatprep.subr.mxu0 0.0
      %3918 = vmatpush1.msra.mxu0 %v3869
      %3919 = vmatprep.subr.mxu0 0.0
      %3920 = vmatpush1.msra.mxu0 %v3870
      %3921 = vmatprep.subr.mxu0 0.0
      %3922 = vmatpush1.msra.mxu0 %v3871
      %3923 = vmatprep.subr.mxu0 0.0
      %3924 = vmatpush1.msra.mxu0 %v3872
      %3925 = vmatprep.subr.mxu0 0.0
      %3926 = vmatpush1.msra.mxu0 %v3873
      %3927 = vmatprep.subr.mxu0 0.0
      %3928 = vmatpush1.msra.mxu0 %v3874
      %3929 = vmatprep.subr.mxu0 0.0
      %3930 = vmatpush1.msra.mxu0 %v3875
      %3931 = vmatprep.subr.mxu0 0.0
      %3932 = vmatpush1.msra.mxu0 %v3876
      %3933 = vmatprep.subr.mxu0 0.0
      %3934 = vmatpush1.msra.mxu0 %v3877
      %3935 = vmatprep.subr.mxu0 0.0
      %3936 = vmatpush1.msra.mxu0 %v3878
      %3937 = vmatprep.subr.mxu0 0.0
      %3938 = vmatpush1.msra.mxu0 %v3879
      %3939 = vmatprep.subr.mxu0 0.0
      %3940 = vmatpush1.msra.mxu0 %v3880
      %3941 = vmatprep.subr.mxu0 0.0
      %3942 = vmatpush1.msra.mxu0 %v3881
      %3943 = vmatprep.subr.mxu0 0.0
      %3944 = vmatpush1.msra.mxu0 %v3882
      %3945 = vmatprep.subr.mxu0 0.0
      %3946 = vmatpush1.msra.mxu0 %v3883
      %3947 = vmatprep.subr.mxu0 0.0
      %3948 = vmatpush1.msra.mxu0 %v3884
      %3949 = vmatprep.subr.mxu0 0.0
      %3950 = vmatpush1.msra.mxu0 %v3885
      %3951 = vmatprep.subr.mxu0 0.0
      %3952 = vmatpush1.msra.mxu0 %v3886
      %3953 = vmatprep.subr.mxu0 0.0
      %3954 = vmatpush1.msra.mxu0 %v3887
      %3955 = vmatprep.subr.mxu0 0.0
      %3956 = vmatpush1.msra.mxu0 %v3888
      %3957 = vmatprep.subr.mxu0 0.0
      %3958 = vmatpush1.msra.mxu0 %v3889
      %3959 = vmatprep.subr.mxu0 0.0
      %3960 = vmatpush1.msra.mxu0 %v3890
      %3961 = vmatprep.subr.mxu0 0.0
      %3962 = vmatpush1.msra.mxu0 %v3891
      %3963 = vmatprep.subr.mxu0 0.0
      %3964 = vmatpush1.msra.mxu0 %v3892
      %3965 = vmatprep.subr.mxu0 0.0
      %3966 = vmatpush1.msra.mxu0 %v3893
      %3967 = vmatprep.subr.mxu0 0.0
      %3968 = vmatpush1.msra.mxu0 %v3894
      %3969 = vmatprep.subr.mxu0 0.0
      %3970 = vmatpush1.msra.mxu0 %v3895
      %3971 = vmatprep.subr.mxu0 0.0
      %3972 = vmatpush1.msra.mxu0 %v3896
      %3973 = vmatprep.subr.mxu0 0.0
      %3974 = vmatpush1.msra.mxu0 %v3897
      %3975 = vmatprep.mubr.f32.mxu0 %v677
      %3976 = vmatmul.mubr.f32.gmra.mrb[0].mxu0 %v676
      %v3977 = vpop.f32.mrb[0].mxu0
      %v3978 = vadd.f32 0.0, %v3977
      %v3979 = vpop.f32.mrb[0].mxu0
      %3980 = vdwg.mxu0
      %3981 = vmatprep.subr.mxu0 0.0
      %3982 = vmatpush1.msra.mxu0 %v3898
      %3983 = vmatprep.subr.mxu0 0.0
      %3984 = vmatpush1.msra.mxu0 %v3899
      %3985 = vmatprep.subr.mxu0 0.0
      %3986 = vmatpush1.msra.mxu0 %v3900
      %3987 = vmatprep.subr.mxu0 0.0
      %3988 = vmatpush1.msra.mxu0 %v3901
      %3989 = vmatprep.subr.mxu0 0.0
      %3990 = vmatpush1.msra.mxu0 0.0
      %3991 = vmatprep.subr.mxu0 0.0
      %3992 = vmatpush1.msra.mxu0 0.0
      %3993 = vmatprep.subr.mxu0 0.0
      %3994 = vmatpush1.msra.mxu0 0.0
      %3995 = vmatprep.subr.mxu0 0.0
      %3996 = vmatpush1.msra.mxu0 0.0
      %3997 = vmatprep.subr.mxu0 0.0
      %3998 = vmatpush1.msra.mxu0 0.0
      %3999 = vmatprep.subr.mxu0 0.0
      %4000 = vmatpush1.msra.mxu0 0.0
      %4001 = vmatprep.subr.mxu0 0.0
      %4002 = vmatpush1.msra.mxu0 0.0
      %4003 = vmatprep.subr.mxu0 0.0
      %4004 = vmatpush1.msra.mxu0 0.0
      %4005 = vmatprep.subr.mxu0 0.0
      %4006 = vmatpush1.msra.mxu0 0.0
      %4007 = vmatprep.subr.mxu0 0.0
      %4008 = vmatpush1.msra.mxu0 0.0
      %4009 = vmatprep.subr.mxu0 0.0
      %4010 = vmatpush1.msra.mxu0 0.0
      %4011 = vmatprep.subr.mxu0 0.0
      %4012 = vmatpush1.msra.mxu0 0.0
      %4013 = vmatprep.subr.mxu0 0.0
      %4014 = vmatpush1.msra.mxu0 0.0
      %4015 = vmatprep.subr.mxu0 0.0
      %4016 = vmatpush1.msra.mxu0 0.0
      %4017 = vmatprep.subr.mxu0 0.0
      %4018 = vmatpush1.msra.mxu0 0.0
      %4019 = vmatprep.subr.mxu0 0.0
      %4020 = vmatpush1.msra.mxu0 0.0
      %4021 = vmatprep.subr.mxu0 0.0
      %4022 = vmatpush1.msra.mxu0 0.0
      %4023 = vmatprep.subr.mxu0 0.0
      %4024 = vmatpush1.msra.mxu0 0.0
      %4025 = vmatprep.subr.mxu0 0.0
      %4026 = vmatpush1.msra.mxu0 0.0
      %4027 = vmatprep.subr.mxu0 0.0
      %4028 = vmatpush1.msra.mxu0 0.0
      %4029 = vmatprep.subr.mxu0 0.0
      %4030 = vmatpush1.msra.mxu0 0.0
      %4031 = vmatprep.subr.mxu0 0.0
      %4032 = vmatpush1.msra.mxu0 0.0
      %4033 = vmatprep.subr.mxu0 0.0
      %4034 = vmatpush1.msra.mxu0 0.0
      %4035 = vmatprep.subr.mxu0 0.0
      %4036 = vmatpush1.msra.mxu0 0.0
      %4037 = vmatprep.subr.mxu0 0.0
      %4038 = vmatpush1.msra.mxu0 0.0
      %4039 = vmatprep.subr.mxu0 0.0
      %4040 = vmatpush1.msra.mxu0 0.0
      %4041 = vmatprep.subr.mxu0 0.0
      %4042 = vmatpush1.msra.mxu0 0.0
      %4043 = vmatprep.subr.mxu0 0.0
      %4044 = vmatpush1.msra.mxu0 0.0
      %4045 = vmatprep.mubr.f32.mxu0 0.0
      %4046 = vmatmul.mubr.f32.gmra.mrb[0].mxu0 %v3909
      %v4047 = vpop.f32.mrb[0].mxu0
      %v4048 = vadd.f32 %v3978, %v4047
      %v4049 = vpop.f32.mrb[0].mxu0
      %4050 = vdwg.mxu0
      %v4051 = vmul.f32 %v3866, %v3866
      %v4052 = vmul.f32 %v3867, %v3867
      %v4053 = vmul.f32 %v3868, %v3868
      %v4054 = vmul.f32 %v3869, %v3869
      %v4055 = vmul.f32 %v3870, %v3870
      %v4056 = vmul.f32 %v3871, %v3871
      %v4057 = vmul.f32 %v3872, %v3872
      %v4058 = vmul.f32 %v3873, %v3873
      %v4059 = vmul.f32 %v3874, %v3874
      %v4060 = vmul.f32 %v3875, %v3875
      %v4061 = vmul.f32 %v3876, %v3876
      %v4062 = vmul.f32 %v3877, %v3877
      %v4063 = vmul.f32 %v3878, %v3878
      %v4064 = vmul.f32 %v3879, %v3879
      %v4065 = vmul.f32 %v3880, %v3880
      %v4066 = vmul.f32 %v3881, %v3881
      %v4067 = vmul.f32 %v3882, %v3882
      %v4068 = vmul.f32 %v3883, %v3883
      %v4069 = vmul.f32 %v3884, %v3884
      %v4070 = vmul.f32 %v3885, %v3885
      %v4071 = vmul.f32 %v3886, %v3886
      %v4072 = vmul.f32 %v3887, %v3887
      %v4073 = vmul.f32 %v3888, %v3888
      %v4074 = vmul.f32 %v3889, %v3889
      %v4075 = vmul.f32 %v3890, %v3890
      %v4076 = vmul.f32 %v3891, %v3891
      %v4077 = vmul.f32 %v3892, %v3892
      %v4078 = vmul.f32 %v3893, %v3893
      %v4079 = vmul.f32 %v3894, %v3894
      %v4080 = vmul.f32 %v3895, %v3895
      %v4081 = vmul.f32 %v3896, %v3896
      %v4082 = vmul.f32 %v3897, %v3897
      %v4083 = vmul.f32 %v3898, %v3898
      %v4084 = vmul.f32 %v3899, %v3899
      %v4085 = vmul.f32 %v3900, %v3900
      %v4086 = vmul.f32 %v3901, %v3901
      %v4087 = vmul.f32 %v3902, 256.0
      %v4088 = vadd.f32 %v4048, %v4087
      %v4089 = vmul.f32 %v3902, 2.0
      %v4090 = vmul.f32 %v4089, %v4048
      %4091 = vmatprep.subr.mxu0 0.0
      %4092 = vmatpush1.msra.mxu0 %v4051
      %4093 = vmatprep.subr.mxu0 0.0
      %4094 = vmatpush1.msra.mxu0 %v4052
      %4095 = vmatprep.subr.mxu0 0.0
      %4096 = vmatpush1.msra.mxu0 %v4053
      %4097 = vmatprep.subr.mxu0 0.0
      %4098 = vmatpush1.msra.mxu0 %v4054
      %4099 = vmatprep.subr.mxu0 0.0
      %4100 = vmatpush1.msra.mxu0 %v4055
      %4101 = vmatprep.subr.mxu0 0.0
      %4102 = vmatpush1.msra.mxu0 %v4056
      %4103 = vmatprep.subr.mxu0 0.0
      %4104 = vmatpush1.msra.mxu0 %v4057
      %4105 = vmatprep.subr.mxu0 0.0
      %4106 = vmatpush1.msra.mxu0 %v4058
      %4107 = vmatprep.subr.mxu0 0.0
      %4108 = vmatpush1.msra.mxu0 %v4059
      %4109 = vmatprep.subr.mxu0 0.0
      %4110 = vmatpush1.msra.mxu0 %v4060
      %4111 = vmatprep.subr.mxu0 0.0
      %4112 = vmatpush1.msra.mxu0 %v4061
      %4113 = vmatprep.subr.mxu0 0.0
      %4114 = vmatpush1.msra.mxu0 %v4062
      %4115 = vmatprep.subr.mxu0 0.0
      %4116 = vmatpush1.msra.mxu0 %v4063
      %4117 = vmatprep.subr.mxu0 0.0
      %4118 = vmatpush1.msra.mxu0 %v4064
      %4119 = vmatprep.subr.mxu0 0.0
      %4120 = vmatpush1.msra.mxu0 %v4065
      %4121 = vmatprep.subr.mxu0 0.0
      %4122 = vmatpush1.msra.mxu0 %v4066
      %4123 = vmatprep.subr.mxu0 0.0
      %4124 = vmatpush1.msra.mxu0 %v4067
      %4125 = vmatprep.subr.mxu0 0.0
      %4126 = vmatpush1.msra.mxu0 %v4068
      %4127 = vmatprep.subr.mxu0 0.0
      %4128 = vmatpush1.msra.mxu0 %v4069
      %4129 = vmatprep.subr.mxu0 0.0
      %4130 = vmatpush1.msra.mxu0 %v4070
      %4131 = vmatprep.subr.mxu0 0.0
      %4132 = vmatpush1.msra.mxu0 %v4071
      %4133 = vmatprep.subr.mxu0 0.0
      %4134 = vmatpush1.msra.mxu0 %v4072
      %4135 = vmatprep.subr.mxu0 0.0
      %4136 = vmatpush1.msra.mxu0 %v4073
      %4137 = vmatprep.subr.mxu0 0.0
      %4138 = vmatpush1.msra.mxu0 %v4074
      %4139 = vmatprep.subr.mxu0 0.0
      %4140 = vmatpush1.msra.mxu0 %v4075
      %4141 = vmatprep.subr.mxu0 0.0
      %4142 = vmatpush1.msra.mxu0 %v4076
      %4143 = vmatprep.subr.mxu0 0.0
      %4144 = vmatpush1.msra.mxu0 %v4077
      %4145 = vmatprep.subr.mxu0 0.0
      %4146 = vmatpush1.msra.mxu0 %v4078
      %4147 = vmatprep.subr.mxu0 0.0
      %4148 = vmatpush1.msra.mxu0 %v4079
      %4149 = vmatprep.subr.mxu0 0.0
      %4150 = vmatpush1.msra.mxu0 %v4080
      %4151 = vmatprep.subr.mxu0 0.0
      %4152 = vmatpush1.msra.mxu0 %v4081
      %4153 = vmatprep.subr.mxu0 0.0
      %4154 = vmatpush1.msra.mxu0 %v4082
      %4155 = vmatprep.mubr.f32.mxu0 %v677
      %4156 = vmatmul.mubr.f32.gmra.mrb[0].mxu0 %v676
      %v4157 = vpop.f32.mrb[0].mxu0
      %v4158 = vadd.f32 %v4090, %v4157
      %v4159 = vpop.f32.mrb[0].mxu0
      %4160 = vdwg.mxu0
      %4161 = vmatprep.subr.mxu0 0.0
      %4162 = vmatpush1.msra.mxu0 %v4083
      %4163 = vmatprep.subr.mxu0 0.0
      %4164 = vmatpush1.msra.mxu0 %v4084
      %4165 = vmatprep.subr.mxu0 0.0
      %4166 = vmatpush1.msra.mxu0 %v4085
      %4167 = vmatprep.subr.mxu0 0.0
      %4168 = vmatpush1.msra.mxu0 %v4086
      %4169 = vmatprep.subr.mxu0 0.0
      %4170 = vmatpush1.msra.mxu0 0.0
      %4171 = vmatprep.subr.mxu0 0.0
      %4172 = vmatpush1.msra.mxu0 0.0
      %4173 = vmatprep.subr.mxu0 0.0
      %4174 = vmatpush1.msra.mxu0 0.0
      %4175 = vmatprep.subr.mxu0 0.0
      %4176 = vmatpush1.msra.mxu0 0.0
      %4177 = vmatprep.subr.mxu0 0.0
      %4178 = vmatpush1.msra.mxu0 0.0
      %4179 = vmatprep.subr.mxu0 0.0
      %4180 = vmatpush1.msra.mxu0 0.0
      %4181 = vmatprep.subr.mxu0 0.0
      %4182 = vmatpush1.msra.mxu0 0.0
      %4183 = vmatprep.subr.mxu0 0.0
      %4184 = vmatpush1.msra.mxu0 0.0
      %4185 = vmatprep.subr.mxu0 0.0
      %4186 = vmatpush1.msra.mxu0 0.0
      %4187 = vmatprep.subr.mxu0 0.0
      %4188 = vmatpush1.msra.mxu0 0.0
      %4189 = vmatprep.subr.mxu0 0.0
      %4190 = vmatpush1.msra.mxu0 0.0
      %4191 = vmatprep.subr.mxu0 0.0
      %4192 = vmatpush1.msra.mxu0 0.0
      %4193 = vmatprep.subr.mxu0 0.0
      %4194 = vmatpush1.msra.mxu0 0.0
      %4195 = vmatprep.subr.mxu0 0.0
      %4196 = vmatpush1.msra.mxu0 0.0
      %4197 = vmatprep.subr.mxu0 0.0
      %4198 = vmatpush1.msra.mxu0 0.0
      %4199 = vmatprep.subr.mxu0 0.0
      %4200 = vmatpush1.msra.mxu0 0.0
      %4201 = vmatprep.subr.mxu0 0.0
      %4202 = vmatpush1.msra.mxu0 0.0
      %4203 = vmatprep.subr.mxu0 0.0
      %4204 = vmatpush1.msra.mxu0 0.0
      %4205 = vmatprep.subr.mxu0 0.0
      %4206 = vmatpush1.msra.mxu0 0.0
      %4207 = vmatprep.subr.mxu0 0.0
      %4208 = vmatpush1.msra.mxu0 0.0
      %4209 = vmatprep.subr.mxu0 0.0
      %4210 = vmatpush1.msra.mxu0 0.0
      %4211 = vmatprep.subr.mxu0 0.0
      %4212 = vmatpush1.msra.mxu0 0.0
      %4213 = vmatprep.subr.mxu0 0.0
      %4214 = vmatpush1.msra.mxu0 0.0
      %4215 = vmatprep.subr.mxu0 0.0
      %4216 = vmatpush1.msra.mxu0 0.0
      %4217 = vmatprep.subr.mxu0 0.0
      %4218 = vmatpush1.msra.mxu0 0.0
      %4219 = vmatprep.subr.mxu0 0.0
      %4220 = vmatpush1.msra.mxu0 0.0
      %4221 = vmatprep.subr.mxu0 0.0
      %4222 = vmatpush1.msra.mxu0 0.0
      %4223 = vmatprep.subr.mxu0 0.0
      %4224 = vmatpush1.msra.mxu0 0.0
      %4225 = vmatprep.mubr.f32.mxu0 0.0
      %4226 = vmatmul.mubr.f32.gmra.mrb[0].mxu0 %v3909
      %v4227 = vpop.f32.mrb[0].mxu0
      %v4228 = vadd.f32 %v4158, %v4227
      %v4229 = vpop.f32.mrb[0].mxu0
      %4230 = vdwg.mxu0
      %v4231 = vmul.f32 %v3902, %v3902
      %v4232 = vmul.f32 %v4231, 256.0
      %v4233 = vadd.f32 %v4228, %v4232
      %v4235 = vrot.slane %v4233, 7
      %vm4237 = vcmask 1040384
      %v4238 = vsel %vm4237, %v4088, %v4235
      %v4239 = vld [vmem:[%s9] sm:$0xff]
      %vm4240 = vcmask 64512
      %v4242 = vsel %vm4240, %v4238, 0
      %4244 = vmatprep.subr.mxu0 0.0
      %4245 = vmatpush1.msra.mxu0 %v4239
      %4246 = vmatprep.subr.mxu0 0.0
      %4247 = vmatpush1.msra.mxu0 0.0
      %4248 = vmatprep.subr.mxu0 0.0
      %4249 = vmatpush1.msra.mxu0 0.0
      %4250 = vmatprep.subr.mxu0 0.0
      %4251 = vmatpush1.msra.mxu0 0.0
      %4252 = vmatprep.subr.mxu0 0.0
      %4253 = vmatpush1.msra.mxu0 0.0
      %4254 = vmatprep.subr.mxu0 0.0
      %4255 = vmatpush1.msra.mxu0 0.0
      %4256 = vmatprep.subr.mxu0 0.0
      %4257 = vmatpush1.msra.mxu0 0.0
      %4258 = vmatprep.subr.mxu0 0.0
      %4259 = vmatpush1.msra.mxu0 0.0
      %4260 = vmatprep.subr.mxu0 0.0
      %4261 = vmatpush1.msra.mxu0 0.0
      %4262 = vmatprep.subr.mxu0 0.0
      %4263 = vmatpush1.msra.mxu0 0.0
      %4264 = vmatprep.subr.mxu0 0.0
      %4265 = vmatpush1.msra.mxu0 0.0
      %4266 = vmatprep.subr.mxu0 0.0
      %4267 = vmatpush1.msra.mxu0 0.0
      %4268 = vmatprep.subr.mxu0 0.0
      %4269 = vmatpush1.msra.mxu0 0.0
      %4270 = vmatprep.subr.mxu0 0.0
      %4271 = vmatpush1.msra.mxu0 0.0
      %4272 = vmatprep.subr.mxu0 0.0
      %4273 = vmatpush1.msra.mxu0 0.0
      %4274 = vmatprep.subr.mxu0 0.0
      %4275 = vmatpush1.msra.mxu0 0.0
      %4276 = vmatprep.subr.mxu0 0.0
      %4277 = vmatpush1.msra.mxu0 0.0
      %4278 = vmatprep.subr.mxu0 0.0
      %4279 = vmatpush1.msra.mxu0 0.0
      %4280 = vmatprep.subr.mxu0 0.0
      %4281 = vmatpush1.msra.mxu0 0.0
      %4282 = vmatprep.subr.mxu0 0.0
      %4283 = vmatpush1.msra.mxu0 0.0
      %4284 = vmatprep.subr.mxu0 0.0
      %4285 = vmatpush1.msra.mxu0 0.0
      %4286 = vmatprep.subr.mxu0 0.0
      %4287 = vmatpush1.msra.mxu0 0.0
      %4288 = vmatprep.subr.mxu0 0.0
      %4289 = vmatpush1.msra.mxu0 0.0
      %4290 = vmatprep.subr.mxu0 0.0
      %4291 = vmatpush1.msra.mxu0 0.0
      %4292 = vmatprep.subr.mxu0 0.0
      %4293 = vmatpush1.msra.mxu0 0.0
      %4294 = vmatprep.subr.mxu0 0.0
      %4295 = vmatpush1.msra.mxu0 0.0
      %4296 = vmatprep.subr.mxu0 0.0
      %4297 = vmatpush1.msra.mxu0 0.0
      %4298 = vmatprep.subr.mxu0 0.0
      %4299 = vmatpush1.msra.mxu0 0.0
      %4300 = vmatprep.subr.mxu0 0.0
      %4301 = vmatpush1.msra.mxu0 0.0
      %4302 = vmatprep.subr.mxu0 0.0
      %4303 = vmatpush1.msra.mxu0 0.0
      %4304 = vmatprep.subr.mxu0 0.0
      %4305 = vmatpush1.msra.mxu0 0.0
      %4306 = vmatprep.subr.mxu0 0.0
      %4307 = vmatpush1.msra.mxu0 0.0
      %4308 = vmatprep.mubr.f32.mxu0 0.0
      %4309 = vmatmul.mubr.f32.gmra.mrb[0].mxu0 %v4242
      %v4310 = vpop.f32.mrb[0].mxu0
      %v4311 = vadd.f32 0.0, %v4310
      %v4312 = vpop.f32.mrb[0].mxu0
      %4313 = vdwg.mxu0
      %v4314 = vmul.f32 %v4311, 0.001953125
      %v4315 = vmul.f32 %v4314, %v4314
      %v4317 = vrot.slane %v4315, 7
      %v4319 = vsub.f32 %v4314, %v4317
      %v4320 = vmax.f32 %v4319, 0.0
      %v4321 = vadd.f32 %v4320, 1e-05
      %v4322 = vrsqrt.pop %v4321
      %v4323 = vsel %vm4237, %v4314, %v4322
      %v4324 = vld [vmem:[%s10] sm:$0xf]
      %v4326 = vsel %vm606, %v4323, 0
      %vm4328 = vcmask 1043456
      %v4330 = vsel %vm4328, %v4324, 0
      %4332 = vmatprep.subr.mxu0 0.0
      %4333 = vmatpush1.msra.mxu0 %v4330
      %4334 = vmatprep.subr.mxu0 0.0
      %4335 = vmatpush1.msra.mxu0 0.0
      %4336 = vmatprep.subr.mxu0 0.0
      %4337 = vmatpush1.msra.mxu0 0.0
      %4338 = vmatprep.subr.mxu0 0.0
      %4339 = vmatpush1.msra.mxu0 0.0
      %4340 = vmatprep.subr.mxu0 0.0
      %4341 = vmatpush1.msra.mxu0 0.0
      %4342 = vmatprep.subr.mxu0 0.0
      %4343 = vmatpush1.msra.mxu0 0.0
      %4344 = vmatprep.subr.mxu0 0.0
      %4345 = vmatpush1.msra.mxu0 0.0
      %4346 = vmatprep.subr.mxu0 0.0
      %4347 = vmatpush1.msra.mxu0 0.0
      %4348 = vmatprep.subr.mxu0 0.0
      %4349 = vmatpush1.msra.mxu0 0.0
      %4350 = vmatprep.subr.mxu0 0.0
      %4351 = vmatpush1.msra.mxu0 0.0
      %4352 = vmatprep.subr.mxu0 0.0
      %4353 = vmatpush1.msra.mxu0 0.0
      %4354 = vmatprep.subr.mxu0 0.0
      %4355 = vmatpush1.msra.mxu0 0.0
      %4356 = vmatprep.subr.mxu0 0.0
      %4357 = vmatpush1.msra.mxu0 0.0
      %4358 = vmatprep.subr.mxu0 0.0
      %4359 = vmatpush1.msra.mxu0 0.0
      %4360 = vmatprep.subr.mxu0 0.0
      %4361 = vmatpush1.msra.mxu0 0.0
      %4362 = vmatprep.subr.mxu0 0.0
      %4363 = vmatpush1.msra.mxu0 0.0
      %4364 = vmatprep.subr.mxu0 0.0
      %4365 = vmatpush1.msra.mxu0 0.0
      %4366 = vmatprep.subr.mxu0 0.0
      %4367 = vmatpush1.msra.mxu0 0.0
      %4368 = vmatprep.subr.mxu0 0.0
      %4369 = vmatpush1.msra.mxu0 0.0
      %4370 = vmatprep.subr.mxu0 0.0
      %4371 = vmatpush1.msra.mxu0 0.0
      %4372 = vmatprep.subr.mxu0 0.0
      %4373 = vmatpush1.msra.mxu0 0.0
      %4374 = vmatprep.subr.mxu0 0.0
      %4375 = vmatpush1.msra.mxu0 0.0
      %4376 = vmatprep.subr.mxu0 0.0
      %4377 = vmatpush1.msra.mxu0 0.0
      %4378 = vmatprep.subr.mxu0 0.0
      %4379 = vmatpush1.msra.mxu0 0.0
      %4380 = vmatprep.subr.mxu0 0.0
      %4381 = vmatpush1.msra.mxu0 0.0
      %4382 = vmatprep.subr.mxu0 0.0
      %4383 = vmatpush1.msra.mxu0 0.0
      %4384 = vmatprep.subr.mxu0 0.0
      %4385 = vmatpush1.msra.mxu0 0.0
      %4386 = vmatprep.subr.mxu0 0.0
      %4387 = vmatpush1.msra.mxu0 0.0
      %4388 = vmatprep.subr.mxu0 0.0
      %4389 = vmatpush1.msra.mxu0 0.0
      %4390 = vmatprep.subr.mxu0 0.0
      %4391 = vmatpush1.msra.mxu0 0.0
      %4392 = vmatprep.subr.mxu0 0.0
      %4393 = vmatpush1.msra.mxu0 0.0
      %4394 = vmatprep.subr.mxu0 0.0
      %4395 = vmatpush1.msra.mxu0 0.0
      %4396 = vmatprep.mubr.f32.mxu0 0.0
      %4397 = vmatmul.mubr.f32.gmra.mrb[0].mxu0 %v4326
      %v4398 = vpop.f32.mrb[0].mxu0
      %v4399 = vadd.f32 0.0, %v4398
      %v4400 = vpop.f32.mrb[0].mxu0
      %4401 = vdwg.mxu0
      %v4403 = vlaneseq
      %v4404 = vshrl.u32 %v4403, 7
      %v4405 = vsub.s32 0, %v4404
      %v4406 = vrot.slane %v3903, %v4405
      %v4408 = vmul.f32 %v4399, %v4406
      %v4410 = vrot.slane %v4408, 1
      %v4412 = vmul.f32 %v4399, %v4410
      %v4413 = vsub.f32 %v3904, %v4412
      %v4414 = vadd.f32 %v3905, 1.0
      %v4416 = vlaneseq
      %v4417 = vshrl.u32 %v4416, 7
      %v4418 = vsub.s32 0, %v4417
      %v4419 = vrot.slane %v4414, %v4418
      %v4421 = vmul.f32 %v4408, %v4419
      %v4422 = vmul.f32 %v4413, %v4414
      %v4423 = vadd.f32 %v4422, %v3906
      %v4426 = vunpack.c.l.s4 1966171168
      %v4427 = vunpack.c.0.s8 %v4426
      %v4428 = vlaneseq
      %v4429 = vshrl.u32 %v4428, 7
      %v4430 = vsub.s32 %v4427, %v4429
      %v4431 = vrot.slane %v4421, %v4430
      %v4432 = vcombine.high %v4431, %v4431
      %v4434 = vunpack.c.l.s4 1966171168
      %v4435 = vunpack.c.0.s8 %v4434
      %v4436 = vlaneseq
      %v4437 = vshrl.u32 %v4436, 7
      %v4438 = vsub.s32 %v4435, %v4437
      %v4439 = vrot.slane %v4432, %v4438
      %v4441 = vmul.f32 %v3902, %v4439
      %v4442 = vadd.f32 %v4423, %v4441
      %v4443 = vlaneseq
      %v4444 = vshrl.u32 %v4443, 7
      %v4445 = vsub.s32 1, %v4444
      %v4446 = vrot.slane %v4421, %v4445
      %v4447 = vmul.f32 %v3866, %v4446
      %v4448 = vmul.f32 %v3867, %v4446
      %v4449 = vmul.f32 %v3868, %v4446
      %v4450 = vmul.f32 %v3869, %v4446
      %v4451 = vmul.f32 %v3870, %v4446
      %v4452 = vmul.f32 %v3871, %v4446
      %v4453 = vmul.f32 %v3872, %v4446
      %v4454 = vmul.f32 %v3873, %v4446
      %v4455 = vmul.f32 %v3874, %v4446
      %v4456 = vmul.f32 %v3875, %v4446
      %v4457 = vmul.f32 %v3876, %v4446
      %v4458 = vmul.f32 %v3877, %v4446
      %v4459 = vmul.f32 %v3878, %v4446
      %v4460 = vmul.f32 %v3879, %v4446
      %v4461 = vmul.f32 %v3880, %v4446
      %v4462 = vmul.f32 %v3881, %v4446
      %v4463 = vmul.f32 %v3882, %v4446
      %v4464 = vmul.f32 %v3883, %v4446
      %v4465 = vmul.f32 %v3884, %v4446
      %v4466 = vmul.f32 %v3885, %v4446
      %v4467 = vmul.f32 %v3886, %v4446
      %v4468 = vmul.f32 %v3887, %v4446
      %v4469 = vmul.f32 %v3888, %v4446
      %v4470 = vmul.f32 %v3889, %v4446
      %v4471 = vmul.f32 %v3890, %v4446
      %v4472 = vmul.f32 %v3891, %v4446
      %v4473 = vmul.f32 %v3892, %v4446
      %v4474 = vmul.f32 %v3893, %v4446
      %v4475 = vmul.f32 %v3894, %v4446
      %v4476 = vmul.f32 %v3895, %v4446
      %v4477 = vmul.f32 %v3896, %v4446
      %v4478 = vmul.f32 %v3897, %v4446
      %v4479 = vmul.f32 %v3898, %v4446
      %v4480 = vmul.f32 %v3899, %v4446
      %v4481 = vmul.f32 %v3900, %v4446
      %v4482 = vmul.f32 %v3901, %v4446
      %v4484 = vlaneseq
      %v4485 = vshrl.u32 %v4484, 7
      %v4486 = vsub.s32 0, %v4485
      %v4487 = vrot.slane %v4442, %v4486
      %v4489 = vadd.f32 %v4447, %v4487
      %v4490 = vadd.f32 %v4448, %v4487
      %v4491 = vadd.f32 %v4449, %v4487
      %v4492 = vadd.f32 %v4450, %v4487
      %v4493 = vadd.f32 %v4451, %v4487
      %v4494 = vadd.f32 %v4452, %v4487
      %v4495 = vadd.f32 %v4453, %v4487
      %v4496 = vadd.f32 %v4454, %v4487
      %v4497 = vadd.f32 %v4455, %v4487
      %v4498 = vadd.f32 %v4456, %v4487
      %v4499 = vadd.f32 %v4457, %v4487
      %v4500 = vadd.f32 %v4458, %v4487
      %v4501 = vadd.f32 %v4459, %v4487
      %v4502 = vadd.f32 %v4460, %v4487
      %v4503 = vadd.f32 %v4461, %v4487
      %v4504 = vadd.f32 %v4462, %v4487
      %v4505 = vadd.f32 %v4463, %v4487
      %v4506 = vadd.f32 %v4464, %v4487
      %v4507 = vadd.f32 %v4465, %v4487
      %v4508 = vadd.f32 %v4466, %v4487
      %v4509 = vadd.f32 %v4467, %v4487
      %v4510 = vadd.f32 %v4468, %v4487
      %v4511 = vadd.f32 %v4469, %v4487
      %v4512 = vadd.f32 %v4470, %v4487
      %v4513 = vadd.f32 %v4471, %v4487
      %v4514 = vadd.f32 %v4472, %v4487
      %v4515 = vadd.f32 %v4473, %v4487
      %v4516 = vadd.f32 %v4474, %v4487
      %v4517 = vadd.f32 %v4475, %v4487
      %v4518 = vadd.f32 %v4476, %v4487
      %v4519 = vadd.f32 %v4477, %v4487
      %v4520 = vadd.f32 %v4478, %v4487
      %v4521 = vadd.f32 %v4479, %v4487
      %v4522 = vadd.f32 %v4480, %v4487
      %v4523 = vadd.f32 %v4481, %v4487
      %v4524 = vadd.f32 %v4482, %v4487
      %v4525 = vsub.f32 0.0, %v4489
      %v4526 = vsub.f32 0.0, %v4490
      %v4527 = vsub.f32 0.0, %v4491
      %v4528 = vsub.f32 0.0, %v4492
      %v4529 = vsub.f32 0.0, %v4493
      %v4530 = vsub.f32 0.0, %v4494
      %v4531 = vsub.f32 0.0, %v4495
      %v4532 = vsub.f32 0.0, %v4496
      %v4533 = vsub.f32 0.0, %v4497
      %v4534 = vsub.f32 0.0, %v4498
      %v4535 = vsub.f32 0.0, %v4499
      %v4536 = vsub.f32 0.0, %v4500
      %v4537 = vsub.f32 0.0, %v4501
      %v4538 = vsub.f32 0.0, %v4502
      %v4539 = vsub.f32 0.0, %v4503
      %v4540 = vsub.f32 0.0, %v4504
      %v4541 = vsub.f32 0.0, %v4505
      %v4542 = vsub.f32 0.0, %v4506
      %v4543 = vsub.f32 0.0, %v4507
      %v4544 = vsub.f32 0.0, %v4508
      %v4545 = vsub.f32 0.0, %v4509
      %v4546 = vsub.f32 0.0, %v4510
      %v4547 = vsub.f32 0.0, %v4511
      %v4548 = vsub.f32 0.0, %v4512
      %v4549 = vsub.f32 0.0, %v4513
      %v4550 = vsub.f32 0.0, %v4514
      %v4551 = vsub.f32 0.0, %v4515
      %v4552 = vsub.f32 0.0, %v4516
      %v4553 = vsub.f32 0.0, %v4517
      %v4554 = vsub.f32 0.0, %v4518
      %v4555 = vsub.f32 0.0, %v4519
      %v4556 = vsub.f32 0.0, %v4520
      %v4557 = vsub.f32 0.0, %v4521
      %v4558 = vsub.f32 0.0, %v4522
      %v4559 = vsub.f32 0.0, %v4523
      %v4560 = vsub.f32 0.0, %v4524
      %v4561 = vmul.f32 %v4525, 1.442695
      %v4562 = vpow.pop %v4561
      %v4563 = vmul.f32 %v4526, 1.442695
      %v4564 = vpow.pop %v4563
      %v4565 = vmul.f32 %v4527, 1.442695
      %v4566 = vpow.pop %v4565
      %v4567 = vmul.f32 %v4528, 1.442695
      %v4568 = vpow.pop %v4567
      %v4569 = vmul.f32 %v4529, 1.442695
      %v4570 = vpow.pop %v4569
      %v4571 = vmul.f32 %v4530, 1.442695
      %v4572 = vpow.pop %v4571
      %v4573 = vmul.f32 %v4531, 1.442695
      %v4574 = vpow.pop %v4573
      %v4575 = vmul.f32 %v4532, 1.442695
      %v4576 = vpow.pop %v4575
      %v4577 = vmul.f32 %v4533, 1.442695
      %v4578 = vpow.pop %v4577
      %v4579 = vmul.f32 %v4534, 1.442695
      %v4580 = vpow.pop %v4579
      %v4581 = vmul.f32 %v4535, 1.442695
      %v4582 = vpow.pop %v4581
      %v4583 = vmul.f32 %v4536, 1.442695
      %v4584 = vpow.pop %v4583
      %v4585 = vmul.f32 %v4537, 1.442695
      %v4586 = vpow.pop %v4585
      %v4587 = vmul.f32 %v4538, 1.442695
      %v4588 = vpow.pop %v4587
      %v4589 = vmul.f32 %v4539, 1.442695
      %v4590 = vpow.pop %v4589
      %v4591 = vmul.f32 %v4540, 1.442695
      %v4592 = vpow.pop %v4591
      %v4593 = vmul.f32 %v4541, 1.442695
      %v4594 = vpow.pop %v4593
      %v4595 = vmul.f32 %v4542, 1.442695
      %v4596 = vpow.pop %v4595
      %v4597 = vmul.f32 %v4543, 1.442695
      %v4598 = vpow.pop %v4597
      %v4599 = vmul.f32 %v4544, 1.442695
      %v4600 = vpow.pop %v4599
      %v4601 = vmul.f32 %v4545, 1.442695
      %v4602 = vpow.pop %v4601
      %v4603 = vmul.f32 %v4546, 1.442695
      %v4604 = vpow.pop %v4603
      %v4605 = vmul.f32 %v4547, 1.442695
      %v4606 = vpow.pop %v4605
      %v4607 = vmul.f32 %v4548, 1.442695
      %v4608 = vpow.pop %v4607
      %v4609 = vmul.f32 %v4549, 1.442695
      %v4610 = vpow.pop %v4609
      %v4611 = vmul.f32 %v4550, 1.442695
      %v4612 = vpow.pop %v4611
      %v4613 = vmul.f32 %v4551, 1.442695
      %v4614 = vpow.pop %v4613
      %v4615 = vmul.f32 %v4552, 1.442695
      %v4616 = vpow.pop %v4615
      %v4617 = vmul.f32 %v4553, 1.442695
      %v4618 = vpow.pop %v4617
      %v4619 = vmul.f32 %v4554, 1.442695
      %v4620 = vpow.pop %v4619
      %v4621 = vmul.f32 %v4555, 1.442695
      %v4622 = vpow.pop %v4621
      %v4623 = vmul.f32 %v4556, 1.442695
      %v4624 = vpow.pop %v4623
      %v4625 = vmul.f32 %v4557, 1.442695
      %v4626 = vpow.pop %v4625
      %v4627 = vmul.f32 %v4558, 1.442695
      %v4628 = vpow.pop %v4627
      %v4629 = vmul.f32 %v4559, 1.442695
      %v4630 = vpow.pop %v4629
      %v4631 = vmul.f32 %v4560, 1.442695
      %v4632 = vpow.pop %v4631
      %v4633 = vadd.f32 %v4562, 1.0
      %v4634 = vadd.f32 %v4564, 1.0
      %v4635 = vadd.f32 %v4566, 1.0
      %v4636 = vadd.f32 %v4568, 1.0
      %v4637 = vadd.f32 %v4570, 1.0
      %v4638 = vadd.f32 %v4572, 1.0
      %v4639 = vadd.f32 %v4574, 1.0
      %v4640 = vadd.f32 %v4576, 1.0
      %v4641 = vadd.f32 %v4578, 1.0
      %v4642 = vadd.f32 %v4580, 1.0
      %v4643 = vadd.f32 %v4582, 1.0
      %v4644 = vadd.f32 %v4584, 1.0
      %v4645 = vadd.f32 %v4586, 1.0
      %v4646 = vadd.f32 %v4588, 1.0
      %v4647 = vadd.f32 %v4590, 1.0
      %v4648 = vadd.f32 %v4592, 1.0
      %v4649 = vadd.f32 %v4594, 1.0
      %v4650 = vadd.f32 %v4596, 1.0
      %v4651 = vadd.f32 %v4598, 1.0
      %v4652 = vadd.f32 %v4600, 1.0
      %v4653 = vadd.f32 %v4602, 1.0
      %v4654 = vadd.f32 %v4604, 1.0
      %v4655 = vadd.f32 %v4606, 1.0
      %v4656 = vadd.f32 %v4608, 1.0
      %v4657 = vadd.f32 %v4610, 1.0
      %v4658 = vadd.f32 %v4612, 1.0
      %v4659 = vadd.f32 %v4614, 1.0
      %v4660 = vadd.f32 %v4616, 1.0
      %v4661 = vadd.f32 %v4618, 1.0
      %v4662 = vadd.f32 %v4620, 1.0
      %v4663 = vadd.f32 %v4622, 1.0
      %v4664 = vadd.f32 %v4624, 1.0
      %v4665 = vadd.f32 %v4626, 1.0
      %v4666 = vadd.f32 %v4628, 1.0
      %v4667 = vadd.f32 %v4630, 1.0
      %v4668 = vadd.f32 %v4632, 1.0
      %v4669 = vrcp.pop %v4633
      %v4670 = vrcp.pop %v4634
      %v4671 = vrcp.pop %v4635
      %v4672 = vrcp.pop %v4636
      %v4673 = vrcp.pop %v4637
      %v4674 = vrcp.pop %v4638
      %v4675 = vrcp.pop %v4639
      %v4676 = vrcp.pop %v4640
      %v4677 = vrcp.pop %v4641
      %v4678 = vrcp.pop %v4642
      %v4679 = vrcp.pop %v4643
      %v4680 = vrcp.pop %v4644
      %v4681 = vrcp.pop %v4645
      %v4682 = vrcp.pop %v4646
      %v4683 = vrcp.pop %v4647
      %v4684 = vrcp.pop %v4648
      %v4685 = vrcp.pop %v4649
      %v4686 = vrcp.pop %v4650
      %v4687 = vrcp.pop %v4651
      %v4688 = vrcp.pop %v4652
      %v4689 = vrcp.pop %v4653
      %v4690 = vrcp.pop %v4654
      %v4691 = vrcp.pop %v4655
      %v4692 = vrcp.pop %v4656
      %v4693 = vrcp.pop %v4657
      %v4694 = vrcp.pop %v4658
      %v4695 = vrcp.pop %v4659
      %v4696 = vrcp.pop %v4660
      %v4697 = vrcp.pop %v4661
      %v4698 = vrcp.pop %v4662
      %v4699 = vrcp.pop %v4663
      %v4700 = vrcp.pop %v4664
      %v4701 = vrcp.pop %v4665
      %v4702 = vrcp.pop %v4666
      %v4703 = vrcp.pop %v4667
      %v4704 = vrcp.pop %v4668
      %v4705 = vmul.f32 %v4489, %v4669
      %v4706 = vmul.f32 %v4490, %v4670
      %v4707 = vmul.f32 %v4491, %v4671
      %v4708 = vmul.f32 %v4492, %v4672
      %v4709 = vmul.f32 %v4493, %v4673
      %v4710 = vmul.f32 %v4494, %v4674
      %v4711 = vmul.f32 %v4495, %v4675
      %v4712 = vmul.f32 %v4496, %v4676
      %v4713 = vmul.f32 %v4497, %v4677
      %v4714 = vmul.f32 %v4498, %v4678
      %v4715 = vmul.f32 %v4499, %v4679
      %v4716 = vmul.f32 %v4500, %v4680
      %v4717 = vmul.f32 %v4501, %v4681
      %v4718 = vmul.f32 %v4502, %v4682
      %v4719 = vmul.f32 %v4503, %v4683
      %v4720 = vmul.f32 %v4504, %v4684
      %v4721 = vmul.f32 %v4505, %v4685
      %v4722 = vmul.f32 %v4506, %v4686
      %v4723 = vmul.f32 %v4507, %v4687
      %v4724 = vmul.f32 %v4508, %v4688
      %v4725 = vmul.f32 %v4509, %v4689
      %v4726 = vmul.f32 %v4510, %v4690
      %v4727 = vmul.f32 %v4511, %v4691
      %v4728 = vmul.f32 %v4512, %v4692
      %v4729 = vmul.f32 %v4513, %v4693
      %v4730 = vmul.f32 %v4514, %v4694
      %v4731 = vmul.f32 %v4515, %v4695
      %v4732 = vmul.f32 %v4516, %v4696
      %v4733 = vmul.f32 %v4517, %v4697
      %v4734 = vmul.f32 %v4518, %v4698
      %v4735 = vmul.f32 %v4519, %v4699
      %v4736 = vmul.f32 %v4520, %v4700
      %v4737 = vmul.f32 %v4521, %v4701
      %v4738 = vmul.f32 %v4522, %v4702
      %v4739 = vmul.f32 %v4523, %v4703
      %v4740 = vmul.f32 %v4524, %v4704
      %4741 = vst.msk [vmem:[#allocation3] sm:$0xff] %vm4240, 0.0
      %4742 = vst.msk [vmem:[#allocation3 + $0x8] sm:$0xff] %vm4240, 0.0
      %4743 = vst.msk [vmem:[#allocation3 + $0x10] sm:$0xff] %vm4240, 0.0
      %4744 = vst.msk [vmem:[#allocation3 + $0x18] sm:$0xff] %vm4240, 0.0
      %4745 = vst.msk [vmem:[#allocation3 + $0x20] sm:$0xff] %vm4240, 0.0
      %4746 = vst.msk [vmem:[#allocation3 + $0x28] sm:$0xff] %vm4240, 0.0
      %4747 = vst.msk [vmem:[#allocation3 + $0x30] sm:$0xff] %vm4240, 0.0
      %4748 = vst.msk [vmem:[#allocation3 + $0x38] sm:$0xff] %vm4240, 0.0
      %4749 = vst.msk [vmem:[#allocation3 + $0x40] sm:$0xff] %vm4240, 0.0
      %4750 = vst.msk [vmem:[#allocation3 + $0x48] sm:$0xff] %vm4240, 0.0
      %4751 = vst.msk [vmem:[#allocation3 + $0x50] sm:$0xff] %vm4240, 0.0
      %4752 = vst.msk [vmem:[#allocation3 + $0x58] sm:$0xff] %vm4240, 0.0
      %4753 = vst.msk [vmem:[#allocation3 + $0x60] sm:$0xff] %vm4240, 0.0
      %4754 = vst.msk [vmem:[#allocation3 + $0x68] sm:$0xff] %vm4240, 0.0
      %4755 = vst.msk [vmem:[#allocation3 + $0x70] sm:$0xff] %vm4240, 0.0
      %4756 = vst.msk [vmem:[#allocation3 + $0x78] sm:$0xff] %vm4240, 0.0
      %4757 = vst.msk [vmem:[#allocation3 + $0x80] sm:$0xff] %vm4240, 0.0
      %4758 = vst.msk [vmem:[#allocation3 + $0x88] sm:$0xff] %vm4240, 0.0
      %4759 = vst.msk [vmem:[#allocation3 + $0x90] sm:$0xff] %vm4240, 0.0
      %4760 = vst.msk [vmem:[#allocation3 + $0x98] sm:$0xff] %vm4240, 0.0
      %4761 = vst.msk [vmem:[#allocation3 + $0xa0] sm:$0xff] %vm4240, 0.0
      %4762 = vst.msk [vmem:[#allocation3 + $0xa8] sm:$0xff] %vm4240, 0.0
      %4763 = vst.msk [vmem:[#allocation3 + $0xb0] sm:$0xff] %vm4240, 0.0
      %4764 = vst.msk [vmem:[#allocation3 + $0xb8] sm:$0xff] %vm4240, 0.0
      %4765 = vst.msk [vmem:[#allocation3 + $0xc0] sm:$0xff] %vm4240, 0.0
      %4766 = vst.msk [vmem:[#allocation3 + $0xc8] sm:$0xff] %vm4240, 0.0
      %4767 = vst.msk [vmem:[#allocation3 + $0xd0] sm:$0xff] %vm4240, 0.0
      %4768 = vst.msk [vmem:[#allocation3 + $0xd8] sm:$0xff] %vm4240, 0.0
      %4769 = vst.msk [vmem:[#allocation3 + $0xe0] sm:$0xff] %vm4240, 0.0
      %4770 = vst.msk [vmem:[#allocation3 + $0xe8] sm:$0xff] %vm4240, 0.0
      %4771 = vst.msk [vmem:[#allocation3 + $0xf0] sm:$0xff] %vm4240, 0.0
      %4772 = vst.msk [vmem:[#allocation3 + $0xf8] sm:$0xff] %vm4240, 0.0
      %4773 = vst.msk [vmem:[#allocation3 + $0x100] sm:$0xff] %vm4240, 0.0
      %4774 = vst.msk [vmem:[#allocation3 + $0x108] sm:$0xff] %vm4240, 0.0
      %4775 = vst.msk [vmem:[#allocation3 + $0x110] sm:$0xff] %vm4240, 0.0
      %4776 = vst.msk [vmem:[#allocation3 + $0x118] sm:$0xff] %vm4240, 0.0
      %4777 = vst.msk [vmem:[#allocation3 + $0x120] sm:$0xff] %vm4240, 0.0
      %4778 = vst.msk [vmem:[#allocation3 + $0x128] sm:$0xff] %vm4240, 0.0
      %4779 = vst.msk [vmem:[#allocation3 + $0x130] sm:$0xff] %vm4240, 0.0
      %4780 = vst.msk [vmem:[#allocation3 + $0x138] sm:$0xff] %vm4240, 0.0
      %4781 = vst.msk [vmem:[#allocation3 + $0x140] sm:$0xff] %vm4240, 0.0
      %v4782 = vmul.f32 %v4705, %v1004
      %v4783 = vmul.f32 %v4706, %v1005
      %v4784 = vmul.f32 %v4707, %v1006
      %v4785 = vmul.f32 %v4708, %v1007
      %v4786 = vmul.f32 %v4709, %v1008
      %v4787 = vmul.f32 %v4710, %v1009
      %v4788 = vmul.f32 %v4711, %v1010
      %v4789 = vmul.f32 %v4712, %v1011
      %v4790 = vmul.f32 %v4713, %v1012
      %v4791 = vmul.f32 %v4714, %v1013
      %v4792 = vmul.f32 %v4715, %v1014
      %v4793 = vmul.f32 %v4716, %v1015
      %v4794 = vmul.f32 %v4717, %v1016
      %v4795 = vmul.f32 %v4718, %v1017
      %v4796 = vmul.f32 %v4719, %v1018
      %v4797 = vmul.f32 %v4720, %v1019
      %v4798 = vmul.f32 %v4721, %v1020
      %v4799 = vmul.f32 %v4722, %v1021
      %v4800 = vmul.f32 %v4723, %v1022
      %v4801 = vmul.f32 %v4724, %v1023
      %v4802 = vmul.f32 %v4725, %v1024
      %v4803 = vmul.f32 %v4726, %v1025
      %v4804 = vmul.f32 %v4727, %v1026
      %v4805 = vmul.f32 %v4728, %v1027
      %v4806 = vmul.f32 %v4729, %v1028
      %v4807 = vmul.f32 %v4730, %v1029
      %v4808 = vmul.f32 %v4731, %v1030
      %v4809 = vmul.f32 %v4732, %v1031
      %v4810 = vmul.f32 %v4733, %v1032
      %v4811 = vmul.f32 %v4734, %v1033
      %v4812 = vmul.f32 %v4735, %v1034
      %v4813 = vmul.f32 %v4736, %v1035
      %v4814 = vmul.f32 %v4737, %v1036
      %v4815 = vmul.f32 %v4738, %v1037
      %v4816 = vmul.f32 %v4739, %v1038
      %v4817 = vmul.f32 %v4740, %v1039
      %4818 = vst.msk [vmem:[#allocation3 + $0x13] sm:$0xff] %vm4240, %v4782
      %4819 = vst.msk [vmem:[#allocation3 + $0x1b] sm:$0xff] %vm4240, %v4783
      %4820 = vst.msk [vmem:[#allocation3 + $0x23] sm:$0xff] %vm4240, %v4784
      %4821 = vst.msk [vmem:[#allocation3 + $0x2b] sm:$0xff] %vm4240, %v4785
      %4822 = vst.msk [vmem:[#allocation3 + $0x33] sm:$0xff] %vm4240, %v4786
      %4823 = vst.msk [vmem:[#allocation3 + $0x3b] sm:$0xff] %vm4240, %v4787
      %4824 = vst.msk [vmem:[#allocation3 + $0x43] sm:$0xff] %vm4240, %v4788
      %4825 = vst.msk [vmem:[#allocation3 + $0x4b] sm:$0xff] %vm4240, %v4789
      %4826 = vst.msk [vmem:[#allocation3 + $0x53] sm:$0xff] %vm4240, %v4790
      %4827 = vst.msk [vmem:[#allocation3 + $0x5b] sm:$0xff] %vm4240, %v4791
      %4828 = vst.msk [vmem:[#allocation3 + $0x63] sm:$0xff] %vm4240, %v4792
      %4829 = vst.msk [vmem:[#allocation3 + $0x6b] sm:$0xff] %vm4240, %v4793
      %4830 = vst.msk [vmem:[#allocation3 + $0x73] sm:$0xff] %vm4240, %v4794
      %4831 = vst.msk [vmem:[#allocation3 + $0x7b] sm:$0xff] %vm4240, %v4795
      %4832 = vst.msk [vmem:[#allocation3 + $0x83] sm:$0xff] %vm4240, %v4796
      %4833 = vst.msk [vmem:[#allocation3 + $0x8b] sm:$0xff] %vm4240, %v4797
      %4834 = vst.msk [vmem:[#allocation3 + $0x93] sm:$0xff] %vm4240, %v4798
      %4835 = vst.msk [vmem:[#allocation3 + $0x9b] sm:$0xff] %vm4240, %v4799
      %4836 = vst.msk [vmem:[#allocation3 + $0xa3] sm:$0xff] %vm4240, %v4800
      %4837 = vst.msk [vmem:[#allocation3 + $0xab] sm:$0xff] %vm4240, %v4801
      %4838 = vst.msk [vmem:[#allocation3 + $0xb3] sm:$0xff] %vm4240, %v4802
      %4839 = vst.msk [vmem:[#allocation3 + $0xbb] sm:$0xff] %vm4240, %v4803
      %4840 = vst.msk [vmem:[#allocation3 + $0xc3] sm:$0xff] %vm4240, %v4804
      %4841 = vst.msk [vmem:[#allocation3 + $0xcb] sm:$0xff] %vm4240, %v4805
      %4842 = vst.msk [vmem:[#allocation3 + $0xd3] sm:$0xff] %vm4240, %v4806
      %4843 = vst.msk [vmem:[#allocation3 + $0xdb] sm:$0xff] %vm4240, %v4807
      %4844 = vst.msk [vmem:[#allocation3 + $0xe3] sm:$0xff] %vm4240, %v4808
      %4845 = vst.msk [vmem:[#allocation3 + $0xeb] sm:$0xff] %vm4240, %v4809
      %4846 = vst.msk [vmem:[#allocation3 + $0xf3] sm:$0xff] %vm4240, %v4810
      %4847 = vst.msk [vmem:[#allocation3 + $0xfb] sm:$0xff] %vm4240, %v4811
      %4848 = vst.msk [vmem:[#allocation3 + $0x103] sm:$0xff] %vm4240, %v4812
      %4849 = vst.msk [vmem:[#allocation3 + $0x10b] sm:$0xff] %vm4240, %v4813
      %4850 = vst.msk [vmem:[#allocation3 + $0x113] sm:$0xff] %vm4240, %v4814
      %4851 = vst.msk [vmem:[#allocation3 + $0x11b] sm:$0xff] %vm4240, %v4815
      %4852 = vst.msk [vmem:[#allocation3 + $0x123] sm:$0xff] %vm4240, %v4816
      %4853 = vst.msk [vmem:[#allocation3 + $0x12b] sm:$0xff] %vm4240, %v4817
      %v4854 = vld [vmem:[#allocation3] sm:$0xff]
      %v4855 = vld [vmem:[#allocation3 + $0x8] sm:$0xff]
      %v4856 = vld [vmem:[#allocation3 + $0x10] sm:$0xff]
      %v4857 = vld [vmem:[#allocation3 + $0x18] sm:$0xff]
      %v4858 = vld [vmem:[#allocation3 + $0x20] sm:$0xff]
      %v4859 = vld [vmem:[#allocation3 + $0x28] sm:$0xff]
      %v4860 = vld [vmem:[#allocation3 + $0x30] sm:$0xff]
      %v4861 = vld [vmem:[#allocation3 + $0x38] sm:$0xff]
      %v4862 = vld [vmem:[#allocation3 + $0x40] sm:$0xff]
      %v4863 = vld [vmem:[#allocation3 + $0x48] sm:$0xff]
      %v4864 = vld [vmem:[#allocation3 + $0x50] sm:$0xff]
      %v4865 = vld [vmem:[#allocation3 + $0x58] sm:$0xff]
      %v4866 = vld [vmem:[#allocation3 + $0x60] sm:$0xff]
      %v4867 = vld [vmem:[#allocation3 + $0x68] sm:$0xff]
      %v4868 = vld [vmem:[#allocation3 + $0x70] sm:$0xff]
      %v4869 = vld [vmem:[#allocation3 + $0x78] sm:$0xff]
      %v4870 = vld [vmem:[#allocation3 + $0x80] sm:$0xff]
      %v4871 = vld [vmem:[#allocation3 + $0x88] sm:$0xff]
      %v4872 = vld [vmem:[#allocation3 + $0x90] sm:$0xff]
      %v4873 = vld [vmem:[#allocation3 + $0x98] sm:$0xff]
      %v4874 = vld [vmem:[#allocation3 + $0xa0] sm:$0xff]
      %v4875 = vld [vmem:[#allocation3 + $0xa8] sm:$0xff]
      %v4876 = vld [vmem:[#allocation3 + $0xb0] sm:$0xff]
      %v4877 = vld [vmem:[#allocation3 + $0xb8] sm:$0xff]
      %v4878 = vld [vmem:[#allocation3 + $0xc0] sm:$0xff]
      %v4879 = vld [vmem:[#allocation3 + $0xc8] sm:$0xff]
      %v4880 = vld [vmem:[#allocation3 + $0xd0] sm:$0xff]
      %v4881 = vld [vmem:[#allocation3 + $0xd8] sm:$0xff]
      %v4882 = vld [vmem:[#allocation3 + $0xe0] sm:$0xff]
      %v4883 = vld [vmem:[#allocation3 + $0xe8] sm:$0xff]
      %v4884 = vld [vmem:[#allocation3 + $0xf0] sm:$0xff]
      %v4885 = vld [vmem:[#allocation3 + $0xf8] sm:$0xff]
      %v4886 = vld [vmem:[#allocation3 + $0x100] sm:$0xff]
      %v4887 = vld [vmem:[#allocation3 + $0x108] sm:$0xff]
      %v4888 = vld [vmem:[#allocation3 + $0x110] sm:$0xff]
      %v4889 = vld [vmem:[#allocation3 + $0x118] sm:$0xff]
      %v4890 = vpack.c.bf16 %v4855, %v4854
      %v4891 = vpack.c.bf16 %v4857, %v4856
      %v4892 = vpack.c.bf16 %v4859, %v4858
      %v4893 = vpack.c.bf16 %v4861, %v4860
      %v4894 = vpack.c.bf16 %v4863, %v4862
      %v4895 = vpack.c.bf16 %v4865, %v4864
      %v4896 = vpack.c.bf16 %v4867, %v4866
      %v4897 = vpack.c.bf16 %v4869, %v4868
      %v4898 = vpack.c.bf16 %v4871, %v4870
      %v4899 = vpack.c.bf16 %v4873, %v4872
      %v4900 = vpack.c.bf16 %v4875, %v4874
      %v4901 = vpack.c.bf16 %v4877, %v4876
      %v4902 = vpack.c.bf16 %v4879, %v4878
      %v4903 = vpack.c.bf16 %v4881, %v4880
      %v4904 = vpack.c.bf16 %v4883, %v4882
      %v4905 = vpack.c.bf16 %v4885, %v4884
      %v4906 = vpack.c.bf16 %v4887, %v4886
      %v4907 = vpack.c.bf16 %v4889, %v4888
      %v4908 = vld [vmem:[%s5] sm:$0xf]
      %v4909 = vld [vmem:[#allocation3 + $0x1] sm:$0xff]
      %v4910 = vld [vmem:[#allocation3 + $0x9] sm:$0xff]
      %v4911 = vld [vmem:[#allocation3 + $0x11] sm:$0xff]
      %v4912 = vld [vmem:[#allocation3 + $0x19] sm:$0xff]
      %v4913 = vld [vmem:[#allocation3 + $0x21] sm:$0xff]
      %v4914 = vld [vmem:[#allocation3 + $0x29] sm:$0xff]
      %v4915 = vld [vmem:[#allocation3 + $0x31] sm:$0xff]
      %v4916 = vld [vmem:[#allocation3 + $0x39] sm:$0xff]
      %v4917 = vld [vmem:[#allocation3 + $0x41] sm:$0xff]
      %v4918 = vld [vmem:[#allocation3 + $0x49] sm:$0xff]
      %v4919 = vld [vmem:[#allocation3 + $0x51] sm:$0xff]
      %v4920 = vld [vmem:[#allocation3 + $0x59] sm:$0xff]
      %v4921 = vld [vmem:[#allocation3 + $0x61] sm:$0xff]
      %v4922 = vld [vmem:[#allocation3 + $0x69] sm:$0xff]
      %v4923 = vld [vmem:[#allocation3 + $0x71] sm:$0xff]
      %v4924 = vld [vmem:[#allocation3 + $0x79] sm:$0xff]
      %v4925 = vld [vmem:[#allocation3 + $0x81] sm:$0xff]
      %v4926 = vld [vmem:[#allocation3 + $0x89] sm:$0xff]
      %v4927 = vld [vmem:[#allocation3 + $0x91] sm:$0xff]
      %v4928 = vld [vmem:[#allocation3 + $0x99] sm:$0xff]
      %v4929 = vld [vmem:[#allocation3 + $0xa1] sm:$0xff]
      %v4930 = vld [vmem:[#allocation3 + $0xa9] sm:$0xff]
      %v4931 = vld [vmem:[#allocation3 + $0xb1] sm:$0xff]
      %v4932 = vld [vmem:[#allocation3 + $0xb9] sm:$0xff]
      %v4933 = vld [vmem:[#allocation3 + $0xc1] sm:$0xff]
      %v4934 = vld [vmem:[#allocation3 + $0xc9] sm:$0xff]
      %v4935 = vld [vmem:[#allocation3 + $0xd1] sm:$0xff]
      %v4936 = vld [vmem:[#allocation3 + $0xd9] sm:$0xff]
      %v4937 = vld [vmem:[#allocation3 + $0xe1] sm:$0xff]
      %v4938 = vld [vmem:[#allocation3 + $0xe9] sm:$0xff]
      %v4939 = vld [vmem:[#allocation3 + $0xf1] sm:$0xff]
      %v4940 = vld [vmem:[#allocation3 + $0xf9] sm:$0xff]
      %v4941 = vld [vmem:[#allocation3 + $0x101] sm:$0xff]
      %v4942 = vld [vmem:[#allocation3 + $0x109] sm:$0xff]
      %v4943 = vld [vmem:[#allocation3 + $0x111] sm:$0xff]
      %v4944 = vld [vmem:[#allocation3 + $0x119] sm:$0xff]
      %v4945 = vpack.c.bf16 %v4910, %v4909
      %v4946 = vpack.c.bf16 %v4912, %v4911
      %v4947 = vpack.c.bf16 %v4914, %v4913
      %v4948 = vpack.c.bf16 %v4916, %v4915
      %v4949 = vpack.c.bf16 %v4918, %v4917
      %v4950 = vpack.c.bf16 %v4920, %v4919
      %v4951 = vpack.c.bf16 %v4922, %v4921
      %v4952 = vpack.c.bf16 %v4924, %v4923
      %v4953 = vpack.c.bf16 %v4926, %v4925
      %v4954 = vpack.c.bf16 %v4928, %v4927
      %v4955 = vpack.c.bf16 %v4930, %v4929
      %v4956 = vpack.c.bf16 %v4932, %v4931
      %v4957 = vpack.c.bf16 %v4934, %v4933
      %v4958 = vpack.c.bf16 %v4936, %v4935
      %v4959 = vpack.c.bf16 %v4938, %v4937
      %v4960 = vpack.c.bf16 %v4940, %v4939
      %v4961 = vpack.c.bf16 %v4942, %v4941
      %v4962 = vpack.c.bf16 %v4944, %v4943
      %s4963 = scalar_lea.vmem %s5, 4
      %v4964 = vld [vmem:[%s4963] sm:$0xf]
      %v4966 = vsel %vm4240, %v4945, 0
      %v4969 = vsel %vm4240, %v4946, 0
      %v4972 = vsel %vm4240, %v4947, 0
      %v4975 = vsel %vm4240, %v4948, 0
      %v4978 = vsel %vm4240, %v4949, 0
      %v4981 = vsel %vm4240, %v4950, 0
      %v4984 = vsel %vm4240, %v4951, 0
      %v4987 = vsel %vm4240, %v4952, 0
      %v4990 = vsel %vm4240, %v4953, 0
      %v4993 = vsel %vm4240, %v4954, 0
      %v4996 = vsel %vm4240, %v4955, 0
      %v4999 = vsel %vm4240, %v4956, 0
      %v5002 = vsel %vm4240, %v4957, 0
      %v5005 = vsel %vm4240, %v4958, 0
      %v5008 = vsel %vm4240, %v4959, 0
      %v5011 = vsel %vm4240, %v4960, 0
      %v5014 = vsel %vm4240, %v4961, 0
      %v5017 = vsel %vm4240, %v4962, 0
      %v5020 = vsel %vm4328, %v4964, 0
      %5022 = vmatprep.subr.bf16.mxu0 0
      %5023 = vmatpush1.bf16.msra.mxu0 %v5020
      %5024 = vmatprep.subr.bf16.mxu0 0
      %5025 = vmatpush1.bf16.msra.mxu0 0
      %5026 = vmatprep.subr.bf16.mxu0 0
      %5027 = vmatpush1.bf16.msra.mxu0 0
      %5028 = vmatprep.subr.bf16.mxu0 0
      %5029 = vmatpush1.bf16.msra.mxu0 0
      %5030 = vmatprep.subr.bf16.mxu0 0
      %5031 = vmatpush1.bf16.msra.mxu0 0
      %5032 = vmatprep.subr.bf16.mxu0 0
      %5033 = vmatpush1.bf16.msra.mxu0 0
      %5034 = vmatprep.subr.bf16.mxu0 0
      %5035 = vmatpush1.bf16.msra.mxu0 0
      %5036 = vmatprep.subr.bf16.mxu0 0
      %5037 = vmatpush1.bf16.msra.mxu0 0
      %5038 = vmatprep.subr.bf16.mxu0 0
      %5039 = vmatpush1.bf16.msra.mxu0 0
      %5040 = vmatprep.subr.bf16.mxu0 0
      %5041 = vmatpush1.bf16.msra.mxu0 0
      %5042 = vmatprep.subr.bf16.mxu0 0
      %5043 = vmatpush1.bf16.msra.mxu0 0
      %5044 = vmatprep.subr.bf16.mxu0 0
      %5045 = vmatpush1.bf16.msra.mxu0 0
      %5046 = vmatprep.subr.bf16.mxu0 0
      %5047 = vmatpush1.bf16.msra.mxu0 0
      %5048 = vmatprep.subr.bf16.mxu0 0
      %5049 = vmatpush1.bf16.msra.mxu0 0
      %5050 = vmatprep.subr.bf16.mxu0 0
      %5051 = vmatpush1.bf16.msra.mxu0 0
      %5052 = vmatprep.subr.bf16.mxu0 0
      %5053 = vmatpush1.bf16.msra.mxu0 0
      %5054 = vmatprep.mubr.bf16.mxu0 0
      %5055 = vmatmul.mubr.bf16.gmra.mrb[0].mxu0 %v4966
      %v5056 = vpop.f32.mrb[0].mxu0
      %v5057 = vadd.f32 0.0, %v5056
      %v5058 = vpop.f32.mrb[0].mxu0
      %v5059 = vpop.f32.mrb[0].mxu0
      %v5060 = vadd.f32 0.0, %v5059
      %v5061 = vpop.f32.mrb[0].mxu0
      %5062 = vmatprep.mubr.bf16.mxu0 0
      %5063 = vmatmul.mubr.bf16.gmra.mrb[0].mxu0 %v4969
      %v5064 = vpop.f32.mrb[0].mxu0
      %v5065 = vadd.f32 0.0, %v5064
      %v5066 = vpop.f32.mrb[0].mxu0
      %v5067 = vpop.f32.mrb[0].mxu0
      %v5068 = vadd.f32 0.0, %v5067
      %v5069 = vpop.f32.mrb[0].mxu0
      %5070 = vmatprep.mubr.bf16.mxu0 0
      %5071 = vmatmul.mubr.bf16.gmra.mrb[0].mxu0 %v4972
      %v5072 = vpop.f32.mrb[0].mxu0
      %v5073 = vadd.f32 0.0, %v5072
      %v5074 = vpop.f32.mrb[0].mxu0
      %v5075 = vpop.f32.mrb[0].mxu0
      %v5076 = vadd.f32 0.0, %v5075
      %v5077 = vpop.f32.mrb[0].mxu0
      %5078 = vmatprep.mubr.bf16.mxu0 0
      %5079 = vmatmul.mubr.bf16.gmra.mrb[0].mxu0 %v4975
      %v5080 = vpop.f32.mrb[0].mxu0
      %v5081 = vadd.f32 0.0, %v5080
      %v5082 = vpop.f32.mrb[0].mxu0
      %v5083 = vpop.f32.mrb[0].mxu0
      %v5084 = vadd.f32 0.0, %v5083
      %v5085 = vpop.f32.mrb[0].mxu0
      %5086 = vmatprep.mubr.bf16.mxu0 0
      %5087 = vmatmul.mubr.bf16.gmra.mrb[0].mxu0 %v4978
      %v5088 = vpop.f32.mrb[0].mxu0
      %v5089 = vadd.f32 0.0, %v5088
      %v5090 = vpop.f32.mrb[0].mxu0
      %v5091 = vpop.f32.mrb[0].mxu0
      %v5092 = vadd.f32 0.0, %v5091
      %v5093 = vpop.f32.mrb[0].mxu0
      %5094 = vmatprep.mubr.bf16.mxu0 0
      %5095 = vmatmul.mubr.bf16.gmra.mrb[0].mxu0 %v4981
      %v5096 = vpop.f32.mrb[0].mxu0
      %v5097 = vadd.f32 0.0, %v5096
      %v5098 = vpop.f32.mrb[0].mxu0
      %v5099 = vpop.f32.mrb[0].mxu0
      %v5100 = vadd.f32 0.0, %v5099
      %v5101 = vpop.f32.mrb[0].mxu0
      %5102 = vmatprep.mubr.bf16.mxu0 0
      %5103 = vmatmul.mubr.bf16.gmra.mrb[0].mxu0 %v4984
      %v5104 = vpop.f32.mrb[0].mxu0
      %v5105 = vadd.f32 0.0, %v5104
      %v5106 = vpop.f32.mrb[0].mxu0
      %v5107 = vpop.f32.mrb[0].mxu0
      %v5108 = vadd.f32 0.0, %v5107
      %v5109 = vpop.f32.mrb[0].mxu0
      %5110 = vmatprep.mubr.bf16.mxu0 0
      %5111 = vmatmul.mubr.bf16.gmra.mrb[0].mxu0 %v4987
      %v5112 = vpop.f32.mrb[0].mxu0
      %v5113 = vadd.f32 0.0, %v5112
      %v5114 = vpop.f32.mrb[0].mxu0
      %v5115 = vpop.f32.mrb[0].mxu0
      %v5116 = vadd.f32 0.0, %v5115
      %v5117 = vpop.f32.mrb[0].mxu0
      %5118 = vmatprep.mubr.bf16.mxu0 0
      %5119 = vmatmul.mubr.bf16.gmra.mrb[0].mxu0 %v4990
      %v5120 = vpop.f32.mrb[0].mxu0
      %v5121 = vadd.f32 0.0, %v5120
      %v5122 = vpop.f32.mrb[0].mxu0
      %v5123 = vpop.f32.mrb[0].mxu0
      %v5124 = vadd.f32 0.0, %v5123
      %v5125 = vpop.f32.mrb[0].mxu0
      %5126 = vmatprep.mubr.bf16.mxu0 0
      %5127 = vmatmul.mubr.bf16.gmra.mrb[0].mxu0 %v4993
      %v5128 = vpop.f32.mrb[0].mxu0
      %v5129 = vadd.f32 0.0, %v5128
      %v5130 = vpop.f32.mrb[0].mxu0
      %v5131 = vpop.f32.mrb[0].mxu0
      %v5132 = vadd.f32 0.0, %v5131
      %v5133 = vpop.f32.mrb[0].mxu0
      %5134 = vmatprep.mubr.bf16.mxu0 0
      %5135 = vmatmul.mubr.bf16.gmra.mrb[0].mxu0 %v4996
      %v5136 = vpop.f32.mrb[0].mxu0
      %v5137 = vadd.f32 0.0, %v5136
      %v5138 = vpop.f32.mrb[0].mxu0
      %v5139 = vpop.f32.mrb[0].mxu0
      %v5140 = vadd.f32 0.0, %v5139
      %v5141 = vpop.f32.mrb[0].mxu0
      %5142 = vmatprep.mubr.bf16.mxu0 0
      %5143 = vmatmul.mubr.bf16.gmra.mrb[0].mxu0 %v4999
      %v5144 = vpop.f32.mrb[0].mxu0
      %v5145 = vadd.f32 0.0, %v5144
      %v5146 = vpop.f32.mrb[0].mxu0
      %v5147 = vpop.f32.mrb[0].mxu0
      %v5148 = vadd.f32 0.0, %v5147
      %v5149 = vpop.f32.mrb[0].mxu0
      %5150 = vmatprep.mubr.bf16.mxu0 0
      %5151 = vmatmul.mubr.bf16.gmra.mrb[0].mxu0 %v5002
      %v5152 = vpop.f32.mrb[0].mxu0
      %v5153 = vadd.f32 0.0, %v5152
      %v5154 = vpop.f32.mrb[0].mxu0
      %v5155 = vpop.f32.mrb[0].mxu0
      %v5156 = vadd.f32 0.0, %v5155
      %v5157 = vpop.f32.mrb[0].mxu0
      %5158 = vmatprep.mubr.bf16.mxu0 0
      %5159 = vmatmul.mubr.bf16.gmra.mrb[0].mxu0 %v5005
      %v5160 = vpop.f32.mrb[0].mxu0
      %v5161 = vadd.f32 0.0, %v5160
      %v5162 = vpop.f32.mrb[0].mxu0
      %v5163 = vpop.f32.mrb[0].mxu0
      %v5164 = vadd.f32 0.0, %v5163
      %v5165 = vpop.f32.mrb[0].mxu0
      %5166 = vmatprep.mubr.bf16.mxu0 0
      %5167 = vmatmul.mubr.bf16.gmra.mrb[0].mxu0 %v5008
      %v5168 = vpop.f32.mrb[0].mxu0
      %v5169 = vadd.f32 0.0, %v5168
      %v5170 = vpop.f32.mrb[0].mxu0
      %v5171 = vpop.f32.mrb[0].mxu0
      %v5172 = vadd.f32 0.0, %v5171
      %v5173 = vpop.f32.mrb[0].mxu0
      %5174 = vmatprep.mubr.bf16.mxu0 0
      %5175 = vmatmul.mubr.bf16.gmra.mrb[0].mxu0 %v5011
      %v5176 = vpop.f32.mrb[0].mxu0
      %v5177 = vadd.f32 0.0, %v5176
      %v5178 = vpop.f32.mrb[0].mxu0
      %v5179 = vpop.f32.mrb[0].mxu0
      %v5180 = vadd.f32 0.0, %v5179
      %v5181 = vpop.f32.mrb[0].mxu0
      %5182 = vmatprep.mubr.bf16.mxu0 0
      %5183 = vmatmul.mubr.bf16.gmra.mrb[0].mxu0 %v5014
      %v5184 = vpop.f32.mrb[0].mxu0
      %v5185 = vadd.f32 0.0, %v5184
      %v5186 = vpop.f32.mrb[0].mxu0
      %v5187 = vpop.f32.mrb[0].mxu0
      %v5188 = vadd.f32 0.0, %v5187
      %v5189 = vpop.f32.mrb[0].mxu0
      %5190 = vmatprep.mubr.bf16.mxu0 0
      %5191 = vmatmul.mubr.bf16.gmra.mrb[0].mxu0 %v5017
      %v5192 = vpop.f32.mrb[0].mxu0
      %v5193 = vadd.f32 0.0, %v5192
      %v5194 = vpop.f32.mrb[0].mxu0
      %v5195 = vpop.f32.mrb[0].mxu0
      %v5196 = vadd.f32 0.0, %v5195
      %v5197 = vpop.f32.mrb[0].mxu0
      %5198 = vdwg.mxu0
      %v5200 = vsel %vm4240, %v4890, 0
      %v5203 = vsel %vm4240, %v4891, 0
      %v5206 = vsel %vm4240, %v4892, 0
      %v5209 = vsel %vm4240, %v4893, 0
      %v5212 = vsel %vm4240, %v4894, 0
      %v5215 = vsel %vm4240, %v4895, 0
      %v5218 = vsel %vm4240, %v4896, 0
      %v5221 = vsel %vm4240, %v4897, 0
      %v5224 = vsel %vm4240, %v4898, 0
      %v5227 = vsel %vm4240, %v4899, 0
      %v5230 = vsel %vm4240, %v4900, 0
      %v5233 = vsel %vm4240, %v4901, 0
      %v5236 = vsel %vm4240, %v4902, 0
      %v5239 = vsel %vm4240, %v4903, 0
      %v5242 = vsel %vm4240, %v4904, 0
      %v5245 = vsel %vm4240, %v4905, 0
      %v5248 = vsel %vm4240, %v4906, 0
      %v5251 = vsel %vm4240, %v4907, 0
      %v5254 = vsel %vm4328, %v4908, 0
      %5256 = vmatprep.subr.bf16.mxu0 0
      %5257 = vmatpush1.bf16.msra.mxu0 %v5254
      %5258 = vmatprep.subr.bf16.mxu0 0
      %5259 = vmatpush1.bf16.msra.mxu0 0
      %5260 = vmatprep.subr.bf16.mxu0 0
      %5261 = vmatpush1.bf16.msra.mxu0 0
      %5262 = vmatprep.subr.bf16.mxu0 0
      %5263 = vmatpush1.bf16.msra.mxu0 0
      %5264 = vmatprep.subr.bf16.mxu0 0
      %5265 = vmatpush1.bf16.msra.mxu0 0
      %5266 = vmatprep.subr.bf16.mxu0 0
      %5267 = vmatpush1.bf16.msra.mxu0 0
      %5268 = vmatprep.subr.bf16.mxu0 0
      %5269 = vmatpush1.bf16.msra.mxu0 0
      %5270 = vmatprep.subr.bf16.mxu0 0
      %5271 = vmatpush1.bf16.msra.mxu0 0
      %5272 = vmatprep.subr.bf16.mxu0 0
      %5273 = vmatpush1.bf16.msra.mxu0 0
      %5274 = vmatprep.subr.bf16.mxu0 0
      %5275 = vmatpush1.bf16.msra.mxu0 0
      %5276 = vmatprep.subr.bf16.mxu0 0
      %5277 = vmatpush1.bf16.msra.mxu0 0
      %5278 = vmatprep.subr.bf16.mxu0 0
      %5279 = vmatpush1.bf16.msra.mxu0 0
      %5280 = vmatprep.subr.bf16.mxu0 0
      %5281 = vmatpush1.bf16.msra.mxu0 0
      %5282 = vmatprep.subr.bf16.mxu0 0
      %5283 = vmatpush1.bf16.msra.mxu0 0
      %5284 = vmatprep.subr.bf16.mxu0 0
      %5285 = vmatpush1.bf16.msra.mxu0 0
      %5286 = vmatprep.subr.bf16.mxu0 0
      %5287 = vmatpush1.bf16.msra.mxu0 0
      %5288 = vmatprep.mubr.bf16.mxu0 0
      %5289 = vmatmul.mubr.bf16.gmra.mrb[0].mxu0 %v5200
      %v5290 = vpop.f32.mrb[0].mxu0
      %v5291 = vadd.f32 %v5057, %v5290
      %v5292 = vpop.f32.mrb[0].mxu0
      %v5293 = vpop.f32.mrb[0].mxu0
      %v5294 = vadd.f32 %v5060, %v5293
      %v5295 = vpop.f32.mrb[0].mxu0
      %5296 = vmatprep.mubr.bf16.mxu0 0
      %5297 = vmatmul.mubr.bf16.gmra.mrb[0].mxu0 %v5203
      %v5298 = vpop.f32.mrb[0].mxu0
      %v5299 = vadd.f32 %v5065, %v5298
      %v5300 = vpop.f32.mrb[0].mxu0
      %v5301 = vpop.f32.mrb[0].mxu0
      %v5302 = vadd.f32 %v5068, %v5301
      %v5303 = vpop.f32.mrb[0].mxu0
      %5304 = vmatprep.mubr.bf16.mxu0 0
      %5305 = vmatmul.mubr.bf16.gmra.mrb[0].mxu0 %v5206
      %v5306 = vpop.f32.mrb[0].mxu0
      %v5307 = vadd.f32 %v5073, %v5306
      %v5308 = vpop.f32.mrb[0].mxu0
      %v5309 = vpop.f32.mrb[0].mxu0
      %v5310 = vadd.f32 %v5076, %v5309
      %v5311 = vpop.f32.mrb[0].mxu0
      %5312 = vmatprep.mubr.bf16.mxu0 0
      %5313 = vmatmul.mubr.bf16.gmra.mrb[0].mxu0 %v5209
      %v5314 = vpop.f32.mrb[0].mxu0
      %v5315 = vadd.f32 %v5081, %v5314
      %v5316 = vpop.f32.mrb[0].mxu0
      %v5317 = vpop.f32.mrb[0].mxu0
      %v5318 = vadd.f32 %v5084, %v5317
      %v5319 = vpop.f32.mrb[0].mxu0
      %5320 = vmatprep.mubr.bf16.mxu0 0
      %5321 = vmatmul.mubr.bf16.gmra.mrb[0].mxu0 %v5212
      %v5322 = vpop.f32.mrb[0].mxu0
      %v5323 = vadd.f32 %v5089, %v5322
      %v5324 = vpop.f32.mrb[0].mxu0
      %v5325 = vpop.f32.mrb[0].mxu0
      %v5326 = vadd.f32 %v5092, %v5325
      %v5327 = vpop.f32.mrb[0].mxu0
      %5328 = vmatprep.mubr.bf16.mxu0 0
      %5329 = vmatmul.mubr.bf16.gmra.mrb[0].mxu0 %v5215
      %v5330 = vpop.f32.mrb[0].mxu0
      %v5331 = vadd.f32 %v5097, %v5330
      %v5332 = vpop.f32.mrb[0].mxu0
      %v5333 = vpop.f32.mrb[0].mxu0
      %v5334 = vadd.f32 %v5100, %v5333
      %v5335 = vpop.f32.mrb[0].mxu0
      %5336 = vmatprep.mubr.bf16.mxu0 0
      %5337 = vmatmul.mubr.bf16.gmra.mrb[0].mxu0 %v5218
      %v5338 = vpop.f32.mrb[0].mxu0
      %v5339 = vadd.f32 %v5105, %v5338
      %v5340 = vpop.f32.mrb[0].mxu0
      %v5341 = vpop.f32.mrb[0].mxu0
      %v5342 = vadd.f32 %v5108, %v5341
      %v5343 = vpop.f32.mrb[0].mxu0
      %5344 = vmatprep.mubr.bf16.mxu0 0
      %5345 = vmatmul.mubr.bf16.gmra.mrb[0].mxu0 %v5221
      %v5346 = vpop.f32.mrb[0].mxu0
      %v5347 = vadd.f32 %v5113, %v5346
      %v5348 = vpop.f32.mrb[0].mxu0
      %v5349 = vpop.f32.mrb[0].mxu0
      %v5350 = vadd.f32 %v5116, %v5349
      %v5351 = vpop.f32.mrb[0].mxu0
      %5352 = vmatprep.mubr.bf16.mxu0 0
      %5353 = vmatmul.mubr.bf16.gmra.mrb[0].mxu0 %v5224
      %v5354 = vpop.f32.mrb[0].mxu0
      %v5355 = vadd.f32 %v5121, %v5354
      %v5356 = vpop.f32.mrb[0].mxu0
      %v5357 = vpop.f32.mrb[0].mxu0
      %v5358 = vadd.f32 %v5124, %v5357
      %v5359 = vpop.f32.mrb[0].mxu0
      %5360 = vmatprep.mubr.bf16.mxu0 0
      %5361 = vmatmul.mubr.bf16.gmra.mrb[0].mxu0 %v5227
      %v5362 = vpop.f32.mrb[0].mxu0
      %v5363 = vadd.f32 %v5129, %v5362
      %v5364 = vpop.f32.mrb[0].mxu0
      %v5365 = vpop.f32.mrb[0].mxu0
      %v5366 = vadd.f32 %v5132, %v5365
      %v5367 = vpop.f32.mrb[0].mxu0
      %5368 = vmatprep.mubr.bf16.mxu0 0
      %5369 = vmatmul.mubr.bf16.gmra.mrb[0].mxu0 %v5230
      %v5370 = vpop.f32.mrb[0].mxu0
      %v5371 = vadd.f32 %v5137, %v5370
      %v5372 = vpop.f32.mrb[0].mxu0
      %v5373 = vpop.f32.mrb[0].mxu0
      %v5374 = vadd.f32 %v5140, %v5373
      %v5375 = vpop.f32.mrb[0].mxu0
      %5376 = vmatprep.mubr.bf16.mxu0 0
      %5377 = vmatmul.mubr.bf16.gmra.mrb[0].mxu0 %v5233
      %v5378 = vpop.f32.mrb[0].mxu0
      %v5379 = vadd.f32 %v5145, %v5378
      %v5380 = vpop.f32.mrb[0].mxu0
      %v5381 = vpop.f32.mrb[0].mxu0
      %v5382 = vadd.f32 %v5148, %v5381
      %v5383 = vpop.f32.mrb[0].mxu0
      %5384 = vmatprep.mubr.bf16.mxu0 0
      %5385 = vmatmul.mubr.bf16.gmra.mrb[0].mxu0 %v5236
      %v5386 = vpop.f32.mrb[0].mxu0
      %v5387 = vadd.f32 %v5153, %v5386
      %v5388 = vpop.f32.mrb[0].mxu0
      %v5389 = vpop.f32.mrb[0].mxu0
      %v5390 = vadd.f32 %v5156, %v5389
      %v5391 = vpop.f32.mrb[0].mxu0
      %5392 = vmatprep.mubr.bf16.mxu0 0
      %5393 = vmatmul.mubr.bf16.gmra.mrb[0].mxu0 %v5239
      %v5394 = vpop.f32.mrb[0].mxu0
      %v5395 = vadd.f32 %v5161, %v5394
      %v5396 = vpop.f32.mrb[0].mxu0
      %v5397 = vpop.f32.mrb[0].mxu0
      %v5398 = vadd.f32 %v5164, %v5397
      %v5399 = vpop.f32.mrb[0].mxu0
      %5400 = vmatprep.mubr.bf16.mxu0 0
      %5401 = vmatmul.mubr.bf16.gmra.mrb[0].mxu0 %v5242
      %v5402 = vpop.f32.mrb[0].mxu0
      %v5403 = vadd.f32 %v5169, %v5402
      %v5404 = vpop.f32.mrb[0].mxu0
      %v5405 = vpop.f32.mrb[0].mxu0
      %v5406 = vadd.f32 %v5172, %v5405
      %v5407 = vpop.f32.mrb[0].mxu0
      %5408 = vmatprep.mubr.bf16.mxu0 0
      %5409 = vmatmul.mubr.bf16.gmra.mrb[0].mxu0 %v5245
      %v5410 = vpop.f32.mrb[0].mxu0
      %v5411 = vadd.f32 %v5177, %v5410
      %v5412 = vpop.f32.mrb[0].mxu0
      %v5413 = vpop.f32.mrb[0].mxu0
      %v5414 = vadd.f32 %v5180, %v5413
      %v5415 = vpop.f32.mrb[0].mxu0
      %5416 = vmatprep.mubr.bf16.mxu0 0
      %5417 = vmatmul.mubr.bf16.gmra.mrb[0].mxu0 %v5248
      %v5418 = vpop.f32.mrb[0].mxu0
      %v5419 = vadd.f32 %v5185, %v5418
      %v5420 = vpop.f32.mrb[0].mxu0
      %v5421 = vpop.f32.mrb[0].mxu0
      %v5422 = vadd.f32 %v5188, %v5421
      %v5423 = vpop.f32.mrb[0].mxu0
      %5424 = vmatprep.mubr.bf16.mxu0 0
      %5425 = vmatmul.mubr.bf16.gmra.mrb[0].mxu0 %v5251
      %v5426 = vpop.f32.mrb[0].mxu0
      %v5427 = vadd.f32 %v5193, %v5426
      %v5428 = vpop.f32.mrb[0].mxu0
      %v5429 = vpop.f32.mrb[0].mxu0
      %v5430 = vadd.f32 %v5196, %v5429
      %v5431 = vpop.f32.mrb[0].mxu0
      %5432 = vdwg.mxu0
      %v5433 = vld [vmem:[#allocation3 + $0x2] sm:$0xff]
      %v5434 = vld [vmem:[#allocation3 + $0xa] sm:$0xff]
      %v5435 = vld [vmem:[#allocation3 + $0x12] sm:$0xff]
      %v5436 = vld [vmem:[#allocation3 + $0x1a] sm:$0xff]
      %v5437 = vld [vmem:[#allocation3 + $0x22] sm:$0xff]
      %v5438 = vld [vmem:[#allocation3 + $0x2a] sm:$0xff]
      %v5439 = vld [vmem:[#allocation3 + $0x32] sm:$0xff]
      %v5440 = vld [vmem:[#allocation3 + $0x3a] sm:$0xff]
      %v5441 = vld [vmem:[#allocation3 + $0x42] sm:$0xff]
      %v5442 = vld [vmem:[#allocation3 + $0x4a] sm:$0xff]
      %v5443 = vld [vmem:[#allocation3 + $0x52] sm:$0xff]
      %v5444 = vld [vmem:[#allocation3 + $0x5a] sm:$0xff]
      %v5445 = vld [vmem:[#allocation3 + $0x62] sm:$0xff]
      %v5446 = vld [vmem:[#allocation3 + $0x6a] sm:$0xff]
      %v5447 = vld [vmem:[#allocation3 + $0x72] sm:$0xff]
      %v5448 = vld [vmem:[#allocation3 + $0x7a] sm:$0xff]
      %v5449 = vld [vmem:[#allocation3 + $0x82] sm:$0xff]
      %v5450 = vld [vmem:[#allocation3 + $0x8a] sm:$0xff]
      %v5451 = vld [vmem:[#allocation3 + $0x92] sm:$0xff]
      %v5452 = vld [vmem:[#allocation3 + $0x9a] sm:$0xff]
      %v5453 = vld [vmem:[#allocation3 + $0xa2] sm:$0xff]
      %v5454 = vld [vmem:[#allocation3 + $0xaa] sm:$0xff]
      %v5455 = vld [vmem:[#allocation3 + $0xb2] sm:$0xff]
      %v5456 = vld [vmem:[#allocation3 + $0xba] sm:$0xff]
      %v5457 = vld [vmem:[#allocation3 + $0xc2] sm:$0xff]
      %v5458 = vld [vmem:[#allocation3 + $0xca] sm:$0xff]
      %v5459 = vld [vmem:[#allocation3 + $0xd2] sm:$0xff]
      %v5460 = vld [vmem:[#allocation3 + $0xda] sm:$0xff]
      %v5461 = vld [vmem:[#allocation3 + $0xe2] sm:$0xff]
      %v5462 = vld [vmem:[#allocation3 + $0xea] sm:$0xff]
      %v5463 = vld [vmem:[#allocation3 + $0xf2] sm:$0xff]
      %v5464 = vld [vmem:[#allocation3 + $0xfa] sm:$0xff]
      %v5465 = vld [vmem:[#allocation3 + $0x102] sm:$0xff]
      %v5466 = vld [vmem:[#allocation3 + $0x10a] sm:$0xff]
      %v5467 = vld [vmem:[#allocation3 + $0x112] sm:$0xff]
      %v5468 = vld [vmem:[#allocation3 + $0x11a] sm:$0xff]
      %v5469 = vpack.c.bf16 %v5434, %v5433
      %v5470 = vpack.c.bf16 %v5436, %v5435
      %v5471 = vpack.c.bf16 %v5438, %v5437
      %v5472 = vpack.c.bf16 %v5440, %v5439
      %v5473 = vpack.c.bf16 %v5442, %v5441
      %v5474 = vpack.c.bf16 %v5444, %v5443
      %v5475 = vpack.c.bf16 %v5446, %v5445
      %v5476 = vpack.c.bf16 %v5448, %v5447
      %v5477 = vpack.c.bf16 %v5450, %v5449
      %v5478 = vpack.c.bf16 %v5452, %v5451
      %v5479 = vpack.c.bf16 %v5454, %v5453
      %v5480 = vpack.c.bf16 %v5456, %v5455
      %v5481 = vpack.c.bf16 %v5458, %v5457
      %v5482 = vpack.c.bf16 %v5460, %v5459
      %v5483 = vpack.c.bf16 %v5462, %v5461
      %v5484 = vpack.c.bf16 %v5464, %v5463
      %v5485 = vpack.c.bf16 %v5466, %v5465
      %v5486 = vpack.c.bf16 %v5468, %v5467
      %s5487 = scalar_lea.vmem %s5, 8
      %v5488 = vld [vmem:[%s5487] sm:$0xf]
      %v5490 = vsel %vm4240, %v5469, 0
      %v5493 = vsel %vm4240, %v5470, 0
      %v5496 = vsel %vm4240, %v5471, 0
      %v5499 = vsel %vm4240, %v5472, 0
      %v5502 = vsel %vm4240, %v5473, 0
      %v5505 = vsel %vm4240, %v5474, 0
      %v5508 = vsel %vm4240, %v5475, 0
      %v5511 = vsel %vm4240, %v5476, 0
      %v5514 = vsel %vm4240, %v5477, 0
      %v5517 = vsel %vm4240, %v5478, 0
      %v5520 = vsel %vm4240, %v5479, 0
      %v5523 = vsel %vm4240, %v5480, 0
      %v5526 = vsel %vm4240, %v5481, 0
      %v5529 = vsel %vm4240, %v5482, 0
      %v5532 = vsel %vm4240, %v5483, 0
      %v5535 = vsel %vm4240, %v5484, 0
      %v5538 = vsel %vm4240, %v5485, 0
      %v5541 = vsel %vm4240, %v5486, 0
      %v5544 = vsel %vm4328, %v5488, 0
      %5546 = vmatprep.subr.bf16.mxu0 0
      %5547 = vmatpush1.bf16.msra.mxu0 %v5544
      %5548 = vmatprep.subr.bf16.mxu0 0
      %5549 = vmatpush1.bf16.msra.mxu0 0
      %5550 = vmatprep.subr.bf16.mxu0 0
      %5551 = vmatpush1.bf16.msra.mxu0 0
      %5552 = vmatprep.subr.bf16.mxu0 0
      %5553 = vmatpush1.bf16.msra.mxu0 0
      %5554 = vmatprep.subr.bf16.mxu0 0
      %5555 = vmatpush1.bf16.msra.mxu0 0
      %5556 = vmatprep.subr.bf16.mxu0 0
      %5557 = vmatpush1.bf16.msra.mxu0 0
      %5558 = vmatprep.subr.bf16.mxu0 0
      %5559 = vmatpush1.bf16.msra.mxu0 0
      %5560 = vmatprep.subr.bf16.mxu0 0
      %5561 = vmatpush1.bf16.msra.mxu0 0
      %5562 = vmatprep.subr.bf16.mxu0 0
      %5563 = vmatpush1.bf16.msra.mxu0 0
      %5564 = vmatprep.subr.bf16.mxu0 0
      %5565 = vmatpush1.bf16.msra.mxu0 0
      %5566 = vmatprep.subr.bf16.mxu0 0
      %5567 = vmatpush1.bf16.msra.mxu0 0
      %5568 = vmatprep.subr.bf16.mxu0 0
      %5569 = vmatpush1.bf16.msra.mxu0 0
      %5570 = vmatprep.subr.bf16.mxu0 0
      %5571 = vmatpush1.bf16.msra.mxu0 0
      %5572 = vmatprep.subr.bf16.mxu0 0
      %5573 = vmatpush1.bf16.msra.mxu0 0
      %5574 = vmatprep.subr.bf16.mxu0 0
      %5575 = vmatpush1.bf16.msra.mxu0 0
      %5576 = vmatprep.subr.bf16.mxu0 0
      %5577 = vmatpush1.bf16.msra.mxu0 0
      %5578 = vmatprep.mubr.bf16.mxu0 0
      %5579 = vmatmul.mubr.bf16.gmra.mrb[0].mxu0 %v5490
      %v5580 = vpop.f32.mrb[0].mxu0
      %v5581 = vadd.f32 0.0, %v5580
      %v5582 = vpop.f32.mrb[0].mxu0
      %v5583 = vpop.f32.mrb[0].mxu0
      %v5584 = vadd.f32 0.0, %v5583
      %v5585 = vpop.f32.mrb[0].mxu0
      %5586 = vmatprep.mubr.bf16.mxu0 0
      %5587 = vmatmul.mubr.bf16.gmra.mrb[0].mxu0 %v5493
      %v5588 = vpop.f32.mrb[0].mxu0
      %v5589 = vadd.f32 0.0, %v5588
      %v5590 = vpop.f32.mrb[0].mxu0
      %v5591 = vpop.f32.mrb[0].mxu0
      %v5592 = vadd.f32 0.0, %v5591
      %v5593 = vpop.f32.mrb[0].mxu0
      %5594 = vmatprep.mubr.bf16.mxu0 0
      %5595 = vmatmul.mubr.bf16.gmra.mrb[0].mxu0 %v5496
      %v5596 = vpop.f32.mrb[0].mxu0
      %v5597 = vadd.f32 0.0, %v5596
      %v5598 = vpop.f32.mrb[0].mxu0
      %v5599 = vpop.f32.mrb[0].mxu0
      %v5600 = vadd.f32 0.0, %v5599
      %v5601 = vpop.f32.mrb[0].mxu0
      %5602 = vmatprep.mubr.bf16.mxu0 0
      %5603 = vmatmul.mubr.bf16.gmra.mrb[0].mxu0 %v5499
      %v5604 = vpop.f32.mrb[0].mxu0
      %v5605 = vadd.f32 0.0, %v5604
      %v5606 = vpop.f32.mrb[0].mxu0
      %v5607 = vpop.f32.mrb[0].mxu0
      %v5608 = vadd.f32 0.0, %v5607
      %v5609 = vpop.f32.mrb[0].mxu0
      %5610 = vmatprep.mubr.bf16.mxu0 0
      %5611 = vmatmul.mubr.bf16.gmra.mrb[0].mxu0 %v5502
      %v5612 = vpop.f32.mrb[0].mxu0
      %v5613 = vadd.f32 0.0, %v5612
      %v5614 = vpop.f32.mrb[0].mxu0
      %v5615 = vpop.f32.mrb[0].mxu0
      %v5616 = vadd.f32 0.0, %v5615
      %v5617 = vpop.f32.mrb[0].mxu0
      %5618 = vmatprep.mubr.bf16.mxu0 0
      %5619 = vmatmul.mubr.bf16.gmra.mrb[0].mxu0 %v5505
      %v5620 = vpop.f32.mrb[0].mxu0
      %v5621 = vadd.f32 0.0, %v5620
      %v5622 = vpop.f32.mrb[0].mxu0
      %v5623 = vpop.f32.mrb[0].mxu0
      %v5624 = vadd.f32 0.0, %v5623
      %v5625 = vpop.f32.mrb[0].mxu0
      %5626 = vmatprep.mubr.bf16.mxu0 0
      %5627 = vmatmul.mubr.bf16.gmra.mrb[0].mxu0 %v5508
      %v5628 = vpop.f32.mrb[0].mxu0
      %v5629 = vadd.f32 0.0, %v5628
      %v5630 = vpop.f32.mrb[0].mxu0
      %v5631 = vpop.f32.mrb[0].mxu0
      %v5632 = vadd.f32 0.0, %v5631
      %v5633 = vpop.f32.mrb[0].mxu0
      %5634 = vmatprep.mubr.bf16.mxu0 0
      %5635 = vmatmul.mubr.bf16.gmra.mrb[0].mxu0 %v5511
      %v5636 = vpop.f32.mrb[0].mxu0
      %v5637 = vadd.f32 0.0, %v5636
      %v5638 = vpop.f32.mrb[0].mxu0
      %v5639 = vpop.f32.mrb[0].mxu0
      %v5640 = vadd.f32 0.0, %v5639
      %v5641 = vpop.f32.mrb[0].mxu0
      %5642 = vmatprep.mubr.bf16.mxu0 0
      %5643 = vmatmul.mubr.bf16.gmra.mrb[0].mxu0 %v5514
      %v5644 = vpop.f32.mrb[0].mxu0
      %v5645 = vadd.f32 0.0, %v5644
      %v5646 = vpop.f32.mrb[0].mxu0
      %v5647 = vpop.f32.mrb[0].mxu0
      %v5648 = vadd.f32 0.0, %v5647
      %v5649 = vpop.f32.mrb[0].mxu0
      %5650 = vmatprep.mubr.bf16.mxu0 0
      %5651 = vmatmul.mubr.bf16.gmra.mrb[0].mxu0 %v5517
      %v5652 = vpop.f32.mrb[0].mxu0
      %v5653 = vadd.f32 0.0, %v5652
      %v5654 = vpop.f32.mrb[0].mxu0
      %v5655 = vpop.f32.mrb[0].mxu0
      %v5656 = vadd.f32 0.0, %v5655
      %v5657 = vpop.f32.mrb[0].mxu0
      %5658 = vmatprep.mubr.bf16.mxu0 0
      %5659 = vmatmul.mubr.bf16.gmra.mrb[0].mxu0 %v5520
      %v5660 = vpop.f32.mrb[0].mxu0
      %v5661 = vadd.f32 0.0, %v5660
      %v5662 = vpop.f32.mrb[0].mxu0
      %v5663 = vpop.f32.mrb[0].mxu0
      %v5664 = vadd.f32 0.0, %v5663
      %v5665 = vpop.f32.mrb[0].mxu0
      %5666 = vmatprep.mubr.bf16.mxu0 0
      %5667 = vmatmul.mubr.bf16.gmra.mrb[0].mxu0 %v5523
      %v5668 = vpop.f32.mrb[0].mxu0
      %v5669 = vadd.f32 0.0, %v5668
      %v5670 = vpop.f32.mrb[0].mxu0
      %v5671 = vpop.f32.mrb[0].mxu0
      %v5672 = vadd.f32 0.0, %v5671
      %v5673 = vpop.f32.mrb[0].mxu0
      %5674 = vmatprep.mubr.bf16.mxu0 0
      %5675 = vmatmul.mubr.bf16.gmra.mrb[0].mxu0 %v5526
      %v5676 = vpop.f32.mrb[0].mxu0
      %v5677 = vadd.f32 0.0, %v5676
      %v5678 = vpop.f32.mrb[0].mxu0
      %v5679 = vpop.f32.mrb[0].mxu0
      %v5680 = vadd.f32 0.0, %v5679
      %v5681 = vpop.f32.mrb[0].mxu0
      %5682 = vmatprep.mubr.bf16.mxu0 0
      %5683 = vmatmul.mubr.bf16.gmra.mrb[0].mxu0 %v5529
      %v5684 = vpop.f32.mrb[0].mxu0
      %v5685 = vadd.f32 0.0, %v5684
      %v5686 = vpop.f32.mrb[0].mxu0
      %v5687 = vpop.f32.mrb[0].mxu0
      %v5688 = vadd.f32 0.0, %v5687
      %v5689 = vpop.f32.mrb[0].mxu0
      %5690 = vmatprep.mubr.bf16.mxu0 0
      %5691 = vmatmul.mubr.bf16.gmra.mrb[0].mxu0 %v5532
      %v5692 = vpop.f32.mrb[0].mxu0
      %v5693 = vadd.f32 0.0, %v5692
      %v5694 = vpop.f32.mrb[0].mxu0
      %v5695 = vpop.f32.mrb[0].mxu0
      %v5696 = vadd.f32 0.0, %v5695
      %v5697 = vpop.f32.mrb[0].mxu0
      %5698 = vmatprep.mubr.bf16.mxu0 0
      %5699 = vmatmul.mubr.bf16.gmra.mrb[0].mxu0 %v5535
      %v5700 = vpop.f32.mrb[0].mxu0
      %v5701 = vadd.f32 0.0, %v5700
      %v5702 = vpop.f32.mrb[0].mxu0
      %v5703 = vpop.f32.mrb[0].mxu0
      %v5704 = vadd.f32 0.0, %v5703
      %v5705 = vpop.f32.mrb[0].mxu0
      %5706 = vmatprep.mubr.bf16.mxu0 0
      %5707 = vmatmul.mubr.bf16.gmra.mrb[0].mxu0 %v5538
      %v5708 = vpop.f32.mrb[0].mxu0
      %v5709 = vadd.f32 0.0, %v5708
      %v5710 = vpop.f32.mrb[0].mxu0
      %v5711 = vpop.f32.mrb[0].mxu0
      %v5712 = vadd.f32 0.0, %v5711
      %v5713 = vpop.f32.mrb[0].mxu0
      %5714 = vmatprep.mubr.bf16.mxu0 0
      %5715 = vmatmul.mubr.bf16.gmra.mrb[0].mxu0 %v5541
      %v5716 = vpop.f32.mrb[0].mxu0
      %v5717 = vadd.f32 0.0, %v5716
      %v5718 = vpop.f32.mrb[0].mxu0
      %v5719 = vpop.f32.mrb[0].mxu0
      %v5720 = vadd.f32 0.0, %v5719
      %v5721 = vpop.f32.mrb[0].mxu0
      %5722 = vdwg.mxu0
      %v5723 = vadd.f32 %v5291, %v5581
      %v5724 = vadd.f32 %v5294, %v5584
      %v5725 = vadd.f32 %v5299, %v5589
      %v5726 = vadd.f32 %v5302, %v5592
      %v5727 = vadd.f32 %v5307, %v5597
      %v5728 = vadd.f32 %v5310, %v5600
      %v5729 = vadd.f32 %v5315, %v5605
      %v5730 = vadd.f32 %v5318, %v5608
      %v5731 = vadd.f32 %v5323, %v5613
      %v5732 = vadd.f32 %v5326, %v5616
      %v5733 = vadd.f32 %v5331, %v5621
      %v5734 = vadd.f32 %v5334, %v5624
      %v5735 = vadd.f32 %v5339, %v5629
      %v5736 = vadd.f32 %v5342, %v5632
      %v5737 = vadd.f32 %v5347, %v5637
      %v5738 = vadd.f32 %v5350, %v5640
      %v5739 = vadd.f32 %v5355, %v5645
      %v5740 = vadd.f32 %v5358, %v5648
      %v5741 = vadd.f32 %v5363, %v5653
      %v5742 = vadd.f32 %v5366, %v5656
      %v5743 = vadd.f32 %v5371, %v5661
      %v5744 = vadd.f32 %v5374, %v5664
      %v5745 = vadd.f32 %v5379, %v5669
      %v5746 = vadd.f32 %v5382, %v5672
      %v5747 = vadd.f32 %v5387, %v5677
      %v5748 = vadd.f32 %v5390, %v5680
      %v5749 = vadd.f32 %v5395, %v5685
      %v5750 = vadd.f32 %v5398, %v5688
      %v5751 = vadd.f32 %v5403, %v5693
      %v5752 = vadd.f32 %v5406, %v5696
      %v5753 = vadd.f32 %v5411, %v5701
      %v5754 = vadd.f32 %v5414, %v5704
      %v5755 = vadd.f32 %v5419, %v5709
      %v5756 = vadd.f32 %v5422, %v5712
      %v5757 = vadd.f32 %v5427, %v5717
      %v5758 = vadd.f32 %v5430, %v5720
      %v5759 = vld [vmem:[#allocation3 + $0x12] sm:$0xff]
      %v5760 = vld [vmem:[#allocation3 + $0x1a] sm:$0xff]
      %v5761 = vld [vmem:[#allocation3 + $0x22] sm:$0xff]
      %v5762 = vld [vmem:[#allocation3 + $0x2a] sm:$0xff]
      %v5763 = vld [vmem:[#allocation3 + $0x32] sm:$0xff]
      %v5764 = vld [vmem:[#allocation3 + $0x3a] sm:$0xff]
      %v5765 = vld [vmem:[#allocation3 + $0x42] sm:$0xff]
      %v5766 = vld [vmem:[#allocation3 + $0x4a] sm:$0xff]
      %v5767 = vld [vmem:[#allocation3 + $0x52] sm:$0xff]
      %v5768 = vld [vmem:[#allocation3 + $0x5a] sm:$0xff]
      %v5769 = vld [vmem:[#allocation3 + $0x62] sm:$0xff]
      %v5770 = vld [vmem:[#allocation3 + $0x6a] sm:$0xff]
      %v5771 = vld [vmem:[#allocation3 + $0x72] sm:$0xff]
      %v5772 = vld [vmem:[#allocation3 + $0x7a] sm:$0xff]
      %v5773 = vld [vmem:[#allocation3 + $0x82] sm:$0xff]
      %v5774 = vld [vmem:[#allocation3 + $0x8a] sm:$0xff]
      %v5775 = vld [vmem:[#allocation3 + $0x92] sm:$0xff]
      %v5776 = vld [vmem:[#allocation3 + $0x9a] sm:$0xff]
      %v5777 = vld [vmem:[#allocation3 + $0xa2] sm:$0xff]
      %v5778 = vld [vmem:[#allocation3 + $0xaa] sm:$0xff]
      %v5779 = vld [vmem:[#allocation3 + $0xb2] sm:$0xff]
      %v5780 = vld [vmem:[#allocation3 + $0xba] sm:$0xff]
      %v5781 = vld [vmem:[#allocation3 + $0xc2] sm:$0xff]
      %v5782 = vld [vmem:[#allocation3 + $0xca] sm:$0xff]
      %v5783 = vld [vmem:[#allocation3 + $0xd2] sm:$0xff]
      %v5784 = vld [vmem:[#allocation3 + $0xda] sm:$0xff]
      %v5785 = vld [vmem:[#allocation3 + $0xe2] sm:$0xff]
      %v5786 = vld [vmem:[#allocation3 + $0xea] sm:$0xff]
      %v5787 = vld [vmem:[#allocation3 + $0xf2] sm:$0xff]
      %v5788 = vld [vmem:[#allocation3 + $0xfa] sm:$0xff]
      %v5789 = vld [vmem:[#allocation3 + $0x102] sm:$0xff]
      %v5790 = vld [vmem:[#allocation3 + $0x10a] sm:$0xff]
      %v5791 = vld [vmem:[#allocation3 + $0x112] sm:$0xff]
      %v5792 = vld [vmem:[#allocation3 + $0x11a] sm:$0xff]
      %v5793 = vld [vmem:[#allocation3 + $0x122] sm:$0xff]
      %v5794 = vld [vmem:[#allocation3 + $0x12a] sm:$0xff]
      %v5795 = vpack.c.bf16 %v5760, %v5759
      %v5796 = vpack.c.bf16 %v5762, %v5761
      %v5797 = vpack.c.bf16 %v5764, %v5763
      %v5798 = vpack.c.bf16 %v5766, %v5765
      %v5799 = vpack.c.bf16 %v5768, %v5767
      %v5800 = vpack.c.bf16 %v5770, %v5769
      %v5801 = vpack.c.bf16 %v5772, %v5771
      %v5802 = vpack.c.bf16 %v5774, %v5773
      %v5803 = vpack.c.bf16 %v5776, %v5775
      %v5804 = vpack.c.bf16 %v5778, %v5777
      %v5805 = vpack.c.bf16 %v5780, %v5779
      %v5806 = vpack.c.bf16 %v5782, %v5781
      %v5807 = vpack.c.bf16 %v5784, %v5783
      %v5808 = vpack.c.bf16 %v5786, %v5785
      %v5809 = vpack.c.bf16 %v5788, %v5787
      %v5810 = vpack.c.bf16 %v5790, %v5789
      %v5811 = vpack.c.bf16 %v5792, %v5791
      %v5812 = vpack.c.bf16 %v5794, %v5793
      %s5813 = scalar_lea.vmem %s5, 12
      %v5814 = vld [vmem:[%s5813] sm:$0xf]
      %v5816 = vsel %vm4240, %v5795, 0
      %v5819 = vsel %vm4240, %v5796, 0
      %v5822 = vsel %vm4240, %v5797, 0
      %v5825 = vsel %vm4240, %v5798, 0
      %v5828 = vsel %vm4240, %v5799, 0
      %v5831 = vsel %vm4240, %v5800, 0
      %v5834 = vsel %vm4240, %v5801, 0
      %v5837 = vsel %vm4240, %v5802, 0
      %v5840 = vsel %vm4240, %v5803, 0
      %v5843 = vsel %vm4240, %v5804, 0
      %v5846 = vsel %vm4240, %v5805, 0
      %v5849 = vsel %vm4240, %v5806, 0
      %v5852 = vsel %vm4240, %v5807, 0
      %v5855 = vsel %vm4240, %v5808, 0
      %v5858 = vsel %vm4240, %v5809, 0
      %v5861 = vsel %vm4240, %v5810, 0
      %v5864 = vsel %vm4240, %v5811, 0
      %v5867 = vsel %vm4240, %v5812, 0
      %v5870 = vsel %vm4328, %v5814, 0
      %5872 = vmatprep.subr.bf16.mxu0 0
      %5873 = vmatpush1.bf16.msra.mxu0 %v5870
      %5874 = vmatprep.subr.bf16.mxu0 0
      %5875 = vmatpush1.bf16.msra.mxu0 0
      %5876 = vmatprep.subr.bf16.mxu0 0
      %5877 = vmatpush1.bf16.msra.mxu0 0
      %5878 = vmatprep.subr.bf16.mxu0 0
      %5879 = vmatpush1.bf16.msra.mxu0 0
      %5880 = vmatprep.subr.bf16.mxu0 0
      %5881 = vmatpush1.bf16.msra.mxu0 0
      %5882 = vmatprep.subr.bf16.mxu0 0
      %5883 = vmatpush1.bf16.msra.mxu0 0
      %5884 = vmatprep.subr.bf16.mxu0 0
      %5885 = vmatpush1.bf16.msra.mxu0 0
      %5886 = vmatprep.subr.bf16.mxu0 0
      %5887 = vmatpush1.bf16.msra.mxu0 0
      %5888 = vmatprep.subr.bf16.mxu0 0
      %5889 = vmatpush1.bf16.msra.mxu0 0
      %5890 = vmatprep.subr.bf16.mxu0 0
      %5891 = vmatpush1.bf16.msra.mxu0 0
      %5892 = vmatprep.subr.bf16.mxu0 0
      %5893 = vmatpush1.bf16.msra.mxu0 0
      %5894 = vmatprep.subr.bf16.mxu0 0
      %5895 = vmatpush1.bf16.msra.mxu0 0
      %5896 = vmatprep.subr.bf16.mxu0 0
      %5897 = vmatpush1.bf16.msra.mxu0 0
      %5898 = vmatprep.subr.bf16.mxu0 0
      %5899 = vmatpush1.bf16.msra.mxu0 0
      %5900 = vmatprep.subr.bf16.mxu0 0
      %5901 = vmatpush1.bf16.msra.mxu0 0
      %5902 = vmatprep.subr.bf16.mxu0 0
      %5903 = vmatpush1.bf16.msra.mxu0 0
      %5904 = vmatprep.mubr.bf16.mxu0 0
      %5905 = vmatmul.mubr.bf16.gmra.mrb[0].mxu0 %v5816
      %v5906 = vpop.f32.mrb[0].mxu0
      %v5907 = vadd.f32 0.0, %v5906
      %v5908 = vpop.f32.mrb[0].mxu0
      %v5909 = vpop.f32.mrb[0].mxu0
      %v5910 = vadd.f32 0.0, %v5909
      %v5911 = vpop.f32.mrb[0].mxu0
      %5912 = vmatprep.mubr.bf16.mxu0 0
      %5913 = vmatmul.mubr.bf16.gmra.mrb[0].mxu0 %v5819
      %v5914 = vpop.f32.mrb[0].mxu0
      %v5915 = vadd.f32 0.0, %v5914
      %v5916 = vpop.f32.mrb[0].mxu0
      %v5917 = vpop.f32.mrb[0].mxu0
      %v5918 = vadd.f32 0.0, %v5917
      %v5919 = vpop.f32.mrb[0].mxu0
      %5920 = vmatprep.mubr.bf16.mxu0 0
      %5921 = vmatmul.mubr.bf16.gmra.mrb[0].mxu0 %v5822
      %v5922 = vpop.f32.mrb[0].mxu0
      %v5923 = vadd.f32 0.0, %v5922
      %v5924 = vpop.f32.mrb[0].mxu0
      %v5925 = vpop.f32.mrb[0].mxu0
      %v5926 = vadd.f32 0.0, %v5925
      %v5927 = vpop.f32.mrb[0].mxu0
      %5928 = vmatprep.mubr.bf16.mxu0 0
      %5929 = vmatmul.mubr.bf16.gmra.mrb[0].mxu0 %v5825
      %v5930 = vpop.f32.mrb[0].mxu0
      %v5931 = vadd.f32 0.0, %v5930
      %v5932 = vpop.f32.mrb[0].mxu0
      %v5933 = vpop.f32.mrb[0].mxu0
      %v5934 = vadd.f32 0.0, %v5933
      %v5935 = vpop.f32.mrb[0].mxu0
      %5936 = vmatprep.mubr.bf16.mxu0 0
      %5937 = vmatmul.mubr.bf16.gmra.mrb[0].mxu0 %v5828
      %v5938 = vpop.f32.mrb[0].mxu0
      %v5939 = vadd.f32 0.0, %v5938
      %v5940 = vpop.f32.mrb[0].mxu0
      %v5941 = vpop.f32.mrb[0].mxu0
      %v5942 = vadd.f32 0.0, %v5941
      %v5943 = vpop.f32.mrb[0].mxu0
      %5944 = vmatprep.mubr.bf16.mxu0 0
      %5945 = vmatmul.mubr.bf16.gmra.mrb[0].mxu0 %v5831
      %v5946 = vpop.f32.mrb[0].mxu0
      %v5947 = vadd.f32 0.0, %v5946
      %v5948 = vpop.f32.mrb[0].mxu0
      %v5949 = vpop.f32.mrb[0].mxu0
      %v5950 = vadd.f32 0.0, %v5949
      %v5951 = vpop.f32.mrb[0].mxu0
      %5952 = vmatprep.mubr.bf16.mxu0 0
      %5953 = vmatmul.mubr.bf16.gmra.mrb[0].mxu0 %v5834
      %v5954 = vpop.f32.mrb[0].mxu0
      %v5955 = vadd.f32 0.0, %v5954
      %v5956 = vpop.f32.mrb[0].mxu0
      %v5957 = vpop.f32.mrb[0].mxu0
      %v5958 = vadd.f32 0.0, %v5957
      %v5959 = vpop.f32.mrb[0].mxu0
      %5960 = vmatprep.mubr.bf16.mxu0 0
      %5961 = vmatmul.mubr.bf16.gmra.mrb[0].mxu0 %v5837
      %v5962 = vpop.f32.mrb[0].mxu0
      %v5963 = vadd.f32 0.0, %v5962
      %v5964 = vpop.f32.mrb[0].mxu0
      %v5965 = vpop.f32.mrb[0].mxu0
      %v5966 = vadd.f32 0.0, %v5965
      %v5967 = vpop.f32.mrb[0].mxu0
      %5968 = vmatprep.mubr.bf16.mxu0 0
      %5969 = vmatmul.mubr.bf16.gmra.mrb[0].mxu0 %v5840
      %v5970 = vpop.f32.mrb[0].mxu0
      %v5971 = vadd.f32 0.0, %v5970
      %v5972 = vpop.f32.mrb[0].mxu0
      %v5973 = vpop.f32.mrb[0].mxu0
      %v5974 = vadd.f32 0.0, %v5973
      %v5975 = vpop.f32.mrb[0].mxu0
      %5976 = vmatprep.mubr.bf16.mxu0 0
      %5977 = vmatmul.mubr.bf16.gmra.mrb[0].mxu0 %v5843
      %v5978 = vpop.f32.mrb[0].mxu0
      %v5979 = vadd.f32 0.0, %v5978
      %v5980 = vpop.f32.mrb[0].mxu0
      %v5981 = vpop.f32.mrb[0].mxu0
      %v5982 = vadd.f32 0.0, %v5981
      %v5983 = vpop.f32.mrb[0].mxu0
      %5984 = vmatprep.mubr.bf16.mxu0 0
      %5985 = vmatmul.mubr.bf16.gmra.mrb[0].mxu0 %v5846
      %v5986 = vpop.f32.mrb[0].mxu0
      %v5987 = vadd.f32 0.0, %v5986
      %v5988 = vpop.f32.mrb[0].mxu0
      %v5989 = vpop.f32.mrb[0].mxu0
      %v5990 = vadd.f32 0.0, %v5989
      %v5991 = vpop.f32.mrb[0].mxu0
      %5992 = vmatprep.mubr.bf16.mxu0 0
      %5993 = vmatmul.mubr.bf16.gmra.mrb[0].mxu0 %v5849
      %v5994 = vpop.f32.mrb[0].mxu0
      %v5995 = vadd.f32 0.0, %v5994
      %v5996 = vpop.f32.mrb[0].mxu0
      %v5997 = vpop.f32.mrb[0].mxu0
      %v5998 = vadd.f32 0.0, %v5997
      %v5999 = vpop.f32.mrb[0].mxu0
      %6000 = vmatprep.mubr.bf16.mxu0 0
      %6001 = vmatmul.mubr.bf16.gmra.mrb[0].mxu0 %v5852
      %v6002 = vpop.f32.mrb[0].mxu0
      %v6003 = vadd.f32 0.0, %v6002
      %v6004 = vpop.f32.mrb[0].mxu0
      %v6005 = vpop.f32.mrb[0].mxu0
      %v6006 = vadd.f32 0.0, %v6005
      %v6007 = vpop.f32.mrb[0].mxu0
      %6008 = vmatprep.mubr.bf16.mxu0 0
      %6009 = vmatmul.mubr.bf16.gmra.mrb[0].mxu0 %v5855
      %v6010 = vpop.f32.mrb[0].mxu0
      %v6011 = vadd.f32 0.0, %v6010
      %v6012 = vpop.f32.mrb[0].mxu0
      %v6013 = vpop.f32.mrb[0].mxu0
      %v6014 = vadd.f32 0.0, %v6013
      %v6015 = vpop.f32.mrb[0].mxu0
      %6016 = vmatprep.mubr.bf16.mxu0 0
      %6017 = vmatmul.mubr.bf16.gmra.mrb[0].mxu0 %v5858
      %v6018 = vpop.f32.mrb[0].mxu0
      %v6019 = vadd.f32 0.0, %v6018
      %v6020 = vpop.f32.mrb[0].mxu0
      %v6021 = vpop.f32.mrb[0].mxu0
      %v6022 = vadd.f32 0.0, %v6021
      %v6023 = vpop.f32.mrb[0].mxu0
      %6024 = vmatprep.mubr.bf16.mxu0 0
      %6025 = vmatmul.mubr.bf16.gmra.mrb[0].mxu0 %v5861
      %v6026 = vpop.f32.mrb[0].mxu0
      %v6027 = vadd.f32 0.0, %v6026
      %v6028 = vpop.f32.mrb[0].mxu0
      %v6029 = vpop.f32.mrb[0].mxu0
      %v6030 = vadd.f32 0.0, %v6029
      %v6031 = vpop.f32.mrb[0].mxu0
      %6032 = vmatprep.mubr.bf16.mxu0 0
      %6033 = vmatmul.mubr.bf16.gmra.mrb[0].mxu0 %v5864
      %v6034 = vpop.f32.mrb[0].mxu0
      %v6035 = vadd.f32 0.0, %v6034
      %v6036 = vpop.f32.mrb[0].mxu0
      %v6037 = vpop.f32.mrb[0].mxu0
      %v6038 = vadd.f32 0.0, %v6037
      %v6039 = vpop.f32.mrb[0].mxu0
      %6040 = vmatprep.mubr.bf16.mxu0 0
      %6041 = vmatmul.mubr.bf16.gmra.mrb[0].mxu0 %v5867
      %v6042 = vpop.f32.mrb[0].mxu0
      %v6043 = vadd.f32 0.0, %v6042
      %v6044 = vpop.f32.mrb[0].mxu0
      %v6045 = vpop.f32.mrb[0].mxu0
      %v6046 = vadd.f32 0.0, %v6045
      %v6047 = vpop.f32.mrb[0].mxu0
      %6048 = vdwg.mxu0
      %v6049 = vadd.f32 %v5723, %v5907
      %v6050 = vadd.f32 %v5724, %v5910
      %v6051 = vadd.f32 %v5725, %v5915
      %v6052 = vadd.f32 %v5726, %v5918
      %v6053 = vadd.f32 %v5727, %v5923
      %v6054 = vadd.f32 %v5728, %v5926
      %v6055 = vadd.f32 %v5729, %v5931
      %v6056 = vadd.f32 %v5730, %v5934
      %v6057 = vadd.f32 %v5731, %v5939
      %v6058 = vadd.f32 %v5732, %v5942
      %v6059 = vadd.f32 %v5733, %v5947
      %v6060 = vadd.f32 %v5734, %v5950
      %v6061 = vadd.f32 %v5735, %v5955
      %v6062 = vadd.f32 %v5736, %v5958
      %v6063 = vadd.f32 %v5737, %v5963
      %v6064 = vadd.f32 %v5738, %v5966
      %v6065 = vadd.f32 %v5739, %v5971
      %v6066 = vadd.f32 %v5740, %v5974
      %v6067 = vadd.f32 %v5741, %v5979
      %v6068 = vadd.f32 %v5742, %v5982
      %v6069 = vadd.f32 %v5743, %v5987
      %v6070 = vadd.f32 %v5744, %v5990
      %v6071 = vadd.f32 %v5745, %v5995
      %v6072 = vadd.f32 %v5746, %v5998
      %v6073 = vadd.f32 %v5747, %v6003
      %v6074 = vadd.f32 %v5748, %v6006
      %v6075 = vadd.f32 %v5749, %v6011
      %v6076 = vadd.f32 %v5750, %v6014
      %v6077 = vadd.f32 %v5751, %v6019
      %v6078 = vadd.f32 %v5752, %v6022
      %v6079 = vadd.f32 %v5753, %v6027
      %v6080 = vadd.f32 %v5754, %v6030
      %v6081 = vadd.f32 %v5755, %v6035
      %v6082 = vadd.f32 %v5756, %v6038
      %v6083 = vadd.f32 %v5757, %v6043
      %v6084 = vadd.f32 %v5758, %v6046
      %v6085 = vld [vmem:[#allocation3 + $0x13] sm:$0xff]
      %v6086 = vld [vmem:[#allocation3 + $0x1b] sm:$0xff]
      %v6087 = vld [vmem:[#allocation3 + $0x23] sm:$0xff]
      %v6088 = vld [vmem:[#allocation3 + $0x2b] sm:$0xff]
      %v6089 = vld [vmem:[#allocation3 + $0x33] sm:$0xff]
      %v6090 = vld [vmem:[#allocation3 + $0x3b] sm:$0xff]
      %v6091 = vld [vmem:[#allocation3 + $0x43] sm:$0xff]
      %v6092 = vld [vmem:[#allocation3 + $0x4b] sm:$0xff]
      %v6093 = vld [vmem:[#allocation3 + $0x53] sm:$0xff]
      %v6094 = vld [vmem:[#allocation3 + $0x5b] sm:$0xff]
      %v6095 = vld [vmem:[#allocation3 + $0x63] sm:$0xff]
      %v6096 = vld [vmem:[#allocation3 + $0x6b] sm:$0xff]
      %v6097 = vld [vmem:[#allocation3 + $0x73] sm:$0xff]
      %v6098 = vld [vmem:[#allocation3 + $0x7b] sm:$0xff]
      %v6099 = vld [vmem:[#allocation3 + $0x83] sm:$0xff]
      %v6100 = vld [vmem:[#allocation3 + $0x8b] sm:$0xff]
      %v6101 = vld [vmem:[#allocation3 + $0x93] sm:$0xff]
      %v6102 = vld [vmem:[#allocation3 + $0x9b] sm:$0xff]
      %v6103 = vld [vmem:[#allocation3 + $0xa3] sm:$0xff]
      %v6104 = vld [vmem:[#allocation3 + $0xab] sm:$0xff]
      %v6105 = vld [vmem:[#allocation3 + $0xb3] sm:$0xff]
      %v6106 = vld [vmem:[#allocation3 + $0xbb] sm:$0xff]
      %v6107 = vld [vmem:[#allocation3 + $0xc3] sm:$0xff]
      %v6108 = vld [vmem:[#allocation3 + $0xcb] sm:$0xff]
      %v6109 = vld [vmem:[#allocation3 + $0xd3] sm:$0xff]
      %v6110 = vld [vmem:[#allocation3 + $0xdb] sm:$0xff]
      %v6111 = vld [vmem:[#allocation3 + $0xe3] sm:$0xff]
      %v6112 = vld [vmem:[#allocation3 + $0xeb] sm:$0xff]
      %v6113 = vld [vmem:[#allocation3 + $0xf3] sm:$0xff]
      %v6114 = vld [vmem:[#allocation3 + $0xfb] sm:$0xff]
      %v6115 = vld [vmem:[#allocation3 + $0x103] sm:$0xff]
      %v6116 = vld [vmem:[#allocation3 + $0x10b] sm:$0xff]
      %v6117 = vld [vmem:[#allocation3 + $0x113] sm:$0xff]
      %v6118 = vld [vmem:[#allocation3 + $0x11b] sm:$0xff]
      %v6119 = vld [vmem:[#allocation3 + $0x123] sm:$0xff]
      %v6120 = vld [vmem:[#allocation3 + $0x12b] sm:$0xff]
      %v6121 = vpack.c.bf16 %v6086, %v6085
      %v6122 = vpack.c.bf16 %v6088, %v6087
      %v6123 = vpack.c.bf16 %v6090, %v6089
      %v6124 = vpack.c.bf16 %v6092, %v6091
      %v6125 = vpack.c.bf16 %v6094, %v6093
      %v6126 = vpack.c.bf16 %v6096, %v6095
      %v6127 = vpack.c.bf16 %v6098, %v6097
      %v6128 = vpack.c.bf16 %v6100, %v6099
      %v6129 = vpack.c.bf16 %v6102, %v6101
      %v6130 = vpack.c.bf16 %v6104, %v6103
      %v6131 = vpack.c.bf16 %v6106, %v6105
      %v6132 = vpack.c.bf16 %v6108, %v6107
      %v6133 = vpack.c.bf16 %v6110, %v6109
      %v6134 = vpack.c.bf16 %v6112, %v6111
      %v6135 = vpack.c.bf16 %v6114, %v6113
      %v6136 = vpack.c.bf16 %v6116, %v6115
      %v6137 = vpack.c.bf16 %v6118, %v6117
      %v6138 = vpack.c.bf16 %v6120, %v6119
      %s6139 = scalar_lea.vmem %s5, 16
      %v6140 = vld [vmem:[%s6139] sm:$0xf]
      %v6142 = vsel %vm4240, %v6121, 0
      %v6145 = vsel %vm4240, %v6122, 0
      %v6148 = vsel %vm4240, %v6123, 0
      %v6151 = vsel %vm4240, %v6124, 0
      %v6154 = vsel %vm4240, %v6125, 0
      %v6157 = vsel %vm4240, %v6126, 0
      %v6160 = vsel %vm4240, %v6127, 0
      %v6163 = vsel %vm4240, %v6128, 0
      %v6166 = vsel %vm4240, %v6129, 0
      %v6169 = vsel %vm4240, %v6130, 0
      %v6172 = vsel %vm4240, %v6131, 0
      %v6175 = vsel %vm4240, %v6132, 0
      %v6178 = vsel %vm4240, %v6133, 0
      %v6181 = vsel %vm4240, %v6134, 0
      %v6184 = vsel %vm4240, %v6135, 0
      %v6187 = vsel %vm4240, %v6136, 0
      %v6190 = vsel %vm4240, %v6137, 0
      %v6193 = vsel %vm4240, %v6138, 0
      %v6196 = vsel %vm4328, %v6140, 0
      %6198 = vmatprep.subr.bf16.mxu0 0
      %6199 = vmatpush1.bf16.msra.mxu0 %v6196
      %6200 = vmatprep.subr.bf16.mxu0 0
      %6201 = vmatpush1.bf16.msra.mxu0 0
      %6202 = vmatprep.subr.bf16.mxu0 0
      %6203 = vmatpush1.bf16.msra.mxu0 0
      %6204 = vmatprep.subr.bf16.mxu0 0
      %6205 = vmatpush1.bf16.msra.mxu0 0
      %6206 = vmatprep.subr.bf16.mxu0 0
      %6207 = vmatpush1.bf16.msra.mxu0 0
      %6208 = vmatprep.subr.bf16.mxu0 0
      %6209 = vmatpush1.bf16.msra.mxu0 0
      %6210 = vmatprep.subr.bf16.mxu0 0
      %6211 = vmatpush1.bf16.msra.mxu0 0
      %6212 = vmatprep.subr.bf16.mxu0 0
      %6213 = vmatpush1.bf16.msra.mxu0 0
      %6214 = vmatprep.subr.bf16.mxu0 0
      %6215 = vmatpush1.bf16.msra.mxu0 0
      %6216 = vmatprep.subr.bf16.mxu0 0
      %6217 = vmatpush1.bf16.msra.mxu0 0
      %6218 = vmatprep.subr.bf16.mxu0 0
      %6219 = vmatpush1.bf16.msra.mxu0 0
      %6220 = vmatprep.subr.bf16.mxu0 0
      %6221 = vmatpush1.bf16.msra.mxu0 0
      %6222 = vmatprep.subr.bf16.mxu0 0
      %6223 = vmatpush1.bf16.msra.mxu0 0
      %6224 = vmatprep.subr.bf16.mxu0 0
      %6225 = vmatpush1.bf16.msra.mxu0 0
      %6226 = vmatprep.subr.bf16.mxu0 0
      %6227 = vmatpush1.bf16.msra.mxu0 0
      %6228 = vmatprep.subr.bf16.mxu0 0
      %6229 = vmatpush1.bf16.msra.mxu0 0
      %6230 = vmatprep.mubr.bf16.mxu0 0
      %6231 = vmatmul.mubr.bf16.gmra.mrb[0].mxu0 %v6142
      %v6232 = vpop.f32.mrb[0].mxu0
      %v6233 = vadd.f32 0.0, %v6232
      %v6234 = vpop.f32.mrb[0].mxu0
      %v6235 = vpop.f32.mrb[0].mxu0
      %v6236 = vadd.f32 0.0, %v6235
      %v6237 = vpop.f32.mrb[0].mxu0
      %6238 = vmatprep.mubr.bf16.mxu0 0
      %6239 = vmatmul.mubr.bf16.gmra.mrb[0].mxu0 %v6145
      %v6240 = vpop.f32.mrb[0].mxu0
      %v6241 = vadd.f32 0.0, %v6240
      %v6242 = vpop.f32.mrb[0].mxu0
      %v6243 = vpop.f32.mrb[0].mxu0
      %v6244 = vadd.f32 0.0, %v6243
      %v6245 = vpop.f32.mrb[0].mxu0
      %6246 = vmatprep.mubr.bf16.mxu0 0
      %6247 = vmatmul.mubr.bf16.gmra.mrb[0].mxu0 %v6148
      %v6248 = vpop.f32.mrb[0].mxu0
      %v6249 = vadd.f32 0.0, %v6248
      %v6250 = vpop.f32.mrb[0].mxu0
      %v6251 = vpop.f32.mrb[0].mxu0
      %v6252 = vadd.f32 0.0, %v6251
      %v6253 = vpop.f32.mrb[0].mxu0
      %6254 = vmatprep.mubr.bf16.mxu0 0
      %6255 = vmatmul.mubr.bf16.gmra.mrb[0].mxu0 %v6151
      %v6256 = vpop.f32.mrb[0].mxu0
      %v6257 = vadd.f32 0.0, %v6256
      %v6258 = vpop.f32.mrb[0].mxu0
      %v6259 = vpop.f32.mrb[0].mxu0
      %v6260 = vadd.f32 0.0, %v6259
      %v6261 = vpop.f32.mrb[0].mxu0
      %6262 = vmatprep.mubr.bf16.mxu0 0
      %6263 = vmatmul.mubr.bf16.gmra.mrb[0].mxu0 %v6154
      %v6264 = vpop.f32.mrb[0].mxu0
      %v6265 = vadd.f32 0.0, %v6264
      %v6266 = vpop.f32.mrb[0].mxu0
      %v6267 = vpop.f32.mrb[0].mxu0
      %v6268 = vadd.f32 0.0, %v6267
      %v6269 = vpop.f32.mrb[0].mxu0
      %6270 = vmatprep.mubr.bf16.mxu0 0
      %6271 = vmatmul.mubr.bf16.gmra.mrb[0].mxu0 %v6157
      %v6272 = vpop.f32.mrb[0].mxu0
      %v6273 = vadd.f32 0.0, %v6272
      %v6274 = vpop.f32.mrb[0].mxu0
      %v6275 = vpop.f32.mrb[0].mxu0
      %v6276 = vadd.f32 0.0, %v6275
      %v6277 = vpop.f32.mrb[0].mxu0
      %6278 = vmatprep.mubr.bf16.mxu0 0
      %6279 = vmatmul.mubr.bf16.gmra.mrb[0].mxu0 %v6160
      %v6280 = vpop.f32.mrb[0].mxu0
      %v6281 = vadd.f32 0.0, %v6280
      %v6282 = vpop.f32.mrb[0].mxu0
      %v6283 = vpop.f32.mrb[0].mxu0
      %v6284 = vadd.f32 0.0, %v6283
      %v6285 = vpop.f32.mrb[0].mxu0
      %6286 = vmatprep.mubr.bf16.mxu0 0
      %6287 = vmatmul.mubr.bf16.gmra.mrb[0].mxu0 %v6163
      %v6288 = vpop.f32.mrb[0].mxu0
      %v6289 = vadd.f32 0.0, %v6288
      %v6290 = vpop.f32.mrb[0].mxu0
      %v6291 = vpop.f32.mrb[0].mxu0
      %v6292 = vadd.f32 0.0, %v6291
      %v6293 = vpop.f32.mrb[0].mxu0
      %6294 = vmatprep.mubr.bf16.mxu0 0
      %6295 = vmatmul.mubr.bf16.gmra.mrb[0].mxu0 %v6166
      %v6296 = vpop.f32.mrb[0].mxu0
      %v6297 = vadd.f32 0.0, %v6296
      %v6298 = vpop.f32.mrb[0].mxu0
      %v6299 = vpop.f32.mrb[0].mxu0
      %v6300 = vadd.f32 0.0, %v6299
      %v6301 = vpop.f32.mrb[0].mxu0
      %6302 = vmatprep.mubr.bf16.mxu0 0
      %6303 = vmatmul.mubr.bf16.gmra.mrb[0].mxu0 %v6169
      %v6304 = vpop.f32.mrb[0].mxu0
      %v6305 = vadd.f32 0.0, %v6304
      %v6306 = vpop.f32.mrb[0].mxu0
      %v6307 = vpop.f32.mrb[0].mxu0
      %v6308 = vadd.f32 0.0, %v6307
      %v6309 = vpop.f32.mrb[0].mxu0
      %6310 = vmatprep.mubr.bf16.mxu0 0
      %6311 = vmatmul.mubr.bf16.gmra.mrb[0].mxu0 %v6172
      %v6312 = vpop.f32.mrb[0].mxu0
      %v6313 = vadd.f32 0.0, %v6312
      %v6314 = vpop.f32.mrb[0].mxu0
      %v6315 = vpop.f32.mrb[0].mxu0
      %v6316 = vadd.f32 0.0, %v6315
      %v6317 = vpop.f32.mrb[0].mxu0
      %6318 = vmatprep.mubr.bf16.mxu0 0
      %6319 = vmatmul.mubr.bf16.gmra.mrb[0].mxu0 %v6175
      %v6320 = vpop.f32.mrb[0].mxu0
      %v6321 = vadd.f32 0.0, %v6320
      %v6322 = vpop.f32.mrb[0].mxu0
      %v6323 = vpop.f32.mrb[0].mxu0
      %v6324 = vadd.f32 0.0, %v6323
      %v6325 = vpop.f32.mrb[0].mxu0
      %6326 = vmatprep.mubr.bf16.mxu0 0
      %6327 = vmatmul.mubr.bf16.gmra.mrb[0].mxu0 %v6178
      %v6328 = vpop.f32.mrb[0].mxu0
      %v6329 = vadd.f32 0.0, %v6328
      %v6330 = vpop.f32.mrb[0].mxu0
      %v6331 = vpop.f32.mrb[0].mxu0
      %v6332 = vadd.f32 0.0, %v6331
      %v6333 = vpop.f32.mrb[0].mxu0
      %6334 = vmatprep.mubr.bf16.mxu0 0
      %6335 = vmatmul.mubr.bf16.gmra.mrb[0].mxu0 %v6181
      %v6336 = vpop.f32.mrb[0].mxu0
      %v6337 = vadd.f32 0.0, %v6336
      %v6338 = vpop.f32.mrb[0].mxu0
      %v6339 = vpop.f32.mrb[0].mxu0
      %v6340 = vadd.f32 0.0, %v6339
      %v6341 = vpop.f32.mrb[0].mxu0
      %6342 = vmatprep.mubr.bf16.mxu0 0
      %6343 = vmatmul.mubr.bf16.gmra.mrb[0].mxu0 %v6184
      %v6344 = vpop.f32.mrb[0].mxu0
      %v6345 = vadd.f32 0.0, %v6344
      %v6346 = vpop.f32.mrb[0].mxu0
      %v6347 = vpop.f32.mrb[0].mxu0
      %v6348 = vadd.f32 0.0, %v6347
      %v6349 = vpop.f32.mrb[0].mxu0
      %6350 = vmatprep.mubr.bf16.mxu0 0
      %6351 = vmatmul.mubr.bf16.gmra.mrb[0].mxu0 %v6187
      %v6352 = vpop.f32.mrb[0].mxu0
      %v6353 = vadd.f32 0.0, %v6352
      %v6354 = vpop.f32.mrb[0].mxu0
      %v6355 = vpop.f32.mrb[0].mxu0
      %v6356 = vadd.f32 0.0, %v6355
      %v6357 = vpop.f32.mrb[0].mxu0
      %6358 = vmatprep.mubr.bf16.mxu0 0
      %6359 = vmatmul.mubr.bf16.gmra.mrb[0].mxu0 %v6190
      %v6360 = vpop.f32.mrb[0].mxu0
      %v6361 = vadd.f32 0.0, %v6360
      %v6362 = vpop.f32.mrb[0].mxu0
      %v6363 = vpop.f32.mrb[0].mxu0
      %v6364 = vadd.f32 0.0, %v6363
      %v6365 = vpop.f32.mrb[0].mxu0
      %6366 = vmatprep.mubr.bf16.mxu0 0
      %6367 = vmatmul.mubr.bf16.gmra.mrb[0].mxu0 %v6193
      %v6368 = vpop.f32.mrb[0].mxu0
      %v6369 = vadd.f32 0.0, %v6368
      %v6370 = vpop.f32.mrb[0].mxu0
      %v6371 = vpop.f32.mrb[0].mxu0
      %v6372 = vadd.f32 0.0, %v6371
      %v6373 = vpop.f32.mrb[0].mxu0
      %6374 = vdwg.mxu0
      %v6375 = vadd.f32 %v6049, %v6233
      %v6376 = vadd.f32 %v6050, %v6236
      %v6377 = vadd.f32 %v6051, %v6241
      %v6378 = vadd.f32 %v6052, %v6244
      %v6379 = vadd.f32 %v6053, %v6249
      %v6380 = vadd.f32 %v6054, %v6252
      %v6381 = vadd.f32 %v6055, %v6257
      %v6382 = vadd.f32 %v6056, %v6260
      %v6383 = vadd.f32 %v6057, %v6265
      %v6384 = vadd.f32 %v6058, %v6268
      %v6385 = vadd.f32 %v6059, %v6273
      %v6386 = vadd.f32 %v6060, %v6276
      %v6387 = vadd.f32 %v6061, %v6281
      %v6388 = vadd.f32 %v6062, %v6284
      %v6389 = vadd.f32 %v6063, %v6289
      %v6390 = vadd.f32 %v6064, %v6292
      %v6391 = vadd.f32 %v6065, %v6297
      %v6392 = vadd.f32 %v6066, %v6300
      %v6393 = vadd.f32 %v6067, %v6305
      %v6394 = vadd.f32 %v6068, %v6308
      %v6395 = vadd.f32 %v6069, %v6313
      %v6396 = vadd.f32 %v6070, %v6316
      %v6397 = vadd.f32 %v6071, %v6321
      %v6398 = vadd.f32 %v6072, %v6324
      %v6399 = vadd.f32 %v6073, %v6329
      %v6400 = vadd.f32 %v6074, %v6332
      %v6401 = vadd.f32 %v6075, %v6337
      %v6402 = vadd.f32 %v6076, %v6340
      %v6403 = vadd.f32 %v6077, %v6345
      %v6404 = vadd.f32 %v6078, %v6348
      %v6405 = vadd.f32 %v6079, %v6353
      %v6406 = vadd.f32 %v6080, %v6356
      %v6407 = vadd.f32 %v6081, %v6361
      %v6408 = vadd.f32 %v6082, %v6364
      %v6409 = vadd.f32 %v6083, %v6369
      %v6410 = vadd.f32 %v6084, %v6372
      %v6411 = vld [vmem:[#allocation3 + $0x14] sm:$0xff]
      %v6412 = vld [vmem:[#allocation3 + $0x1c] sm:$0xff]
      %v6413 = vld [vmem:[#allocation3 + $0x24] sm:$0xff]
      %v6414 = vld [vmem:[#allocation3 + $0x2c] sm:$0xff]
      %v6415 = vld [vmem:[#allocation3 + $0x34] sm:$0xff]
      %v6416 = vld [vmem:[#allocation3 + $0x3c] sm:$0xff]
      %v6417 = vld [vmem:[#allocation3 + $0x44] sm:$0xff]
      %v6418 = vld [vmem:[#allocation3 + $0x4c] sm:$0xff]
      %v6419 = vld [vmem:[#allocation3 + $0x54] sm:$0xff]
      %v6420 = vld [vmem:[#allocation3 + $0x5c] sm:$0xff]
      %v6421 = vld [vmem:[#allocation3 + $0x64] sm:$0xff]
      %v6422 = vld [vmem:[#allocation3 + $0x6c] sm:$0xff]
      %v6423 = vld [vmem:[#allocation3 + $0x74] sm:$0xff]
      %v6424 = vld [vmem:[#allocation3 + $0x7c] sm:$0xff]
      %v6425 = vld [vmem:[#allocation3 + $0x84] sm:$0xff]
      %v6426 = vld [vmem:[#allocation3 + $0x8c] sm:$0xff]
      %v6427 = vld [vmem:[#allocation3 + $0x94] sm:$0xff]
      %v6428 = vld [vmem:[#allocation3 + $0x9c] sm:$0xff]
      %v6429 = vld [vmem:[#allocation3 + $0xa4] sm:$0xff]
      %v6430 = vld [vmem:[#allocation3 + $0xac] sm:$0xff]
      %v6431 = vld [vmem:[#allocation3 + $0xb4] sm:$0xff]
      %v6432 = vld [vmem:[#allocation3 + $0xbc] sm:$0xff]
      %v6433 = vld [vmem:[#allocation3 + $0xc4] sm:$0xff]
      %v6434 = vld [vmem:[#allocation3 + $0xcc] sm:$0xff]
      %v6435 = vld [vmem:[#allocation3 + $0xd4] sm:$0xff]
      %v6436 = vld [vmem:[#allocation3 + $0xdc] sm:$0xff]
      %v6437 = vld [vmem:[#allocation3 + $0xe4] sm:$0xff]
      %v6438 = vld [vmem:[#allocation3 + $0xec] sm:$0xff]
      %v6439 = vld [vmem:[#allocation3 + $0xf4] sm:$0xff]
      %v6440 = vld [vmem:[#allocation3 + $0xfc] sm:$0xff]
      %v6441 = vld [vmem:[#allocation3 + $0x104] sm:$0xff]
      %v6442 = vld [vmem:[#allocation3 + $0x10c] sm:$0xff]
      %v6443 = vld [vmem:[#allocation3 + $0x114] sm:$0xff]
      %v6444 = vld [vmem:[#allocation3 + $0x11c] sm:$0xff]
      %v6445 = vld [vmem:[#allocation3 + $0x124] sm:$0xff]
      %v6446 = vld [vmem:[#allocation3 + $0x12c] sm:$0xff]
      %v6447 = vpack.c.bf16 %v6412, %v6411
      %v6448 = vpack.c.bf16 %v6414, %v6413
      %v6449 = vpack.c.bf16 %v6416, %v6415
      %v6450 = vpack.c.bf16 %v6418, %v6417
      %v6451 = vpack.c.bf16 %v6420, %v6419
      %v6452 = vpack.c.bf16 %v6422, %v6421
      %v6453 = vpack.c.bf16 %v6424, %v6423
      %v6454 = vpack.c.bf16 %v6426, %v6425
      %v6455 = vpack.c.bf16 %v6428, %v6427
      %v6456 = vpack.c.bf16 %v6430, %v6429
      %v6457 = vpack.c.bf16 %v6432, %v6431
      %v6458 = vpack.c.bf16 %v6434, %v6433
      %v6459 = vpack.c.bf16 %v6436, %v6435
      %v6460 = vpack.c.bf16 %v6438, %v6437
      %v6461 = vpack.c.bf16 %v6440, %v6439
      %v6462 = vpack.c.bf16 %v6442, %v6441
      %v6463 = vpack.c.bf16 %v6444, %v6443
      %v6464 = vpack.c.bf16 %v6446, %v6445
      %s6465 = scalar_lea.vmem %s5, 20
      %v6466 = vld [vmem:[%s6465] sm:$0xf]
      %v6468 = vsel %vm4240, %v6447, 0
      %v6471 = vsel %vm4240, %v6448, 0
      %v6474 = vsel %vm4240, %v6449, 0
      %v6477 = vsel %vm4240, %v6450, 0
      %v6480 = vsel %vm4240, %v6451, 0
      %v6483 = vsel %vm4240, %v6452, 0
      %v6486 = vsel %vm4240, %v6453, 0
      %v6489 = vsel %vm4240, %v6454, 0
      %v6492 = vsel %vm4240, %v6455, 0
      %v6495 = vsel %vm4240, %v6456, 0
      %v6498 = vsel %vm4240, %v6457, 0
      %v6501 = vsel %vm4240, %v6458, 0
      %v6504 = vsel %vm4240, %v6459, 0
      %v6507 = vsel %vm4240, %v6460, 0
      %v6510 = vsel %vm4240, %v6461, 0
      %v6513 = vsel %vm4240, %v6462, 0
      %v6516 = vsel %vm4240, %v6463, 0
      %v6519 = vsel %vm4240, %v6464, 0
      %v6522 = vsel %vm4328, %v6466, 0
      %6524 = vmatprep.subr.bf16.mxu0 0
      %6525 = vmatpush1.bf16.msra.mxu0 %v6522
      %6526 = vmatprep.subr.bf16.mxu0 0
      %6527 = vmatpush1.bf16.msra.mxu0 0
      %6528 = vmatprep.subr.bf16.mxu0 0
      %6529 = vmatpush1.bf16.msra.mxu0 0
      %6530 = vmatprep.subr.bf16.mxu0 0
      %6531 = vmatpush1.bf16.msra.mxu0 0
      %6532 = vmatprep.subr.bf16.mxu0 0
      %6533 = vmatpush1.bf16.msra.mxu0 0
      %6534 = vmatprep.subr.bf16.mxu0 0
      %6535 = vmatpush1.bf16.msra.mxu0 0
      %6536 = vmatprep.subr.bf16.mxu0 0
      %6537 = vmatpush1.bf16.msra.mxu0 0
      %6538 = vmatprep.subr.bf16.mxu0 0
      %6539 = vmatpush1.bf16.msra.mxu0 0
      %6540 = vmatprep.subr.bf16.mxu0 0
      %6541 = vmatpush1.bf16.msra.mxu0 0
      %6542 = vmatprep.subr.bf16.mxu0 0
      %6543 = vmatpush1.bf16.msra.mxu0 0
      %6544 = vmatprep.subr.bf16.mxu0 0
      %6545 = vmatpush1.bf16.msra.mxu0 0
      %6546 = vmatprep.subr.bf16.mxu0 0
      %6547 = vmatpush1.bf16.msra.mxu0 0
      %6548 = vmatprep.subr.bf16.mxu0 0
      %6549 = vmatpush1.bf16.msra.mxu0 0
      %6550 = vmatprep.subr.bf16.mxu0 0
      %6551 = vmatpush1.bf16.msra.mxu0 0
      %6552 = vmatprep.subr.bf16.mxu0 0
      %6553 = vmatpush1.bf16.msra.mxu0 0
      %6554 = vmatprep.subr.bf16.mxu0 0
      %6555 = vmatpush1.bf16.msra.mxu0 0
      %6556 = vmatprep.mubr.bf16.mxu0 0
      %6557 = vmatmul.mubr.bf16.gmra.mrb[0].mxu0 %v6468
      %v6558 = vpop.f32.mrb[0].mxu0
      %v6559 = vadd.f32 0.0, %v6558
      %v6560 = vpop.f32.mrb[0].mxu0
      %v6561 = vpop.f32.mrb[0].mxu0
      %v6562 = vadd.f32 0.0, %v6561
      %v6563 = vpop.f32.mrb[0].mxu0
      %6564 = vmatprep.mubr.bf16.mxu0 0
      %6565 = vmatmul.mubr.bf16.gmra.mrb[0].mxu0 %v6471
      %v6566 = vpop.f32.mrb[0].mxu0
      %v6567 = vadd.f32 0.0, %v6566
      %v6568 = vpop.f32.mrb[0].mxu0
      %v6569 = vpop.f32.mrb[0].mxu0
      %v6570 = vadd.f32 0.0, %v6569
      %v6571 = vpop.f32.mrb[0].mxu0
      %6572 = vmatprep.mubr.bf16.mxu0 0
      %6573 = vmatmul.mubr.bf16.gmra.mrb[0].mxu0 %v6474
      %v6574 = vpop.f32.mrb[0].mxu0
      %v6575 = vadd.f32 0.0, %v6574
      %v6576 = vpop.f32.mrb[0].mxu0
      %v6577 = vpop.f32.mrb[0].mxu0
      %v6578 = vadd.f32 0.0, %v6577
      %v6579 = vpop.f32.mrb[0].mxu0
      %6580 = vmatprep.mubr.bf16.mxu0 0
      %6581 = vmatmul.mubr.bf16.gmra.mrb[0].mxu0 %v6477
      %v6582 = vpop.f32.mrb[0].mxu0
      %v6583 = vadd.f32 0.0, %v6582
      %v6584 = vpop.f32.mrb[0].mxu0
      %v6585 = vpop.f32.mrb[0].mxu0
      %v6586 = vadd.f32 0.0, %v6585
      %v6587 = vpop.f32.mrb[0].mxu0
      %6588 = vmatprep.mubr.bf16.mxu0 0
      %6589 = vmatmul.mubr.bf16.gmra.mrb[0].mxu0 %v6480
      %v6590 = vpop.f32.mrb[0].mxu0
      %v6591 = vadd.f32 0.0, %v6590
      %v6592 = vpop.f32.mrb[0].mxu0
      %v6593 = vpop.f32.mrb[0].mxu0
      %v6594 = vadd.f32 0.0, %v6593
      %v6595 = vpop.f32.mrb[0].mxu0
      %6596 = vmatprep.mubr.bf16.mxu0 0
      %6597 = vmatmul.mubr.bf16.gmra.mrb[0].mxu0 %v6483
      %v6598 = vpop.f32.mrb[0].mxu0
      %v6599 = vadd.f32 0.0, %v6598
      %v6600 = vpop.f32.mrb[0].mxu0
      %v6601 = vpop.f32.mrb[0].mxu0
      %v6602 = vadd.f32 0.0, %v6601
      %v6603 = vpop.f32.mrb[0].mxu0
      %6604 = vmatprep.mubr.bf16.mxu0 0
      %6605 = vmatmul.mubr.bf16.gmra.mrb[0].mxu0 %v6486
      %v6606 = vpop.f32.mrb[0].mxu0
      %v6607 = vadd.f32 0.0, %v6606
      %v6608 = vpop.f32.mrb[0].mxu0
      %v6609 = vpop.f32.mrb[0].mxu0
      %v6610 = vadd.f32 0.0, %v6609
      %v6611 = vpop.f32.mrb[0].mxu0
      %6612 = vmatprep.mubr.bf16.mxu0 0
      %6613 = vmatmul.mubr.bf16.gmra.mrb[0].mxu0 %v6489
      %v6614 = vpop.f32.mrb[0].mxu0
      %v6615 = vadd.f32 0.0, %v6614
      %v6616 = vpop.f32.mrb[0].mxu0
      %v6617 = vpop.f32.mrb[0].mxu0
      %v6618 = vadd.f32 0.0, %v6617
      %v6619 = vpop.f32.mrb[0].mxu0
      %6620 = vmatprep.mubr.bf16.mxu0 0
      %6621 = vmatmul.mubr.bf16.gmra.mrb[0].mxu0 %v6492
      %v6622 = vpop.f32.mrb[0].mxu0
      %v6623 = vadd.f32 0.0, %v6622
      %v6624 = vpop.f32.mrb[0].mxu0
      %v6625 = vpop.f32.mrb[0].mxu0
      %v6626 = vadd.f32 0.0, %v6625
      %v6627 = vpop.f32.mrb[0].mxu0
      %6628 = vmatprep.mubr.bf16.mxu0 0
      %6629 = vmatmul.mubr.bf16.gmra.mrb[0].mxu0 %v6495
      %v6630 = vpop.f32.mrb[0].mxu0
      %v6631 = vadd.f32 0.0, %v6630
      %v6632 = vpop.f32.mrb[0].mxu0
      %v6633 = vpop.f32.mrb[0].mxu0
      %v6634 = vadd.f32 0.0, %v6633
      %v6635 = vpop.f32.mrb[0].mxu0
      %6636 = vmatprep.mubr.bf16.mxu0 0
      %6637 = vmatmul.mubr.bf16.gmra.mrb[0].mxu0 %v6498
      %v6638 = vpop.f32.mrb[0].mxu0
      %v6639 = vadd.f32 0.0, %v6638
      %v6640 = vpop.f32.mrb[0].mxu0
      %v6641 = vpop.f32.mrb[0].mxu0
      %v6642 = vadd.f32 0.0, %v6641
      %v6643 = vpop.f32.mrb[0].mxu0
      %6644 = vmatprep.mubr.bf16.mxu0 0
      %6645 = vmatmul.mubr.bf16.gmra.mrb[0].mxu0 %v6501
      %v6646 = vpop.f32.mrb[0].mxu0
      %v6647 = vadd.f32 0.0, %v6646
      %v6648 = vpop.f32.mrb[0].mxu0
      %v6649 = vpop.f32.mrb[0].mxu0
      %v6650 = vadd.f32 0.0, %v6649
      %v6651 = vpop.f32.mrb[0].mxu0
      %6652 = vmatprep.mubr.bf16.mxu0 0
      %6653 = vmatmul.mubr.bf16.gmra.mrb[0].mxu0 %v6504
      %v6654 = vpop.f32.mrb[0].mxu0
      %v6655 = vadd.f32 0.0, %v6654
      %v6656 = vpop.f32.mrb[0].mxu0
      %v6657 = vpop.f32.mrb[0].mxu0
      %v6658 = vadd.f32 0.0, %v6657
      %v6659 = vpop.f32.mrb[0].mxu0
      %6660 = vmatprep.mubr.bf16.mxu0 0
      %6661 = vmatmul.mubr.bf16.gmra.mrb[0].mxu0 %v6507
      %v6662 = vpop.f32.mrb[0].mxu0
      %v6663 = vadd.f32 0.0, %v6662
      %v6664 = vpop.f32.mrb[0].mxu0
      %v6665 = vpop.f32.mrb[0].mxu0
      %v6666 = vadd.f32 0.0, %v6665
      %v6667 = vpop.f32.mrb[0].mxu0
      %6668 = vmatprep.mubr.bf16.mxu0 0
      %6669 = vmatmul.mubr.bf16.gmra.mrb[0].mxu0 %v6510
      %v6670 = vpop.f32.mrb[0].mxu0
      %v6671 = vadd.f32 0.0, %v6670
      %v6672 = vpop.f32.mrb[0].mxu0
      %v6673 = vpop.f32.mrb[0].mxu0
      %v6674 = vadd.f32 0.0, %v6673
      %v6675 = vpop.f32.mrb[0].mxu0
      %6676 = vmatprep.mubr.bf16.mxu0 0
      %6677 = vmatmul.mubr.bf16.gmra.mrb[0].mxu0 %v6513
      %v6678 = vpop.f32.mrb[0].mxu0
      %v6679 = vadd.f32 0.0, %v6678
      %v6680 = vpop.f32.mrb[0].mxu0
      %v6681 = vpop.f32.mrb[0].mxu0
      %v6682 = vadd.f32 0.0, %v6681
      %v6683 = vpop.f32.mrb[0].mxu0
      %6684 = vmatprep.mubr.bf16.mxu0 0
      %6685 = vmatmul.mubr.bf16.gmra.mrb[0].mxu0 %v6516
      %v6686 = vpop.f32.mrb[0].mxu0
      %v6687 = vadd.f32 0.0, %v6686
      %v6688 = vpop.f32.mrb[0].mxu0
      %v6689 = vpop.f32.mrb[0].mxu0
      %v6690 = vadd.f32 0.0, %v6689
      %v6691 = vpop.f32.mrb[0].mxu0
      %6692 = vmatprep.mubr.bf16.mxu0 0
      %6693 = vmatmul.mubr.bf16.gmra.mrb[0].mxu0 %v6519
      %v6694 = vpop.f32.mrb[0].mxu0
      %v6695 = vadd.f32 0.0, %v6694
      %v6696 = vpop.f32.mrb[0].mxu0
      %v6697 = vpop.f32.mrb[0].mxu0
      %v6698 = vadd.f32 0.0, %v6697
      %v6699 = vpop.f32.mrb[0].mxu0
      %6700 = vdwg.mxu0
      %v6701 = vadd.f32 %v6375, %v6559
      %v6702 = vadd.f32 %v6376, %v6562
      %v6703 = vadd.f32 %v6377, %v6567
      %v6704 = vadd.f32 %v6378, %v6570
      %v6705 = vadd.f32 %v6379, %v6575
      %v6706 = vadd.f32 %v6380, %v6578
      %v6707 = vadd.f32 %v6381, %v6583
      %v6708 = vadd.f32 %v6382, %v6586
      %v6709 = vadd.f32 %v6383, %v6591
      %v6710 = vadd.f32 %v6384, %v6594
      %v6711 = vadd.f32 %v6385, %v6599
      %v6712 = vadd.f32 %v6386, %v6602
      %v6713 = vadd.f32 %v6387, %v6607
      %v6714 = vadd.f32 %v6388, %v6610
      %v6715 = vadd.f32 %v6389, %v6615
      %v6716 = vadd.f32 %v6390, %v6618
      %v6717 = vadd.f32 %v6391, %v6623
      %v6718 = vadd.f32 %v6392, %v6626
      %v6719 = vadd.f32 %v6393, %v6631
      %v6720 = vadd.f32 %v6394, %v6634
      %v6721 = vadd.f32 %v6395, %v6639
      %v6722 = vadd.f32 %v6396, %v6642
      %v6723 = vadd.f32 %v6397, %v6647
      %v6724 = vadd.f32 %v6398, %v6650
      %v6725 = vadd.f32 %v6399, %v6655
      %v6726 = vadd.f32 %v6400, %v6658
      %v6727 = vadd.f32 %v6401, %v6663
      %v6728 = vadd.f32 %v6402, %v6666
      %v6729 = vadd.f32 %v6403, %v6671
      %v6730 = vadd.f32 %v6404, %v6674
      %v6731 = vadd.f32 %v6405, %v6679
      %v6732 = vadd.f32 %v6406, %v6682
      %v6733 = vadd.f32 %v6407, %v6687
      %v6734 = vadd.f32 %v6408, %v6690
      %v6735 = vadd.f32 %v6409, %v6695
      %v6736 = vadd.f32 %v6410, %v6698
      %v6737 = vld [vmem:[#allocation3 + $0x24] sm:$0xff]
      %v6738 = vld [vmem:[#allocation3 + $0x2c] sm:$0xff]
      %v6739 = vld [vmem:[#allocation3 + $0x34] sm:$0xff]
      %v6740 = vld [vmem:[#allocation3 + $0x3c] sm:$0xff]
      %v6741 = vld [vmem:[#allocation3 + $0x44] sm:$0xff]
      %v6742 = vld [vmem:[#allocation3 + $0x4c] sm:$0xff]
      %v6743 = vld [vmem:[#allocation3 + $0x54] sm:$0xff]
      %v6744 = vld [vmem:[#allocation3 + $0x5c] sm:$0xff]
      %v6745 = vld [vmem:[#allocation3 + $0x64] sm:$0xff]
      %v6746 = vld [vmem:[#allocation3 + $0x6c] sm:$0xff]
      %v6747 = vld [vmem:[#allocation3 + $0x74] sm:$0xff]
      %v6748 = vld [vmem:[#allocation3 + $0x7c] sm:$0xff]
      %v6749 = vld [vmem:[#allocation3 + $0x84] sm:$0xff]
      %v6750 = vld [vmem:[#allocation3 + $0x8c] sm:$0xff]
      %v6751 = vld [vmem:[#allocation3 + $0x94] sm:$0xff]
      %v6752 = vld [vmem:[#allocation3 + $0x9c] sm:$0xff]
      %v6753 = vld [vmem:[#allocation3 + $0xa4] sm:$0xff]
      %v6754 = vld [vmem:[#allocation3 + $0xac] sm:$0xff]
      %v6755 = vld [vmem:[#allocation3 + $0xb4] sm:$0xff]
      %v6756 = vld [vmem:[#allocation3 + $0xbc] sm:$0xff]
      %v6757 = vld [vmem:[#allocation3 + $0xc4] sm:$0xff]
      %v6758 = vld [vmem:[#allocation3 + $0xcc] sm:$0xff]
      %v6759 = vld [vmem:[#allocation3 + $0xd4] sm:$0xff]
      %v6760 = vld [vmem:[#allocation3 + $0xdc] sm:$0xff]
      %v6761 = vld [vmem:[#allocation3 + $0xe4] sm:$0xff]
      %v6762 = vld [vmem:[#allocation3 + $0xec] sm:$0xff]
      %v6763 = vld [vmem:[#allocation3 + $0xf4] sm:$0xff]
      %v6764 = vld [vmem:[#allocation3 + $0xfc] sm:$0xff]
      %v6765 = vld [vmem:[#allocation3 + $0x104] sm:$0xff]
      %v6766 = vld [vmem:[#allocation3 + $0x10c] sm:$0xff]
      %v6767 = vld [vmem:[#allocation3 + $0x114] sm:$0xff]
      %v6768 = vld [vmem:[#allocation3 + $0x11c] sm:$0xff]
      %v6769 = vld [vmem:[#allocation3 + $0x124] sm:$0xff]
      %v6770 = vld [vmem:[#allocation3 + $0x12c] sm:$0xff]
      %v6771 = vld [vmem:[#allocation3 + $0x134] sm:$0xff]
      %v6772 = vld [vmem:[#allocation3 + $0x13c] sm:$0xff]
      %v6773 = vpack.c.bf16 %v6738, %v6737
      %v6774 = vpack.c.bf16 %v6740, %v6739
      %v6775 = vpack.c.bf16 %v6742, %v6741
      %v6776 = vpack.c.bf16 %v6744, %v6743
      %v6777 = vpack.c.bf16 %v6746, %v6745
      %v6778 = vpack.c.bf16 %v6748, %v6747
      %v6779 = vpack.c.bf16 %v6750, %v6749
      %v6780 = vpack.c.bf16 %v6752, %v6751
      %v6781 = vpack.c.bf16 %v6754, %v6753
      %v6782 = vpack.c.bf16 %v6756, %v6755
      %v6783 = vpack.c.bf16 %v6758, %v6757
      %v6784 = vpack.c.bf16 %v6760, %v6759
      %v6785 = vpack.c.bf16 %v6762, %v6761
      %v6786 = vpack.c.bf16 %v6764, %v6763
      %v6787 = vpack.c.bf16 %v6766, %v6765
      %v6788 = vpack.c.bf16 %v6768, %v6767
      %v6789 = vpack.c.bf16 %v6770, %v6769
      %v6790 = vpack.c.bf16 %v6772, %v6771
      %s6791 = scalar_lea.vmem %s5, 24
      %v6792 = vld [vmem:[%s6791] sm:$0xf]
      %v6794 = vsel %vm4240, %v6773, 0
      %v6797 = vsel %vm4240, %v6774, 0
      %v6800 = vsel %vm4240, %v6775, 0
      %v6803 = vsel %vm4240, %v6776, 0
      %v6806 = vsel %vm4240, %v6777, 0
      %v6809 = vsel %vm4240, %v6778, 0
      %v6812 = vsel %vm4240, %v6779, 0
      %v6815 = vsel %vm4240, %v6780, 0
      %v6818 = vsel %vm4240, %v6781, 0
      %v6821 = vsel %vm4240, %v6782, 0
      %v6824 = vsel %vm4240, %v6783, 0
      %v6827 = vsel %vm4240, %v6784, 0
      %v6830 = vsel %vm4240, %v6785, 0
      %v6833 = vsel %vm4240, %v6786, 0
      %v6836 = vsel %vm4240, %v6787, 0
      %v6839 = vsel %vm4240, %v6788, 0
      %v6842 = vsel %vm4240, %v6789, 0
      %v6845 = vsel %vm4240, %v6790, 0
      %v6848 = vsel %vm4328, %v6792, 0
      %6850 = vmatprep.subr.bf16.mxu0 0
      %6851 = vmatpush1.bf16.msra.mxu0 %v6848
      %6852 = vmatprep.subr.bf16.mxu0 0
      %6853 = vmatpush1.bf16.msra.mxu0 0
      %6854 = vmatprep.subr.bf16.mxu0 0
      %6855 = vmatpush1.bf16.msra.mxu0 0
      %6856 = vmatprep.subr.bf16.mxu0 0
      %6857 = vmatpush1.bf16.msra.mxu0 0
      %6858 = vmatprep.subr.bf16.mxu0 0
      %6859 = vmatpush1.bf16.msra.mxu0 0
      %6860 = vmatprep.subr.bf16.mxu0 0
      %6861 = vmatpush1.bf16.msra.mxu0 0
      %6862 = vmatprep.subr.bf16.mxu0 0
      %6863 = vmatpush1.bf16.msra.mxu0 0
      %6864 = vmatprep.subr.bf16.mxu0 0
      %6865 = vmatpush1.bf16.msra.mxu0 0
      %6866 = vmatprep.subr.bf16.mxu0 0
      %6867 = vmatpush1.bf16.msra.mxu0 0
      %6868 = vmatprep.subr.bf16.mxu0 0
      %6869 = vmatpush1.bf16.msra.mxu0 0
      %6870 = vmatprep.subr.bf16.mxu0 0
      %6871 = vmatpush1.bf16.msra.mxu0 0
      %6872 = vmatprep.subr.bf16.mxu0 0
      %6873 = vmatpush1.bf16.msra.mxu0 0
      %6874 = vmatprep.subr.bf16.mxu0 0
      %6875 = vmatpush1.bf16.msra.mxu0 0
      %6876 = vmatprep.subr.bf16.mxu0 0
      %6877 = vmatpush1.bf16.msra.mxu0 0
      %6878 = vmatprep.subr.bf16.mxu0 0
      %6879 = vmatpush1.bf16.msra.mxu0 0
      %6880 = vmatprep.subr.bf16.mxu0 0
      %6881 = vmatpush1.bf16.msra.mxu0 0
      %6882 = vmatprep.mubr.bf16.mxu0 0
      %6883 = vmatmul.mubr.bf16.gmra.mrb[0].mxu0 %v6794
      %v6884 = vpop.f32.mrb[0].mxu0
      %v6885 = vadd.f32 0.0, %v6884
      %v6886 = vpop.f32.mrb[0].mxu0
      %v6887 = vpop.f32.mrb[0].mxu0
      %v6888 = vadd.f32 0.0, %v6887
      %v6889 = vpop.f32.mrb[0].mxu0
      %6890 = vmatprep.mubr.bf16.mxu0 0
      %6891 = vmatmul.mubr.bf16.gmra.mrb[0].mxu0 %v6797
      %v6892 = vpop.f32.mrb[0].mxu0
      %v6893 = vadd.f32 0.0, %v6892
      %v6894 = vpop.f32.mrb[0].mxu0
      %v6895 = vpop.f32.mrb[0].mxu0
      %v6896 = vadd.f32 0.0, %v6895
      %v6897 = vpop.f32.mrb[0].mxu0
      %6898 = vmatprep.mubr.bf16.mxu0 0
      %6899 = vmatmul.mubr.bf16.gmra.mrb[0].mxu0 %v6800
      %v6900 = vpop.f32.mrb[0].mxu0
      %v6901 = vadd.f32 0.0, %v6900
      %v6902 = vpop.f32.mrb[0].mxu0
      %v6903 = vpop.f32.mrb[0].mxu0
      %v6904 = vadd.f32 0.0, %v6903
      %v6905 = vpop.f32.mrb[0].mxu0
      %6906 = vmatprep.mubr.bf16.mxu0 0
      %6907 = vmatmul.mubr.bf16.gmra.mrb[0].mxu0 %v6803
      %v6908 = vpop.f32.mrb[0].mxu0
      %v6909 = vadd.f32 0.0, %v6908
      %v6910 = vpop.f32.mrb[0].mxu0
      %v6911 = vpop.f32.mrb[0].mxu0
      %v6912 = vadd.f32 0.0, %v6911
      %v6913 = vpop.f32.mrb[0].mxu0
      %6914 = vmatprep.mubr.bf16.mxu0 0
      %6915 = vmatmul.mubr.bf16.gmra.mrb[0].mxu0 %v6806
      %v6916 = vpop.f32.mrb[0].mxu0
      %v6917 = vadd.f32 0.0, %v6916
      %v6918 = vpop.f32.mrb[0].mxu0
      %v6919 = vpop.f32.mrb[0].mxu0
      %v6920 = vadd.f32 0.0, %v6919
      %v6921 = vpop.f32.mrb[0].mxu0
      %6922 = vmatprep.mubr.bf16.mxu0 0
      %6923 = vmatmul.mubr.bf16.gmra.mrb[0].mxu0 %v6809
      %v6924 = vpop.f32.mrb[0].mxu0
      %v6925 = vadd.f32 0.0, %v6924
      %v6926 = vpop.f32.mrb[0].mxu0
      %v6927 = vpop.f32.mrb[0].mxu0
      %v6928 = vadd.f32 0.0, %v6927
      %v6929 = vpop.f32.mrb[0].mxu0
      %6930 = vmatprep.mubr.bf16.mxu0 0
      %6931 = vmatmul.mubr.bf16.gmra.mrb[0].mxu0 %v6812
      %v6932 = vpop.f32.mrb[0].mxu0
      %v6933 = vadd.f32 0.0, %v6932
      %v6934 = vpop.f32.mrb[0].mxu0
      %v6935 = vpop.f32.mrb[0].mxu0
      %v6936 = vadd.f32 0.0, %v6935
      %v6937 = vpop.f32.mrb[0].mxu0
      %6938 = vmatprep.mubr.bf16.mxu0 0
      %6939 = vmatmul.mubr.bf16.gmra.mrb[0].mxu0 %v6815
      %v6940 = vpop.f32.mrb[0].mxu0
      %v6941 = vadd.f32 0.0, %v6940
      %v6942 = vpop.f32.mrb[0].mxu0
      %v6943 = vpop.f32.mrb[0].mxu0
      %v6944 = vadd.f32 0.0, %v6943
      %v6945 = vpop.f32.mrb[0].mxu0
      %6946 = vmatprep.mubr.bf16.mxu0 0
      %6947 = vmatmul.mubr.bf16.gmra.mrb[0].mxu0 %v6818
      %v6948 = vpop.f32.mrb[0].mxu0
      %v6949 = vadd.f32 0.0, %v6948
      %v6950 = vpop.f32.mrb[0].mxu0
      %v6951 = vpop.f32.mrb[0].mxu0
      %v6952 = vadd.f32 0.0, %v6951
      %v6953 = vpop.f32.mrb[0].mxu0
      %6954 = vmatprep.mubr.bf16.mxu0 0
      %6955 = vmatmul.mubr.bf16.gmra.mrb[0].mxu0 %v6821
      %v6956 = vpop.f32.mrb[0].mxu0
      %v6957 = vadd.f32 0.0, %v6956
      %v6958 = vpop.f32.mrb[0].mxu0
      %v6959 = vpop.f32.mrb[0].mxu0
      %v6960 = vadd.f32 0.0, %v6959
      %v6961 = vpop.f32.mrb[0].mxu0
      %6962 = vmatprep.mubr.bf16.mxu0 0
      %6963 = vmatmul.mubr.bf16.gmra.mrb[0].mxu0 %v6824
      %v6964 = vpop.f32.mrb[0].mxu0
      %v6965 = vadd.f32 0.0, %v6964
      %v6966 = vpop.f32.mrb[0].mxu0
      %v6967 = vpop.f32.mrb[0].mxu0
      %v6968 = vadd.f32 0.0, %v6967
      %v6969 = vpop.f32.mrb[0].mxu0
      %6970 = vmatprep.mubr.bf16.mxu0 0
      %6971 = vmatmul.mubr.bf16.gmra.mrb[0].mxu0 %v6827
      %v6972 = vpop.f32.mrb[0].mxu0
      %v6973 = vadd.f32 0.0, %v6972
      %v6974 = vpop.f32.mrb[0].mxu0
      %v6975 = vpop.f32.mrb[0].mxu0
      %v6976 = vadd.f32 0.0, %v6975
      %v6977 = vpop.f32.mrb[0].mxu0
      %6978 = vmatprep.mubr.bf16.mxu0 0
      %6979 = vmatmul.mubr.bf16.gmra.mrb[0].mxu0 %v6830
      %v6980 = vpop.f32.mrb[0].mxu0
      %v6981 = vadd.f32 0.0, %v6980
      %v6982 = vpop.f32.mrb[0].mxu0
      %v6983 = vpop.f32.mrb[0].mxu0
      %v6984 = vadd.f32 0.0, %v6983
      %v6985 = vpop.f32.mrb[0].mxu0
      %6986 = vmatprep.mubr.bf16.mxu0 0
      %6987 = vmatmul.mubr.bf16.gmra.mrb[0].mxu0 %v6833
      %v6988 = vpop.f32.mrb[0].mxu0
      %v6989 = vadd.f32 0.0, %v6988
      %v6990 = vpop.f32.mrb[0].mxu0
      %v6991 = vpop.f32.mrb[0].mxu0
      %v6992 = vadd.f32 0.0, %v6991
      %v6993 = vpop.f32.mrb[0].mxu0
      %6994 = vmatprep.mubr.bf16.mxu0 0
      %6995 = vmatmul.mubr.bf16.gmra.mrb[0].mxu0 %v6836
      %v6996 = vpop.f32.mrb[0].mxu0
      %v6997 = vadd.f32 0.0, %v6996
      %v6998 = vpop.f32.mrb[0].mxu0
      %v6999 = vpop.f32.mrb[0].mxu0
      %v7000 = vadd.f32 0.0, %v6999
      %v7001 = vpop.f32.mrb[0].mxu0
      %7002 = vmatprep.mubr.bf16.mxu0 0
      %7003 = vmatmul.mubr.bf16.gmra.mrb[0].mxu0 %v6839
      %v7004 = vpop.f32.mrb[0].mxu0
      %v7005 = vadd.f32 0.0, %v7004
      %v7006 = vpop.f32.mrb[0].mxu0
      %v7007 = vpop.f32.mrb[0].mxu0
      %v7008 = vadd.f32 0.0, %v7007
      %v7009 = vpop.f32.mrb[0].mxu0
      %7010 = vmatprep.mubr.bf16.mxu0 0
      %7011 = vmatmul.mubr.bf16.gmra.mrb[0].mxu0 %v6842
      %v7012 = vpop.f32.mrb[0].mxu0
      %v7013 = vadd.f32 0.0, %v7012
      %v7014 = vpop.f32.mrb[0].mxu0
      %v7015 = vpop.f32.mrb[0].mxu0
      %v7016 = vadd.f32 0.0, %v7015
      %v7017 = vpop.f32.mrb[0].mxu0
      %7018 = vmatprep.mubr.bf16.mxu0 0
      %7019 = vmatmul.mubr.bf16.gmra.mrb[0].mxu0 %v6845
      %v7020 = vpop.f32.mrb[0].mxu0
      %v7021 = vadd.f32 0.0, %v7020
      %v7022 = vpop.f32.mrb[0].mxu0
      %v7023 = vpop.f32.mrb[0].mxu0
      %v7024 = vadd.f32 0.0, %v7023
      %v7025 = vpop.f32.mrb[0].mxu0
      %7026 = vdwg.mxu0
      %v7027 = vadd.f32 %v6701, %v6885
      %v7028 = vadd.f32 %v6702, %v6888
      %v7029 = vadd.f32 %v6703, %v6893
      %v7030 = vadd.f32 %v6704, %v6896
      %v7031 = vadd.f32 %v6705, %v6901
      %v7032 = vadd.f32 %v6706, %v6904
      %v7033 = vadd.f32 %v6707, %v6909
      %v7034 = vadd.f32 %v6708, %v6912
      %v7035 = vadd.f32 %v6709, %v6917
      %v7036 = vadd.f32 %v6710, %v6920
      %v7037 = vadd.f32 %v6711, %v6925
      %v7038 = vadd.f32 %v6712, %v6928
      %v7039 = vadd.f32 %v6713, %v6933
      %v7040 = vadd.f32 %v6714, %v6936
      %v7041 = vadd.f32 %v6715, %v6941
      %v7042 = vadd.f32 %v6716, %v6944
      %v7043 = vadd.f32 %v6717, %v6949
      %v7044 = vadd.f32 %v6718, %v6952
      %v7045 = vadd.f32 %v6719, %v6957
      %v7046 = vadd.f32 %v6720, %v6960
      %v7047 = vadd.f32 %v6721, %v6965
      %v7048 = vadd.f32 %v6722, %v6968
      %v7049 = vadd.f32 %v6723, %v6973
      %v7050 = vadd.f32 %v6724, %v6976
      %v7051 = vadd.f32 %v6725, %v6981
      %v7052 = vadd.f32 %v6726, %v6984
      %v7053 = vadd.f32 %v6727, %v6989
      %v7054 = vadd.f32 %v6728, %v6992
      %v7055 = vadd.f32 %v6729, %v6997
      %v7056 = vadd.f32 %v6730, %v7000
      %v7057 = vadd.f32 %v6731, %v7005
      %v7058 = vadd.f32 %v6732, %v7008
      %v7059 = vadd.f32 %v6733, %v7013
      %v7060 = vadd.f32 %v6734, %v7016
      %v7061 = vadd.f32 %v6735, %v7021
      %v7062 = vadd.f32 %v6736, %v7024
      %v7063 = vld [vmem:[#allocation3 + $0x25] sm:$0xff]
      %v7064 = vld [vmem:[#allocation3 + $0x2d] sm:$0xff]
      %v7065 = vld [vmem:[#allocation3 + $0x35] sm:$0xff]
      %v7066 = vld [vmem:[#allocation3 + $0x3d] sm:$0xff]
      %v7067 = vld [vmem:[#allocation3 + $0x45] sm:$0xff]
      %v7068 = vld [vmem:[#allocation3 + $0x4d] sm:$0xff]
      %v7069 = vld [vmem:[#allocation3 + $0x55] sm:$0xff]
      %v7070 = vld [vmem:[#allocation3 + $0x5d] sm:$0xff]
      %v7071 = vld [vmem:[#allocation3 + $0x65] sm:$0xff]
      %v7072 = vld [vmem:[#allocation3 + $0x6d] sm:$0xff]
      %v7073 = vld [vmem:[#allocation3 + $0x75] sm:$0xff]
      %v7074 = vld [vmem:[#allocation3 + $0x7d] sm:$0xff]
      %v7075 = vld [vmem:[#allocation3 + $0x85] sm:$0xff]
      %v7076 = vld [vmem:[#allocation3 + $0x8d] sm:$0xff]
      %v7077 = vld [vmem:[#allocation3 + $0x95] sm:$0xff]
      %v7078 = vld [vmem:[#allocation3 + $0x9d] sm:$0xff]
      %v7079 = vld [vmem:[#allocation3 + $0xa5] sm:$0xff]
      %v7080 = vld [vmem:[#allocation3 + $0xad] sm:$0xff]
      %v7081 = vld [vmem:[#allocation3 + $0xb5] sm:$0xff]
      %v7082 = vld [vmem:[#allocation3 + $0xbd] sm:$0xff]
      %v7083 = vld [vmem:[#allocation3 + $0xc5] sm:$0xff]
      %v7084 = vld [vmem:[#allocation3 + $0xcd] sm:$0xff]
      %v7085 = vld [vmem:[#allocation3 + $0xd5] sm:$0xff]
      %v7086 = vld [vmem:[#allocation3 + $0xdd] sm:$0xff]
      %v7087 = vld [vmem:[#allocation3 + $0xe5] sm:$0xff]
      %v7088 = vld [vmem:[#allocation3 + $0xed] sm:$0xff]
      %v7089 = vld [vmem:[#allocation3 + $0xf5] sm:$0xff]
      %v7090 = vld [vmem:[#allocation3 + $0xfd] sm:$0xff]
      %v7091 = vld [vmem:[#allocation3 + $0x105] sm:$0xff]
      %v7092 = vld [vmem:[#allocation3 + $0x10d] sm:$0xff]
      %v7093 = vld [vmem:[#allocation3 + $0x115] sm:$0xff]
      %v7094 = vld [vmem:[#allocation3 + $0x11d] sm:$0xff]
      %v7095 = vld [vmem:[#allocation3 + $0x125] sm:$0xff]
      %v7096 = vld [vmem:[#allocation3 + $0x12d] sm:$0xff]
      %v7097 = vld [vmem:[#allocation3 + $0x135] sm:$0xff]
      %v7098 = vld [vmem:[#allocation3 + $0x13d] sm:$0xff]
      %v7099 = vpack.c.bf16 %v7064, %v7063
      %v7100 = vpack.c.bf16 %v7066, %v7065
      %v7101 = vpack.c.bf16 %v7068, %v7067
      %v7102 = vpack.c.bf16 %v7070, %v7069
      %v7103 = vpack.c.bf16 %v7072, %v7071
      %v7104 = vpack.c.bf16 %v7074, %v7073
      %v7105 = vpack.c.bf16 %v7076, %v7075
      %v7106 = vpack.c.bf16 %v7078, %v7077
      %v7107 = vpack.c.bf16 %v7080, %v7079
      %v7108 = vpack.c.bf16 %v7082, %v7081
      %v7109 = vpack.c.bf16 %v7084, %v7083
      %v7110 = vpack.c.bf16 %v7086, %v7085
      %v7111 = vpack.c.bf16 %v7088, %v7087
      %v7112 = vpack.c.bf16 %v7090, %v7089
      %v7113 = vpack.c.bf16 %v7092, %v7091
      %v7114 = vpack.c.bf16 %v7094, %v7093
      %v7115 = vpack.c.bf16 %v7096, %v7095
      %v7116 = vpack.c.bf16 %v7098, %v7097
      %s7117 = scalar_lea.vmem %s5, 28
      %v7118 = vld [vmem:[%s7117] sm:$0xf]
      %v7120 = vsel %vm4240, %v7099, 0
      %v7123 = vsel %vm4240, %v7100, 0
      %v7126 = vsel %vm4240, %v7101, 0
      %v7129 = vsel %vm4240, %v7102, 0
      %v7132 = vsel %vm4240, %v7103, 0
      %v7135 = vsel %vm4240, %v7104, 0
      %v7138 = vsel %vm4240, %v7105, 0
      %v7141 = vsel %vm4240, %v7106, 0
      %v7144 = vsel %vm4240, %v7107, 0
      %v7147 = vsel %vm4240, %v7108, 0
      %v7150 = vsel %vm4240, %v7109, 0
      %v7153 = vsel %vm4240, %v7110, 0
      %v7156 = vsel %vm4240, %v7111, 0
      %v7159 = vsel %vm4240, %v7112, 0
      %v7162 = vsel %vm4240, %v7113, 0
      %v7165 = vsel %vm4240, %v7114, 0
      %v7168 = vsel %vm4240, %v7115, 0
      %v7171 = vsel %vm4240, %v7116, 0
      %v7174 = vsel %vm4328, %v7118, 0
      %7176 = vmatprep.subr.bf16.mxu0 0
      %7177 = vmatpush1.bf16.msra.mxu0 %v7174
      %7178 = vmatprep.subr.bf16.mxu0 0
      %7179 = vmatpush1.bf16.msra.mxu0 0
      %7180 = vmatprep.subr.bf16.mxu0 0
      %7181 = vmatpush1.bf16.msra.mxu0 0
      %7182 = vmatprep.subr.bf16.mxu0 0
      %7183 = vmatpush1.bf16.msra.mxu0 0
      %7184 = vmatprep.subr.bf16.mxu0 0
      %7185 = vmatpush1.bf16.msra.mxu0 0
      %7186 = vmatprep.subr.bf16.mxu0 0
      %7187 = vmatpush1.bf16.msra.mxu0 0
      %7188 = vmatprep.subr.bf16.mxu0 0
      %7189 = vmatpush1.bf16.msra.mxu0 0
      %7190 = vmatprep.subr.bf16.mxu0 0
      %7191 = vmatpush1.bf16.msra.mxu0 0
      %7192 = vmatprep.subr.bf16.mxu0 0
      %7193 = vmatpush1.bf16.msra.mxu0 0
      %7194 = vmatprep.subr.bf16.mxu0 0
      %7195 = vmatpush1.bf16.msra.mxu0 0
      %7196 = vmatprep.subr.bf16.mxu0 0
      %7197 = vmatpush1.bf16.msra.mxu0 0
      %7198 = vmatprep.subr.bf16.mxu0 0
      %7199 = vmatpush1.bf16.msra.mxu0 0
      %7200 = vmatprep.subr.bf16.mxu0 0
      %7201 = vmatpush1.bf16.msra.mxu0 0
      %7202 = vmatprep.subr.bf16.mxu0 0
      %7203 = vmatpush1.bf16.msra.mxu0 0
      %7204 = vmatprep.subr.bf16.mxu0 0
      %7205 = vmatpush1.bf16.msra.mxu0 0
      %7206 = vmatprep.subr.bf16.mxu0 0
      %7207 = vmatpush1.bf16.msra.mxu0 0
      %7208 = vmatprep.mubr.bf16.mxu0 0
      %7209 = vmatmul.mubr.bf16.gmra.mrb[0].mxu0 %v7120
      %v7210 = vpop.f32.mrb[0].mxu0
      %v7211 = vadd.f32 0.0, %v7210
      %v7212 = vpop.f32.mrb[0].mxu0
      %v7213 = vpop.f32.mrb[0].mxu0
      %v7214 = vadd.f32 0.0, %v7213
      %v7215 = vpop.f32.mrb[0].mxu0
      %7216 = vmatprep.mubr.bf16.mxu0 0
      %7217 = vmatmul.mubr.bf16.gmra.mrb[0].mxu0 %v7123
      %v7218 = vpop.f32.mrb[0].mxu0
      %v7219 = vadd.f32 0.0, %v7218
      %v7220 = vpop.f32.mrb[0].mxu0
      %v7221 = vpop.f32.mrb[0].mxu0
      %v7222 = vadd.f32 0.0, %v7221
      %v7223 = vpop.f32.mrb[0].mxu0
      %7224 = vmatprep.mubr.bf16.mxu0 0
      %7225 = vmatmul.mubr.bf16.gmra.mrb[0].mxu0 %v7126
      %v7226 = vpop.f32.mrb[0].mxu0
      %v7227 = vadd.f32 0.0, %v7226
      %v7228 = vpop.f32.mrb[0].mxu0
      %v7229 = vpop.f32.mrb[0].mxu0
      %v7230 = vadd.f32 0.0, %v7229
      %v7231 = vpop.f32.mrb[0].mxu0
      %7232 = vmatprep.mubr.bf16.mxu0 0
      %7233 = vmatmul.mubr.bf16.gmra.mrb[0].mxu0 %v7129
      %v7234 = vpop.f32.mrb[0].mxu0
      %v7235 = vadd.f32 0.0, %v7234
      %v7236 = vpop.f32.mrb[0].mxu0
      %v7237 = vpop.f32.mrb[0].mxu0
      %v7238 = vadd.f32 0.0, %v7237
      %v7239 = vpop.f32.mrb[0].mxu0
      %7240 = vmatprep.mubr.bf16.mxu0 0
      %7241 = vmatmul.mubr.bf16.gmra.mrb[0].mxu0 %v7132
      %v7242 = vpop.f32.mrb[0].mxu0
      %v7243 = vadd.f32 0.0, %v7242
      %v7244 = vpop.f32.mrb[0].mxu0
      %v7245 = vpop.f32.mrb[0].mxu0
      %v7246 = vadd.f32 0.0, %v7245
      %v7247 = vpop.f32.mrb[0].mxu0
      %7248 = vmatprep.mubr.bf16.mxu0 0
      %7249 = vmatmul.mubr.bf16.gmra.mrb[0].mxu0 %v7135
      %v7250 = vpop.f32.mrb[0].mxu0
      %v7251 = vadd.f32 0.0, %v7250
      %v7252 = vpop.f32.mrb[0].mxu0
      %v7253 = vpop.f32.mrb[0].mxu0
      %v7254 = vadd.f32 0.0, %v7253
      %v7255 = vpop.f32.mrb[0].mxu0
      %7256 = vmatprep.mubr.bf16.mxu0 0
      %7257 = vmatmul.mubr.bf16.gmra.mrb[0].mxu0 %v7138
      %v7258 = vpop.f32.mrb[0].mxu0
      %v7259 = vadd.f32 0.0, %v7258
      %v7260 = vpop.f32.mrb[0].mxu0
      %v7261 = vpop.f32.mrb[0].mxu0
      %v7262 = vadd.f32 0.0, %v7261
      %v7263 = vpop.f32.mrb[0].mxu0
      %7264 = vmatprep.mubr.bf16.mxu0 0
      %7265 = vmatmul.mubr.bf16.gmra.mrb[0].mxu0 %v7141
      %v7266 = vpop.f32.mrb[0].mxu0
      %v7267 = vadd.f32 0.0, %v7266
      %v7268 = vpop.f32.mrb[0].mxu0
      %v7269 = vpop.f32.mrb[0].mxu0
      %v7270 = vadd.f32 0.0, %v7269
      %v7271 = vpop.f32.mrb[0].mxu0
      %7272 = vmatprep.mubr.bf16.mxu0 0
      %7273 = vmatmul.mubr.bf16.gmra.mrb[0].mxu0 %v7144
      %v7274 = vpop.f32.mrb[0].mxu0
      %v7275 = vadd.f32 0.0, %v7274
      %v7276 = vpop.f32.mrb[0].mxu0
      %v7277 = vpop.f32.mrb[0].mxu0
      %v7278 = vadd.f32 0.0, %v7277
      %v7279 = vpop.f32.mrb[0].mxu0
      %7280 = vmatprep.mubr.bf16.mxu0 0
      %7281 = vmatmul.mubr.bf16.gmra.mrb[0].mxu0 %v7147
      %v7282 = vpop.f32.mrb[0].mxu0
      %v7283 = vadd.f32 0.0, %v7282
      %v7284 = vpop.f32.mrb[0].mxu0
      %v7285 = vpop.f32.mrb[0].mxu0
      %v7286 = vadd.f32 0.0, %v7285
      %v7287 = vpop.f32.mrb[0].mxu0
      %7288 = vmatprep.mubr.bf16.mxu0 0
      %7289 = vmatmul.mubr.bf16.gmra.mrb[0].mxu0 %v7150
      %v7290 = vpop.f32.mrb[0].mxu0
      %v7291 = vadd.f32 0.0, %v7290
      %v7292 = vpop.f32.mrb[0].mxu0
      %v7293 = vpop.f32.mrb[0].mxu0
      %v7294 = vadd.f32 0.0, %v7293
      %v7295 = vpop.f32.mrb[0].mxu0
      %7296 = vmatprep.mubr.bf16.mxu0 0
      %7297 = vmatmul.mubr.bf16.gmra.mrb[0].mxu0 %v7153
      %v7298 = vpop.f32.mrb[0].mxu0
      %v7299 = vadd.f32 0.0, %v7298
      %v7300 = vpop.f32.mrb[0].mxu0
      %v7301 = vpop.f32.mrb[0].mxu0
      %v7302 = vadd.f32 0.0, %v7301
      %v7303 = vpop.f32.mrb[0].mxu0
      %7304 = vmatprep.mubr.bf16.mxu0 0
      %7305 = vmatmul.mubr.bf16.gmra.mrb[0].mxu0 %v7156
      %v7306 = vpop.f32.mrb[0].mxu0
      %v7307 = vadd.f32 0.0, %v7306
      %v7308 = vpop.f32.mrb[0].mxu0
      %v7309 = vpop.f32.mrb[0].mxu0
      %v7310 = vadd.f32 0.0, %v7309
      %v7311 = vpop.f32.mrb[0].mxu0
      %7312 = vmatprep.mubr.bf16.mxu0 0
      %7313 = vmatmul.mubr.bf16.gmra.mrb[0].mxu0 %v7159
      %v7314 = vpop.f32.mrb[0].mxu0
      %v7315 = vadd.f32 0.0, %v7314
      %v7316 = vpop.f32.mrb[0].mxu0
      %v7317 = vpop.f32.mrb[0].mxu0
      %v7318 = vadd.f32 0.0, %v7317
      %v7319 = vpop.f32.mrb[0].mxu0
      %7320 = vmatprep.mubr.bf16.mxu0 0
      %7321 = vmatmul.mubr.bf16.gmra.mrb[0].mxu0 %v7162
      %v7322 = vpop.f32.mrb[0].mxu0
      %v7323 = vadd.f32 0.0, %v7322
      %v7324 = vpop.f32.mrb[0].mxu0
      %v7325 = vpop.f32.mrb[0].mxu0
      %v7326 = vadd.f32 0.0, %v7325
      %v7327 = vpop.f32.mrb[0].mxu0
      %7328 = vmatprep.mubr.bf16.mxu0 0
      %7329 = vmatmul.mubr.bf16.gmra.mrb[0].mxu0 %v7165
      %v7330 = vpop.f32.mrb[0].mxu0
      %v7331 = vadd.f32 0.0, %v7330
      %v7332 = vpop.f32.mrb[0].mxu0
      %v7333 = vpop.f32.mrb[0].mxu0
      %v7334 = vadd.f32 0.0, %v7333
      %v7335 = vpop.f32.mrb[0].mxu0
      %7336 = vmatprep.mubr.bf16.mxu0 0
      %7337 = vmatmul.mubr.bf16.gmra.mrb[0].mxu0 %v7168
      %v7338 = vpop.f32.mrb[0].mxu0
      %v7339 = vadd.f32 0.0, %v7338
      %v7340 = vpop.f32.mrb[0].mxu0
      %v7341 = vpop.f32.mrb[0].mxu0
      %v7342 = vadd.f32 0.0, %v7341
      %v7343 = vpop.f32.mrb[0].mxu0
      %7344 = vmatprep.mubr.bf16.mxu0 0
      %7345 = vmatmul.mubr.bf16.gmra.mrb[0].mxu0 %v7171
      %v7346 = vpop.f32.mrb[0].mxu0
      %v7347 = vadd.f32 0.0, %v7346
      %v7348 = vpop.f32.mrb[0].mxu0
      %v7349 = vpop.f32.mrb[0].mxu0
      %v7350 = vadd.f32 0.0, %v7349
      %v7351 = vpop.f32.mrb[0].mxu0
      %7352 = vdwg.mxu0
      %v7353 = vadd.f32 %v7027, %v7211
      %v7354 = vadd.f32 %v7028, %v7214
      %v7355 = vadd.f32 %v7029, %v7219
      %v7356 = vadd.f32 %v7030, %v7222
      %v7357 = vadd.f32 %v7031, %v7227
      %v7358 = vadd.f32 %v7032, %v7230
      %v7359 = vadd.f32 %v7033, %v7235
      %v7360 = vadd.f32 %v7034, %v7238
      %v7361 = vadd.f32 %v7035, %v7243
      %v7362 = vadd.f32 %v7036, %v7246
      %v7363 = vadd.f32 %v7037, %v7251
      %v7364 = vadd.f32 %v7038, %v7254
      %v7365 = vadd.f32 %v7039, %v7259
      %v7366 = vadd.f32 %v7040, %v7262
      %v7367 = vadd.f32 %v7041, %v7267
      %v7368 = vadd.f32 %v7042, %v7270
      %v7369 = vadd.f32 %v7043, %v7275
      %v7370 = vadd.f32 %v7044, %v7278
      %v7371 = vadd.f32 %v7045, %v7283
      %v7372 = vadd.f32 %v7046, %v7286
      %v7373 = vadd.f32 %v7047, %v7291
      %v7374 = vadd.f32 %v7048, %v7294
      %v7375 = vadd.f32 %v7049, %v7299
      %v7376 = vadd.f32 %v7050, %v7302
      %v7377 = vadd.f32 %v7051, %v7307
      %v7378 = vadd.f32 %v7052, %v7310
      %v7379 = vadd.f32 %v7053, %v7315
      %v7380 = vadd.f32 %v7054, %v7318
      %v7381 = vadd.f32 %v7055, %v7323
      %v7382 = vadd.f32 %v7056, %v7326
      %v7383 = vadd.f32 %v7057, %v7331
      %v7384 = vadd.f32 %v7058, %v7334
      %v7385 = vadd.f32 %v7059, %v7339
      %v7386 = vadd.f32 %v7060, %v7342
      %v7387 = vadd.f32 %v7061, %v7347
      %v7388 = vadd.f32 %v7062, %v7350
      %v7389 = vld [vmem:[#allocation3 + $0x26] sm:$0xff]
      %v7390 = vld [vmem:[#allocation3 + $0x2e] sm:$0xff]
      %v7391 = vld [vmem:[#allocation3 + $0x36] sm:$0xff]
      %v7392 = vld [vmem:[#allocation3 + $0x3e] sm:$0xff]
      %v7393 = vld [vmem:[#allocation3 + $0x46] sm:$0xff]
      %v7394 = vld [vmem:[#allocation3 + $0x4e] sm:$0xff]
      %v7395 = vld [vmem:[#allocation3 + $0x56] sm:$0xff]
      %v7396 = vld [vmem:[#allocation3 + $0x5e] sm:$0xff]
      %v7397 = vld [vmem:[#allocation3 + $0x66] sm:$0xff]
      %v7398 = vld [vmem:[#allocation3 + $0x6e] sm:$0xff]
      %v7399 = vld [vmem:[#allocation3 + $0x76] sm:$0xff]
      %v7400 = vld [vmem:[#allocation3 + $0x7e] sm:$0xff]
      %v7401 = vld [vmem:[#allocation3 + $0x86] sm:$0xff]
      %v7402 = vld [vmem:[#allocation3 + $0x8e] sm:$0xff]
      %v7403 = vld [vmem:[#allocation3 + $0x96] sm:$0xff]
      %v7404 = vld [vmem:[#allocation3 + $0x9e] sm:$0xff]
      %v7405 = vld [vmem:[#allocation3 + $0xa6] sm:$0xff]
      %v7406 = vld [vmem:[#allocation3 + $0xae] sm:$0xff]
      %v7407 = vld [vmem:[#allocation3 + $0xb6] sm:$0xff]
      %v7408 = vld [vmem:[#allocation3 + $0xbe] sm:$0xff]
      %v7409 = vld [vmem:[#allocation3 + $0xc6] sm:$0xff]
      %v7410 = vld [vmem:[#allocation3 + $0xce] sm:$0xff]
      %v7411 = vld [vmem:[#allocation3 + $0xd6] sm:$0xff]
      %v7412 = vld [vmem:[#allocation3 + $0xde] sm:$0xff]
      %v7413 = vld [vmem:[#allocation3 + $0xe6] sm:$0xff]
      %v7414 = vld [vmem:[#allocation3 + $0xee] sm:$0xff]
      %v7415 = vld [vmem:[#allocation3 + $0xf6] sm:$0xff]
      %v7416 = vld [vmem:[#allocation3 + $0xfe] sm:$0xff]
      %v7417 = vld [vmem:[#allocation3 + $0x106] sm:$0xff]
      %v7418 = vld [vmem:[#allocation3 + $0x10e] sm:$0xff]
      %v7419 = vld [vmem:[#allocation3 + $0x116] sm:$0xff]
      %v7420 = vld [vmem:[#allocation3 + $0x11e] sm:$0xff]
      %v7421 = vld [vmem:[#allocation3 + $0x126] sm:$0xff]
      %v7422 = vld [vmem:[#allocation3 + $0x12e] sm:$0xff]
      %v7423 = vld [vmem:[#allocation3 + $0x136] sm:$0xff]
      %v7424 = vld [vmem:[#allocation3 + $0x13e] sm:$0xff]
      %v7425 = vpack.c.bf16 %v7390, %v7389
      %v7426 = vpack.c.bf16 %v7392, %v7391
      %v7427 = vpack.c.bf16 %v7394, %v7393
      %v7428 = vpack.c.bf16 %v7396, %v7395
      %v7429 = vpack.c.bf16 %v7398, %v7397
      %v7430 = vpack.c.bf16 %v7400, %v7399
      %v7431 = vpack.c.bf16 %v7402, %v7401
      %v7432 = vpack.c.bf16 %v7404, %v7403
      %v7433 = vpack.c.bf16 %v7406, %v7405
      %v7434 = vpack.c.bf16 %v7408, %v7407
      %v7435 = vpack.c.bf16 %v7410, %v7409
      %v7436 = vpack.c.bf16 %v7412, %v7411
      %v7437 = vpack.c.bf16 %v7414, %v7413
      %v7438 = vpack.c.bf16 %v7416, %v7415
      %v7439 = vpack.c.bf16 %v7418, %v7417
      %v7440 = vpack.c.bf16 %v7420, %v7419
      %v7441 = vpack.c.bf16 %v7422, %v7421
      %v7442 = vpack.c.bf16 %v7424, %v7423
      %s7443 = scalar_lea.vmem %s5, 32
      %v7444 = vld [vmem:[%s7443] sm:$0xf]
      %v7446 = vsel %vm4240, %v7425, 0
      %v7449 = vsel %vm4240, %v7426, 0
      %v7452 = vsel %vm4240, %v7427, 0
      %v7455 = vsel %vm4240, %v7428, 0
      %v7458 = vsel %vm4240, %v7429, 0
      %v7461 = vsel %vm4240, %v7430, 0
      %v7464 = vsel %vm4240, %v7431, 0
      %v7467 = vsel %vm4240, %v7432, 0
      %v7470 = vsel %vm4240, %v7433, 0
      %v7473 = vsel %vm4240, %v7434, 0
      %v7476 = vsel %vm4240, %v7435, 0
      %v7479 = vsel %vm4240, %v7436, 0
      %v7482 = vsel %vm4240, %v7437, 0
      %v7485 = vsel %vm4240, %v7438, 0
      %v7488 = vsel %vm4240, %v7439, 0
      %v7491 = vsel %vm4240, %v7440, 0
      %v7494 = vsel %vm4240, %v7441, 0
      %v7497 = vsel %vm4240, %v7442, 0
      %v7500 = vsel %vm4328, %v7444, 0
      %7502 = vmatprep.subr.bf16.mxu0 0
      %7503 = vmatpush1.bf16.msra.mxu0 %v7500
      %7504 = vmatprep.subr.bf16.mxu0 0
      %7505 = vmatpush1.bf16.msra.mxu0 0
      %7506 = vmatprep.subr.bf16.mxu0 0
      %7507 = vmatpush1.bf16.msra.mxu0 0
      %7508 = vmatprep.subr.bf16.mxu0 0
      %7509 = vmatpush1.bf16.msra.mxu0 0
      %7510 = vmatprep.subr.bf16.mxu0 0
      %7511 = vmatpush1.bf16.msra.mxu0 0
      %7512 = vmatprep.subr.bf16.mxu0 0
      %7513 = vmatpush1.bf16.msra.mxu0 0
      %7514 = vmatprep.subr.bf16.mxu0 0
      %7515 = vmatpush1.bf16.msra.mxu0 0
      %7516 = vmatprep.subr.bf16.mxu0 0
      %7517 = vmatpush1.bf16.msra.mxu0 0
      %7518 = vmatprep.subr.bf16.mxu0 0
      %7519 = vmatpush1.bf16.msra.mxu0 0
      %7520 = vmatprep.subr.bf16.mxu0 0
      %7521 = vmatpush1.bf16.msra.mxu0 0
      %7522 = vmatprep.subr.bf16.mxu0 0
      %7523 = vmatpush1.bf16.msra.mxu0 0
      %7524 = vmatprep.subr.bf16.mxu0 0
      %7525 = vmatpush1.bf16.msra.mxu0 0
      %7526 = vmatprep.subr.bf16.mxu0 0
      %7527 = vmatpush1.bf16.msra.mxu0 0
      %7528 = vmatprep.subr.bf16.mxu0 0
      %7529 = vmatpush1.bf16.msra.mxu0 0
      %7530 = vmatprep.subr.bf16.mxu0 0
      %7531 = vmatpush1.bf16.msra.mxu0 0
      %7532 = vmatprep.subr.bf16.mxu0 0
      %7533 = vmatpush1.bf16.msra.mxu0 0
      %7534 = vmatprep.mubr.bf16.mxu0 0
      %7535 = vmatmul.mubr.bf16.gmra.mrb[0].mxu0 %v7446
      %v7536 = vpop.f32.mrb[0].mxu0
      %v7537 = vadd.f32 0.0, %v7536
      %v7538 = vpop.f32.mrb[0].mxu0
      %v7539 = vpop.f32.mrb[0].mxu0
      %v7540 = vadd.f32 0.0, %v7539
      %v7541 = vpop.f32.mrb[0].mxu0
      %7542 = vmatprep.mubr.bf16.mxu0 0
      %7543 = vmatmul.mubr.bf16.gmra.mrb[0].mxu0 %v7449
      %v7544 = vpop.f32.mrb[0].mxu0
      %v7545 = vadd.f32 0.0, %v7544
      %v7546 = vpop.f32.mrb[0].mxu0
      %v7547 = vpop.f32.mrb[0].mxu0
      %v7548 = vadd.f32 0.0, %v7547
      %v7549 = vpop.f32.mrb[0].mxu0
      %7550 = vmatprep.mubr.bf16.mxu0 0
      %7551 = vmatmul.mubr.bf16.gmra.mrb[0].mxu0 %v7452
      %v7552 = vpop.f32.mrb[0].mxu0
      %v7553 = vadd.f32 0.0, %v7552
      %v7554 = vpop.f32.mrb[0].mxu0
      %v7555 = vpop.f32.mrb[0].mxu0
      %v7556 = vadd.f32 0.0, %v7555
      %v7557 = vpop.f32.mrb[0].mxu0
      %7558 = vmatprep.mubr.bf16.mxu0 0
      %7559 = vmatmul.mubr.bf16.gmra.mrb[0].mxu0 %v7455
      %v7560 = vpop.f32.mrb[0].mxu0
      %v7561 = vadd.f32 0.0, %v7560
      %v7562 = vpop.f32.mrb[0].mxu0
      %v7563 = vpop.f32.mrb[0].mxu0
      %v7564 = vadd.f32 0.0, %v7563
      %v7565 = vpop.f32.mrb[0].mxu0
      %7566 = vmatprep.mubr.bf16.mxu0 0
      %7567 = vmatmul.mubr.bf16.gmra.mrb[0].mxu0 %v7458
      %v7568 = vpop.f32.mrb[0].mxu0
      %v7569 = vadd.f32 0.0, %v7568
      %v7570 = vpop.f32.mrb[0].mxu0
      %v7571 = vpop.f32.mrb[0].mxu0
      %v7572 = vadd.f32 0.0, %v7571
      %v7573 = vpop.f32.mrb[0].mxu0
      %7574 = vmatprep.mubr.bf16.mxu0 0
      %7575 = vmatmul.mubr.bf16.gmra.mrb[0].mxu0 %v7461
      %v7576 = vpop.f32.mrb[0].mxu0
      %v7577 = vadd.f32 0.0, %v7576
      %v7578 = vpop.f32.mrb[0].mxu0
      %v7579 = vpop.f32.mrb[0].mxu0
      %v7580 = vadd.f32 0.0, %v7579
      %v7581 = vpop.f32.mrb[0].mxu0
      %7582 = vmatprep.mubr.bf16.mxu0 0
      %7583 = vmatmul.mubr.bf16.gmra.mrb[0].mxu0 %v7464
      %v7584 = vpop.f32.mrb[0].mxu0
      %v7585 = vadd.f32 0.0, %v7584
      %v7586 = vpop.f32.mrb[0].mxu0
      %v7587 = vpop.f32.mrb[0].mxu0
      %v7588 = vadd.f32 0.0, %v7587
      %v7589 = vpop.f32.mrb[0].mxu0
      %7590 = vmatprep.mubr.bf16.mxu0 0
      %7591 = vmatmul.mubr.bf16.gmra.mrb[0].mxu0 %v7467
      %v7592 = vpop.f32.mrb[0].mxu0
      %v7593 = vadd.f32 0.0, %v7592
      %v7594 = vpop.f32.mrb[0].mxu0
      %v7595 = vpop.f32.mrb[0].mxu0
      %v7596 = vadd.f32 0.0, %v7595
      %v7597 = vpop.f32.mrb[0].mxu0
      %7598 = vmatprep.mubr.bf16.mxu0 0
      %7599 = vmatmul.mubr.bf16.gmra.mrb[0].mxu0 %v7470
      %v7600 = vpop.f32.mrb[0].mxu0
      %v7601 = vadd.f32 0.0, %v7600
      %v7602 = vpop.f32.mrb[0].mxu0
      %v7603 = vpop.f32.mrb[0].mxu0
      %v7604 = vadd.f32 0.0, %v7603
      %v7605 = vpop.f32.mrb[0].mxu0
      %7606 = vmatprep.mubr.bf16.mxu0 0
      %7607 = vmatmul.mubr.bf16.gmra.mrb[0].mxu0 %v7473
      %v7608 = vpop.f32.mrb[0].mxu0
      %v7609 = vadd.f32 0.0, %v7608
      %v7610 = vpop.f32.mrb[0].mxu0
      %v7611 = vpop.f32.mrb[0].mxu0
      %v7612 = vadd.f32 0.0, %v7611
      %v7613 = vpop.f32.mrb[0].mxu0
      %7614 = vmatprep.mubr.bf16.mxu0 0
      %7615 = vmatmul.mubr.bf16.gmra.mrb[0].mxu0 %v7476
      %v7616 = vpop.f32.mrb[0].mxu0
      %v7617 = vadd.f32 0.0, %v7616
      %v7618 = vpop.f32.mrb[0].mxu0
      %v7619 = vpop.f32.mrb[0].mxu0
      %v7620 = vadd.f32 0.0, %v7619
      %v7621 = vpop.f32.mrb[0].mxu0
      %7622 = vmatprep.mubr.bf16.mxu0 0
      %7623 = vmatmul.mubr.bf16.gmra.mrb[0].mxu0 %v7479
      %v7624 = vpop.f32.mrb[0].mxu0
      %v7625 = vadd.f32 0.0, %v7624
      %v7626 = vpop.f32.mrb[0].mxu0
      %v7627 = vpop.f32.mrb[0].mxu0
      %v7628 = vadd.f32 0.0, %v7627
      %v7629 = vpop.f32.mrb[0].mxu0
      %7630 = vmatprep.mubr.bf16.mxu0 0
      %7631 = vmatmul.mubr.bf16.gmra.mrb[0].mxu0 %v7482
      %v7632 = vpop.f32.mrb[0].mxu0
      %v7633 = vadd.f32 0.0, %v7632
      %v7634 = vpop.f32.mrb[0].mxu0
      %v7635 = vpop.f32.mrb[0].mxu0
      %v7636 = vadd.f32 0.0, %v7635
      %v7637 = vpop.f32.mrb[0].mxu0
      %7638 = vmatprep.mubr.bf16.mxu0 0
      %7639 = vmatmul.mubr.bf16.gmra.mrb[0].mxu0 %v7485
      %v7640 = vpop.f32.mrb[0].mxu0
      %v7641 = vadd.f32 0.0, %v7640
      %v7642 = vpop.f32.mrb[0].mxu0
      %v7643 = vpop.f32.mrb[0].mxu0
      %v7644 = vadd.f32 0.0, %v7643
      %v7645 = vpop.f32.mrb[0].mxu0
      %7646 = vmatprep.mubr.bf16.mxu0 0
      %7647 = vmatmul.mubr.bf16.gmra.mrb[0].mxu0 %v7488
      %v7648 = vpop.f32.mrb[0].mxu0
      %v7649 = vadd.f32 0.0, %v7648
      %v7650 = vpop.f32.mrb[0].mxu0
      %v7651 = vpop.f32.mrb[0].mxu0
      %v7652 = vadd.f32 0.0, %v7651
      %v7653 = vpop.f32.mrb[0].mxu0
      %7654 = vmatprep.mubr.bf16.mxu0 0
      %7655 = vmatmul.mubr.bf16.gmra.mrb[0].mxu0 %v7491
      %v7656 = vpop.f32.mrb[0].mxu0
      %v7657 = vadd.f32 0.0, %v7656
      %v7658 = vpop.f32.mrb[0].mxu0
      %v7659 = vpop.f32.mrb[0].mxu0
      %v7660 = vadd.f32 0.0, %v7659
      %v7661 = vpop.f32.mrb[0].mxu0
      %7662 = vmatprep.mubr.bf16.mxu0 0
      %7663 = vmatmul.mubr.bf16.gmra.mrb[0].mxu0 %v7494
      %v7664 = vpop.f32.mrb[0].mxu0
      %v7665 = vadd.f32 0.0, %v7664
      %v7666 = vpop.f32.mrb[0].mxu0
      %v7667 = vpop.f32.mrb[0].mxu0
      %v7668 = vadd.f32 0.0, %v7667
      %v7669 = vpop.f32.mrb[0].mxu0
      %7670 = vmatprep.mubr.bf16.mxu0 0
      %7671 = vmatmul.mubr.bf16.gmra.mrb[0].mxu0 %v7497
      %v7672 = vpop.f32.mrb[0].mxu0
      %v7673 = vadd.f32 0.0, %v7672
      %v7674 = vpop.f32.mrb[0].mxu0
      %v7675 = vpop.f32.mrb[0].mxu0
      %v7676 = vadd.f32 0.0, %v7675
      %v7677 = vpop.f32.mrb[0].mxu0
      %7678 = vdwg.mxu0
      %v7679 = vadd.f32 %v7353, %v7537
      %v7680 = vadd.f32 %v7354, %v7540
      %v7681 = vadd.f32 %v7355, %v7545
      %v7682 = vadd.f32 %v7356, %v7548
      %v7683 = vadd.f32 %v7357, %v7553
      %v7684 = vadd.f32 %v7358, %v7556
      %v7685 = vadd.f32 %v7359, %v7561
      %v7686 = vadd.f32 %v7360, %v7564
      %v7687 = vadd.f32 %v7361, %v7569
      %v7688 = vadd.f32 %v7362, %v7572
      %v7689 = vadd.f32 %v7363, %v7577
      %v7690 = vadd.f32 %v7364, %v7580
      %v7691 = vadd.f32 %v7365, %v7585
      %v7692 = vadd.f32 %v7366, %v7588
      %v7693 = vadd.f32 %v7367, %v7593
      %v7694 = vadd.f32 %v7368, %v7596
      %v7695 = vadd.f32 %v7369, %v7601
      %v7696 = vadd.f32 %v7370, %v7604
      %v7697 = vadd.f32 %v7371, %v7609
      %v7698 = vadd.f32 %v7372, %v7612
      %v7699 = vadd.f32 %v7373, %v7617
      %v7700 = vadd.f32 %v7374, %v7620
      %v7701 = vadd.f32 %v7375, %v7625
      %v7702 = vadd.f32 %v7376, %v7628
      %v7703 = vadd.f32 %v7377, %v7633
      %v7704 = vadd.f32 %v7378, %v7636
      %v7705 = vadd.f32 %v7379, %v7641
      %v7706 = vadd.f32 %v7380, %v7644
      %v7707 = vadd.f32 %v7381, %v7649
      %v7708 = vadd.f32 %v7382, %v7652
      %v7709 = vadd.f32 %v7383, %v7657
      %v7710 = vadd.f32 %v7384, %v7660
      %v7711 = vadd.f32 %v7385, %v7665
      %v7712 = vadd.f32 %v7386, %v7668
      %v7713 = vadd.f32 %v7387, %v7673
      %v7714 = vadd.f32 %v7388, %v7676
      %v7715 = vld [vmem:[%s6] sm:$0x1]
      %v7716 = vld [vmem:[%s7] sm:$0x1]
      %v7717 = vld [vmem:[%s8] sm:$0x1]
      %7718 = vmatprep.subr.mxu0 0.0
      %7719 = vmatpush1.msra.mxu0 %v7679
      %7720 = vmatprep.subr.mxu0 0.0
      %7721 = vmatpush1.msra.mxu0 %v7680
      %7722 = vmatprep.subr.mxu0 0.0
      %7723 = vmatpush1.msra.mxu0 %v7681
      %7724 = vmatprep.subr.mxu0 0.0
      %7725 = vmatpush1.msra.mxu0 %v7682
      %7726 = vmatprep.subr.mxu0 0.0
      %7727 = vmatpush1.msra.mxu0 %v7683
      %7728 = vmatprep.subr.mxu0 0.0
      %7729 = vmatpush1.msra.mxu0 %v7684
      %7730 = vmatprep.subr.mxu0 0.0
      %7731 = vmatpush1.msra.mxu0 %v7685
      %7732 = vmatprep.subr.mxu0 0.0
      %7733 = vmatpush1.msra.mxu0 %v7686
      %7734 = vmatprep.subr.mxu0 0.0
      %7735 = vmatpush1.msra.mxu0 %v7687
      %7736 = vmatprep.subr.mxu0 0.0
      %7737 = vmatpush1.msra.mxu0 %v7688
      %7738 = vmatprep.subr.mxu0 0.0
      %7739 = vmatpush1.msra.mxu0 %v7689
      %7740 = vmatprep.subr.mxu0 0.0
      %7741 = vmatpush1.msra.mxu0 %v7690
      %7742 = vmatprep.subr.mxu0 0.0
      %7743 = vmatpush1.msra.mxu0 %v7691
      %7744 = vmatprep.subr.mxu0 0.0
      %7745 = vmatpush1.msra.mxu0 %v7692
      %7746 = vmatprep.subr.mxu0 0.0
      %7747 = vmatpush1.msra.mxu0 %v7693
      %7748 = vmatprep.subr.mxu0 0.0
      %7749 = vmatpush1.msra.mxu0 %v7694
      %7750 = vmatprep.subr.mxu0 0.0
      %7751 = vmatpush1.msra.mxu0 %v7695
      %7752 = vmatprep.subr.mxu0 0.0
      %7753 = vmatpush1.msra.mxu0 %v7696
      %7754 = vmatprep.subr.mxu0 0.0
      %7755 = vmatpush1.msra.mxu0 %v7697
      %7756 = vmatprep.subr.mxu0 0.0
      %7757 = vmatpush1.msra.mxu0 %v7698
      %7758 = vmatprep.subr.mxu0 0.0
      %7759 = vmatpush1.msra.mxu0 %v7699
      %7760 = vmatprep.subr.mxu0 0.0
      %7761 = vmatpush1.msra.mxu0 %v7700
      %7762 = vmatprep.subr.mxu0 0.0
      %7763 = vmatpush1.msra.mxu0 %v7701
      %7764 = vmatprep.subr.mxu0 0.0
      %7765 = vmatpush1.msra.mxu0 %v7702
      %7766 = vmatprep.subr.mxu0 0.0
      %7767 = vmatpush1.msra.mxu0 %v7703
      %7768 = vmatprep.subr.mxu0 0.0
      %7769 = vmatpush1.msra.mxu0 %v7704
      %7770 = vmatprep.subr.mxu0 0.0
      %7771 = vmatpush1.msra.mxu0 %v7705
      %7772 = vmatprep.subr.mxu0 0.0
      %7773 = vmatpush1.msra.mxu0 %v7706
      %7774 = vmatprep.subr.mxu0 0.0
      %7775 = vmatpush1.msra.mxu0 %v7707
      %7776 = vmatprep.subr.mxu0 0.0
      %7777 = vmatpush1.msra.mxu0 %v7708
      %7778 = vmatprep.subr.mxu0 0.0
      %7779 = vmatpush1.msra.mxu0 %v7709
      %7780 = vmatprep.subr.mxu0 0.0
      %7781 = vmatpush1.msra.mxu0 %v7710
      %7782 = vmatprep.mubr.f32.mxu0 %v677
      %7783 = vmatmul.mubr.f32.gmra.mrb[0].mxu0 %v676
      %v7784 = vpop.f32.mrb[0].mxu0
      %v7785 = vadd.f32 0.0, %v7784
      %v7786 = vpop.f32.mrb[0].mxu0
      %7787 = vdwg.mxu0
      %7788 = vmatprep.subr.mxu0 0.0
      %7789 = vmatpush1.msra.mxu0 %v7711
      %7790 = vmatprep.subr.mxu0 0.0
      %7791 = vmatpush1.msra.mxu0 %v7712
      %7792 = vmatprep.subr.mxu0 0.0
      %7793 = vmatpush1.msra.mxu0 %v7713
      %7794 = vmatprep.subr.mxu0 0.0
      %7795 = vmatpush1.msra.mxu0 %v7714
      %7796 = vmatprep.subr.mxu0 0.0
      %7797 = vmatpush1.msra.mxu0 0.0
      %7798 = vmatprep.subr.mxu0 0.0
      %7799 = vmatpush1.msra.mxu0 0.0
      %7800 = vmatprep.subr.mxu0 0.0
      %7801 = vmatpush1.msra.mxu0 0.0
      %7802 = vmatprep.subr.mxu0 0.0
      %7803 = vmatpush1.msra.mxu0 0.0
      %7804 = vmatprep.subr.mxu0 0.0
      %7805 = vmatpush1.msra.mxu0 0.0
      %7806 = vmatprep.subr.mxu0 0.0
      %7807 = vmatpush1.msra.mxu0 0.0
      %7808 = vmatprep.subr.mxu0 0.0
      %7809 = vmatpush1.msra.mxu0 0.0
      %7810 = vmatprep.subr.mxu0 0.0
      %7811 = vmatpush1.msra.mxu0 0.0
      %7812 = vmatprep.subr.mxu0 0.0
      %7813 = vmatpush1.msra.mxu0 0.0
      %7814 = vmatprep.subr.mxu0 0.0
      %7815 = vmatpush1.msra.mxu0 0.0
      %7816 = vmatprep.subr.mxu0 0.0
      %7817 = vmatpush1.msra.mxu0 0.0
      %7818 = vmatprep.subr.mxu0 0.0
      %7819 = vmatpush1.msra.mxu0 0.0
      %7820 = vmatprep.subr.mxu0 0.0
      %7821 = vmatpush1.msra.mxu0 0.0
      %7822 = vmatprep.subr.mxu0 0.0
      %7823 = vmatpush1.msra.mxu0 0.0
      %7824 = vmatprep.subr.mxu0 0.0
      %7825 = vmatpush1.msra.mxu0 0.0
      %7826 = vmatprep.subr.mxu0 0.0
      %7827 = vmatpush1.msra.mxu0 0.0
      %7828 = vmatprep.subr.mxu0 0.0
      %7829 = vmatpush1.msra.mxu0 0.0
      %7830 = vmatprep.subr.mxu0 0.0
      %7831 = vmatpush1.msra.mxu0 0.0
      %7832 = vmatprep.subr.mxu0 0.0
      %7833 = vmatpush1.msra.mxu0 0.0
      %7834 = vmatprep.subr.mxu0 0.0
      %7835 = vmatpush1.msra.mxu0 0.0
      %7836 = vmatprep.subr.mxu0 0.0
      %7837 = vmatpush1.msra.mxu0 0.0
      %7838 = vmatprep.subr.mxu0 0.0
      %7839 = vmatpush1.msra.mxu0 0.0
      %7840 = vmatprep.subr.mxu0 0.0
      %7841 = vmatpush1.msra.mxu0 0.0
      %7842 = vmatprep.subr.mxu0 0.0
      %7843 = vmatpush1.msra.mxu0 0.0
      %7844 = vmatprep.subr.mxu0 0.0
      %7845 = vmatpush1.msra.mxu0 0.0
      %7846 = vmatprep.subr.mxu0 0.0
      %7847 = vmatpush1.msra.mxu0 0.0
      %7848 = vmatprep.subr.mxu0 0.0
      %7849 = vmatpush1.msra.mxu0 0.0
      %7850 = vmatprep.subr.mxu0 0.0
      %7851 = vmatpush1.msra.mxu0 0.0
      %7852 = vmatprep.mubr.f32.mxu0 0.0
      %7853 = vmatmul.mubr.f32.gmra.mrb[0].mxu0 %v3909
      %v7854 = vpop.f32.mrb[0].mxu0
      %v7855 = vadd.f32 %v7785, %v7854
      %v7856 = vpop.f32.mrb[0].mxu0
      %7857 = vdwg.mxu0
      %v7858 = vmul.f32 %v7679, %v7679
      %v7859 = vmul.f32 %v7680, %v7680
      %v7860 = vmul.f32 %v7681, %v7681
      %v7861 = vmul.f32 %v7682, %v7682
      %v7862 = vmul.f32 %v7683, %v7683
      %v7863 = vmul.f32 %v7684, %v7684
      %v7864 = vmul.f32 %v7685, %v7685
      %v7865 = vmul.f32 %v7686, %v7686
      %v7866 = vmul.f32 %v7687, %v7687
      %v7867 = vmul.f32 %v7688, %v7688
      %v7868 = vmul.f32 %v7689, %v7689
      %v7869 = vmul.f32 %v7690, %v7690
      %v7870 = vmul.f32 %v7691, %v7691
      %v7871 = vmul.f32 %v7692, %v7692
      %v7872 = vmul.f32 %v7693, %v7693
      %v7873 = vmul.f32 %v7694, %v7694
      %v7874 = vmul.f32 %v7695, %v7695
      %v7875 = vmul.f32 %v7696, %v7696
      %v7876 = vmul.f32 %v7697, %v7697
      %v7877 = vmul.f32 %v7698, %v7698
      %v7878 = vmul.f32 %v7699, %v7699
      %v7879 = vmul.f32 %v7700, %v7700
      %v7880 = vmul.f32 %v7701, %v7701
      %v7881 = vmul.f32 %v7702, %v7702
      %v7882 = vmul.f32 %v7703, %v7703
      %v7883 = vmul.f32 %v7704, %v7704
      %v7884 = vmul.f32 %v7705, %v7705
      %v7885 = vmul.f32 %v7706, %v7706
      %v7886 = vmul.f32 %v7707, %v7707
      %v7887 = vmul.f32 %v7708, %v7708
      %v7888 = vmul.f32 %v7709, %v7709
      %v7889 = vmul.f32 %v7710, %v7710
      %v7890 = vmul.f32 %v7711, %v7711
      %v7891 = vmul.f32 %v7712, %v7712
      %v7892 = vmul.f32 %v7713, %v7713
      %v7893 = vmul.f32 %v7714, %v7714
      %v7894 = vmul.f32 %v7715, 256.0
      %v7895 = vadd.f32 %v7855, %v7894
      %v7896 = vmul.f32 %v7715, 2.0
      %v7897 = vmul.f32 %v7896, %v7855
      %7898 = vmatprep.subr.mxu0 0.0
      %7899 = vmatpush1.msra.mxu0 %v7858
      %7900 = vmatprep.subr.mxu0 0.0
      %7901 = vmatpush1.msra.mxu0 %v7859
      %7902 = vmatprep.subr.mxu0 0.0
      %7903 = vmatpush1.msra.mxu0 %v7860
      %7904 = vmatprep.subr.mxu0 0.0
      %7905 = vmatpush1.msra.mxu0 %v7861
      %7906 = vmatprep.subr.mxu0 0.0
      %7907 = vmatpush1.msra.mxu0 %v7862
      %7908 = vmatprep.subr.mxu0 0.0
      %7909 = vmatpush1.msra.mxu0 %v7863
      %7910 = vmatprep.subr.mxu0 0.0
      %7911 = vmatpush1.msra.mxu0 %v7864
      %7912 = vmatprep.subr.mxu0 0.0
      %7913 = vmatpush1.msra.mxu0 %v7865
      %7914 = vmatprep.subr.mxu0 0.0
      %7915 = vmatpush1.msra.mxu0 %v7866
      %7916 = vmatprep.subr.mxu0 0.0
      %7917 = vmatpush1.msra.mxu0 %v7867
      %7918 = vmatprep.subr.mxu0 0.0
      %7919 = vmatpush1.msra.mxu0 %v7868
      %7920 = vmatprep.subr.mxu0 0.0
      %7921 = vmatpush1.msra.mxu0 %v7869
      %7922 = vmatprep.subr.mxu0 0.0
      %7923 = vmatpush1.msra.mxu0 %v7870
      %7924 = vmatprep.subr.mxu0 0.0
      %7925 = vmatpush1.msra.mxu0 %v7871
      %7926 = vmatprep.subr.mxu0 0.0
      %7927 = vmatpush1.msra.mxu0 %v7872
      %7928 = vmatprep.subr.mxu0 0.0
      %7929 = vmatpush1.msra.mxu0 %v7873
      %7930 = vmatprep.subr.mxu0 0.0
      %7931 = vmatpush1.msra.mxu0 %v7874
      %7932 = vmatprep.subr.mxu0 0.0
      %7933 = vmatpush1.msra.mxu0 %v7875
      %7934 = vmatprep.subr.mxu0 0.0
      %7935 = vmatpush1.msra.mxu0 %v7876
      %7936 = vmatprep.subr.mxu0 0.0
      %7937 = vmatpush1.msra.mxu0 %v7877
      %7938 = vmatprep.subr.mxu0 0.0
      %7939 = vmatpush1.msra.mxu0 %v7878
      %7940 = vmatprep.subr.mxu0 0.0
      %7941 = vmatpush1.msra.mxu0 %v7879
      %7942 = vmatprep.subr.mxu0 0.0
      %7943 = vmatpush1.msra.mxu0 %v7880
      %7944 = vmatprep.subr.mxu0 0.0
      %7945 = vmatpush1.msra.mxu0 %v7881
      %7946 = vmatprep.subr.mxu0 0.0
      %7947 = vmatpush1.msra.mxu0 %v7882
      %7948 = vmatprep.subr.mxu0 0.0
      %7949 = vmatpush1.msra.mxu0 %v7883
      %7950 = vmatprep.subr.mxu0 0.0
      %7951 = vmatpush1.msra.mxu0 %v7884
      %7952 = vmatprep.subr.mxu0 0.0
      %7953 = vmatpush1.msra.mxu0 %v7885
      %7954 = vmatprep.subr.mxu0 0.0
      %7955 = vmatpush1.msra.mxu0 %v7886
      %7956 = vmatprep.subr.mxu0 0.0
      %7957 = vmatpush1.msra.mxu0 %v7887
      %7958 = vmatprep.subr.mxu0 0.0
      %7959 = vmatpush1.msra.mxu0 %v7888
      %7960 = vmatprep.subr.mxu0 0.0
      %7961 = vmatpush1.msra.mxu0 %v7889
      %7962 = vmatprep.mubr.f32.mxu0 %v677
      %7963 = vmatmul.mubr.f32.gmra.mrb[0].mxu0 %v676
      %v7964 = vpop.f32.mrb[0].mxu0
      %v7965 = vadd.f32 %v7897, %v7964
      %v7966 = vpop.f32.mrb[0].mxu0
      %7967 = vdwg.mxu0
      %7968 = vmatprep.subr.mxu0 0.0
      %7969 = vmatpush1.msra.mxu0 %v7890
      %7970 = vmatprep.subr.mxu0 0.0
      %7971 = vmatpush1.msra.mxu0 %v7891
      %7972 = vmatprep.subr.mxu0 0.0
      %7973 = vmatpush1.msra.mxu0 %v7892
      %7974 = vmatprep.subr.mxu0 0.0
      %7975 = vmatpush1.msra.mxu0 %v7893
      %7976 = vmatprep.subr.mxu0 0.0
      %7977 = vmatpush1.msra.mxu0 0.0
      %7978 = vmatprep.subr.mxu0 0.0
      %7979 = vmatpush1.msra.mxu0 0.0
      %7980 = vmatprep.subr.mxu0 0.0
      %7981 = vmatpush1.msra.mxu0 0.0
      %7982 = vmatprep.subr.mxu0 0.0
      %7983 = vmatpush1.msra.mxu0 0.0
      %7984 = vmatprep.subr.mxu0 0.0
      %7985 = vmatpush1.msra.mxu0 0.0
      %7986 = vmatprep.subr.mxu0 0.0
      %7987 = vmatpush1.msra.mxu0 0.0
      %7988 = vmatprep.subr.mxu0 0.0
      %7989 = vmatpush1.msra.mxu0 0.0
      %7990 = vmatprep.subr.mxu0 0.0
      %7991 = vmatpush1.msra.mxu0 0.0
      %7992 = vmatprep.subr.mxu0 0.0
      %7993 = vmatpush1.msra.mxu0 0.0
      %7994 = vmatprep.subr.mxu0 0.0
      %7995 = vmatpush1.msra.mxu0 0.0
      %7996 = vmatprep.subr.mxu0 0.0
      %7997 = vmatpush1.msra.mxu0 0.0
      %7998 = vmatprep.subr.mxu0 0.0
      %7999 = vmatpush1.msra.mxu0 0.0
      %8000 = vmatprep.subr.mxu0 0.0
      %8001 = vmatpush1.msra.mxu0 0.0
      %8002 = vmatprep.subr.mxu0 0.0
      %8003 = vmatpush1.msra.mxu0 0.0
      %8004 = vmatprep.subr.mxu0 0.0
      %8005 = vmatpush1.msra.mxu0 0.0
      %8006 = vmatprep.subr.mxu0 0.0
      %8007 = vmatpush1.msra.mxu0 0.0
      %8008 = vmatprep.subr.mxu0 0.0
      %8009 = vmatpush1.msra.mxu0 0.0
      %8010 = vmatprep.subr.mxu0 0.0
      %8011 = vmatpush1.msra.mxu0 0.0
      %8012 = vmatprep.subr.mxu0 0.0
      %8013 = vmatpush1.msra.mxu0 0.0
      %8014 = vmatprep.subr.mxu0 0.0
      %8015 = vmatpush1.msra.mxu0 0.0
      %8016 = vmatprep.subr.mxu0 0.0
      %8017 = vmatpush1.msra.mxu0 0.0
      %8018 = vmatprep.subr.mxu0 0.0
      %8019 = vmatpush1.msra.mxu0 0.0
      %8020 = vmatprep.subr.mxu0 0.0
      %8021 = vmatpush1.msra.mxu0 0.0
      %8022 = vmatprep.subr.mxu0 0.0
      %8023 = vmatpush1.msra.mxu0 0.0
      %8024 = vmatprep.subr.mxu0 0.0
      %8025 = vmatpush1.msra.mxu0 0.0
      %8026 = vmatprep.subr.mxu0 0.0
      %8027 = vmatpush1.msra.mxu0 0.0
      %8028 = vmatprep.subr.mxu0 0.0
      %8029 = vmatpush1.msra.mxu0 0.0
      %8030 = vmatprep.subr.mxu0 0.0
      %8031 = vmatpush1.msra.mxu0 0.0
      %8032 = vmatprep.mubr.f32.mxu0 0.0
      %8033 = vmatmul.mubr.f32.gmra.mrb[0].mxu0 %v3909
      %v8034 = vpop.f32.mrb[0].mxu0
      %v8035 = vadd.f32 %v7965, %v8034
      %v8036 = vpop.f32.mrb[0].mxu0
      %8037 = vdwg.mxu0
      %v8038 = vmul.f32 %v7715, %v7715
      %v8039 = vmul.f32 %v8038, 256.0
      %v8040 = vadd.f32 %v8035, %v8039
      %v8042 = vrot.slane %v8040, 7
      %v8044 = vsel %vm4237, %v7895, %v8042
      %v8045 = vld [vmem:[%s9] sm:$0xff]
      %v8047 = vsel %vm4240, %v8044, 0
      %8049 = vmatprep.subr.mxu0 0.0
      %8050 = vmatpush1.msra.mxu0 %v8045
      %8051 = vmatprep.subr.mxu0 0.0
      %8052 = vmatpush1.msra.mxu0 0.0
      %8053 = vmatprep.subr.mxu0 0.0
      %8054 = vmatpush1.msra.mxu0 0.0
      %8055 = vmatprep.subr.mxu0 0.0
      %8056 = vmatpush1.msra.mxu0 0.0
      %8057 = vmatprep.subr.mxu0 0.0
      %8058 = vmatpush1.msra.mxu0 0.0
      %8059 = vmatprep.subr.mxu0 0.0
      %8060 = vmatpush1.msra.mxu0 0.0
      %8061 = vmatprep.subr.mxu0 0.0
      %8062 = vmatpush1.msra.mxu0 0.0
      %8063 = vmatprep.subr.mxu0 0.0
      %8064 = vmatpush1.msra.mxu0 0.0
      %8065 = vmatprep.subr.mxu0 0.0
      %8066 = vmatpush1.msra.mxu0 0.0
      %8067 = vmatprep.subr.mxu0 0.0
      %8068 = vmatpush1.msra.mxu0 0.0
      %8069 = vmatprep.subr.mxu0 0.0
      %8070 = vmatpush1.msra.mxu0 0.0
      %8071 = vmatprep.subr.mxu0 0.0
      %8072 = vmatpush1.msra.mxu0 0.0
      %8073 = vmatprep.subr.mxu0 0.0
      %8074 = vmatpush1.msra.mxu0 0.0
      %8075 = vmatprep.subr.mxu0 0.0
      %8076 = vmatpush1.msra.mxu0 0.0
      %8077 = vmatprep.subr.mxu0 0.0
      %8078 = vmatpush1.msra.mxu0 0.0
      %8079 = vmatprep.subr.mxu0 0.0
      %8080 = vmatpush1.msra.mxu0 0.0
      %8081 = vmatprep.subr.mxu0 0.0
      %8082 = vmatpush1.msra.mxu0 0.0
      %8083 = vmatprep.subr.mxu0 0.0
      %8084 = vmatpush1.msra.mxu0 0.0
      %8085 = vmatprep.subr.mxu0 0.0
      %8086 = vmatpush1.msra.mxu0 0.0
      %8087 = vmatprep.subr.mxu0 0.0
      %8088 = vmatpush1.msra.mxu0 0.0
      %8089 = vmatprep.subr.mxu0 0.0
      %8090 = vmatpush1.msra.mxu0 0.0
      %8091 = vmatprep.subr.mxu0 0.0
      %8092 = vmatpush1.msra.mxu0 0.0
      %8093 = vmatprep.subr.mxu0 0.0
      %8094 = vmatpush1.msra.mxu0 0.0
      %8095 = vmatprep.subr.mxu0 0.0
      %8096 = vmatpush1.msra.mxu0 0.0
      %8097 = vmatprep.subr.mxu0 0.0
      %8098 = vmatpush1.msra.mxu0 0.0
      %8099 = vmatprep.subr.mxu0 0.0
      %8100 = vmatpush1.msra.mxu0 0.0
      %8101 = vmatprep.subr.mxu0 0.0
      %8102 = vmatpush1.msra.mxu0 0.0
      %8103 = vmatprep.subr.mxu0 0.0
      %8104 = vmatpush1.msra.mxu0 0.0
      %8105 = vmatprep.subr.mxu0 0.0
      %8106 = vmatpush1.msra.mxu0 0.0
      %8107 = vmatprep.subr.mxu0 0.0
      %8108 = vmatpush1.msra.mxu0 0.0
      %8109 = vmatprep.subr.mxu0 0.0
      %8110 = vmatpush1.msra.mxu0 0.0
      %8111 = vmatprep.subr.mxu0 0.0
      %8112 = vmatpush1.msra.mxu0 0.0
      %8113 = vmatprep.mubr.f32.mxu0 0.0
      %8114 = vmatmul.mubr.f32.gmra.mrb[0].mxu0 %v8047
      %v8115 = vpop.f32.mrb[0].mxu0
      %v8116 = vadd.f32 0.0, %v8115
      %v8117 = vpop.f32.mrb[0].mxu0
      %8118 = vdwg.mxu0
      %v8119 = vmul.f32 %v8116, 0.001953125
      %v8120 = vmul.f32 %v8119, %v8119
      %v8122 = vrot.slane %v8120, 7
      %v8124 = vsub.f32 %v8119, %v8122
      %v8125 = vmax.f32 %v8124, 0.0
      %v8126 = vadd.f32 %v8125, 1e-05
      %v8127 = vrsqrt.pop %v8126
      %v8128 = vsel %vm4237, %v8119, %v8127
      %v8129 = vld [vmem:[%s10] sm:$0xf]
      %v8131 = vsel %vm606, %v8128, 0
      %v8134 = vsel %vm4328, %v8129, 0
      %8136 = vmatprep.subr.mxu0 0.0
      %8137 = vmatpush1.msra.mxu0 %v8134
      %8138 = vmatprep.subr.mxu0 0.0
      %8139 = vmatpush1.msra.mxu0 0.0
      %8140 = vmatprep.subr.mxu0 0.0
      %8141 = vmatpush1.msra.mxu0 0.0
      %8142 = vmatprep.subr.mxu0 0.0
      %8143 = vmatpush1.msra.mxu0 0.0
      %8144 = vmatprep.subr.mxu0 0.0
      %8145 = vmatpush1.msra.mxu0 0.0
      %8146 = vmatprep.subr.mxu0 0.0
      %8147 = vmatpush1.msra.mxu0 0.0
      %8148 = vmatprep.subr.mxu0 0.0
      %8149 = vmatpush1.msra.mxu0 0.0
      %8150 = vmatprep.subr.mxu0 0.0
      %8151 = vmatpush1.msra.mxu0 0.0
      %8152 = vmatprep.subr.mxu0 0.0
      %8153 = vmatpush1.msra.mxu0 0.0
      %8154 = vmatprep.subr.mxu0 0.0
      %8155 = vmatpush1.msra.mxu0 0.0
      %8156 = vmatprep.subr.mxu0 0.0
      %8157 = vmatpush1.msra.mxu0 0.0
      %8158 = vmatprep.subr.mxu0 0.0
      %8159 = vmatpush1.msra.mxu0 0.0
      %8160 = vmatprep.subr.mxu0 0.0
      %8161 = vmatpush1.msra.mxu0 0.0
      %8162 = vmatprep.subr.mxu0 0.0
      %8163 = vmatpush1.msra.mxu0 0.0
      %8164 = vmatprep.subr.mxu0 0.0
      %8165 = vmatpush1.msra.mxu0 0.0
      %8166 = vmatprep.subr.mxu0 0.0
      %8167 = vmatpush1.msra.mxu0 0.0
      %8168 = vmatprep.subr.mxu0 0.0
      %8169 = vmatpush1.msra.mxu0 0.0
      %8170 = vmatprep.subr.mxu0 0.0
      %8171 = vmatpush1.msra.mxu0 0.0
      %8172 = vmatprep.subr.mxu0 0.0
      %8173 = vmatpush1.msra.mxu0 0.0
      %8174 = vmatprep.subr.mxu0 0.0
      %8175 = vmatpush1.msra.mxu0 0.0
      %8176 = vmatprep.subr.mxu0 0.0
      %8177 = vmatpush1.msra.mxu0 0.0
      %8178 = vmatprep.subr.mxu0 0.0
      %8179 = vmatpush1.msra.mxu0 0.0
      %8180 = vmatprep.subr.mxu0 0.0
      %8181 = vmatpush1.msra.mxu0 0.0
      %8182 = vmatprep.subr.mxu0 0.0
      %8183 = vmatpush1.msra.mxu0 0.0
      %8184 = vmatprep.subr.mxu0 0.0
      %8185 = vmatpush1.msra.mxu0 0.0
      %8186 = vmatprep.subr.mxu0 0.0
      %8187 = vmatpush1.msra.mxu0 0.0
      %8188 = vmatprep.subr.mxu0 0.0
      %8189 = vmatpush1.msra.mxu0 0.0
      %8190 = vmatprep.subr.mxu0 0.0
      %8191 = vmatpush1.msra.mxu0 0.0
      %8192 = vmatprep.subr.mxu0 0.0
      %8193 = vmatpush1.msra.mxu0 0.0
      %8194 = vmatprep.subr.mxu0 0.0
      %8195 = vmatpush1.msra.mxu0 0.0
      %8196 = vmatprep.subr.mxu0 0.0
      %8197 = vmatpush1.msra.mxu0 0.0
      %8198 = vmatprep.subr.mxu0 0.0
      %8199 = vmatpush1.msra.mxu0 0.0
      %8200 = vmatprep.mubr.f32.mxu0 0.0
      %8201 = vmatmul.mubr.f32.gmra.mrb[0].mxu0 %v8131
      %v8202 = vpop.f32.mrb[0].mxu0
      %v8203 = vadd.f32 0.0, %v8202
      %v8204 = vpop.f32.mrb[0].mxu0
      %8205 = vdwg.mxu0
      %v8207 = vlaneseq
      %v8208 = vshrl.u32 %v8207, 7
      %v8209 = vsub.s32 0, %v8208
      %v8210 = vrot.slane %v7716, %v8209
      %v8212 = vmul.f32 %v8203, %v8210
      %v8214 = vrot.slane %v8212, 1
      %v8216 = vmul.f32 %v8203, %v8214
      %v8217 = vsub.f32 %v7717, %v8216
      %v8219 = vunpack.c.l.s4 1966171168
      %v8220 = vunpack.c.0.s8 %v8219
      %v8221 = vlaneseq
      %v8222 = vshrl.u32 %v8221, 7
      %v8223 = vsub.s32 %v8220, %v8222
      %v8224 = vrot.slane %v8212, %v8223
      %v8225 = vcombine.high %v8224, %v8224
      %v8227 = vunpack.c.l.s4 1966171168
      %v8228 = vunpack.c.0.s8 %v8227
      %v8229 = vlaneseq
      %v8230 = vshrl.u32 %v8229, 7
      %v8231 = vsub.s32 %v8228, %v8230
      %v8232 = vrot.slane %v8225, %v8231
      %v8234 = vmul.f32 %v7715, %v8232
      %v8235 = vadd.f32 %v8217, %v8234
      %v8236 = vlaneseq
      %v8237 = vshrl.u32 %v8236, 7
      %v8238 = vsub.s32 1, %v8237
      %v8239 = vrot.slane %v8212, %v8238
      %v8240 = vmul.f32 %v7679, %v8239
      %v8241 = vmul.f32 %v7680, %v8239
      %v8242 = vmul.f32 %v7681, %v8239
      %v8243 = vmul.f32 %v7682, %v8239
      %v8244 = vmul.f32 %v7683, %v8239
      %v8245 = vmul.f32 %v7684, %v8239
      %v8246 = vmul.f32 %v7685, %v8239
      %v8247 = vmul.f32 %v7686, %v8239
      %v8248 = vmul.f32 %v7687, %v8239
      %v8249 = vmul.f32 %v7688, %v8239
      %v8250 = vmul.f32 %v7689, %v8239
      %v8251 = vmul.f32 %v7690, %v8239
      %v8252 = vmul.f32 %v7691, %v8239
      %v8253 = vmul.f32 %v7692, %v8239
      %v8254 = vmul.f32 %v7693, %v8239
      %v8255 = vmul.f32 %v7694, %v8239
      %v8256 = vmul.f32 %v7695, %v8239
      %v8257 = vmul.f32 %v7696, %v8239
      %v8258 = vmul.f32 %v7697, %v8239
      %v8259 = vmul.f32 %v7698, %v8239
      %v8260 = vmul.f32 %v7699, %v8239
      %v8261 = vmul.f32 %v7700, %v8239
      %v8262 = vmul.f32 %v7701, %v8239
      %v8263 = vmul.f32 %v7702, %v8239
      %v8264 = vmul.f32 %v7703, %v8239
      %v8265 = vmul.f32 %v7704, %v8239
      %v8266 = vmul.f32 %v7705, %v8239
      %v8267 = vmul.f32 %v7706, %v8239
      %v8268 = vmul.f32 %v7707, %v8239
      %v8269 = vmul.f32 %v7708, %v8239
      %v8270 = vmul.f32 %v7709, %v8239
      %v8271 = vmul.f32 %v7710, %v8239
      %v8272 = vmul.f32 %v7711, %v8239
      %v8273 = vmul.f32 %v7712, %v8239
      %v8274 = vmul.f32 %v7713, %v8239
      %v8275 = vmul.f32 %v7714, %v8239
      %v8277 = vlaneseq
      %v8278 = vshrl.u32 %v8277, 7
      %v8279 = vsub.s32 0, %v8278
      %v8280 = vrot.slane %v8235, %v8279
      %v8282 = vadd.f32 %v8240, %v8280
      %v8283 = vadd.f32 %v8241, %v8280
      %v8284 = vadd.f32 %v8242, %v8280
      %v8285 = vadd.f32 %v8243, %v8280
      %v8286 = vadd.f32 %v8244, %v8280
      %v8287 = vadd.f32 %v8245, %v8280
      %v8288 = vadd.f32 %v8246, %v8280
      %v8289 = vadd.f32 %v8247, %v8280
      %v8290 = vadd.f32 %v8248, %v8280
      %v8291 = vadd.f32 %v8249, %v8280
      %v8292 = vadd.f32 %v8250, %v8280
      %v8293 = vadd.f32 %v8251, %v8280
      %v8294 = vadd.f32 %v8252, %v8280
      %v8295 = vadd.f32 %v8253, %v8280
      %v8296 = vadd.f32 %v8254, %v8280
      %v8297 = vadd.f32 %v8255, %v8280
      %v8298 = vadd.f32 %v8256, %v8280
      %v8299 = vadd.f32 %v8257, %v8280
      %v8300 = vadd.f32 %v8258, %v8280
      %v8301 = vadd.f32 %v8259, %v8280
      %v8302 = vadd.f32 %v8260, %v8280
      %v8303 = vadd.f32 %v8261, %v8280
      %v8304 = vadd.f32 %v8262, %v8280
      %v8305 = vadd.f32 %v8263, %v8280
      %v8306 = vadd.f32 %v8264, %v8280
      %v8307 = vadd.f32 %v8265, %v8280
      %v8308 = vadd.f32 %v8266, %v8280
      %v8309 = vadd.f32 %v8267, %v8280
      %v8310 = vadd.f32 %v8268, %v8280
      %v8311 = vadd.f32 %v8269, %v8280
      %v8312 = vadd.f32 %v8270, %v8280
      %v8313 = vadd.f32 %v8271, %v8280
      %v8314 = vadd.f32 %v8272, %v8280
      %v8315 = vadd.f32 %v8273, %v8280
      %v8316 = vadd.f32 %v8274, %v8280
      %v8317 = vadd.f32 %v8275, %v8280
      %v8318 = vsub.f32 0.0, %v8282
      %v8319 = vsub.f32 0.0, %v8283
      %v8320 = vsub.f32 0.0, %v8284
      %v8321 = vsub.f32 0.0, %v8285
      %v8322 = vsub.f32 0.0, %v8286
      %v8323 = vsub.f32 0.0, %v8287
      %v8324 = vsub.f32 0.0, %v8288
      %v8325 = vsub.f32 0.0, %v8289
      %v8326 = vsub.f32 0.0, %v8290
      %v8327 = vsub.f32 0.0, %v8291
      %v8328 = vsub.f32 0.0, %v8292
      %v8329 = vsub.f32 0.0, %v8293
      %v8330 = vsub.f32 0.0, %v8294
      %v8331 = vsub.f32 0.0, %v8295
      %v8332 = vsub.f32 0.0, %v8296
      %v8333 = vsub.f32 0.0, %v8297
      %v8334 = vsub.f32 0.0, %v8298
      %v8335 = vsub.f32 0.0, %v8299
      %v8336 = vsub.f32 0.0, %v8300
      %v8337 = vsub.f32 0.0, %v8301
      %v8338 = vsub.f32 0.0, %v8302
      %v8339 = vsub.f32 0.0, %v8303
      %v8340 = vsub.f32 0.0, %v8304
      %v8341 = vsub.f32 0.0, %v8305
      %v8342 = vsub.f32 0.0, %v8306
      %v8343 = vsub.f32 0.0, %v8307
      %v8344 = vsub.f32 0.0, %v8308
      %v8345 = vsub.f32 0.0, %v8309
      %v8346 = vsub.f32 0.0, %v8310
      %v8347 = vsub.f32 0.0, %v8311
      %v8348 = vsub.f32 0.0, %v8312
      %v8349 = vsub.f32 0.0, %v8313
      %v8350 = vsub.f32 0.0, %v8314
      %v8351 = vsub.f32 0.0, %v8315
      %v8352 = vsub.f32 0.0, %v8316
      %v8353 = vsub.f32 0.0, %v8317
      %v8354 = vmul.f32 %v8318, 1.442695
      %v8355 = vpow.pop %v8354
      %v8356 = vmul.f32 %v8319, 1.442695
      %v8357 = vpow.pop %v8356
      %v8358 = vmul.f32 %v8320, 1.442695
      %v8359 = vpow.pop %v8358
      %v8360 = vmul.f32 %v8321, 1.442695
      %v8361 = vpow.pop %v8360
      %v8362 = vmul.f32 %v8322, 1.442695
      %v8363 = vpow.pop %v8362
      %v8364 = vmul.f32 %v8323, 1.442695
      %v8365 = vpow.pop %v8364
      %v8366 = vmul.f32 %v8324, 1.442695
      %v8367 = vpow.pop %v8366
      %v8368 = vmul.f32 %v8325, 1.442695
      %v8369 = vpow.pop %v8368
      %v8370 = vmul.f32 %v8326, 1.442695
      %v8371 = vpow.pop %v8370
      %v8372 = vmul.f32 %v8327, 1.442695
      %v8373 = vpow.pop %v8372
      %v8374 = vmul.f32 %v8328, 1.442695
      %v8375 = vpow.pop %v8374
      %v8376 = vmul.f32 %v8329, 1.442695
      %v8377 = vpow.pop %v8376
      %v8378 = vmul.f32 %v8330, 1.442695
      %v8379 = vpow.pop %v8378
      %v8380 = vmul.f32 %v8331, 1.442695
      %v8381 = vpow.pop %v8380
      %v8382 = vmul.f32 %v8332, 1.442695
      %v8383 = vpow.pop %v8382
      %v8384 = vmul.f32 %v8333, 1.442695
      %v8385 = vpow.pop %v8384
      %v8386 = vmul.f32 %v8334, 1.442695
      %v8387 = vpow.pop %v8386
      %v8388 = vmul.f32 %v8335, 1.442695
      %v8389 = vpow.pop %v8388
      %v8390 = vmul.f32 %v8336, 1.442695
      %v8391 = vpow.pop %v8390
      %v8392 = vmul.f32 %v8337, 1.442695
      %v8393 = vpow.pop %v8392
      %v8394 = vmul.f32 %v8338, 1.442695
      %v8395 = vpow.pop %v8394
      %v8396 = vmul.f32 %v8339, 1.442695
      %v8397 = vpow.pop %v8396
      %v8398 = vmul.f32 %v8340, 1.442695
      %v8399 = vpow.pop %v8398
      %v8400 = vmul.f32 %v8341, 1.442695
      %v8401 = vpow.pop %v8400
      %v8402 = vmul.f32 %v8342, 1.442695
      %v8403 = vpow.pop %v8402
      %v8404 = vmul.f32 %v8343, 1.442695
      %v8405 = vpow.pop %v8404
      %v8406 = vmul.f32 %v8344, 1.442695
      %v8407 = vpow.pop %v8406
      %v8408 = vmul.f32 %v8345, 1.442695
      %v8409 = vpow.pop %v8408
      %v8410 = vmul.f32 %v8346, 1.442695
      %v8411 = vpow.pop %v8410
      %v8412 = vmul.f32 %v8347, 1.442695
      %v8413 = vpow.pop %v8412
      %v8414 = vmul.f32 %v8348, 1.442695
      %v8415 = vpow.pop %v8414
      %v8416 = vmul.f32 %v8349, 1.442695
      %v8417 = vpow.pop %v8416
      %v8418 = vmul.f32 %v8350, 1.442695
      %v8419 = vpow.pop %v8418
      %v8420 = vmul.f32 %v8351, 1.442695
      %v8421 = vpow.pop %v8420
      %v8422 = vmul.f32 %v8352, 1.442695
      %v8423 = vpow.pop %v8422
      %v8424 = vmul.f32 %v8353, 1.442695
      %v8425 = vpow.pop %v8424
      %v8426 = vadd.f32 %v8355, 1.0
      %v8427 = vadd.f32 %v8357, 1.0
      %v8428 = vadd.f32 %v8359, 1.0
      %v8429 = vadd.f32 %v8361, 1.0
      %v8430 = vadd.f32 %v8363, 1.0
      %v8431 = vadd.f32 %v8365, 1.0
      %v8432 = vadd.f32 %v8367, 1.0
      %v8433 = vadd.f32 %v8369, 1.0
      %v8434 = vadd.f32 %v8371, 1.0
      %v8435 = vadd.f32 %v8373, 1.0
      %v8436 = vadd.f32 %v8375, 1.0
      %v8437 = vadd.f32 %v8377, 1.0
      %v8438 = vadd.f32 %v8379, 1.0
      %v8439 = vadd.f32 %v8381, 1.0
      %v8440 = vadd.f32 %v8383, 1.0
      %v8441 = vadd.f32 %v8385, 1.0
      %v8442 = vadd.f32 %v8387, 1.0
      %v8443 = vadd.f32 %v8389, 1.0
      %v8444 = vadd.f32 %v8391, 1.0
      %v8445 = vadd.f32 %v8393, 1.0
      %v8446 = vadd.f32 %v8395, 1.0
      %v8447 = vadd.f32 %v8397, 1.0
      %v8448 = vadd.f32 %v8399, 1.0
      %v8449 = vadd.f32 %v8401, 1.0
      %v8450 = vadd.f32 %v8403, 1.0
      %v8451 = vadd.f32 %v8405, 1.0
      %v8452 = vadd.f32 %v8407, 1.0
      %v8453 = vadd.f32 %v8409, 1.0
      %v8454 = vadd.f32 %v8411, 1.0
      %v8455 = vadd.f32 %v8413, 1.0
      %v8456 = vadd.f32 %v8415, 1.0
      %v8457 = vadd.f32 %v8417, 1.0
      %v8458 = vadd.f32 %v8419, 1.0
      %v8459 = vadd.f32 %v8421, 1.0
      %v8460 = vadd.f32 %v8423, 1.0
      %v8461 = vadd.f32 %v8425, 1.0
      %v8462 = vrcp.pop %v8426
      %v8463 = vrcp.pop %v8427
      %v8464 = vrcp.pop %v8428
      %v8465 = vrcp.pop %v8429
      %v8466 = vrcp.pop %v8430
      %v8467 = vrcp.pop %v8431
      %v8468 = vrcp.pop %v8432
      %v8469 = vrcp.pop %v8433
      %v8470 = vrcp.pop %v8434
      %v8471 = vrcp.pop %v8435
      %v8472 = vrcp.pop %v8436
      %v8473 = vrcp.pop %v8437
      %v8474 = vrcp.pop %v8438
      %v8475 = vrcp.pop %v8439
      %v8476 = vrcp.pop %v8440
      %v8477 = vrcp.pop %v8441
      %v8478 = vrcp.pop %v8442
      %v8479 = vrcp.pop %v8443
      %v8480 = vrcp.pop %v8444
      %v8481 = vrcp.pop %v8445
      %v8482 = vrcp.pop %v8446
      %v8483 = vrcp.pop %v8447
      %v8484 = vrcp.pop %v8448
      %v8485 = vrcp.pop %v8449
      %v8486 = vrcp.pop %v8450
      %v8487 = vrcp.pop %v8451
      %v8488 = vrcp.pop %v8452
      %v8489 = vrcp.pop %v8453
      %v8490 = vrcp.pop %v8454
      %v8491 = vrcp.pop %v8455
      %v8492 = vrcp.pop %v8456
      %v8493 = vrcp.pop %v8457
      %v8494 = vrcp.pop %v8458
      %v8495 = vrcp.pop %v8459
      %v8496 = vrcp.pop %v8460
      %v8497 = vrcp.pop %v8461
      %v8498 = vmul.f32 %v8282, %v8462
      %v8499 = vmul.f32 %v8283, %v8463
      %v8500 = vmul.f32 %v8284, %v8464
      %v8501 = vmul.f32 %v8285, %v8465
      %v8502 = vmul.f32 %v8286, %v8466
      %v8503 = vmul.f32 %v8287, %v8467
      %v8504 = vmul.f32 %v8288, %v8468
      %v8505 = vmul.f32 %v8289, %v8469
      %v8506 = vmul.f32 %v8290, %v8470
      %v8507 = vmul.f32 %v8291, %v8471
      %v8508 = vmul.f32 %v8292, %v8472
      %v8509 = vmul.f32 %v8293, %v8473
      %v8510 = vmul.f32 %v8294, %v8474
      %v8511 = vmul.f32 %v8295, %v8475
      %v8512 = vmul.f32 %v8296, %v8476
      %v8513 = vmul.f32 %v8297, %v8477
      %v8514 = vmul.f32 %v8298, %v8478
      %v8515 = vmul.f32 %v8299, %v8479
      %v8516 = vmul.f32 %v8300, %v8480
      %v8517 = vmul.f32 %v8301, %v8481
      %v8518 = vmul.f32 %v8302, %v8482
      %v8519 = vmul.f32 %v8303, %v8483
      %v8520 = vmul.f32 %v8304, %v8484
      %v8521 = vmul.f32 %v8305, %v8485
      %v8522 = vmul.f32 %v8306, %v8486
      %v8523 = vmul.f32 %v8307, %v8487
      %v8524 = vmul.f32 %v8308, %v8488
      %v8525 = vmul.f32 %v8309, %v8489
      %v8526 = vmul.f32 %v8310, %v8490
      %v8527 = vmul.f32 %v8311, %v8491
      %v8528 = vmul.f32 %v8312, %v8492
      %v8529 = vmul.f32 %v8313, %v8493
      %v8530 = vmul.f32 %v8314, %v8494
      %v8531 = vmul.f32 %v8315, %v8495
      %v8532 = vmul.f32 %v8316, %v8496
      %v8533 = vmul.f32 %v8317, %v8497
      %v8534 = vld [vmem:[#allocation2 + $0x13] sm:$0xff]
      %v8535 = vld [vmem:[#allocation2 + $0x1b] sm:$0xff]
      %v8536 = vld [vmem:[#allocation2 + $0x23] sm:$0xff]
      %v8537 = vld [vmem:[#allocation2 + $0x2b] sm:$0xff]
      %v8538 = vld [vmem:[#allocation2 + $0x33] sm:$0xff]
      %v8539 = vld [vmem:[#allocation2 + $0x3b] sm:$0xff]
      %v8540 = vld [vmem:[#allocation2 + $0x43] sm:$0xff]
      %v8541 = vld [vmem:[#allocation2 + $0x4b] sm:$0xff]
      %v8542 = vld [vmem:[#allocation2 + $0x53] sm:$0xff]
      %v8543 = vld [vmem:[#allocation2 + $0x5b] sm:$0xff]
      %v8544 = vld [vmem:[#allocation2 + $0x63] sm:$0xff]
      %v8545 = vld [vmem:[#allocation2 + $0x6b] sm:$0xff]
      %v8546 = vld [vmem:[#allocation2 + $0x73] sm:$0xff]
      %v8547 = vld [vmem:[#allocation2 + $0x7b] sm:$0xff]
      %v8548 = vld [vmem:[#allocation2 + $0x83] sm:$0xff]
      %v8549 = vld [vmem:[#allocation2 + $0x8b] sm:$0xff]
      %v8550 = vld [vmem:[#allocation2 + $0x93] sm:$0xff]
      %v8551 = vld [vmem:[#allocation2 + $0x9b] sm:$0xff]
      %v8552 = vld [vmem:[#allocation2 + $0xa3] sm:$0xff]
      %v8553 = vld [vmem:[#allocation2 + $0xab] sm:$0xff]
      %v8554 = vld [vmem:[#allocation2 + $0xb3] sm:$0xff]
      %v8555 = vld [vmem:[#allocation2 + $0xbb] sm:$0xff]
      %v8556 = vld [vmem:[#allocation2 + $0xc3] sm:$0xff]
      %v8557 = vld [vmem:[#allocation2 + $0xcb] sm:$0xff]
      %v8558 = vld [vmem:[#allocation2 + $0xd3] sm:$0xff]
      %v8559 = vld [vmem:[#allocation2 + $0xdb] sm:$0xff]
      %v8560 = vld [vmem:[#allocation2 + $0xe3] sm:$0xff]
      %v8561 = vld [vmem:[#allocation2 + $0xeb] sm:$0xff]
      %v8562 = vld [vmem:[#allocation2 + $0xf3] sm:$0xff]
      %v8563 = vld [vmem:[#allocation2 + $0xfb] sm:$0xff]
      %v8564 = vld [vmem:[#allocation2 + $0x103] sm:$0xff]
      %v8565 = vld [vmem:[#allocation2 + $0x10b] sm:$0xff]
      %v8566 = vld [vmem:[#allocation2 + $0x113] sm:$0xff]
      %v8567 = vld [vmem:[#allocation2 + $0x11b] sm:$0xff]
      %v8568 = vld [vmem:[#allocation2 + $0x123] sm:$0xff]
      %v8569 = vld [vmem:[#allocation2 + $0x12b] sm:$0xff]
      %v8570 = vpack.c.bf16 %v8535, %v8534
      %v8571 = vpack.c.bf16 %v8537, %v8536
      %v8572 = vpack.c.bf16 %v8539, %v8538
      %v8573 = vpack.c.bf16 %v8541, %v8540
      %v8574 = vpack.c.bf16 %v8543, %v8542
      %v8575 = vpack.c.bf16 %v8545, %v8544
      %v8576 = vpack.c.bf16 %v8547, %v8546
      %v8577 = vpack.c.bf16 %v8549, %v8548
      %v8578 = vpack.c.bf16 %v8551, %v8550
      %v8579 = vpack.c.bf16 %v8553, %v8552
      %v8580 = vpack.c.bf16 %v8555, %v8554
      %v8581 = vpack.c.bf16 %v8557, %v8556
      %v8582 = vpack.c.bf16 %v8559, %v8558
      %v8583 = vpack.c.bf16 %v8561, %v8560
      %v8584 = vpack.c.bf16 %v8563, %v8562
      %v8585 = vpack.c.bf16 %v8565, %v8564
      %v8586 = vpack.c.bf16 %v8567, %v8566
      %v8587 = vpack.c.bf16 %v8569, %v8568
      %v8588 = vld [vmem:[%s13] sm:$0x3]
      %v8589 = vld [vmem:[%s14] sm:$0x1]
      %v8591 = vlaneseq
      %v8592 = vshrl.u32 %v8591, 7
      %v8593 = vsub.s32 0, %v8592
      %v8594 = vrot.slane %v8589, %v8593
      %v8597 = vsel %vm606, %v8570, 0
      %v8600 = vsel %vm606, %v8571, 0
      %v8603 = vsel %vm606, %v8572, 0
      %v8606 = vsel %vm606, %v8573, 0
      %v8609 = vsel %vm606, %v8574, 0
      %v8612 = vsel %vm606, %v8575, 0
      %v8615 = vsel %vm606, %v8576, 0
      %v8618 = vsel %vm606, %v8577, 0
      %v8621 = vsel %vm606, %v8578, 0
      %v8624 = vsel %vm606, %v8579, 0
      %v8627 = vsel %vm606, %v8580, 0
      %v8630 = vsel %vm606, %v8581, 0
      %v8633 = vsel %vm606, %v8582, 0
      %v8636 = vsel %vm606, %v8583, 0
      %v8639 = vsel %vm606, %v8584, 0
      %v8642 = vsel %vm606, %v8585, 0
      %v8645 = vsel %vm606, %v8586, 0
      %v8648 = vsel %vm606, %v8587, 0
      %v8651 = vsel %vm1205, %v8588, 0
      %8653 = vmatprep.subr.bf16.mxu0 0
      %8654 = vmatpush1.bf16.msra.mxu0 %v8651
      %8655 = vmatprep.subr.bf16.mxu0 0
      %8656 = vmatpush1.bf16.msra.mxu0 0
      %8657 = vmatprep.subr.bf16.mxu0 0
      %8658 = vmatpush1.bf16.msra.mxu0 0
      %8659 = vmatprep.subr.bf16.mxu0 0
      %8660 = vmatpush1.bf16.msra.mxu0 0
      %8661 = vmatprep.subr.bf16.mxu0 0
      %8662 = vmatpush1.bf16.msra.mxu0 0
      %8663 = vmatprep.subr.bf16.mxu0 0
      %8664 = vmatpush1.bf16.msra.mxu0 0
      %8665 = vmatprep.subr.bf16.mxu0 0
      %8666 = vmatpush1.bf16.msra.mxu0 0
      %8667 = vmatprep.subr.bf16.mxu0 0
      %8668 = vmatpush1.bf16.msra.mxu0 0
      %8669 = vmatprep.subr.bf16.mxu0 0
      %8670 = vmatpush1.bf16.msra.mxu0 0
      %8671 = vmatprep.subr.bf16.mxu0 0
      %8672 = vmatpush1.bf16.msra.mxu0 0
      %8673 = vmatprep.subr.bf16.mxu0 0
      %8674 = vmatpush1.bf16.msra.mxu0 0
      %8675 = vmatprep.subr.bf16.mxu0 0
      %8676 = vmatpush1.bf16.msra.mxu0 0
      %8677 = vmatprep.subr.bf16.mxu0 0
      %8678 = vmatpush1.bf16.msra.mxu0 0
      %8679 = vmatprep.subr.bf16.mxu0 0
      %8680 = vmatpush1.bf16.msra.mxu0 0
      %8681 = vmatprep.subr.bf16.mxu0 0
      %8682 = vmatpush1.bf16.msra.mxu0 0
      %8683 = vmatprep.subr.bf16.mxu0 0
      %8684 = vmatpush1.bf16.msra.mxu0 0
      %8685 = vmatprep.mubr.bf16.mxu0 0
      %8686 = vmatmul.mubr.bf16.gmra.mrb[0].mxu0 %v8597
      %v8687 = vpop.f32.mrb[0].mxu0
      %v8688 = vadd.f32 %v8594, %v8687
      %v8689 = vpop.f32.mrb[0].mxu0
      %v8690 = vpop.f32.mrb[0].mxu0
      %v8691 = vadd.f32 %v8594, %v8690
      %v8692 = vpop.f32.mrb[0].mxu0
      %8693 = vmatprep.mubr.bf16.mxu0 0
      %8694 = vmatmul.mubr.bf16.gmra.mrb[0].mxu0 %v8600
      %v8695 = vpop.f32.mrb[0].mxu0
      %v8696 = vadd.f32 %v8594, %v8695
      %v8697 = vpop.f32.mrb[0].mxu0
      %v8698 = vpop.f32.mrb[0].mxu0
      %v8699 = vadd.f32 %v8594, %v8698
      %v8700 = vpop.f32.mrb[0].mxu0
      %8701 = vmatprep.mubr.bf16.mxu0 0
      %8702 = vmatmul.mubr.bf16.gmra.mrb[0].mxu0 %v8603
      %v8703 = vpop.f32.mrb[0].mxu0
      %v8704 = vadd.f32 %v8594, %v8703
      %v8705 = vpop.f32.mrb[0].mxu0
      %v8706 = vpop.f32.mrb[0].mxu0
      %v8707 = vadd.f32 %v8594, %v8706
      %v8708 = vpop.f32.mrb[0].mxu0
      %8709 = vmatprep.mubr.bf16.mxu0 0
      %8710 = vmatmul.mubr.bf16.gmra.mrb[0].mxu0 %v8606
      %v8711 = vpop.f32.mrb[0].mxu0
      %v8712 = vadd.f32 %v8594, %v8711
      %v8713 = vpop.f32.mrb[0].mxu0
      %v8714 = vpop.f32.mrb[0].mxu0
      %v8715 = vadd.f32 %v8594, %v8714
      %v8716 = vpop.f32.mrb[0].mxu0
      %8717 = vmatprep.mubr.bf16.mxu0 0
      %8718 = vmatmul.mubr.bf16.gmra.mrb[0].mxu0 %v8609
      %v8719 = vpop.f32.mrb[0].mxu0
      %v8720 = vadd.f32 %v8594, %v8719
      %v8721 = vpop.f32.mrb[0].mxu0
      %v8722 = vpop.f32.mrb[0].mxu0
      %v8723 = vadd.f32 %v8594, %v8722
      %v8724 = vpop.f32.mrb[0].mxu0
      %8725 = vmatprep.mubr.bf16.mxu0 0
      %8726 = vmatmul.mubr.bf16.gmra.mrb[0].mxu0 %v8612
      %v8727 = vpop.f32.mrb[0].mxu0
      %v8728 = vadd.f32 %v8594, %v8727
      %v8729 = vpop.f32.mrb[0].mxu0
      %v8730 = vpop.f32.mrb[0].mxu0
      %v8731 = vadd.f32 %v8594, %v8730
      %v8732 = vpop.f32.mrb[0].mxu0
      %8733 = vmatprep.mubr.bf16.mxu0 0
      %8734 = vmatmul.mubr.bf16.gmra.mrb[0].mxu0 %v8615
      %v8735 = vpop.f32.mrb[0].mxu0
      %v8736 = vadd.f32 %v8594, %v8735
      %v8737 = vpop.f32.mrb[0].mxu0
      %v8738 = vpop.f32.mrb[0].mxu0
      %v8739 = vadd.f32 %v8594, %v8738
      %v8740 = vpop.f32.mrb[0].mxu0
      %8741 = vmatprep.mubr.bf16.mxu0 0
      %8742 = vmatmul.mubr.bf16.gmra.mrb[0].mxu0 %v8618
      %v8743 = vpop.f32.mrb[0].mxu0
      %v8744 = vadd.f32 %v8594, %v8743
      %v8745 = vpop.f32.mrb[0].mxu0
      %v8746 = vpop.f32.mrb[0].mxu0
      %v8747 = vadd.f32 %v8594, %v8746
      %v8748 = vpop.f32.mrb[0].mxu0
      %8749 = vmatprep.mubr.bf16.mxu0 0
      %8750 = vmatmul.mubr.bf16.gmra.mrb[0].mxu0 %v8621
      %v8751 = vpop.f32.mrb[0].mxu0
      %v8752 = vadd.f32 %v8594, %v8751
      %v8753 = vpop.f32.mrb[0].mxu0
      %v8754 = vpop.f32.mrb[0].mxu0
      %v8755 = vadd.f32 %v8594, %v8754
      %v8756 = vpop.f32.mrb[0].mxu0
      %8757 = vmatprep.mubr.bf16.mxu0 0
      %8758 = vmatmul.mubr.bf16.gmra.mrb[0].mxu0 %v8624
      %v8759 = vpop.f32.mrb[0].mxu0
      %v8760 = vadd.f32 %v8594, %v8759
      %v8761 = vpop.f32.mrb[0].mxu0
      %v8762 = vpop.f32.mrb[0].mxu0
      %v8763 = vadd.f32 %v8594, %v8762
      %v8764 = vpop.f32.mrb[0].mxu0
      %8765 = vmatprep.mubr.bf16.mxu0 0
      %8766 = vmatmul.mubr.bf16.gmra.mrb[0].mxu0 %v8627
      %v8767 = vpop.f32.mrb[0].mxu0
      %v8768 = vadd.f32 %v8594, %v8767
      %v8769 = vpop.f32.mrb[0].mxu0
      %v8770 = vpop.f32.mrb[0].mxu0
      %v8771 = vadd.f32 %v8594, %v8770
      %v8772 = vpop.f32.mrb[0].mxu0
      %8773 = vmatprep.mubr.bf16.mxu0 0
      %8774 = vmatmul.mubr.bf16.gmra.mrb[0].mxu0 %v8630
      %v8775 = vpop.f32.mrb[0].mxu0
      %v8776 = vadd.f32 %v8594, %v8775
      %v8777 = vpop.f32.mrb[0].mxu0
      %v8778 = vpop.f32.mrb[0].mxu0
      %v8779 = vadd.f32 %v8594, %v8778
      %v8780 = vpop.f32.mrb[0].mxu0
      %8781 = vmatprep.mubr.bf16.mxu0 0
      %8782 = vmatmul.mubr.bf16.gmra.mrb[0].mxu0 %v8633
      %v8783 = vpop.f32.mrb[0].mxu0
      %v8784 = vadd.f32 %v8594, %v8783
      %v8785 = vpop.f32.mrb[0].mxu0
      %v8786 = vpop.f32.mrb[0].mxu0
      %v8787 = vadd.f32 %v8594, %v8786
      %v8788 = vpop.f32.mrb[0].mxu0
      %8789 = vmatprep.mubr.bf16.mxu0 0
      %8790 = vmatmul.mubr.bf16.gmra.mrb[0].mxu0 %v8636
      %v8791 = vpop.f32.mrb[0].mxu0
      %v8792 = vadd.f32 %v8594, %v8791
      %v8793 = vpop.f32.mrb[0].mxu0
      %v8794 = vpop.f32.mrb[0].mxu0
      %v8795 = vadd.f32 %v8594, %v8794
      %v8796 = vpop.f32.mrb[0].mxu0
      %8797 = vmatprep.mubr.bf16.mxu0 0
      %8798 = vmatmul.mubr.bf16.gmra.mrb[0].mxu0 %v8639
      %v8799 = vpop.f32.mrb[0].mxu0
      %v8800 = vadd.f32 %v8594, %v8799
      %v8801 = vpop.f32.mrb[0].mxu0
      %v8802 = vpop.f32.mrb[0].mxu0
      %v8803 = vadd.f32 %v8594, %v8802
      %v8804 = vpop.f32.mrb[0].mxu0
      %8805 = vmatprep.mubr.bf16.mxu0 0
      %8806 = vmatmul.mubr.bf16.gmra.mrb[0].mxu0 %v8642
      %v8807 = vpop.f32.mrb[0].mxu0
      %v8808 = vadd.f32 %v8594, %v8807
      %v8809 = vpop.f32.mrb[0].mxu0
      %v8810 = vpop.f32.mrb[0].mxu0
      %v8811 = vadd.f32 %v8594, %v8810
      %v8812 = vpop.f32.mrb[0].mxu0
      %8813 = vmatprep.mubr.bf16.mxu0 0
      %8814 = vmatmul.mubr.bf16.gmra.mrb[0].mxu0 %v8645
      %v8815 = vpop.f32.mrb[0].mxu0
      %v8816 = vadd.f32 %v8594, %v8815
      %v8817 = vpop.f32.mrb[0].mxu0
      %v8818 = vpop.f32.mrb[0].mxu0
      %v8819 = vadd.f32 %v8594, %v8818
      %v8820 = vpop.f32.mrb[0].mxu0
      %8821 = vmatprep.mubr.bf16.mxu0 0
      %8822 = vmatmul.mubr.bf16.gmra.mrb[0].mxu0 %v8648
      %v8823 = vpop.f32.mrb[0].mxu0
      %v8824 = vadd.f32 %v8594, %v8823
      %v8825 = vpop.f32.mrb[0].mxu0
      %v8826 = vpop.f32.mrb[0].mxu0
      %v8827 = vadd.f32 %v8594, %v8826
      %v8828 = vpop.f32.mrb[0].mxu0
      %8829 = vdwg.mxu0
      %v8830 = vadd.f32 %v8498, %v8688
      %v8831 = vadd.f32 %v8499, %v8691
      %v8832 = vadd.f32 %v8500, %v8696
      %v8833 = vadd.f32 %v8501, %v8699
      %v8834 = vadd.f32 %v8502, %v8704
      %v8835 = vadd.f32 %v8503, %v8707
      %v8836 = vadd.f32 %v8504, %v8712
      %v8837 = vadd.f32 %v8505, %v8715
      %v8838 = vadd.f32 %v8506, %v8720
      %v8839 = vadd.f32 %v8507, %v8723
      %v8840 = vadd.f32 %v8508, %v8728
      %v8841 = vadd.f32 %v8509, %v8731
      %v8842 = vadd.f32 %v8510, %v8736
      %v8843 = vadd.f32 %v8511, %v8739
      %v8844 = vadd.f32 %v8512, %v8744
      %v8845 = vadd.f32 %v8513, %v8747
      %v8846 = vadd.f32 %v8514, %v8752
      %v8847 = vadd.f32 %v8515, %v8755
      %v8848 = vadd.f32 %v8516, %v8760
      %v8849 = vadd.f32 %v8517, %v8763
      %v8850 = vadd.f32 %v8518, %v8768
      %v8851 = vadd.f32 %v8519, %v8771
      %v8852 = vadd.f32 %v8520, %v8776
      %v8853 = vadd.f32 %v8521, %v8779
      %v8854 = vadd.f32 %v8522, %v8784
      %v8855 = vadd.f32 %v8523, %v8787
      %v8856 = vadd.f32 %v8524, %v8792
      %v8857 = vadd.f32 %v8525, %v8795
      %v8858 = vadd.f32 %v8526, %v8800
      %v8859 = vadd.f32 %v8527, %v8803
      %v8860 = vadd.f32 %v8528, %v8808
      %v8861 = vadd.f32 %v8529, %v8811
      %v8862 = vadd.f32 %v8530, %v8816
      %v8863 = vadd.f32 %v8531, %v8819
      %v8864 = vadd.f32 %v8532, %v8824
      %v8865 = vadd.f32 %v8533, %v8827
      %8866 = vst.msk [vmem:[%s522] sm:$0xff] %vm4240, %v8830
      %8867 = vst.msk [vmem:[%s522 + $0x8] sm:$0xff] %vm4240, %v8831
      %8868 = vst.msk [vmem:[%s522 + $0x10] sm:$0xff] %vm4240, %v8832
      %8869 = vst.msk [vmem:[%s522 + $0x18] sm:$0xff] %vm4240, %v8833
      %8870 = vst.msk [vmem:[%s522 + $0x20] sm:$0xff] %vm4240, %v8834
      %8871 = vst.msk [vmem:[%s522 + $0x28] sm:$0xff] %vm4240, %v8835
      %8872 = vst.msk [vmem:[%s522 + $0x30] sm:$0xff] %vm4240, %v8836
      %8873 = vst.msk [vmem:[%s522 + $0x38] sm:$0xff] %vm4240, %v8837
      %8874 = vst.msk [vmem:[%s522 + $0x40] sm:$0xff] %vm4240, %v8838
      %8875 = vst.msk [vmem:[%s522 + $0x48] sm:$0xff] %vm4240, %v8839
      %8876 = vst.msk [vmem:[%s522 + $0x50] sm:$0xff] %vm4240, %v8840
      %8877 = vst.msk [vmem:[%s522 + $0x58] sm:$0xff] %vm4240, %v8841
      %8878 = vst.msk [vmem:[%s522 + $0x60] sm:$0xff] %vm4240, %v8842
      %8879 = vst.msk [vmem:[%s522 + $0x68] sm:$0xff] %vm4240, %v8843
      %8880 = vst.msk [vmem:[%s522 + $0x70] sm:$0xff] %vm4240, %v8844
      %8881 = vst.msk [vmem:[%s522 + $0x78] sm:$0xff] %vm4240, %v8845
      %8882 = vst.msk [vmem:[%s522 + $0x80] sm:$0xff] %vm4240, %v8846
      %8883 = vst.msk [vmem:[%s522 + $0x88] sm:$0xff] %vm4240, %v8847
      %8884 = vst.msk [vmem:[%s522 + $0x90] sm:$0xff] %vm4240, %v8848
      %8885 = vst.msk [vmem:[%s522 + $0x98] sm:$0xff] %vm4240, %v8849
      %8886 = vst.msk [vmem:[%s522 + $0xa0] sm:$0xff] %vm4240, %v8850
      %8887 = vst.msk [vmem:[%s522 + $0xa8] sm:$0xff] %vm4240, %v8851
      %8888 = vst.msk [vmem:[%s522 + $0xb0] sm:$0xff] %vm4240, %v8852
      %8889 = vst.msk [vmem:[%s522 + $0xb8] sm:$0xff] %vm4240, %v8853
      %8890 = vst.msk [vmem:[%s522 + $0xc0] sm:$0xff] %vm4240, %v8854
      %8891 = vst.msk [vmem:[%s522 + $0xc8] sm:$0xff] %vm4240, %v8855
      %8892 = vst.msk [vmem:[%s522 + $0xd0] sm:$0xff] %vm4240, %v8856
      %8893 = vst.msk [vmem:[%s522 + $0xd8] sm:$0xff] %vm4240, %v8857
      %8894 = vst.msk [vmem:[%s522 + $0xe0] sm:$0xff] %vm4240, %v8858
      %8895 = vst.msk [vmem:[%s522 + $0xe8] sm:$0xff] %vm4240, %v8859
      %8896 = vst.msk [vmem:[%s522 + $0xf0] sm:$0xff] %vm4240, %v8860
      %8897 = vst.msk [vmem:[%s522 + $0xf8] sm:$0xff] %vm4240, %v8861
      %8898 = vst.msk [vmem:[%s522 + $0x100] sm:$0xff] %vm4240, %v8862
      %8899 = vst.msk [vmem:[%s522 + $0x108] sm:$0xff] %vm4240, %v8863
      %8900 = vst.msk [vmem:[%s522 + $0x110] sm:$0xff] %vm4240, %v8864
      %8901 = vst.msk [vmem:[%s522 + $0x118] sm:$0xff] %vm4240, %v8865
      %p8902 = scmp.lt.s32.totalorder %s26, 1
      %s8903 = scalar_select %p8902, %s26, 1
      %s8904 = smul.addr %s8903, 36
      %s8905 = smul.addr %s8904, 8
      %s8906 = scalar_lea.vmem %s15, %s8905
      // Predicated region
      $region81: #{resnet_block_forward.1} parent=79 // pred_check
        %p8907 = pneg %p374
      $region82: #{resnet_block_forward.1} parent=79 // pred_check_branch
        %8909 = sbr.rel (%p8907) target = $region84
      $region83: #{resnet_block_forward.1} parent=79 // pred_region
        _
      $region84: #{resnet_block_forward.1} parent=79 // pred_fallthru
        _
    $region80: #{resnet_block_forward.1} parent=5 // pred_fallthru
      _
    %p8910 = scmp.le.s32.totalorder 2, %s21
    // Predicated region
    $region85: #{resnet_block_forward.1} parent=5 // pred_check
      %p8911 = pneg %p8910
    $region86: #{resnet_block_forward.1} parent=5 // pred_check_branch
      %8913 = sbr.rel (%p8911) target = $region88
    $region87: #{resnet_block_forward.1} parent=5 // pred_region
      %s8914 = ssub.s32 %s21, 2
      // Predicated region
      $region89: #{resnet_block_forward.1} parent=87 // pred_check
        %p8915 = pneg %p380
      $region90: #{resnet_block_forward.1} parent=87 // pred_check_branch
        %8917 = sbr.rel (%p8915) target = $region92
      $region91: #{resnet_block_forward.1} parent=87 // pred_region
        %p8918 = scmp.lt.s32.totalorder %s27, 1
        %s8919 = scalar_select %p8918, %s27, 1
        %s8920 = smul.addr %s8919, 36
        %s8921 = smul.addr %s8920, 8
        %s8922 = scalar_lea.vmem %s15, %s8921
      $region92: #{resnet_block_forward.1} parent=87 // pred_fallthru
        _
    $region88: #{resnet_block_forward.1} parent=5 // pred_fallthru
      _
  $region6: #{resnet_block_forward.1} parent=0 // loop_footer
    %s25 = sadd.s32 1, %s21
  $region7: #{resnet_block_forward.1} parent=0 // loop_footer_branch
    %20 = sbr.rel target = $region3
  $region8: #{resnet_block_forward.1} parent=0 // loop_exit
    _

</llo_original>
